<compile_context>
chip_gen: v7x
topology: tpu7x:2x2x1
jax: 0.10.0
libtpu: 0.0.40
codegen_flags: <defaults>
</compile_context>

<pallas_src>
import jax
import jax.numpy as jnp
import numpy as np
from jax import lax
from jax.experimental import pallas as pl
from jax.experimental.pallas import tpu as pltpu


def _round_up(x, m):
    return (x + m - 1) // m * m


def _block_vmem_bytes(th, w, cp, c1p):
    """Rough per-grid-step VMEM need (bytes) for a (th, w) row block."""
    r, wt = th + 4, w + 4
    m1, m2 = (th + 2) * (w + 2), th * w
    io = 2 * (r * wt * cp * 2 + th * w * cp * 2)          # double-buffered bf16 in/out blocks
    conv1 = (r * (w + 2) * cp * 2                         # dw slab (bf16)
             + 2 * m1 * 3 * cp * 2                        # concat + flat patch (bf16)
             + m1 * c1p * (4 + 4 + 2))                    # acc1 f32 + y f32 + yb bf16
    conv2 = ((th + 2) * w * c1p * 2                       # dw slab (bf16)
             + 2 * m2 * 3 * c1p * 2                       # concat + flat patch (bf16)
             + m2 * cp * (4 + 4))                         # acc2 f32 + z f32
    return io + conv1 + conv2


def bridge_kernel(x_ref, w1_ref, b1_ref, w2_ref, b2_ref, o_ref):
    # x_ref : (TH+4, W+4, Cp)  bf16  one batch element, one row block (+2-px halo)
    # w1_ref: (3, 3*Cp, C1p)   bf16  conv1 taps (dw, dh-major x cin, cout), BN1 scale folded
    # b1_ref: (1, C1p)         f32   BN1 shift
    # w2_ref: (3, 3*C1p, Cp)   bf16  conv2 taps, BN2 scale folded
    # b2_ref: (1, Cp)          f32   BN2 shift
    # o_ref : (TH, W, Cp)      bf16  output row block
    TH, W, Cop = o_ref.shape
    Cp = x_ref.shape[-1]
    C1p = w1_ref.shape[-1]

    r = pl.program_id(1)
    n_r = pl.num_programs(1)

    x = x_ref[...]                                          # (TH+4, W+4, Cp) bf16

    def im2col_dw(src, dw, rows, cols, cin):
        # src: (rows+2, cols+2, cin).  dw-shifted slab, then the three dh-shifted
        # row windows concatenated along channels -> (rows*cols, 3*cin), so each
        # conv is 3 matmuls with K = 3*cin (fills the 256-deep MXU, dh taps
        # accumulate inside the MXU).
        slab = src[:, dw:dw + cols, :]                      # (rows+2, cols, cin)
        cat = jnp.concatenate(
            [slab[0:rows], slab[1:rows + 1], slab[2:rows + 2]], axis=-1)
        return cat.reshape(rows * cols, 3 * cin)

    # ---- conv1 evaluated at (TH+2, W+2) positions (1-px halo of y for conv2) ----
    acc1 = jnp.dot(im2col_dw(x, 0, TH + 2, W + 2, Cp), w1_ref[0],
                   preferred_element_type=jnp.float32)
    for dw in (1, 2):
        acc1 = acc1 + jnp.dot(im2col_dw(x, dw, TH + 2, W + 2, Cp), w1_ref[dw],
                              preferred_element_type=jnp.float32)
    # BN1 shift (scale already folded into the weights) + ReLU in f32
    y = jnp.maximum(acc1 + b1_ref[...], 0.0).reshape(TH + 2, W + 2, C1p)

    # Zero the y positions outside the image: they are conv2's zero padding
    # (left/right columns always; top/bottom rows only on the first/last block).
    ii = lax.broadcasted_iota(jnp.int32, (TH + 2, W + 2, 1), 0)
    wi = lax.broadcasted_iota(jnp.int32, (TH + 2, W + 2, 1), 1)
    inside = (wi >= 1) & (wi <= W)
    inside = jnp.logical_and(inside, jnp.logical_or(r > 0, ii >= 1))
    inside = jnp.logical_and(inside, jnp.logical_or(r < n_r - 1, ii <= TH))
    yb = jnp.where(inside, y, 0.0).astype(jnp.bfloat16)     # (TH+2, W+2, C1p)

    # ---- conv2 evaluated at the (TH, W) output positions ----
    acc2 = jnp.dot(im2col_dw(yb, 0, TH, W, C1p), w2_ref[0],
                   preferred_element_type=jnp.float32)
    for dw in (1, 2):
        acc2 = acc2 + jnp.dot(im2col_dw(yb, dw, TH, W, C1p), w2_ref[dw],
                              preferred_element_type=jnp.float32)
    z = jnp.maximum(acc2 + b2_ref[...], 0.0)
    o_ref[...] = z.reshape(TH, W, Cop).astype(o_ref.dtype)


@jax.jit
def bridge_forward(x_nchw, w1_hwio, s1, w2_hwio, s2):
    """x_nchw: (N, C, H, W) f32; w1_hwio: (3,3,C,2C); w2_hwio: (3,3,2C,C);
    s1/s2: (2, cout) folded BN [scale; shift].  Returns (N, C, H, W) f32."""
    N, C, H, W = x_nchw.shape
    C1 = w1_hwio.shape[3]
    Cp, C1p = _round_up(C, 128), _round_up(C1, 128)

    # ---- generation-aware VMEM budget -> row-tile selection ----
    try:
        vmem_cap = int(pltpu.get_tpu_info().vmem_capacity_bytes)
    except Exception:
        vmem_cap = 64 << 20                                  # conservative fallback
    w_bytes = 2 * (9 * Cp * C1p * 2) + (C1p + Cp) * 4        # resident weights + shifts
    budget = int(vmem_cap * 0.75) - w_bytes
    th = 1
    for d in range(H, 0, -1):                                # largest divisor of H that fits
        if H % d == 0 and _block_vmem_bytes(d, W, Cp, C1p) <= budget:
            th = d
            break
    nR = H // th

    # ---- layout plumbing (drops out entirely in an NHWC bf16 end-to-end UNet) ----
    x = jnp.transpose(x_nchw, (0, 2, 3, 1)).astype(jnp.bfloat16)
    x = jnp.pad(x, ((0, 0), (2, 2), (2, 2), (0, Cp - C)))    # 2-px spatial halo + lane pad

    # Fold BN scale into conv weights (host-side); kernel keeps only shift+ReLU.
    w1f = jnp.zeros((3, 3, Cp, C1p), jnp.float32).at[:, :, :C, :C1].set(
        w1_hwio * s1[0][None, None, None, :])
    w2f = jnp.zeros((3, 3, C1p, Cp), jnp.float32).at[:, :, :C1, :C].set(
        w2_hwio * s2[0][None, None, None, :])
    # (dh, dw, cin, cout) -> (dw, dh*cin, cout): one matmul per dw with K = 3*cin.
    w1k = jnp.transpose(w1f, (1, 0, 2, 3)).reshape(3, 3 * Cp, C1p).astype(jnp.bfloat16)
    w2k = jnp.transpose(w2f, (1, 0, 2, 3)).reshape(3, 3 * C1p, Cp).astype(jnp.bfloat16)
    b1 = jnp.zeros((1, C1p), jnp.float32).at[0, :C1].set(s1[1])
    b2 = jnp.zeros((1, Cp), jnp.float32).at[0, :C].set(s2[1])

    # ---- explicit, generation-aware VMEM limit ----
    need = _block_vmem_bytes(th, W, Cp, C1p) + w_bytes
    hard_cap = vmem_cap - (16 << 20) if vmem_cap >= (96 << 20) else vmem_cap - (8 << 20)
    vmem_limit = int(max(32 << 20, min(2 * need + (8 << 20), hard_cap)))

    if nR == 1:
        # Whole padded plane per step: plain blocked spec, no halo duplication.
        x_spec = pl.BlockSpec((None, H + 4, W + 4, Cp), lambda n, r: (n, 0, 0, 0))
    else:
        # Overlapping (halo) row windows straight out of the padded input via an
        # element-offset row dim -> still no host-side duplication.
        x_spec = pl.BlockSpec((None, pl.Element(th + 4), W + 4, Cp),
                              lambda n, r: (n, r * th, 0, 0))

    out = pl.pallas_call(
        bridge_kernel,
        out_shape=jax.ShapeDtypeStruct((N, H, W, Cp), jnp.bfloat16),
        grid_spec=pltpu.PrefetchScalarGridSpec(
            num_scalar_prefetch=0,
            grid=(N, nR),                                    # N>=2 keeps both v7x cores busy
            in_specs=[
                x_spec,
                pl.BlockSpec(memory_space=pltpu.MemorySpace.VMEM),   # w1 (resident)
                pl.BlockSpec(memory_space=pltpu.MemorySpace.VMEM),   # b1
                pl.BlockSpec(memory_space=pltpu.MemorySpace.VMEM),   # w2 (resident)
                pl.BlockSpec(memory_space=pltpu.MemorySpace.VMEM),   # b2
            ],
            out_specs=pl.BlockSpec((None, th, W, Cp), lambda n, r: (n, r, 0, 0)),
        ),
        compiler_params=pltpu.CompilerParams(
            dimension_semantics=("parallel", "parallel"),
            vmem_limit_bytes=vmem_limit),
    )(x, w1k, b1, w2k, b2)

    # Module-facing interface (NCHW f32); an NHWC bf16 pipeline would use `out` directly.
    return jnp.transpose(out[..., :C].astype(jnp.float32), (0, 3, 1, 2))


# ----------------------------- reference (pure JAX) -----------------------------
def _q_bf16(a):
    # match the kernel's bf16 matmul-operand quantization
    return a.astype(jnp.bfloat16).astype(jnp.float32)


def bridge_ref(x_nchw, w1_hwio, s1, w2_hwio, s2):
    x = _q_bf16(jnp.transpose(x_nchw, (0, 2, 3, 1)))
    w1e = _q_bf16(w1_hwio * s1[0][None, None, None, :])     # BN scale folded like the kernel
    y = lax.conv_general_dilated(x, w1e, (1, 1), "SAME",
                                 dimension_numbers=("NHWC", "HWIO", "NHWC"),
                                 precision=lax.Precision.HIGHEST)
    y = jnp.maximum(y + s1[1], 0.0)
    w2e = _q_bf16(w2_hwio * s2[0][None, None, None, :])
    z = lax.conv_general_dilated(_q_bf16(y), w2e, (1, 1), "SAME",
                                 dimension_numbers=("NHWC", "HWIO", "NHWC"),
                                 precision=lax.Precision.HIGHEST)
    z = jnp.maximum(z + s2[1], 0.0)
    return jnp.transpose(z, (0, 3, 1, 2))


def fold_bn(gamma, beta, mean, var, eps=1e-5):
    scale = gamma / jnp.sqrt(var + eps)
    shift = beta - mean * scale
    return jnp.stack([scale, shift], axis=0)    # (2, C)


if __name__ == "__main__":
    N, C, H, W = 2, 4, 16, 16
    C1 = 2 * C

    key = jax.random.PRNGKey(0)
    ks = jax.random.split(key, 11)

    x = jax.random.normal(ks[0], (N, C, H, W), jnp.float32)

    # conv weights in HWIO; the wrapper pads / reorders them for the kernel
    w1_hwio = 0.2 * jax.random.normal(ks[1], (3, 3, C, C1), jnp.float32)
    w2_hwio = 0.2 * jax.random.normal(ks[2], (3, 3, C1, C), jnp.float32)

    # BatchNorm (inference) parameters, folded to scale/shift
    s1 = fold_bn(
        1.0 + 0.1 * jax.random.normal(ks[3], (C1,), jnp.float32),
        0.1 * jax.random.normal(ks[4], (C1,), jnp.float32),
        0.1 * jax.random.normal(ks[5], (C1,), jnp.float32),
        0.5 + jax.random.uniform(ks[6], (C1,), jnp.float32))
    s2 = fold_bn(
        1.0 + 0.1 * jax.random.normal(ks[7], (C,), jnp.float32),
        0.1 * jax.random.normal(ks[8], (C,), jnp.float32),
        0.1 * jax.random.normal(ks[9], (C,), jnp.float32),
        0.5 + jax.random.uniform(ks[10], (C,), jnp.float32))

    out = jax.block_until_ready(bridge_forward(x, w1_hwio, s1, w2_hwio, s2))
    ref = jax.block_until_ready(bridge_ref(x, w1_hwio, s1, w2_hwio, s2))

    # bf16 operands + bf16 output / f32 accumulation: loose tolerance (the
    # reference quantizes its operands identically).
    np.testing.assert_allclose(np.asarray(out), np.asarray(ref),
                               rtol=5e-2, atol=5e-2)
    print("KERNEL_OK")
</pallas_src>

<mosaic_0001>
module attributes {stable_mosaic.version = 11 : i64} {
  func.func @bridge_kernel(%arg0: i32, %arg1: i32, %arg2: memref<1x20x20x128xbf16, #tpu.memory_space<vmem>>, %arg3: memref<3x384x128xbf16, #tpu.memory_space<vmem>>, %arg4: memref<1x128xf32, #tpu.memory_space<vmem>>, %arg5: memref<3x384x128xbf16, #tpu.memory_space<vmem>>, %arg6: memref<1x128xf32, #tpu.memory_space<vmem>>, %arg7: memref<1x16x16x128xbf16, #tpu.memory_space<vmem>>) attributes {dimension_semantics = [#tpu.dimension_semantics<parallel>, #tpu.dimension_semantics<parallel>], iteration_bounds = array<i64: 2, 1>, scalar_prefetch = 0 : i64, scratch_operands = 0 : i64, tpu.core_type = #tpu.core_type<tc>, window_params = [{transform_indices = @transform_0, window_bounds = array<i64: 1, 20, 20, 128>}, {pipeline_mode = #tpu.pipeline_mode<synchronous>, transform_indices = @transform_1, window_bounds = array<i64: 3, 384, 128>}, {pipeline_mode = #tpu.pipeline_mode<synchronous>, transform_indices = @transform_2, window_bounds = array<i64: 1, 128>}, {pipeline_mode = #tpu.pipeline_mode<synchronous>, transform_indices = @transform_3, window_bounds = array<i64: 3, 384, 128>}, {pipeline_mode = #tpu.pipeline_mode<synchronous>, transform_indices = @transform_4, window_bounds = array<i64: 1, 128>}, {transform_indices = @transform_5, window_bounds = array<i64: 1, 16, 16, 128>}]} {
    %c0 = arith.constant 0 : index
    %c0_0 = arith.constant 0 : index
    %c0_1 = arith.constant 0 : index
    %c0_2 = arith.constant 0 : index
    %0 = vector.load %arg2[%c0, %c0_0, %c0_1, %c0_2] : memref<1x20x20x128xbf16, #tpu.memory_space<vmem>>, vector<1x20x20x128xbf16>
    %1 = vector.shape_cast %0 : vector<1x20x20x128xbf16> to vector<20x20x128xbf16>
    %2 = vector.extract_strided_slice %1 {offsets = [0, 0, 0], sizes = [20, 18, 128], strides = [1, 1, 1]} : vector<20x20x128xbf16> to vector<20x18x128xbf16>
    %3 = vector.extract_strided_slice %2 {offsets = [0, 0, 0], sizes = [18, 18, 128], strides = [1, 1, 1]} : vector<20x18x128xbf16> to vector<18x18x128xbf16>
    %4 = vector.extract_strided_slice %2 {offsets = [1, 0, 0], sizes = [18, 18, 128], strides = [1, 1, 1]} : vector<20x18x128xbf16> to vector<18x18x128xbf16>
    %5 = vector.extract_strided_slice %2 {offsets = [2, 0, 0], sizes = [18, 18, 128], strides = [1, 1, 1]} : vector<20x18x128xbf16> to vector<18x18x128xbf16>
    %6 = tpu.concatenate %3, %4, %5 in 2 : vector<18x18x128xbf16>, vector<18x18x128xbf16>, vector<18x18x128xbf16> -> vector<18x18x384xbf16>
    %7 = vector.shape_cast %6 : vector<18x18x384xbf16> to vector<324x384xbf16>
    %c0_3 = arith.constant 0 : index
    %c0_4 = arith.constant 0 : index
    %c0_5 = arith.constant 0 : index
    %8 = vector.load %arg3[%c0_3, %c0_4, %c0_5] : memref<3x384x128xbf16, #tpu.memory_space<vmem>>, vector<1x384x128xbf16>
    %9 = vector.shape_cast %8 : vector<1x384x128xbf16> to vector<384x128xbf16>
    %cst = arith.constant dense<0.000000e+00> : vector<324x128xf32>
    %10 = tpu.matmul %7, %9, %cst {dimension_numbers = #tpu.dot_dimension_numbers<[1], [0], [0], [1], [0, 0, 1, 1], [], []>} : vector<324x384xbf16>, vector<384x128xbf16>, vector<324x128xf32> -> vector<324x128xf32>
    %11 = vector.extract_strided_slice %1 {offsets = [0, 1, 0], sizes = [20, 18, 128], strides = [1, 1, 1]} : vector<20x20x128xbf16> to vector<20x18x128xbf16>
    %12 = vector.extract_strided_slice %11 {offsets = [0, 0, 0], sizes = [18, 18, 128], strides = [1, 1, 1]} : vector<20x18x128xbf16> to vector<18x18x128xbf16>
    %13 = vector.extract_strided_slice %11 {offsets = [1, 0, 0], sizes = [18, 18, 128], strides = [1, 1, 1]} : vector<20x18x128xbf16> to vector<18x18x128xbf16>
    %14 = vector.extract_strided_slice %11 {offsets = [2, 0, 0], sizes = [18, 18, 128], strides = [1, 1, 1]} : vector<20x18x128xbf16> to vector<18x18x128xbf16>
    %15 = tpu.concatenate %12, %13, %14 in 2 : vector<18x18x128xbf16>, vector<18x18x128xbf16>, vector<18x18x128xbf16> -> vector<18x18x384xbf16>
    %16 = vector.shape_cast %15 : vector<18x18x384xbf16> to vector<324x384xbf16>
    %c1 = arith.constant 1 : index
    %c0_6 = arith.constant 0 : index
    %c0_7 = arith.constant 0 : index
    %17 = vector.load %arg3[%c1, %c0_6, %c0_7] : memref<3x384x128xbf16, #tpu.memory_space<vmem>>, vector<1x384x128xbf16>
    %18 = vector.shape_cast %17 : vector<1x384x128xbf16> to vector<384x128xbf16>
    %cst_8 = arith.constant dense<0.000000e+00> : vector<324x128xf32>
    %19 = tpu.matmul %16, %18, %cst_8 {dimension_numbers = #tpu.dot_dimension_numbers<[1], [0], [0], [1], [0, 0, 1, 1], [], []>} : vector<324x384xbf16>, vector<384x128xbf16>, vector<324x128xf32> -> vector<324x128xf32>
    %20 = arith.addf %10, %19 : vector<324x128xf32>
    %21 = vector.extract_strided_slice %1 {offsets = [0, 2, 0], sizes = [20, 18, 128], strides = [1, 1, 1]} : vector<20x20x128xbf16> to vector<20x18x128xbf16>
    %22 = vector.extract_strided_slice %21 {offsets = [0, 0, 0], sizes = [18, 18, 128], strides = [1, 1, 1]} : vector<20x18x128xbf16> to vector<18x18x128xbf16>
    %23 = vector.extract_strided_slice %21 {offsets = [1, 0, 0], sizes = [18, 18, 128], strides = [1, 1, 1]} : vector<20x18x128xbf16> to vector<18x18x128xbf16>
    %24 = vector.extract_strided_slice %21 {offsets = [2, 0, 0], sizes = [18, 18, 128], strides = [1, 1, 1]} : vector<20x18x128xbf16> to vector<18x18x128xbf16>
    %25 = tpu.concatenate %22, %23, %24 in 2 : vector<18x18x128xbf16>, vector<18x18x128xbf16>, vector<18x18x128xbf16> -> vector<18x18x384xbf16>
    %26 = vector.shape_cast %25 : vector<18x18x384xbf16> to vector<324x384xbf16>
    %c2 = arith.constant 2 : index
    %c0_9 = arith.constant 0 : index
    %c0_10 = arith.constant 0 : index
    %27 = vector.load %arg3[%c2, %c0_9, %c0_10] : memref<3x384x128xbf16, #tpu.memory_space<vmem>>, vector<1x384x128xbf16>
    %28 = vector.shape_cast %27 : vector<1x384x128xbf16> to vector<384x128xbf16>
    %cst_11 = arith.constant dense<0.000000e+00> : vector<324x128xf32>
    %29 = tpu.matmul %26, %28, %cst_11 {dimension_numbers = #tpu.dot_dimension_numbers<[1], [0], [0], [1], [0, 0, 1, 1], [], []>} : vector<324x384xbf16>, vector<384x128xbf16>, vector<324x128xf32> -> vector<324x128xf32>
    %30 = arith.addf %20, %29 : vector<324x128xf32>
    %c0_12 = arith.constant 0 : index
    %c0_13 = arith.constant 0 : index
    %31 = vector.load %arg4[%c0_12, %c0_13] : memref<1x128xf32, #tpu.memory_space<vmem>>, vector<1x128xf32>
    %32 = vector.broadcast %31 : vector<1x128xf32> to vector<324x128xf32>
    %33 = arith.addf %30, %32 : vector<324x128xf32>
    %cst_14 = arith.constant 0.000000e+00 : f32
    %34 = vector.broadcast %cst_14 : f32 to vector<324x128xf32>
    %35 = arith.maximumf %33, %34 : vector<324x128xf32>
    %36 = vector.shape_cast %35 : vector<324x128xf32> to vector<18x18x128xf32>
    %37 = tpu.iota {dimensions = array<i32: 0>} : vector<18x18x1xi32>
    %38 = tpu.iota {dimensions = array<i32: 1>} : vector<18x18x1xi32>
    %c1_i32 = arith.constant 1 : i32
    %39 = vector.broadcast %c1_i32 : i32 to vector<18x18x1xi32>
    %40 = arith.cmpi sge, %38, %39 : vector<18x18x1xi32>
    %c16_i32 = arith.constant 16 : i32
    %41 = vector.broadcast %c16_i32 : i32 to vector<18x18x1xi32>
    %42 = arith.cmpi sle, %38, %41 : vector<18x18x1xi32>
    %43 = arith.andi %40, %42 : vector<18x18x1xi1>
    %c0_i32 = arith.constant 0 : i32
    %44 = arith.cmpi sgt, %arg1, %c0_i32 : i32
    %c1_i32_15 = arith.constant 1 : i32
    %45 = vector.broadcast %c1_i32_15 : i32 to vector<18x18x1xi32>
    %46 = arith.cmpi sge, %37, %45 : vector<18x18x1xi32>
    %47 = vector.broadcast %44 : i1 to vector<18x18x1xi1>
    %48 = arith.ori %47, %46 : vector<18x18x1xi1>
    %49 = arith.andi %43, %48 : vector<18x18x1xi1>
    %c0_i32_16 = arith.constant 0 : i32
    %50 = arith.cmpi slt, %arg1, %c0_i32_16 : i32
    %c16_i32_17 = arith.constant 16 : i32
    %51 = vector.broadcast %c16_i32_17 : i32 to vector<18x18x1xi32>
    %52 = arith.cmpi sle, %37, %51 : vector<18x18x1xi32>
    %53 = vector.broadcast %50 : i1 to vector<18x18x1xi1>
    %54 = arith.ori %53, %52 : vector<18x18x1xi1>
    %55 = arith.andi %49, %54 : vector<18x18x1xi1>
    %cst_18 = arith.constant 0.000000e+00 : f32
    %56 = vector.shape_cast %55 : vector<18x18x1xi1> to vector<18x18x1xi1>
    %57 = vector.broadcast %56 : vector<18x18x1xi1> to vector<18x18x128xi1>
    %58 = vector.broadcast %cst_18 : f32 to vector<18x18x128xf32>
    %59 = arith.select %57, %36, %58 : vector<18x18x128xi1>, vector<18x18x128xf32>
    %60 = arith.truncf %59 : vector<18x18x128xf32> to vector<18x18x128xbf16>
    %61 = vector.extract_strided_slice %60 {offsets = [0, 0, 0], sizes = [18, 16, 128], strides = [1, 1, 1]} : vector<18x18x128xbf16> to vector<18x16x128xbf16>
    %62 = vector.extract_strided_slice %61 {offsets = [0, 0, 0], sizes = [16, 16, 128], strides = [1, 1, 1]} : vector<18x16x128xbf16> to vector<16x16x128xbf16>
    %63 = vector.extract_strided_slice %61 {offsets = [1, 0, 0], sizes = [16, 16, 128], strides = [1, 1, 1]} : vector<18x16x128xbf16> to vector<16x16x128xbf16>
    %64 = vector.extract_strided_slice %61 {offsets = [2, 0, 0], sizes = [16, 16, 128], strides = [1, 1, 1]} : vector<18x16x128xbf16> to vector<16x16x128xbf16>
    %65 = tpu.concatenate %62, %63, %64 in 2 : vector<16x16x128xbf16>, vector<16x16x128xbf16>, vector<16x16x128xbf16> -> vector<16x16x384xbf16>
    %66 = vector.shape_cast %65 : vector<16x16x384xbf16> to vector<256x384xbf16>
    %c0_19 = arith.constant 0 : index
    %c0_20 = arith.constant 0 : index
    %c0_21 = arith.constant 0 : index
    %67 = vector.load %arg5[%c0_19, %c0_20, %c0_21] : memref<3x384x128xbf16, #tpu.memory_space<vmem>>, vector<1x384x128xbf16>
    %68 = vector.shape_cast %67 : vector<1x384x128xbf16> to vector<384x128xbf16>
    %cst_22 = arith.constant dense<0.000000e+00> : vector<256x128xf32>
    %69 = tpu.matmul %66, %68, %cst_22 {dimension_numbers = #tpu.dot_dimension_numbers<[1], [0], [0], [1], [0, 0, 1, 1], [], []>} : vector<256x384xbf16>, vector<384x128xbf16>, vector<256x128xf32> -> vector<256x128xf32>
    %70 = vector.extract_strided_slice %60 {offsets = [0, 1, 0], sizes = [18, 16, 128], strides = [1, 1, 1]} : vector<18x18x128xbf16> to vector<18x16x128xbf16>
    %71 = vector.extract_strided_slice %70 {offsets = [0, 0, 0], sizes = [16, 16, 128], strides = [1, 1, 1]} : vector<18x16x128xbf16> to vector<16x16x128xbf16>
    %72 = vector.extract_strided_slice %70 {offsets = [1, 0, 0], sizes = [16, 16, 128], strides = [1, 1, 1]} : vector<18x16x128xbf16> to vector<16x16x128xbf16>
    %73 = vector.extract_strided_slice %70 {offsets = [2, 0, 0], sizes = [16, 16, 128], strides = [1, 1, 1]} : vector<18x16x128xbf16> to vector<16x16x128xbf16>
    %74 = tpu.concatenate %71, %72, %73 in 2 : vector<16x16x128xbf16>, vector<16x16x128xbf16>, vector<16x16x128xbf16> -> vector<16x16x384xbf16>
    %75 = vector.shape_cast %74 : vector<16x16x384xbf16> to vector<256x384xbf16>
    %c1_23 = arith.constant 1 : index
    %c0_24 = arith.constant 0 : index
    %c0_25 = arith.constant 0 : index
    %76 = vector.load %arg5[%c1_23, %c0_24, %c0_25] : memref<3x384x128xbf16, #tpu.memory_space<vmem>>, vector<1x384x128xbf16>
    %77 = vector.shape_cast %76 : vector<1x384x128xbf16> to vector<384x128xbf16>
    %cst_26 = arith.constant dense<0.000000e+00> : vector<256x128xf32>
    %78 = tpu.matmul %75, %77, %cst_26 {dimension_numbers = #tpu.dot_dimension_numbers<[1], [0], [0], [1], [0, 0, 1, 1], [], []>} : vector<256x384xbf16>, vector<384x128xbf16>, vector<256x128xf32> -> vector<256x128xf32>
    %79 = arith.addf %69, %78 : vector<256x128xf32>
    %80 = vector.extract_strided_slice %60 {offsets = [0, 2, 0], sizes = [18, 16, 128], strides = [1, 1, 1]} : vector<18x18x128xbf16> to vector<18x16x128xbf16>
    %81 = vector.extract_strided_slice %80 {offsets = [0, 0, 0], sizes = [16, 16, 128], strides = [1, 1, 1]} : vector<18x16x128xbf16> to vector<16x16x128xbf16>
    %82 = vector.extract_strided_slice %80 {offsets = [1, 0, 0], sizes = [16, 16, 128], strides = [1, 1, 1]} : vector<18x16x128xbf16> to vector<16x16x128xbf16>
    %83 = vector.extract_strided_slice %80 {offsets = [2, 0, 0], sizes = [16, 16, 128], strides = [1, 1, 1]} : vector<18x16x128xbf16> to vector<16x16x128xbf16>
    %84 = tpu.concatenate %81, %82, %83 in 2 : vector<16x16x128xbf16>, vector<16x16x128xbf16>, vector<16x16x128xbf16> -> vector<16x16x384xbf16>
    %85 = vector.shape_cast %84 : vector<16x16x384xbf16> to vector<256x384xbf16>
    %c2_27 = arith.constant 2 : index
    %c0_28 = arith.constant 0 : index
    %c0_29 = arith.constant 0 : index
    %86 = vector.load %arg5[%c2_27, %c0_28, %c0_29] : memref<3x384x128xbf16, #tpu.memory_space<vmem>>, vector<1x384x128xbf16>
    %87 = vector.shape_cast %86 : vector<1x384x128xbf16> to vector<384x128xbf16>
    %cst_30 = arith.constant dense<0.000000e+00> : vector<256x128xf32>
    %88 = tpu.matmul %85, %87, %cst_30 {dimension_numbers = #tpu.dot_dimension_numbers<[1], [0], [0], [1], [0, 0, 1, 1], [], []>} : vector<256x384xbf16>, vector<384x128xbf16>, vector<256x128xf32> -> vector<256x128xf32>
    %89 = arith.addf %79, %88 : vector<256x128xf32>
    %c0_31 = arith.constant 0 : index
    %c0_32 = arith.constant 0 : index
    %90 = vector.load %arg6[%c0_31, %c0_32] : memref<1x128xf32, #tpu.memory_space<vmem>>, vector<1x128xf32>
    %91 = vector.broadcast %90 : vector<1x128xf32> to vector<256x128xf32>
    %92 = arith.addf %89, %91 : vector<256x128xf32>
    %cst_33 = arith.constant 0.000000e+00 : f32
    %93 = vector.broadcast %cst_33 : f32 to vector<256x128xf32>
    %94 = arith.maximumf %92, %93 : vector<256x128xf32>
    %95 = vector.shape_cast %94 : vector<256x128xf32> to vector<16x16x128xf32>
    %96 = arith.truncf %95 : vector<16x16x128xf32> to vector<16x16x128xbf16>
    %c0_34 = arith.constant 0 : index
    %c0_35 = arith.constant 0 : index
    %c0_36 = arith.constant 0 : index
    %c0_37 = arith.constant 0 : index
    %97 = vector.load %arg7[%c0_34, %c0_35, %c0_36, %c0_37] : memref<1x16x16x128xbf16, #tpu.memory_space<vmem>>, vector<1x16x16x128xbf16>
    %98 = vector.shape_cast %97 : vector<1x16x16x128xbf16> to vector<16x16x128xbf16>
    %99 = vector.shape_cast %96 : vector<16x16x128xbf16> to vector<1x16x16x128xbf16>
    tpu.vector_store %arg7[%c0_34, %c0_35, %c0_36, %c0_37], %99 {strides = array<i32>} : memref<1x16x16x128xbf16, #tpu.memory_space<vmem>>, vector<1x16x16x128xbf16>,
    return
  }
  func.func @transform_0(%arg0: i32, %arg1: i32) -> (i32, i32, i32, i32) {
    %c0_i32 = arith.constant 0 : i32
    %c0_i32_0 = arith.constant 0 : i32
    %c0_i32_1 = arith.constant 0 : i32
    %c0_i32_2 = arith.constant 0 : i32
    return %arg0, %c0_i32, %c0_i32_0, %c0_i32_1 : i32, i32, i32, i32
  }
  func.func @transform_1(%arg0: i32, %arg1: i32) -> (i32, i32, i32) {
    %c0_i32 = arith.constant 0 : i32
    %c0_i32_0 = arith.constant 0 : i32
    %c0_i32_1 = arith.constant 0 : i32
    %c0_i32_2 = arith.constant 0 : i32
    return %c0_i32, %c0_i32_0, %c0_i32_1 : i32, i32, i32
  }
  func.func @transform_2(%arg0: i32, %arg1: i32) -> (i32, i32) {
    %c0_i32 = arith.constant 0 : i32
    %c0_i32_0 = arith.constant 0 : i32
    %c0_i32_1 = arith.constant 0 : i32
    return %c0_i32, %c0_i32_0 : i32, i32
  }
  func.func @transform_3(%arg0: i32, %arg1: i32) -> (i32, i32, i32) {
    %c0_i32 = arith.constant 0 : i32
    %c0_i32_0 = arith.constant 0 : i32
    %c0_i32_1 = arith.constant 0 : i32
    %c0_i32_2 = arith.constant 0 : i32
    return %c0_i32, %c0_i32_0, %c0_i32_1 : i32, i32, i32
  }
  func.func @transform_4(%arg0: i32, %arg1: i32) -> (i32, i32) {
    %c0_i32 = arith.constant 0 : i32
    %c0_i32_0 = arith.constant 0 : i32
    %c0_i32_1 = arith.constant 0 : i32
    return %c0_i32, %c0_i32_0 : i32, i32
  }
  func.func @transform_5(%arg0: i32, %arg1: i32) -> (i32, i32, i32, i32) {
    %c0_i32 = arith.constant 0 : i32
    %c0_i32_0 = arith.constant 0 : i32
    %c0_i32_1 = arith.constant 0 : i32
    return %arg0, %arg1, %c0_i32, %c0_i32_0 : i32, i32, i32, i32
  }
}

</mosaic_0001>

<llo_original>
// kernel: bridge_forward.1
$region0: #{bridge_forward.1}
  #allocation0 [shape = 'u32[]', space=smem, size = 0x4, offset = 0x4, fixed_abs, tag = 'smem constant byte address 0x4 - core index']
  #allocation1 [shape = 'u32[144,128]{1,0:T(1,128)}', space=vmem, size = 0x12000, scoped, tag = 'internal scratch']
  %s0 = inlined_call_operand.vmem [shape: bf16[2,20,20,128], index: 0, kind: input, shape index: {}]
  %s1 = inlined_call_operand.vmem [shape: bf16[3,384,128], index: 1, kind: input, shape index: {}]
  %s2 = inlined_call_operand.vmem [shape: f32[1,128], index: 2, kind: input, shape index: {}]
  %s3 = inlined_call_operand.vmem [shape: bf16[3,384,128], index: 3, kind: input, shape index: {}]
  %s4 = inlined_call_operand.vmem [shape: f32[1,128], index: 4, kind: input, shape index: {}]
  %s5 = inlined_call_operand.vmem [shape: bf16[2,16,16,128], index: 5, kind: output, shape index: {}]
  %s6 = sld [smem:[#allocation0]]
  $region53: #{bridge_forward.1} parent=0
    _
  %s8 = ssub.s32 1, %s6
  %s9 = scalar_select 0, %s8, %s6
  loop: start=0, step=1, limit=4
  $region2: #{bridge_forward.1} parent=0 // loop_pre_header
    _
  $region3: #{bridge_forward.1} parent=0 // loop_header
    %s11 = sphi 0, %s15
    %p12 = scmp.ge.s32.totalorder %s11, 4
    %s18 = sphi 0, %s30
    %s19 = sphi 0, %s26
    %s20 = sphi 0, %s18
    %s21 = sphi 0, %s19
    %s22 = sphi 0, %s20
    %s23 = sphi 0, %s21
    %s33 = sphi 0, %s35
    %s36 = sphi 0, %s33
    %s37 = sphi 0, %s36
    %s53 = sphi 0, %s37
    %s57 = sphi 0, %s57
    %s59 = sphi 0, %s57
    %s60 = sphi 0, %s59
    %s74 = sphi 0, %s60
    %s78 = sphi 0, %s78
    %s80 = sphi 0, %s78
    %s81 = sphi 0, %s80
    %s95 = sphi 0, %s81
    %s99 = sphi 0, %s99
    %s101 = sphi 0, %s99
    %s102 = sphi 0, %s101
    %s116 = sphi 0, %s102
    %s120 = sphi 0, %s120
    %s122 = sphi 0, %s120
    %s123 = sphi 0, %s122
    %s137 = sphi 0, %s123
    %s145 = sphi 0, %s147
    %s148 = sphi 0, %s145
    %s149 = sphi 0, %s148
    %s165 = sphi 0, %s149
  $region4: #{bridge_forward.1} parent=0 // loop_header_branch
    %14 = sbr.rel (%p12) target = $region8
  $region5: #{bridge_forward.1} parent=0 // loop_body
    %s16 = ssub.s32 %s11, 1
    %s17 = ssub.s32 %s11, 2
    %s24 = sadd.s32 1, %s19
    %p25 = scmp.ge.s32.totalorder %s24, 1
    %s26 = scalar_select %p25, 0, %s24
    %s27 = sadd.s32 1, %s18
    %s28 = scalar_select %p25, %s27, %s18
    %p29 = scmp.ge.s32.totalorder %s28, 2
    %s30 = scalar_select %p29, 0, %s28
    %s31 = ssub.s32 %s18, %s30
    %p32 = scmp.eq.s32.totalorder %s31, 0
    %s34 = sadd.s32 %s33, 1
    %s35 = scalar_select %p32, %s33, %s34
    %p38 = pneg %p32
    %p39 = scmp.eq.s32.totalorder %s11, 1
    %p40 = por %p38, %p39
    %p41 = scmp.ne.s32.totalorder %s33, %s36
    %p42 = scmp.eq.s32.totalorder %s11, 0
    %p43 = por %p41, %p42
    %p44 = scmp.ne.s32.totalorder %s33, %s36
    %p45 = scmp.eq.s32.totalorder %s16, 1
    %p46 = por %p44, %p45
    %p47 = scmp.ne.s32.totalorder %s36, %s37
    %p48 = scmp.eq.s32.totalorder %s16, 0
    %p49 = por %p47, %p48
    %p50 = scmp.ne.s32.totalorder %s36, %s37
    %p51 = scmp.eq.s32.totalorder %s17, 1
    %p52 = por %p50, %p51
    %p54 = scmp.ne.s32.totalorder %s37, %s53
    %p55 = scmp.eq.s32.totalorder %s17, 0
    %p56 = por %p54, %p55
    %s58 = sadd.s32 %s57, 1
    %p61 = scmp.eq.s32.totalorder %s11, 1
    %p62 = scmp.ne.s32.totalorder %s57, %s59
    %p63 = scmp.eq.s32.totalorder %s11, 0
    %p64 = por %p62, %p63
    %p65 = scmp.ne.s32.totalorder %s57, %s59
    %p66 = scmp.eq.s32.totalorder %s16, 1
    %p67 = por %p65, %p66
    %p68 = scmp.ne.s32.totalorder %s59, %s60
    %p69 = scmp.eq.s32.totalorder %s16, 0
    %p70 = por %p68, %p69
    %p71 = scmp.ne.s32.totalorder %s59, %s60
    %p72 = scmp.eq.s32.totalorder %s17, 1
    %p73 = por %p71, %p72
    %p75 = scmp.ne.s32.totalorder %s60, %s74
    %p76 = scmp.eq.s32.totalorder %s17, 0
    %p77 = por %p75, %p76
    %s79 = sadd.s32 %s78, 1
    %p82 = scmp.eq.s32.totalorder %s11, 1
    %p83 = scmp.ne.s32.totalorder %s78, %s80
    %p84 = scmp.eq.s32.totalorder %s11, 0
    %p85 = por %p83, %p84
    %p86 = scmp.ne.s32.totalorder %s78, %s80
    %p87 = scmp.eq.s32.totalorder %s16, 1
    %p88 = por %p86, %p87
    %p89 = scmp.ne.s32.totalorder %s80, %s81
    %p90 = scmp.eq.s32.totalorder %s16, 0
    %p91 = por %p89, %p90
    %p92 = scmp.ne.s32.totalorder %s80, %s81
    %p93 = scmp.eq.s32.totalorder %s17, 1
    %p94 = por %p92, %p93
    %p96 = scmp.ne.s32.totalorder %s81, %s95
    %p97 = scmp.eq.s32.totalorder %s17, 0
    %p98 = por %p96, %p97
    %s100 = sadd.s32 %s99, 1
    %p103 = scmp.eq.s32.totalorder %s11, 1
    %p104 = scmp.ne.s32.totalorder %s99, %s101
    %p105 = scmp.eq.s32.totalorder %s11, 0
    %p106 = por %p104, %p105
    %p107 = scmp.ne.s32.totalorder %s99, %s101
    %p108 = scmp.eq.s32.totalorder %s16, 1
    %p109 = por %p107, %p108
    %p110 = scmp.ne.s32.totalorder %s101, %s102
    %p111 = scmp.eq.s32.totalorder %s16, 0
    %p112 = por %p110, %p111
    %p113 = scmp.ne.s32.totalorder %s101, %s102
    %p114 = scmp.eq.s32.totalorder %s17, 1
    %p115 = por %p113, %p114
    %p117 = scmp.ne.s32.totalorder %s102, %s116
    %p118 = scmp.eq.s32.totalorder %s17, 0
    %p119 = por %p117, %p118
    %s121 = sadd.s32 %s120, 1
    %p124 = scmp.eq.s32.totalorder %s11, 1
    %p125 = scmp.ne.s32.totalorder %s120, %s122
    %p126 = scmp.eq.s32.totalorder %s11, 0
    %p127 = por %p125, %p126
    %p128 = scmp.ne.s32.totalorder %s120, %s122
    %p129 = scmp.eq.s32.totalorder %s16, 1
    %p130 = por %p128, %p129
    %p131 = scmp.ne.s32.totalorder %s122, %s123
    %p132 = scmp.eq.s32.totalorder %s16, 0
    %p133 = por %p131, %p132
    %p134 = scmp.ne.s32.totalorder %s122, %s123
    %p135 = scmp.eq.s32.totalorder %s17, 1
    %p136 = por %p134, %p135
    %p138 = scmp.ne.s32.totalorder %s123, %s137
    %p139 = scmp.eq.s32.totalorder %s17, 0
    %p140 = por %p138, %p139
    %s141 = ssub.s32 %s18, %s30
    %s142 = ssub.s32 %s19, %s26
    %s143 = sor.u32 %s141, %s142
    %p144 = scmp.eq.s32.totalorder %s143, 0
    %s146 = sadd.s32 %s145, 1
    %s147 = scalar_select %p144, %s145, %s146
    %p150 = pneg %p144
    %p151 = scmp.eq.s32.totalorder %s11, 1
    %p152 = por %p150, %p151
    %p153 = scmp.ne.s32.totalorder %s145, %s148
    %p154 = scmp.eq.s32.totalorder %s11, 0
    %p155 = por %p153, %p154
    %p156 = scmp.ne.s32.totalorder %s145, %s148
    %p157 = scmp.eq.s32.totalorder %s16, 1
    %p158 = por %p156, %p157
    %p159 = scmp.ne.s32.totalorder %s148, %s149
    %p160 = scmp.eq.s32.totalorder %s16, 0
    %p161 = por %p159, %p160
    %p162 = scmp.ne.s32.totalorder %s148, %s149
    %p163 = scmp.eq.s32.totalorder %s17, 1
    %p164 = por %p162, %p163
    %p166 = scmp.ne.s32.totalorder %s149, %s165
    %p167 = scmp.eq.s32.totalorder %s17, 0
    %p168 = por %p166, %p167
    %p169 = scmp.le.s32.totalorder 1, %s11
    %p170 = scmp.lt.s32.totalorder %s11, 3
    %p171 = pnand %p169, %p170
    %p172 = pneg %p171
    // Predicated region
    $region9: #{bridge_forward.1} parent=5 // pred_check
      _
    $region10: #{bridge_forward.1} parent=5 // pred_check_branch
      %174 = sbr.rel (%p171) target = $region12
    $region11: #{bridge_forward.1} parent=5 // pred_region
      %s175 = ssub.s32 %s11, 1
      // Predicated region
      $region13: #{bridge_forward.1} parent=11 // pred_check
        %p176 = pneg %p70
      $region14: #{bridge_forward.1} parent=11 // pred_check_branch
        %178 = sbr.rel (%p176) target = $region16
      $region15: #{bridge_forward.1} parent=11 // pred_region
        _
      $region16: #{bridge_forward.1} parent=11 // pred_fallthru
        _
      // Predicated region
      $region17: #{bridge_forward.1} parent=11 // pred_check
        %p179 = pneg %p91
      $region18: #{bridge_forward.1} parent=11 // pred_check_branch
        %181 = sbr.rel (%p179) target = $region20
      $region19: #{bridge_forward.1} parent=11 // pred_region
        _
      $region20: #{bridge_forward.1} parent=11 // pred_fallthru
        _
      // Predicated region
      $region21: #{bridge_forward.1} parent=11 // pred_check
        %p182 = pneg %p112
      $region22: #{bridge_forward.1} parent=11 // pred_check_branch
        %184 = sbr.rel (%p182) target = $region24
      $region23: #{bridge_forward.1} parent=11 // pred_region
        _
      $region24: #{bridge_forward.1} parent=11 // pred_fallthru
        _
      // Predicated region
      $region25: #{bridge_forward.1} parent=11 // pred_check
        %p185 = pneg %p133
      $region26: #{bridge_forward.1} parent=11 // pred_check_branch
        %187 = sbr.rel (%p185) target = $region28
      $region27: #{bridge_forward.1} parent=11 // pred_region
        _
      $region28: #{bridge_forward.1} parent=11 // pred_fallthru
        _
    $region12: #{bridge_forward.1} parent=5 // pred_fallthru
      _
    %p188 = scmp.lt.s32.totalorder %s11, 2
    // Predicated region
    $region29: #{bridge_forward.1} parent=5 // pred_check
      %p189 = pneg %p188
    $region30: #{bridge_forward.1} parent=5 // pred_check_branch
      %191 = sbr.rel (%p189) target = $region32
    $region31: #{bridge_forward.1} parent=5 // pred_region
      // Predicated region
      $region33: #{bridge_forward.1} parent=31 // pred_check
        %p192 = pneg %p43
      $region34: #{bridge_forward.1} parent=31 // pred_check_branch
        %194 = sbr.rel (%p192) target = $region36
      $region35: #{bridge_forward.1} parent=31 // pred_region
        %p195 = scmp.lt.s32.totalorder %s18, 1
        %s196 = scalar_select %p195, %s18, 1
        %s197 = smul.addr %s196, 60
        %s198 = smul.addr %s197, 4
        %s199 = scalar_lea.vmem %s0, %s198
      $region36: #{bridge_forward.1} parent=31 // pred_fallthru
        _
    $region32: #{bridge_forward.1} parent=5 // pred_fallthru
      _
    %p200 = scmp.le.s32.totalorder 1, %s11
    %p201 = scmp.lt.s32.totalorder %s11, 3
    %p202 = pnand %p200, %p201
    %p203 = pneg %p202
    // Predicated region
    $region37: #{bridge_forward.1} parent=5 // pred_check
      _
    $region38: #{bridge_forward.1} parent=5 // pred_check_branch
      %205 = sbr.rel (%p202) target = $region40
    $region39: #{bridge_forward.1} parent=5 // pred_region
      %s206 = ssub.s32 %s11, 1
      %p207 = scmp.lt.s32.totalorder %s20, 1
      %s208 = scalar_select %p207, %s20, 1
      %s209 = smul.addr %s208, 60
      %s210 = smul.addr %s209, 4
      %s211 = scalar_lea.vmem %s0, %s210
      %p212 = pneg %p49
      %p213 = pneg %p46
      %p214 = pneg %p70
      %p215 = pneg %p67
      %p216 = pneg %p91
      %p217 = pneg %p88
      %p218 = pneg %p112
      %p219 = pneg %p109
      %p220 = pneg %p133
      %p221 = pneg %p130
      %p222 = pneg %p161
      %p223 = pneg %p158
      %s224 = smul.u32 16, %s21
      %p225 = scmp.lt.s32.totalorder %s20, 1
      %s226 = scalar_select %p225, %s20, 1
      %p227 = scmp.lt.s32.totalorder %s224, 15
      %s228 = scalar_select %p227, %s224, 15
      %s229 = smul.addr %s228, 2
      %s230 = smul.addr %s226, 32
      %s231 = sadd.s32 %s229, %s230
      %s232 = smul.addr %s231, 4
      %s233 = scalar_lea.vmem %s5, %s232
      %p234 = scmp.lt.s32.totalorder %s20, 1
      %s235 = scalar_select %p234, %s20, 1
      %s236 = smul.addr %s235, 60
      %s237 = smul.addr %s236, 4
      %s238 = scalar_lea.vmem %s0, %s237
      %s239 = smul.u32 16, %s21
      %p240 = scmp.lt.s32.totalorder %s20, 1
      %s241 = scalar_select %p240, %s20, 1
      %p242 = scmp.lt.s32.totalorder %s239, 15
      %s243 = scalar_select %p242, %s239, 15
      %s244 = smul.addr %s243, 2
      %s245 = smul.addr %s241, 32
      %s246 = sadd.s32 %s244, %s245
      %s247 = smul.addr %s246, 4
      %s248 = scalar_lea.vmem %s5, %s247
      %s249 = smul.u32 16, %s21
      %v251 = vld [vmem:[%s238] sm:$0xf]
      %v252 = vld [vmem:[%s238 + $0x4] sm:$0xf]
      %v253 = vld [vmem:[%s238 + $0x8] sm:$0x3]
      %v254 = vld [vmem:[%s238 + $0xc] sm:$0xf]
      %v255 = vld [vmem:[%s238 + $0x10] sm:$0xf]
      %v256 = vld [vmem:[%s238 + $0x14] sm:$0x3]
      %v257 = vld [vmem:[%s238 + $0x18] sm:$0xf]
      %v258 = vld [vmem:[%s238 + $0x1c] sm:$0xf]
      %v259 = vld [vmem:[%s238 + $0x20] sm:$0x3]
      %v260 = vld [vmem:[%s238 + $0x24] sm:$0xf]
      %v261 = vld [vmem:[%s238 + $0x28] sm:$0xf]
      %v262 = vld [vmem:[%s238 + $0x2c] sm:$0x3]
      %v263 = vld [vmem:[%s238 + $0x30] sm:$0xf]
      %v264 = vld [vmem:[%s238 + $0x34] sm:$0xf]
      %v265 = vld [vmem:[%s238 + $0x38] sm:$0x3]
      %v266 = vld [vmem:[%s238 + $0x3c] sm:$0xf]
      %v267 = vld [vmem:[%s238 + $0x40] sm:$0xf]
      %v268 = vld [vmem:[%s238 + $0x44] sm:$0x3]
      %v269 = vld [vmem:[%s238 + $0x48] sm:$0xf]
      %v270 = vld [vmem:[%s238 + $0x4c] sm:$0xf]
      %v271 = vld [vmem:[%s238 + $0x50] sm:$0x3]
      %v272 = vld [vmem:[%s238 + $0x54] sm:$0xf]
      %v273 = vld [vmem:[%s238 + $0x58] sm:$0xf]
      %v274 = vld [vmem:[%s238 + $0x5c] sm:$0x3]
      %v275 = vld [vmem:[%s238 + $0x60] sm:$0xf]
      %v276 = vld [vmem:[%s238 + $0x64] sm:$0xf]
      %v277 = vld [vmem:[%s238 + $0x68] sm:$0x3]
      %v278 = vld [vmem:[%s238 + $0x6c] sm:$0xf]
      %v279 = vld [vmem:[%s238 + $0x70] sm:$0xf]
      %v280 = vld [vmem:[%s238 + $0x74] sm:$0x3]
      %v281 = vld [vmem:[%s238 + $0x78] sm:$0xf]
      %v282 = vld [vmem:[%s238 + $0x7c] sm:$0xf]
      %v283 = vld [vmem:[%s238 + $0x80] sm:$0x3]
      %v284 = vld [vmem:[%s238 + $0x84] sm:$0xf]
      %v285 = vld [vmem:[%s238 + $0x88] sm:$0xf]
      %v286 = vld [vmem:[%s238 + $0x8c] sm:$0x3]
      %v287 = vld [vmem:[%s238 + $0x90] sm:$0xf]
      %v288 = vld [vmem:[%s238 + $0x94] sm:$0xf]
      %v289 = vld [vmem:[%s238 + $0x98] sm:$0x3]
      %v290 = vld [vmem:[%s238 + $0x9c] sm:$0xf]
      %v291 = vld [vmem:[%s238 + $0xa0] sm:$0xf]
      %v292 = vld [vmem:[%s238 + $0xa4] sm:$0x3]
      %v293 = vld [vmem:[%s238 + $0xa8] sm:$0xf]
      %v294 = vld [vmem:[%s238 + $0xac] sm:$0xf]
      %v295 = vld [vmem:[%s238 + $0xb0] sm:$0x3]
      %v296 = vld [vmem:[%s238 + $0xb4] sm:$0xf]
      %v297 = vld [vmem:[%s238 + $0xb8] sm:$0xf]
      %v298 = vld [vmem:[%s238 + $0xbc] sm:$0x3]
      %v299 = vld [vmem:[%s238 + $0xc0] sm:$0xf]
      %v300 = vld [vmem:[%s238 + $0xc4] sm:$0xf]
      %v301 = vld [vmem:[%s238 + $0xc8] sm:$0x3]
      %v302 = vld [vmem:[%s238 + $0xcc] sm:$0xf]
      %v303 = vld [vmem:[%s238 + $0xd0] sm:$0xf]
      %v304 = vld [vmem:[%s238 + $0xd4] sm:$0x3]
      %v305 = vld [vmem:[%s238 + $0xd8] sm:$0xf]
      %v306 = vld [vmem:[%s238 + $0xdc] sm:$0xf]
      %v307 = vld [vmem:[%s238 + $0xe0] sm:$0x3]
      %v308 = vld [vmem:[%s238 + $0xe4] sm:$0xf]
      %v309 = vld [vmem:[%s238 + $0xe8] sm:$0xf]
      %v310 = vld [vmem:[%s238 + $0xec] sm:$0x3]
      %v365 = vunpack.c.l.b16 %v251
      %v366 = vunpack.c.l.b16 %v252
      %v367 = vunpack.c.l.b16 %v253
      %v368 = vunpack.c.l.b16 %v254
      %v369 = vunpack.c.l.b16 %v255
      %v370 = vunpack.c.l.b16 %v256
      %v371 = vunpack.c.l.b16 %v257
      %v372 = vunpack.c.l.b16 %v258
      %v373 = vunpack.c.l.b16 %v259
      %v374 = vunpack.c.l.b16 %v260
      %v375 = vunpack.c.l.b16 %v261
      %v376 = vunpack.c.l.b16 %v262
      %v377 = vunpack.c.l.b16 %v263
      %v378 = vunpack.c.l.b16 %v264
      %v379 = vunpack.c.l.b16 %v265
      %v380 = vunpack.c.l.b16 %v266
      %v381 = vunpack.c.l.b16 %v267
      %v382 = vunpack.c.l.b16 %v268
      %v383 = vunpack.c.l.b16 %v269
      %v384 = vunpack.c.l.b16 %v270
      %v385 = vunpack.c.l.b16 %v271
      %v386 = vunpack.c.l.b16 %v272
      %v387 = vunpack.c.l.b16 %v273
      %v388 = vunpack.c.l.b16 %v274
      %v389 = vunpack.c.l.b16 %v275
      %v390 = vunpack.c.l.b16 %v276
      %v391 = vunpack.c.l.b16 %v277
      %v392 = vunpack.c.l.b16 %v278
      %v393 = vunpack.c.l.b16 %v279
      %v394 = vunpack.c.l.b16 %v280
      %v395 = vunpack.c.l.b16 %v281
      %v396 = vunpack.c.l.b16 %v282
      %v397 = vunpack.c.l.b16 %v283
      %v398 = vunpack.c.l.b16 %v284
      %v399 = vunpack.c.l.b16 %v285
      %v400 = vunpack.c.l.b16 %v286
      %v401 = vunpack.c.l.b16 %v287
      %v402 = vunpack.c.l.b16 %v288
      %v403 = vunpack.c.l.b16 %v289
      %v404 = vunpack.c.l.b16 %v290
      %v405 = vunpack.c.l.b16 %v291
      %v406 = vunpack.c.l.b16 %v292
      %v407 = vunpack.c.l.b16 %v293
      %v408 = vunpack.c.l.b16 %v294
      %v409 = vunpack.c.l.b16 %v295
      %v410 = vunpack.c.l.b16 %v296
      %v411 = vunpack.c.l.b16 %v297
      %v412 = vunpack.c.l.b16 %v298
      %v413 = vunpack.c.l.b16 %v299
      %v414 = vunpack.c.l.b16 %v300
      %v415 = vunpack.c.l.b16 %v301
      %v416 = vunpack.c.l.b16 %v302
      %v417 = vunpack.c.l.b16 %v303
      %v418 = vunpack.c.l.b16 %v304
      %v419 = vpack.c.b16 %v366, %v365
      %v420 = vpack.c.b16 %v367, %v367
      %v421 = vpack.c.b16 %v369, %v368
      %v422 = vpack.c.b16 %v370, %v370
      %v423 = vpack.c.b16 %v372, %v371
      %v424 = vpack.c.b16 %v373, %v373
      %v425 = vpack.c.b16 %v375, %v374
      %v426 = vpack.c.b16 %v376, %v376
      %v427 = vpack.c.b16 %v378, %v377
      %v428 = vpack.c.b16 %v379, %v379
      %v429 = vpack.c.b16 %v381, %v380
      %v430 = vpack.c.b16 %v382, %v382
      %v431 = vpack.c.b16 %v384, %v383
      %v432 = vpack.c.b16 %v385, %v385
      %v433 = vpack.c.b16 %v387, %v386
      %v434 = vpack.c.b16 %v388, %v388
      %v435 = vpack.c.b16 %v390, %v389
      %v436 = vpack.c.b16 %v391, %v391
      %v437 = vpack.c.b16 %v393, %v392
      %v438 = vpack.c.b16 %v394, %v394
      %v439 = vpack.c.b16 %v396, %v395
      %v440 = vpack.c.b16 %v397, %v397
      %v441 = vpack.c.b16 %v399, %v398
      %v442 = vpack.c.b16 %v400, %v400
      %v443 = vpack.c.b16 %v402, %v401
      %v444 = vpack.c.b16 %v403, %v403
      %v445 = vpack.c.b16 %v405, %v404
      %v446 = vpack.c.b16 %v406, %v406
      %v447 = vpack.c.b16 %v408, %v407
      %v448 = vpack.c.b16 %v409, %v409
      %v449 = vpack.c.b16 %v411, %v410
      %v450 = vpack.c.b16 %v412, %v412
      %v451 = vpack.c.b16 %v414, %v413
      %v452 = vpack.c.b16 %v415, %v415
      %v453 = vpack.c.b16 %v417, %v416
      %v454 = vpack.c.b16 %v418, %v418
      %v458 = vunpack.c.l.b16 %v305
      %v459 = vunpack.c.l.b16 %v306
      %v460 = vunpack.c.l.b16 %v307
      %v461 = vpack.c.b16 %v459, %v458
      %v462 = vpack.c.b16 %v460, %v460
      %v466 = vunpack.c.l.b16 %v308
      %v467 = vunpack.c.l.b16 %v309
      %v468 = vunpack.c.l.b16 %v310
      %v469 = vpack.c.b16 %v467, %v466
      %v470 = vpack.c.b16 %v468, %v468
      %v471 = vcombine.low %v419, %v421
      %v472 = vcombine.high %v419, %v421
      %v473 = vcombine.high %v423, %v423
      %v475 = vunpack.c.l.s4 1966171168
      %v476 = vunpack.c.0.s8 %v475
      %v477 = vlaneseq
      %v478 = vshrl.u32 %v477, 7
      %v479 = vsub.s32 %v476, %v478
      %v480 = vrot.slane %v471, %v479
      %v482 = vunpack.c.l.s4 1966171168
      %v483 = vunpack.c.0.s8 %v482
      %v484 = vlaneseq
      %v485 = vshrl.u32 %v484, 7
      %v486 = vsub.s32 %v483, %v485
      %v487 = vrot.slane %v472, %v486
      %v489 = vunpack.c.l.s4 1966171168
      %v490 = vunpack.c.0.s8 %v489
      %v491 = vlaneseq
      %v492 = vshrl.u32 %v491, 7
      %v493 = vsub.s32 %v490, %v492
      %v494 = vrot.slane %v423, %v493
      %v496 = vunpack.c.l.s4 1966171168
      %v497 = vunpack.c.0.s8 %v496
      %v498 = vlaneseq
      %v499 = vshrl.u32 %v498, 7
      %v500 = vsub.s32 %v497, %v499
      %v501 = vrot.slane %v473, %v500
      %v502 = vcombine.low %v480, %v494
      %v503 = vcombine.high %v480, %v494
      %v504 = vcombine.low %v487, %v501
      %v505 = vcombine.high %v487, %v501
      %v507 = vunpack.c.l.s4 1966171168
      %v508 = vunpack.c.0.s8 %v507
      %v509 = vlaneseq
      %v510 = vshrl.u32 %v509, 7
      %v511 = vsub.s32 %v508, %v510
      %v512 = vrot.slane %v502, %v511
      %v514 = vunpack.c.l.s4 1966171168
      %v515 = vunpack.c.0.s8 %v514
      %v516 = vlaneseq
      %v517 = vshrl.u32 %v516, 7
      %v518 = vsub.s32 %v515, %v517
      %v519 = vrot.slane %v504, %v518
      %v521 = vunpack.c.l.s4 1966171168
      %v522 = vunpack.c.0.s8 %v521
      %v523 = vlaneseq
      %v524 = vshrl.u32 %v523, 7
      %v525 = vsub.s32 %v522, %v524
      %v526 = vrot.slane %v503, %v525
      %v528 = vunpack.c.l.s4 1966171168
      %v529 = vunpack.c.0.s8 %v528
      %v530 = vlaneseq
      %v531 = vshrl.u32 %v530, 7
      %v532 = vsub.s32 %v529, %v531
      %v533 = vrot.slane %v505, %v532
      %v534 = vcombine.high %v512, %v512
      %v535 = vcombine.high %v519, %v519
      %v536 = vcombine.high %v526, %v526
      %v537 = vcombine.high %v533, %v533
      %v538 = vcombine.low %v420, %v422
      %v540 = vunpack.c.l.s4 1966171168
      %v541 = vunpack.c.0.s8 %v540
      %v542 = vlaneseq
      %v543 = vshrl.u32 %v542, 7
      %v544 = vsub.s32 %v541, %v543
      %v545 = vrot.slane %v538, %v544
      %v547 = vunpack.c.l.s4 1966171168
      %v548 = vunpack.c.0.s8 %v547
      %v549 = vlaneseq
      %v550 = vshrl.u32 %v549, 7
      %v551 = vsub.s32 %v548, %v550
      %v552 = vrot.slane %v424, %v551
      %v553 = vcombine.low %v545, %v552
      %v555 = vunpack.c.l.s4 1966171168
      %v556 = vunpack.c.0.s8 %v555
      %v557 = vlaneseq
      %v558 = vshrl.u32 %v557, 7
      %v559 = vsub.s32 %v556, %v558
      %v560 = vrot.slane %v553, %v559
      %v561 = vcombine.low %v421, %v423
      %v562 = vcombine.high %v421, %v423
      %v563 = vcombine.high %v425, %v425
      %v565 = vunpack.c.l.s4 1966171168
      %v566 = vunpack.c.0.s8 %v565
      %v567 = vlaneseq
      %v568 = vshrl.u32 %v567, 7
      %v569 = vsub.s32 %v566, %v568
      %v570 = vrot.slane %v561, %v569
      %v572 = vunpack.c.l.s4 1966171168
      %v573 = vunpack.c.0.s8 %v572
      %v574 = vlaneseq
      %v575 = vshrl.u32 %v574, 7
      %v576 = vsub.s32 %v573, %v575
      %v577 = vrot.slane %v562, %v576
      %v579 = vunpack.c.l.s4 1966171168
      %v580 = vunpack.c.0.s8 %v579
      %v581 = vlaneseq
      %v582 = vshrl.u32 %v581, 7
      %v583 = vsub.s32 %v580, %v582
      %v584 = vrot.slane %v425, %v583
      %v586 = vunpack.c.l.s4 1966171168
      %v587 = vunpack.c.0.s8 %v586
      %v588 = vlaneseq
      %v589 = vshrl.u32 %v588, 7
      %v590 = vsub.s32 %v587, %v589
      %v591 = vrot.slane %v563, %v590
      %v592 = vcombine.low %v570, %v584
      %v593 = vcombine.high %v570, %v584
      %v594 = vcombine.low %v577, %v591
      %v595 = vcombine.high %v577, %v591
      %v597 = vunpack.c.l.s4 1966171168
      %v598 = vunpack.c.0.s8 %v597
      %v599 = vlaneseq
      %v600 = vshrl.u32 %v599, 7
      %v601 = vsub.s32 %v598, %v600
      %v602 = vrot.slane %v592, %v601
      %v604 = vunpack.c.l.s4 1966171168
      %v605 = vunpack.c.0.s8 %v604
      %v606 = vlaneseq
      %v607 = vshrl.u32 %v606, 7
      %v608 = vsub.s32 %v605, %v607
      %v609 = vrot.slane %v594, %v608
      %v611 = vunpack.c.l.s4 1966171168
      %v612 = vunpack.c.0.s8 %v611
      %v613 = vlaneseq
      %v614 = vshrl.u32 %v613, 7
      %v615 = vsub.s32 %v612, %v614
      %v616 = vrot.slane %v593, %v615
      %v618 = vunpack.c.l.s4 1966171168
      %v619 = vunpack.c.0.s8 %v618
      %v620 = vlaneseq
      %v621 = vshrl.u32 %v620, 7
      %v622 = vsub.s32 %v619, %v621
      %v623 = vrot.slane %v595, %v622
      %v624 = vcombine.high %v602, %v602
      %v625 = vcombine.high %v609, %v609
      %v626 = vcombine.high %v616, %v616
      %v627 = vcombine.high %v623, %v623
      %v628 = vcombine.low %v422, %v424
      %v630 = vunpack.c.l.s4 1966171168
      %v631 = vunpack.c.0.s8 %v630
      %v632 = vlaneseq
      %v633 = vshrl.u32 %v632, 7
      %v634 = vsub.s32 %v631, %v633
      %v635 = vrot.slane %v628, %v634
      %v637 = vunpack.c.l.s4 1966171168
      %v638 = vunpack.c.0.s8 %v637
      %v639 = vlaneseq
      %v640 = vshrl.u32 %v639, 7
      %v641 = vsub.s32 %v638, %v640
      %v642 = vrot.slane %v426, %v641
      %v643 = vcombine.low %v635, %v642
      %v645 = vunpack.c.l.s4 1966171168
      %v646 = vunpack.c.0.s8 %v645
      %v647 = vlaneseq
      %v648 = vshrl.u32 %v647, 7
      %v649 = vsub.s32 %v646, %v648
      %v650 = vrot.slane %v643, %v649
      %v651 = vcombine.low %v423, %v425
      %v652 = vcombine.high %v423, %v425
      %v653 = vcombine.high %v427, %v427
      %v655 = vunpack.c.l.s4 1966171168
      %v656 = vunpack.c.0.s8 %v655
      %v657 = vlaneseq
      %v658 = vshrl.u32 %v657, 7
      %v659 = vsub.s32 %v656, %v658
      %v660 = vrot.slane %v651, %v659
      %v662 = vunpack.c.l.s4 1966171168
      %v663 = vunpack.c.0.s8 %v662
      %v664 = vlaneseq
      %v665 = vshrl.u32 %v664, 7
      %v666 = vsub.s32 %v663, %v665
      %v667 = vrot.slane %v652, %v666
      %v669 = vunpack.c.l.s4 1966171168
      %v670 = vunpack.c.0.s8 %v669
      %v671 = vlaneseq
      %v672 = vshrl.u32 %v671, 7
      %v673 = vsub.s32 %v670, %v672
      %v674 = vrot.slane %v427, %v673
      %v676 = vunpack.c.l.s4 1966171168
      %v677 = vunpack.c.0.s8 %v676
      %v678 = vlaneseq
      %v679 = vshrl.u32 %v678, 7
      %v680 = vsub.s32 %v677, %v679
      %v681 = vrot.slane %v653, %v680
      %v682 = vcombine.low %v660, %v674
      %v683 = vcombine.high %v660, %v674
      %v684 = vcombine.low %v667, %v681
      %v685 = vcombine.high %v667, %v681
      %v687 = vunpack.c.l.s4 1966171168
      %v688 = vunpack.c.0.s8 %v687
      %v689 = vlaneseq
      %v690 = vshrl.u32 %v689, 7
      %v691 = vsub.s32 %v688, %v690
      %v692 = vrot.slane %v682, %v691
      %v694 = vunpack.c.l.s4 1966171168
      %v695 = vunpack.c.0.s8 %v694
      %v696 = vlaneseq
      %v697 = vshrl.u32 %v696, 7
      %v698 = vsub.s32 %v695, %v697
      %v699 = vrot.slane %v684, %v698
      %v701 = vunpack.c.l.s4 1966171168
      %v702 = vunpack.c.0.s8 %v701
      %v703 = vlaneseq
      %v704 = vshrl.u32 %v703, 7
      %v705 = vsub.s32 %v702, %v704
      %v706 = vrot.slane %v683, %v705
      %v708 = vunpack.c.l.s4 1966171168
      %v709 = vunpack.c.0.s8 %v708
      %v710 = vlaneseq
      %v711 = vshrl.u32 %v710, 7
      %v712 = vsub.s32 %v709, %v711
      %v713 = vrot.slane %v685, %v712
      %v714 = vcombine.high %v692, %v692
      %v715 = vcombine.high %v699, %v699
      %v716 = vcombine.high %v706, %v706
      %v717 = vcombine.high %v713, %v713
      %v718 = vcombine.low %v424, %v426
      %v720 = vunpack.c.l.s4 1966171168
      %v721 = vunpack.c.0.s8 %v720
      %v722 = vlaneseq
      %v723 = vshrl.u32 %v722, 7
      %v724 = vsub.s32 %v721, %v723
      %v725 = vrot.slane %v718, %v724
      %v727 = vunpack.c.l.s4 1966171168
      %v728 = vunpack.c.0.s8 %v727
      %v729 = vlaneseq
      %v730 = vshrl.u32 %v729, 7
      %v731 = vsub.s32 %v728, %v730
      %v732 = vrot.slane %v428, %v731
      %v733 = vcombine.low %v725, %v732
      %v735 = vunpack.c.l.s4 1966171168
      %v736 = vunpack.c.0.s8 %v735
      %v737 = vlaneseq
      %v738 = vshrl.u32 %v737, 7
      %v739 = vsub.s32 %v736, %v738
      %v740 = vrot.slane %v733, %v739
      %v741 = vcombine.low %v425, %v427
      %v742 = vcombine.high %v425, %v427
      %v743 = vcombine.high %v429, %v429
      %v745 = vunpack.c.l.s4 1966171168
      %v746 = vunpack.c.0.s8 %v745
      %v747 = vlaneseq
      %v748 = vshrl.u32 %v747, 7
      %v749 = vsub.s32 %v746, %v748
      %v750 = vrot.slane %v741, %v749
      %v752 = vunpack.c.l.s4 1966171168
      %v753 = vunpack.c.0.s8 %v752
      %v754 = vlaneseq
      %v755 = vshrl.u32 %v754, 7
      %v756 = vsub.s32 %v753, %v755
      %v757 = vrot.slane %v742, %v756
      %v759 = vunpack.c.l.s4 1966171168
      %v760 = vunpack.c.0.s8 %v759
      %v761 = vlaneseq
      %v762 = vshrl.u32 %v761, 7
      %v763 = vsub.s32 %v760, %v762
      %v764 = vrot.slane %v429, %v763
      %v766 = vunpack.c.l.s4 1966171168
      %v767 = vunpack.c.0.s8 %v766
      %v768 = vlaneseq
      %v769 = vshrl.u32 %v768, 7
      %v770 = vsub.s32 %v767, %v769
      %v771 = vrot.slane %v743, %v770
      %v772 = vcombine.low %v750, %v764
      %v773 = vcombine.high %v750, %v764
      %v774 = vcombine.low %v757, %v771
      %v775 = vcombine.high %v757, %v771
      %v777 = vunpack.c.l.s4 1966171168
      %v778 = vunpack.c.0.s8 %v777
      %v779 = vlaneseq
      %v780 = vshrl.u32 %v779, 7
      %v781 = vsub.s32 %v778, %v780
      %v782 = vrot.slane %v772, %v781
      %v784 = vunpack.c.l.s4 1966171168
      %v785 = vunpack.c.0.s8 %v784
      %v786 = vlaneseq
      %v787 = vshrl.u32 %v786, 7
      %v788 = vsub.s32 %v785, %v787
      %v789 = vrot.slane %v774, %v788
      %v791 = vunpack.c.l.s4 1966171168
      %v792 = vunpack.c.0.s8 %v791
      %v793 = vlaneseq
      %v794 = vshrl.u32 %v793, 7
      %v795 = vsub.s32 %v792, %v794
      %v796 = vrot.slane %v773, %v795
      %v798 = vunpack.c.l.s4 1966171168
      %v799 = vunpack.c.0.s8 %v798
      %v800 = vlaneseq
      %v801 = vshrl.u32 %v800, 7
      %v802 = vsub.s32 %v799, %v801
      %v803 = vrot.slane %v775, %v802
      %v804 = vcombine.high %v782, %v782
      %v805 = vcombine.high %v789, %v789
      %v806 = vcombine.high %v796, %v796
      %v807 = vcombine.high %v803, %v803
      %v808 = vcombine.low %v426, %v428
      %v810 = vunpack.c.l.s4 1966171168
      %v811 = vunpack.c.0.s8 %v810
      %v812 = vlaneseq
      %v813 = vshrl.u32 %v812, 7
      %v814 = vsub.s32 %v811, %v813
      %v815 = vrot.slane %v808, %v814
      %v817 = vunpack.c.l.s4 1966171168
      %v818 = vunpack.c.0.s8 %v817
      %v819 = vlaneseq
      %v820 = vshrl.u32 %v819, 7
      %v821 = vsub.s32 %v818, %v820
      %v822 = vrot.slane %v430, %v821
      %v823 = vcombine.low %v815, %v822
      %v825 = vunpack.c.l.s4 1966171168
      %v826 = vunpack.c.0.s8 %v825
      %v827 = vlaneseq
      %v828 = vshrl.u32 %v827, 7
      %v829 = vsub.s32 %v826, %v828
      %v830 = vrot.slane %v823, %v829
      %v831 = vcombine.low %v427, %v429
      %v832 = vcombine.high %v427, %v429
      %v833 = vcombine.high %v431, %v431
      %v835 = vunpack.c.l.s4 1966171168
      %v836 = vunpack.c.0.s8 %v835
      %v837 = vlaneseq
      %v838 = vshrl.u32 %v837, 7
      %v839 = vsub.s32 %v836, %v838
      %v840 = vrot.slane %v831, %v839
      %v842 = vunpack.c.l.s4 1966171168
      %v843 = vunpack.c.0.s8 %v842
      %v844 = vlaneseq
      %v845 = vshrl.u32 %v844, 7
      %v846 = vsub.s32 %v843, %v845
      %v847 = vrot.slane %v832, %v846
      %v849 = vunpack.c.l.s4 1966171168
      %v850 = vunpack.c.0.s8 %v849
      %v851 = vlaneseq
      %v852 = vshrl.u32 %v851, 7
      %v853 = vsub.s32 %v850, %v852
      %v854 = vrot.slane %v431, %v853
      %v856 = vunpack.c.l.s4 1966171168
      %v857 = vunpack.c.0.s8 %v856
      %v858 = vlaneseq
      %v859 = vshrl.u32 %v858, 7
      %v860 = vsub.s32 %v857, %v859
      %v861 = vrot.slane %v833, %v860
      %v862 = vcombine.low %v840, %v854
      %v863 = vcombine.high %v840, %v854
      %v864 = vcombine.low %v847, %v861
      %v865 = vcombine.high %v847, %v861
      %v867 = vunpack.c.l.s4 1966171168
      %v868 = vunpack.c.0.s8 %v867
      %v869 = vlaneseq
      %v870 = vshrl.u32 %v869, 7
      %v871 = vsub.s32 %v868, %v870
      %v872 = vrot.slane %v862, %v871
      %v874 = vunpack.c.l.s4 1966171168
      %v875 = vunpack.c.0.s8 %v874
      %v876 = vlaneseq
      %v877 = vshrl.u32 %v876, 7
      %v878 = vsub.s32 %v875, %v877
      %v879 = vrot.slane %v864, %v878
      %v881 = vunpack.c.l.s4 1966171168
      %v882 = vunpack.c.0.s8 %v881
      %v883 = vlaneseq
      %v884 = vshrl.u32 %v883, 7
      %v885 = vsub.s32 %v882, %v884
      %v886 = vrot.slane %v863, %v885
      %v888 = vunpack.c.l.s4 1966171168
      %v889 = vunpack.c.0.s8 %v888
      %v890 = vlaneseq
      %v891 = vshrl.u32 %v890, 7
      %v892 = vsub.s32 %v889, %v891
      %v893 = vrot.slane %v865, %v892
      %v894 = vcombine.high %v872, %v872
      %v895 = vcombine.high %v879, %v879
      %v896 = vcombine.high %v886, %v886
      %v897 = vcombine.high %v893, %v893
      %v898 = vcombine.low %v428, %v430
      %v900 = vunpack.c.l.s4 1966171168
      %v901 = vunpack.c.0.s8 %v900
      %v902 = vlaneseq
      %v903 = vshrl.u32 %v902, 7
      %v904 = vsub.s32 %v901, %v903
      %v905 = vrot.slane %v898, %v904
      %v907 = vunpack.c.l.s4 1966171168
      %v908 = vunpack.c.0.s8 %v907
      %v909 = vlaneseq
      %v910 = vshrl.u32 %v909, 7
      %v911 = vsub.s32 %v908, %v910
      %v912 = vrot.slane %v432, %v911
      %v913 = vcombine.low %v905, %v912
      %v915 = vunpack.c.l.s4 1966171168
      %v916 = vunpack.c.0.s8 %v915
      %v917 = vlaneseq
      %v918 = vshrl.u32 %v917, 7
      %v919 = vsub.s32 %v916, %v918
      %v920 = vrot.slane %v913, %v919
      %v921 = vcombine.low %v429, %v431
      %v922 = vcombine.high %v429, %v431
      %v923 = vcombine.high %v433, %v433
      %v925 = vunpack.c.l.s4 1966171168
      %v926 = vunpack.c.0.s8 %v925
      %v927 = vlaneseq
      %v928 = vshrl.u32 %v927, 7
      %v929 = vsub.s32 %v926, %v928
      %v930 = vrot.slane %v921, %v929
      %v932 = vunpack.c.l.s4 1966171168
      %v933 = vunpack.c.0.s8 %v932
      %v934 = vlaneseq
      %v935 = vshrl.u32 %v934, 7
      %v936 = vsub.s32 %v933, %v935
      %v937 = vrot.slane %v922, %v936
      %v939 = vunpack.c.l.s4 1966171168
      %v940 = vunpack.c.0.s8 %v939
      %v941 = vlaneseq
      %v942 = vshrl.u32 %v941, 7
      %v943 = vsub.s32 %v940, %v942
      %v944 = vrot.slane %v433, %v943
      %v946 = vunpack.c.l.s4 1966171168
      %v947 = vunpack.c.0.s8 %v946
      %v948 = vlaneseq
      %v949 = vshrl.u32 %v948, 7
      %v950 = vsub.s32 %v947, %v949
      %v951 = vrot.slane %v923, %v950
      %v952 = vcombine.low %v930, %v944
      %v953 = vcombine.high %v930, %v944
      %v954 = vcombine.low %v937, %v951
      %v955 = vcombine.high %v937, %v951
      %v957 = vunpack.c.l.s4 1966171168
      %v958 = vunpack.c.0.s8 %v957
      %v959 = vlaneseq
      %v960 = vshrl.u32 %v959, 7
      %v961 = vsub.s32 %v958, %v960
      %v962 = vrot.slane %v952, %v961
      %v964 = vunpack.c.l.s4 1966171168
      %v965 = vunpack.c.0.s8 %v964
      %v966 = vlaneseq
      %v967 = vshrl.u32 %v966, 7
      %v968 = vsub.s32 %v965, %v967
      %v969 = vrot.slane %v954, %v968
      %v971 = vunpack.c.l.s4 1966171168
      %v972 = vunpack.c.0.s8 %v971
      %v973 = vlaneseq
      %v974 = vshrl.u32 %v973, 7
      %v975 = vsub.s32 %v972, %v974
      %v976 = vrot.slane %v953, %v975
      %v978 = vunpack.c.l.s4 1966171168
      %v979 = vunpack.c.0.s8 %v978
      %v980 = vlaneseq
      %v981 = vshrl.u32 %v980, 7
      %v982 = vsub.s32 %v979, %v981
      %v983 = vrot.slane %v955, %v982
      %v984 = vcombine.high %v962, %v962
      %v985 = vcombine.high %v969, %v969
      %v986 = vcombine.high %v976, %v976
      %v987 = vcombine.high %v983, %v983
      %v988 = vcombine.low %v430, %v432
      %v990 = vunpack.c.l.s4 1966171168
      %v991 = vunpack.c.0.s8 %v990
      %v992 = vlaneseq
      %v993 = vshrl.u32 %v992, 7
      %v994 = vsub.s32 %v991, %v993
      %v995 = vrot.slane %v988, %v994
      %v997 = vunpack.c.l.s4 1966171168
      %v998 = vunpack.c.0.s8 %v997
      %v999 = vlaneseq
      %v1000 = vshrl.u32 %v999, 7
      %v1001 = vsub.s32 %v998, %v1000
      %v1002 = vrot.slane %v434, %v1001
      %v1003 = vcombine.low %v995, %v1002
      %v1005 = vunpack.c.l.s4 1966171168
      %v1006 = vunpack.c.0.s8 %v1005
      %v1007 = vlaneseq
      %v1008 = vshrl.u32 %v1007, 7
      %v1009 = vsub.s32 %v1006, %v1008
      %v1010 = vrot.slane %v1003, %v1009
      %v1011 = vcombine.low %v431, %v433
      %v1012 = vcombine.high %v431, %v433
      %v1013 = vcombine.high %v435, %v435
      %v1015 = vunpack.c.l.s4 1966171168
      %v1016 = vunpack.c.0.s8 %v1015
      %v1017 = vlaneseq
      %v1018 = vshrl.u32 %v1017, 7
      %v1019 = vsub.s32 %v1016, %v1018
      %v1020 = vrot.slane %v1011, %v1019
      %v1022 = vunpack.c.l.s4 1966171168
      %v1023 = vunpack.c.0.s8 %v1022
      %v1024 = vlaneseq
      %v1025 = vshrl.u32 %v1024, 7
      %v1026 = vsub.s32 %v1023, %v1025
      %v1027 = vrot.slane %v1012, %v1026
      %v1029 = vunpack.c.l.s4 1966171168
      %v1030 = vunpack.c.0.s8 %v1029
      %v1031 = vlaneseq
      %v1032 = vshrl.u32 %v1031, 7
      %v1033 = vsub.s32 %v1030, %v1032
      %v1034 = vrot.slane %v435, %v1033
      %v1036 = vunpack.c.l.s4 1966171168
      %v1037 = vunpack.c.0.s8 %v1036
      %v1038 = vlaneseq
      %v1039 = vshrl.u32 %v1038, 7
      %v1040 = vsub.s32 %v1037, %v1039
      %v1041 = vrot.slane %v1013, %v1040
      %v1042 = vcombine.low %v1020, %v1034
      %v1043 = vcombine.high %v1020, %v1034
      %v1044 = vcombine.low %v1027, %v1041
      %v1045 = vcombine.high %v1027, %v1041
      %v1047 = vunpack.c.l.s4 1966171168
      %v1048 = vunpack.c.0.s8 %v1047
      %v1049 = vlaneseq
      %v1050 = vshrl.u32 %v1049, 7
      %v1051 = vsub.s32 %v1048, %v1050
      %v1052 = vrot.slane %v1042, %v1051
      %v1054 = vunpack.c.l.s4 1966171168
      %v1055 = vunpack.c.0.s8 %v1054
      %v1056 = vlaneseq
      %v1057 = vshrl.u32 %v1056, 7
      %v1058 = vsub.s32 %v1055, %v1057
      %v1059 = vrot.slane %v1044, %v1058
      %v1061 = vunpack.c.l.s4 1966171168
      %v1062 = vunpack.c.0.s8 %v1061
      %v1063 = vlaneseq
      %v1064 = vshrl.u32 %v1063, 7
      %v1065 = vsub.s32 %v1062, %v1064
      %v1066 = vrot.slane %v1043, %v1065
      %v1068 = vunpack.c.l.s4 1966171168
      %v1069 = vunpack.c.0.s8 %v1068
      %v1070 = vlaneseq
      %v1071 = vshrl.u32 %v1070, 7
      %v1072 = vsub.s32 %v1069, %v1071
      %v1073 = vrot.slane %v1045, %v1072
      %v1074 = vcombine.high %v1052, %v1052
      %v1075 = vcombine.high %v1059, %v1059
      %v1076 = vcombine.high %v1066, %v1066
      %v1077 = vcombine.high %v1073, %v1073
      %v1078 = vcombine.low %v432, %v434
      %v1080 = vunpack.c.l.s4 1966171168
      %v1081 = vunpack.c.0.s8 %v1080
      %v1082 = vlaneseq
      %v1083 = vshrl.u32 %v1082, 7
      %v1084 = vsub.s32 %v1081, %v1083
      %v1085 = vrot.slane %v1078, %v1084
      %v1087 = vunpack.c.l.s4 1966171168
      %v1088 = vunpack.c.0.s8 %v1087
      %v1089 = vlaneseq
      %v1090 = vshrl.u32 %v1089, 7
      %v1091 = vsub.s32 %v1088, %v1090
      %v1092 = vrot.slane %v436, %v1091
      %v1093 = vcombine.low %v1085, %v1092
      %v1095 = vunpack.c.l.s4 1966171168
      %v1096 = vunpack.c.0.s8 %v1095
      %v1097 = vlaneseq
      %v1098 = vshrl.u32 %v1097, 7
      %v1099 = vsub.s32 %v1096, %v1098
      %v1100 = vrot.slane %v1093, %v1099
      %v1101 = vcombine.low %v433, %v435
      %v1102 = vcombine.high %v433, %v435
      %v1103 = vcombine.high %v437, %v437
      %v1105 = vunpack.c.l.s4 1966171168
      %v1106 = vunpack.c.0.s8 %v1105
      %v1107 = vlaneseq
      %v1108 = vshrl.u32 %v1107, 7
      %v1109 = vsub.s32 %v1106, %v1108
      %v1110 = vrot.slane %v1101, %v1109
      %v1112 = vunpack.c.l.s4 1966171168
      %v1113 = vunpack.c.0.s8 %v1112
      %v1114 = vlaneseq
      %v1115 = vshrl.u32 %v1114, 7
      %v1116 = vsub.s32 %v1113, %v1115
      %v1117 = vrot.slane %v1102, %v1116
      %v1119 = vunpack.c.l.s4 1966171168
      %v1120 = vunpack.c.0.s8 %v1119
      %v1121 = vlaneseq
      %v1122 = vshrl.u32 %v1121, 7
      %v1123 = vsub.s32 %v1120, %v1122
      %v1124 = vrot.slane %v437, %v1123
      %v1126 = vunpack.c.l.s4 1966171168
      %v1127 = vunpack.c.0.s8 %v1126
      %v1128 = vlaneseq
      %v1129 = vshrl.u32 %v1128, 7
      %v1130 = vsub.s32 %v1127, %v1129
      %v1131 = vrot.slane %v1103, %v1130
      %v1132 = vcombine.low %v1110, %v1124
      %v1133 = vcombine.high %v1110, %v1124
      %v1134 = vcombine.low %v1117, %v1131
      %v1135 = vcombine.high %v1117, %v1131
      %v1137 = vunpack.c.l.s4 1966171168
      %v1138 = vunpack.c.0.s8 %v1137
      %v1139 = vlaneseq
      %v1140 = vshrl.u32 %v1139, 7
      %v1141 = vsub.s32 %v1138, %v1140
      %v1142 = vrot.slane %v1132, %v1141
      %v1144 = vunpack.c.l.s4 1966171168
      %v1145 = vunpack.c.0.s8 %v1144
      %v1146 = vlaneseq
      %v1147 = vshrl.u32 %v1146, 7
      %v1148 = vsub.s32 %v1145, %v1147
      %v1149 = vrot.slane %v1134, %v1148
      %v1151 = vunpack.c.l.s4 1966171168
      %v1152 = vunpack.c.0.s8 %v1151
      %v1153 = vlaneseq
      %v1154 = vshrl.u32 %v1153, 7
      %v1155 = vsub.s32 %v1152, %v1154
      %v1156 = vrot.slane %v1133, %v1155
      %v1158 = vunpack.c.l.s4 1966171168
      %v1159 = vunpack.c.0.s8 %v1158
      %v1160 = vlaneseq
      %v1161 = vshrl.u32 %v1160, 7
      %v1162 = vsub.s32 %v1159, %v1161
      %v1163 = vrot.slane %v1135, %v1162
      %v1164 = vcombine.high %v1142, %v1142
      %v1165 = vcombine.high %v1149, %v1149
      %v1166 = vcombine.high %v1156, %v1156
      %v1167 = vcombine.high %v1163, %v1163
      %v1168 = vcombine.low %v434, %v436
      %v1170 = vunpack.c.l.s4 1966171168
      %v1171 = vunpack.c.0.s8 %v1170
      %v1172 = vlaneseq
      %v1173 = vshrl.u32 %v1172, 7
      %v1174 = vsub.s32 %v1171, %v1173
      %v1175 = vrot.slane %v1168, %v1174
      %v1177 = vunpack.c.l.s4 1966171168
      %v1178 = vunpack.c.0.s8 %v1177
      %v1179 = vlaneseq
      %v1180 = vshrl.u32 %v1179, 7
      %v1181 = vsub.s32 %v1178, %v1180
      %v1182 = vrot.slane %v438, %v1181
      %v1183 = vcombine.low %v1175, %v1182
      %v1185 = vunpack.c.l.s4 1966171168
      %v1186 = vunpack.c.0.s8 %v1185
      %v1187 = vlaneseq
      %v1188 = vshrl.u32 %v1187, 7
      %v1189 = vsub.s32 %v1186, %v1188
      %v1190 = vrot.slane %v1183, %v1189
      %v1191 = vcombine.low %v435, %v437
      %v1192 = vcombine.high %v435, %v437
      %v1193 = vcombine.high %v439, %v439
      %v1195 = vunpack.c.l.s4 1966171168
      %v1196 = vunpack.c.0.s8 %v1195
      %v1197 = vlaneseq
      %v1198 = vshrl.u32 %v1197, 7
      %v1199 = vsub.s32 %v1196, %v1198
      %v1200 = vrot.slane %v1191, %v1199
      %v1202 = vunpack.c.l.s4 1966171168
      %v1203 = vunpack.c.0.s8 %v1202
      %v1204 = vlaneseq
      %v1205 = vshrl.u32 %v1204, 7
      %v1206 = vsub.s32 %v1203, %v1205
      %v1207 = vrot.slane %v1192, %v1206
      %v1209 = vunpack.c.l.s4 1966171168
      %v1210 = vunpack.c.0.s8 %v1209
      %v1211 = vlaneseq
      %v1212 = vshrl.u32 %v1211, 7
      %v1213 = vsub.s32 %v1210, %v1212
      %v1214 = vrot.slane %v439, %v1213
      %v1216 = vunpack.c.l.s4 1966171168
      %v1217 = vunpack.c.0.s8 %v1216
      %v1218 = vlaneseq
      %v1219 = vshrl.u32 %v1218, 7
      %v1220 = vsub.s32 %v1217, %v1219
      %v1221 = vrot.slane %v1193, %v1220
      %v1222 = vcombine.low %v1200, %v1214
      %v1223 = vcombine.high %v1200, %v1214
      %v1224 = vcombine.low %v1207, %v1221
      %v1225 = vcombine.high %v1207, %v1221
      %v1227 = vunpack.c.l.s4 1966171168
      %v1228 = vunpack.c.0.s8 %v1227
      %v1229 = vlaneseq
      %v1230 = vshrl.u32 %v1229, 7
      %v1231 = vsub.s32 %v1228, %v1230
      %v1232 = vrot.slane %v1222, %v1231
      %v1234 = vunpack.c.l.s4 1966171168
      %v1235 = vunpack.c.0.s8 %v1234
      %v1236 = vlaneseq
      %v1237 = vshrl.u32 %v1236, 7
      %v1238 = vsub.s32 %v1235, %v1237
      %v1239 = vrot.slane %v1224, %v1238
      %v1241 = vunpack.c.l.s4 1966171168
      %v1242 = vunpack.c.0.s8 %v1241
      %v1243 = vlaneseq
      %v1244 = vshrl.u32 %v1243, 7
      %v1245 = vsub.s32 %v1242, %v1244
      %v1246 = vrot.slane %v1223, %v1245
      %v1248 = vunpack.c.l.s4 1966171168
      %v1249 = vunpack.c.0.s8 %v1248
      %v1250 = vlaneseq
      %v1251 = vshrl.u32 %v1250, 7
      %v1252 = vsub.s32 %v1249, %v1251
      %v1253 = vrot.slane %v1225, %v1252
      %v1254 = vcombine.high %v1232, %v1232
      %v1255 = vcombine.high %v1239, %v1239
      %v1256 = vcombine.high %v1246, %v1246
      %v1257 = vcombine.high %v1253, %v1253
      %v1258 = vcombine.low %v436, %v438
      %v1260 = vunpack.c.l.s4 1966171168
      %v1261 = vunpack.c.0.s8 %v1260
      %v1262 = vlaneseq
      %v1263 = vshrl.u32 %v1262, 7
      %v1264 = vsub.s32 %v1261, %v1263
      %v1265 = vrot.slane %v1258, %v1264
      %v1267 = vunpack.c.l.s4 1966171168
      %v1268 = vunpack.c.0.s8 %v1267
      %v1269 = vlaneseq
      %v1270 = vshrl.u32 %v1269, 7
      %v1271 = vsub.s32 %v1268, %v1270
      %v1272 = vrot.slane %v440, %v1271
      %v1273 = vcombine.low %v1265, %v1272
      %v1275 = vunpack.c.l.s4 1966171168
      %v1276 = vunpack.c.0.s8 %v1275
      %v1277 = vlaneseq
      %v1278 = vshrl.u32 %v1277, 7
      %v1279 = vsub.s32 %v1276, %v1278
      %v1280 = vrot.slane %v1273, %v1279
      %v1281 = vcombine.low %v437, %v439
      %v1282 = vcombine.high %v437, %v439
      %v1283 = vcombine.high %v441, %v441
      %v1285 = vunpack.c.l.s4 1966171168
      %v1286 = vunpack.c.0.s8 %v1285
      %v1287 = vlaneseq
      %v1288 = vshrl.u32 %v1287, 7
      %v1289 = vsub.s32 %v1286, %v1288
      %v1290 = vrot.slane %v1281, %v1289
      %v1292 = vunpack.c.l.s4 1966171168
      %v1293 = vunpack.c.0.s8 %v1292
      %v1294 = vlaneseq
      %v1295 = vshrl.u32 %v1294, 7
      %v1296 = vsub.s32 %v1293, %v1295
      %v1297 = vrot.slane %v1282, %v1296
      %v1299 = vunpack.c.l.s4 1966171168
      %v1300 = vunpack.c.0.s8 %v1299
      %v1301 = vlaneseq
      %v1302 = vshrl.u32 %v1301, 7
      %v1303 = vsub.s32 %v1300, %v1302
      %v1304 = vrot.slane %v441, %v1303
      %v1306 = vunpack.c.l.s4 1966171168
      %v1307 = vunpack.c.0.s8 %v1306
      %v1308 = vlaneseq
      %v1309 = vshrl.u32 %v1308, 7
      %v1310 = vsub.s32 %v1307, %v1309
      %v1311 = vrot.slane %v1283, %v1310
      %v1312 = vcombine.low %v1290, %v1304
      %v1313 = vcombine.high %v1290, %v1304
      %v1314 = vcombine.low %v1297, %v1311
      %v1315 = vcombine.high %v1297, %v1311
      %v1317 = vunpack.c.l.s4 1966171168
      %v1318 = vunpack.c.0.s8 %v1317
      %v1319 = vlaneseq
      %v1320 = vshrl.u32 %v1319, 7
      %v1321 = vsub.s32 %v1318, %v1320
      %v1322 = vrot.slane %v1312, %v1321
      %v1324 = vunpack.c.l.s4 1966171168
      %v1325 = vunpack.c.0.s8 %v1324
      %v1326 = vlaneseq
      %v1327 = vshrl.u32 %v1326, 7
      %v1328 = vsub.s32 %v1325, %v1327
      %v1329 = vrot.slane %v1314, %v1328
      %v1331 = vunpack.c.l.s4 1966171168
      %v1332 = vunpack.c.0.s8 %v1331
      %v1333 = vlaneseq
      %v1334 = vshrl.u32 %v1333, 7
      %v1335 = vsub.s32 %v1332, %v1334
      %v1336 = vrot.slane %v1313, %v1335
      %v1338 = vunpack.c.l.s4 1966171168
      %v1339 = vunpack.c.0.s8 %v1338
      %v1340 = vlaneseq
      %v1341 = vshrl.u32 %v1340, 7
      %v1342 = vsub.s32 %v1339, %v1341
      %v1343 = vrot.slane %v1315, %v1342
      %v1344 = vcombine.high %v1322, %v1322
      %v1345 = vcombine.high %v1329, %v1329
      %v1346 = vcombine.high %v1336, %v1336
      %v1347 = vcombine.high %v1343, %v1343
      %v1348 = vcombine.low %v438, %v440
      %v1350 = vunpack.c.l.s4 1966171168
      %v1351 = vunpack.c.0.s8 %v1350
      %v1352 = vlaneseq
      %v1353 = vshrl.u32 %v1352, 7
      %v1354 = vsub.s32 %v1351, %v1353
      %v1355 = vrot.slane %v1348, %v1354
      %v1357 = vunpack.c.l.s4 1966171168
      %v1358 = vunpack.c.0.s8 %v1357
      %v1359 = vlaneseq
      %v1360 = vshrl.u32 %v1359, 7
      %v1361 = vsub.s32 %v1358, %v1360
      %v1362 = vrot.slane %v442, %v1361
      %v1363 = vcombine.low %v1355, %v1362
      %v1365 = vunpack.c.l.s4 1966171168
      %v1366 = vunpack.c.0.s8 %v1365
      %v1367 = vlaneseq
      %v1368 = vshrl.u32 %v1367, 7
      %v1369 = vsub.s32 %v1366, %v1368
      %v1370 = vrot.slane %v1363, %v1369
      %v1371 = vcombine.low %v439, %v441
      %v1372 = vcombine.high %v439, %v441
      %v1373 = vcombine.high %v443, %v443
      %v1375 = vunpack.c.l.s4 1966171168
      %v1376 = vunpack.c.0.s8 %v1375
      %v1377 = vlaneseq
      %v1378 = vshrl.u32 %v1377, 7
      %v1379 = vsub.s32 %v1376, %v1378
      %v1380 = vrot.slane %v1371, %v1379
      %v1382 = vunpack.c.l.s4 1966171168
      %v1383 = vunpack.c.0.s8 %v1382
      %v1384 = vlaneseq
      %v1385 = vshrl.u32 %v1384, 7
      %v1386 = vsub.s32 %v1383, %v1385
      %v1387 = vrot.slane %v1372, %v1386
      %v1389 = vunpack.c.l.s4 1966171168
      %v1390 = vunpack.c.0.s8 %v1389
      %v1391 = vlaneseq
      %v1392 = vshrl.u32 %v1391, 7
      %v1393 = vsub.s32 %v1390, %v1392
      %v1394 = vrot.slane %v443, %v1393
      %v1396 = vunpack.c.l.s4 1966171168
      %v1397 = vunpack.c.0.s8 %v1396
      %v1398 = vlaneseq
      %v1399 = vshrl.u32 %v1398, 7
      %v1400 = vsub.s32 %v1397, %v1399
      %v1401 = vrot.slane %v1373, %v1400
      %v1402 = vcombine.low %v1380, %v1394
      %v1403 = vcombine.high %v1380, %v1394
      %v1404 = vcombine.low %v1387, %v1401
      %v1405 = vcombine.high %v1387, %v1401
      %v1407 = vunpack.c.l.s4 1966171168
      %v1408 = vunpack.c.0.s8 %v1407
      %v1409 = vlaneseq
      %v1410 = vshrl.u32 %v1409, 7
      %v1411 = vsub.s32 %v1408, %v1410
      %v1412 = vrot.slane %v1402, %v1411
      %v1414 = vunpack.c.l.s4 1966171168
      %v1415 = vunpack.c.0.s8 %v1414
      %v1416 = vlaneseq
      %v1417 = vshrl.u32 %v1416, 7
      %v1418 = vsub.s32 %v1415, %v1417
      %v1419 = vrot.slane %v1404, %v1418
      %v1421 = vunpack.c.l.s4 1966171168
      %v1422 = vunpack.c.0.s8 %v1421
      %v1423 = vlaneseq
      %v1424 = vshrl.u32 %v1423, 7
      %v1425 = vsub.s32 %v1422, %v1424
      %v1426 = vrot.slane %v1403, %v1425
      %v1428 = vunpack.c.l.s4 1966171168
      %v1429 = vunpack.c.0.s8 %v1428
      %v1430 = vlaneseq
      %v1431 = vshrl.u32 %v1430, 7
      %v1432 = vsub.s32 %v1429, %v1431
      %v1433 = vrot.slane %v1405, %v1432
      %v1434 = vcombine.high %v1412, %v1412
      %v1435 = vcombine.high %v1419, %v1419
      %v1436 = vcombine.high %v1426, %v1426
      %v1437 = vcombine.high %v1433, %v1433
      %v1438 = vcombine.low %v440, %v442
      %v1440 = vunpack.c.l.s4 1966171168
      %v1441 = vunpack.c.0.s8 %v1440
      %v1442 = vlaneseq
      %v1443 = vshrl.u32 %v1442, 7
      %v1444 = vsub.s32 %v1441, %v1443
      %v1445 = vrot.slane %v1438, %v1444
      %v1447 = vunpack.c.l.s4 1966171168
      %v1448 = vunpack.c.0.s8 %v1447
      %v1449 = vlaneseq
      %v1450 = vshrl.u32 %v1449, 7
      %v1451 = vsub.s32 %v1448, %v1450
      %v1452 = vrot.slane %v444, %v1451
      %v1453 = vcombine.low %v1445, %v1452
      %v1455 = vunpack.c.l.s4 1966171168
      %v1456 = vunpack.c.0.s8 %v1455
      %v1457 = vlaneseq
      %v1458 = vshrl.u32 %v1457, 7
      %v1459 = vsub.s32 %v1456, %v1458
      %v1460 = vrot.slane %v1453, %v1459
      %v1461 = vcombine.low %v441, %v443
      %v1462 = vcombine.high %v441, %v443
      %v1463 = vcombine.high %v445, %v445
      %v1465 = vunpack.c.l.s4 1966171168
      %v1466 = vunpack.c.0.s8 %v1465
      %v1467 = vlaneseq
      %v1468 = vshrl.u32 %v1467, 7
      %v1469 = vsub.s32 %v1466, %v1468
      %v1470 = vrot.slane %v1461, %v1469
      %v1472 = vunpack.c.l.s4 1966171168
      %v1473 = vunpack.c.0.s8 %v1472
      %v1474 = vlaneseq
      %v1475 = vshrl.u32 %v1474, 7
      %v1476 = vsub.s32 %v1473, %v1475
      %v1477 = vrot.slane %v1462, %v1476
      %v1479 = vunpack.c.l.s4 1966171168
      %v1480 = vunpack.c.0.s8 %v1479
      %v1481 = vlaneseq
      %v1482 = vshrl.u32 %v1481, 7
      %v1483 = vsub.s32 %v1480, %v1482
      %v1484 = vrot.slane %v445, %v1483
      %v1486 = vunpack.c.l.s4 1966171168
      %v1487 = vunpack.c.0.s8 %v1486
      %v1488 = vlaneseq
      %v1489 = vshrl.u32 %v1488, 7
      %v1490 = vsub.s32 %v1487, %v1489
      %v1491 = vrot.slane %v1463, %v1490
      %v1492 = vcombine.low %v1470, %v1484
      %v1493 = vcombine.high %v1470, %v1484
      %v1494 = vcombine.low %v1477, %v1491
      %v1495 = vcombine.high %v1477, %v1491
      %v1497 = vunpack.c.l.s4 1966171168
      %v1498 = vunpack.c.0.s8 %v1497
      %v1499 = vlaneseq
      %v1500 = vshrl.u32 %v1499, 7
      %v1501 = vsub.s32 %v1498, %v1500
      %v1502 = vrot.slane %v1492, %v1501
      %v1504 = vunpack.c.l.s4 1966171168
      %v1505 = vunpack.c.0.s8 %v1504
      %v1506 = vlaneseq
      %v1507 = vshrl.u32 %v1506, 7
      %v1508 = vsub.s32 %v1505, %v1507
      %v1509 = vrot.slane %v1494, %v1508
      %v1511 = vunpack.c.l.s4 1966171168
      %v1512 = vunpack.c.0.s8 %v1511
      %v1513 = vlaneseq
      %v1514 = vshrl.u32 %v1513, 7
      %v1515 = vsub.s32 %v1512, %v1514
      %v1516 = vrot.slane %v1493, %v1515
      %v1518 = vunpack.c.l.s4 1966171168
      %v1519 = vunpack.c.0.s8 %v1518
      %v1520 = vlaneseq
      %v1521 = vshrl.u32 %v1520, 7
      %v1522 = vsub.s32 %v1519, %v1521
      %v1523 = vrot.slane %v1495, %v1522
      %v1524 = vcombine.high %v1502, %v1502
      %v1525 = vcombine.high %v1509, %v1509
      %v1526 = vcombine.high %v1516, %v1516
      %v1527 = vcombine.high %v1523, %v1523
      %v1528 = vcombine.low %v442, %v444
      %v1530 = vunpack.c.l.s4 1966171168
      %v1531 = vunpack.c.0.s8 %v1530
      %v1532 = vlaneseq
      %v1533 = vshrl.u32 %v1532, 7
      %v1534 = vsub.s32 %v1531, %v1533
      %v1535 = vrot.slane %v1528, %v1534
      %v1537 = vunpack.c.l.s4 1966171168
      %v1538 = vunpack.c.0.s8 %v1537
      %v1539 = vlaneseq
      %v1540 = vshrl.u32 %v1539, 7
      %v1541 = vsub.s32 %v1538, %v1540
      %v1542 = vrot.slane %v446, %v1541
      %v1543 = vcombine.low %v1535, %v1542
      %v1545 = vunpack.c.l.s4 1966171168
      %v1546 = vunpack.c.0.s8 %v1545
      %v1547 = vlaneseq
      %v1548 = vshrl.u32 %v1547, 7
      %v1549 = vsub.s32 %v1546, %v1548
      %v1550 = vrot.slane %v1543, %v1549
      %v1551 = vcombine.low %v443, %v445
      %v1552 = vcombine.high %v443, %v445
      %v1553 = vcombine.high %v447, %v447
      %v1555 = vunpack.c.l.s4 1966171168
      %v1556 = vunpack.c.0.s8 %v1555
      %v1557 = vlaneseq
      %v1558 = vshrl.u32 %v1557, 7
      %v1559 = vsub.s32 %v1556, %v1558
      %v1560 = vrot.slane %v1551, %v1559
      %v1562 = vunpack.c.l.s4 1966171168
      %v1563 = vunpack.c.0.s8 %v1562
      %v1564 = vlaneseq
      %v1565 = vshrl.u32 %v1564, 7
      %v1566 = vsub.s32 %v1563, %v1565
      %v1567 = vrot.slane %v1552, %v1566
      %v1569 = vunpack.c.l.s4 1966171168
      %v1570 = vunpack.c.0.s8 %v1569
      %v1571 = vlaneseq
      %v1572 = vshrl.u32 %v1571, 7
      %v1573 = vsub.s32 %v1570, %v1572
      %v1574 = vrot.slane %v447, %v1573
      %v1576 = vunpack.c.l.s4 1966171168
      %v1577 = vunpack.c.0.s8 %v1576
      %v1578 = vlaneseq
      %v1579 = vshrl.u32 %v1578, 7
      %v1580 = vsub.s32 %v1577, %v1579
      %v1581 = vrot.slane %v1553, %v1580
      %v1582 = vcombine.low %v1560, %v1574
      %v1583 = vcombine.high %v1560, %v1574
      %v1584 = vcombine.low %v1567, %v1581
      %v1585 = vcombine.high %v1567, %v1581
      %v1587 = vunpack.c.l.s4 1966171168
      %v1588 = vunpack.c.0.s8 %v1587
      %v1589 = vlaneseq
      %v1590 = vshrl.u32 %v1589, 7
      %v1591 = vsub.s32 %v1588, %v1590
      %v1592 = vrot.slane %v1582, %v1591
      %v1594 = vunpack.c.l.s4 1966171168
      %v1595 = vunpack.c.0.s8 %v1594
      %v1596 = vlaneseq
      %v1597 = vshrl.u32 %v1596, 7
      %v1598 = vsub.s32 %v1595, %v1597
      %v1599 = vrot.slane %v1584, %v1598
      %v1601 = vunpack.c.l.s4 1966171168
      %v1602 = vunpack.c.0.s8 %v1601
      %v1603 = vlaneseq
      %v1604 = vshrl.u32 %v1603, 7
      %v1605 = vsub.s32 %v1602, %v1604
      %v1606 = vrot.slane %v1583, %v1605
      %v1608 = vunpack.c.l.s4 1966171168
      %v1609 = vunpack.c.0.s8 %v1608
      %v1610 = vlaneseq
      %v1611 = vshrl.u32 %v1610, 7
      %v1612 = vsub.s32 %v1609, %v1611
      %v1613 = vrot.slane %v1585, %v1612
      %v1614 = vcombine.high %v1592, %v1592
      %v1615 = vcombine.high %v1599, %v1599
      %v1616 = vcombine.high %v1606, %v1606
      %v1617 = vcombine.high %v1613, %v1613
      %v1618 = vcombine.low %v444, %v446
      %v1620 = vunpack.c.l.s4 1966171168
      %v1621 = vunpack.c.0.s8 %v1620
      %v1622 = vlaneseq
      %v1623 = vshrl.u32 %v1622, 7
      %v1624 = vsub.s32 %v1621, %v1623
      %v1625 = vrot.slane %v1618, %v1624
      %v1627 = vunpack.c.l.s4 1966171168
      %v1628 = vunpack.c.0.s8 %v1627
      %v1629 = vlaneseq
      %v1630 = vshrl.u32 %v1629, 7
      %v1631 = vsub.s32 %v1628, %v1630
      %v1632 = vrot.slane %v448, %v1631
      %v1633 = vcombine.low %v1625, %v1632
      %v1635 = vunpack.c.l.s4 1966171168
      %v1636 = vunpack.c.0.s8 %v1635
      %v1637 = vlaneseq
      %v1638 = vshrl.u32 %v1637, 7
      %v1639 = vsub.s32 %v1636, %v1638
      %v1640 = vrot.slane %v1633, %v1639
      %v1641 = vcombine.low %v445, %v447
      %v1642 = vcombine.high %v445, %v447
      %v1643 = vcombine.high %v449, %v449
      %v1645 = vunpack.c.l.s4 1966171168
      %v1646 = vunpack.c.0.s8 %v1645
      %v1647 = vlaneseq
      %v1648 = vshrl.u32 %v1647, 7
      %v1649 = vsub.s32 %v1646, %v1648
      %v1650 = vrot.slane %v1641, %v1649
      %v1652 = vunpack.c.l.s4 1966171168
      %v1653 = vunpack.c.0.s8 %v1652
      %v1654 = vlaneseq
      %v1655 = vshrl.u32 %v1654, 7
      %v1656 = vsub.s32 %v1653, %v1655
      %v1657 = vrot.slane %v1642, %v1656
      %v1659 = vunpack.c.l.s4 1966171168
      %v1660 = vunpack.c.0.s8 %v1659
      %v1661 = vlaneseq
      %v1662 = vshrl.u32 %v1661, 7
      %v1663 = vsub.s32 %v1660, %v1662
      %v1664 = vrot.slane %v449, %v1663
      %v1666 = vunpack.c.l.s4 1966171168
      %v1667 = vunpack.c.0.s8 %v1666
      %v1668 = vlaneseq
      %v1669 = vshrl.u32 %v1668, 7
      %v1670 = vsub.s32 %v1667, %v1669
      %v1671 = vrot.slane %v1643, %v1670
      %v1672 = vcombine.low %v1650, %v1664
      %v1673 = vcombine.high %v1650, %v1664
      %v1674 = vcombine.low %v1657, %v1671
      %v1675 = vcombine.high %v1657, %v1671
      %v1677 = vunpack.c.l.s4 1966171168
      %v1678 = vunpack.c.0.s8 %v1677
      %v1679 = vlaneseq
      %v1680 = vshrl.u32 %v1679, 7
      %v1681 = vsub.s32 %v1678, %v1680
      %v1682 = vrot.slane %v1672, %v1681
      %v1684 = vunpack.c.l.s4 1966171168
      %v1685 = vunpack.c.0.s8 %v1684
      %v1686 = vlaneseq
      %v1687 = vshrl.u32 %v1686, 7
      %v1688 = vsub.s32 %v1685, %v1687
      %v1689 = vrot.slane %v1674, %v1688
      %v1691 = vunpack.c.l.s4 1966171168
      %v1692 = vunpack.c.0.s8 %v1691
      %v1693 = vlaneseq
      %v1694 = vshrl.u32 %v1693, 7
      %v1695 = vsub.s32 %v1692, %v1694
      %v1696 = vrot.slane %v1673, %v1695
      %v1698 = vunpack.c.l.s4 1966171168
      %v1699 = vunpack.c.0.s8 %v1698
      %v1700 = vlaneseq
      %v1701 = vshrl.u32 %v1700, 7
      %v1702 = vsub.s32 %v1699, %v1701
      %v1703 = vrot.slane %v1675, %v1702
      %v1704 = vcombine.high %v1682, %v1682
      %v1705 = vcombine.high %v1689, %v1689
      %v1706 = vcombine.high %v1696, %v1696
      %v1707 = vcombine.high %v1703, %v1703
      %v1708 = vcombine.low %v446, %v448
      %v1710 = vunpack.c.l.s4 1966171168
      %v1711 = vunpack.c.0.s8 %v1710
      %v1712 = vlaneseq
      %v1713 = vshrl.u32 %v1712, 7
      %v1714 = vsub.s32 %v1711, %v1713
      %v1715 = vrot.slane %v1708, %v1714
      %v1717 = vunpack.c.l.s4 1966171168
      %v1718 = vunpack.c.0.s8 %v1717
      %v1719 = vlaneseq
      %v1720 = vshrl.u32 %v1719, 7
      %v1721 = vsub.s32 %v1718, %v1720
      %v1722 = vrot.slane %v450, %v1721
      %v1723 = vcombine.low %v1715, %v1722
      %v1725 = vunpack.c.l.s4 1966171168
      %v1726 = vunpack.c.0.s8 %v1725
      %v1727 = vlaneseq
      %v1728 = vshrl.u32 %v1727, 7
      %v1729 = vsub.s32 %v1726, %v1728
      %v1730 = vrot.slane %v1723, %v1729
      %v1731 = vcombine.low %v447, %v449
      %v1732 = vcombine.high %v447, %v449
      %v1733 = vcombine.high %v451, %v451
      %v1735 = vunpack.c.l.s4 1966171168
      %v1736 = vunpack.c.0.s8 %v1735
      %v1737 = vlaneseq
      %v1738 = vshrl.u32 %v1737, 7
      %v1739 = vsub.s32 %v1736, %v1738
      %v1740 = vrot.slane %v1731, %v1739
      %v1742 = vunpack.c.l.s4 1966171168
      %v1743 = vunpack.c.0.s8 %v1742
      %v1744 = vlaneseq
      %v1745 = vshrl.u32 %v1744, 7
      %v1746 = vsub.s32 %v1743, %v1745
      %v1747 = vrot.slane %v1732, %v1746
      %v1749 = vunpack.c.l.s4 1966171168
      %v1750 = vunpack.c.0.s8 %v1749
      %v1751 = vlaneseq
      %v1752 = vshrl.u32 %v1751, 7
      %v1753 = vsub.s32 %v1750, %v1752
      %v1754 = vrot.slane %v451, %v1753
      %v1756 = vunpack.c.l.s4 1966171168
      %v1757 = vunpack.c.0.s8 %v1756
      %v1758 = vlaneseq
      %v1759 = vshrl.u32 %v1758, 7
      %v1760 = vsub.s32 %v1757, %v1759
      %v1761 = vrot.slane %v1733, %v1760
      %v1762 = vcombine.low %v1740, %v1754
      %v1763 = vcombine.high %v1740, %v1754
      %v1764 = vcombine.low %v1747, %v1761
      %v1765 = vcombine.high %v1747, %v1761
      %v1767 = vunpack.c.l.s4 1966171168
      %v1768 = vunpack.c.0.s8 %v1767
      %v1769 = vlaneseq
      %v1770 = vshrl.u32 %v1769, 7
      %v1771 = vsub.s32 %v1768, %v1770
      %v1772 = vrot.slane %v1762, %v1771
      %v1774 = vunpack.c.l.s4 1966171168
      %v1775 = vunpack.c.0.s8 %v1774
      %v1776 = vlaneseq
      %v1777 = vshrl.u32 %v1776, 7
      %v1778 = vsub.s32 %v1775, %v1777
      %v1779 = vrot.slane %v1764, %v1778
      %v1781 = vunpack.c.l.s4 1966171168
      %v1782 = vunpack.c.0.s8 %v1781
      %v1783 = vlaneseq
      %v1784 = vshrl.u32 %v1783, 7
      %v1785 = vsub.s32 %v1782, %v1784
      %v1786 = vrot.slane %v1763, %v1785
      %v1788 = vunpack.c.l.s4 1966171168
      %v1789 = vunpack.c.0.s8 %v1788
      %v1790 = vlaneseq
      %v1791 = vshrl.u32 %v1790, 7
      %v1792 = vsub.s32 %v1789, %v1791
      %v1793 = vrot.slane %v1765, %v1792
      %v1794 = vcombine.high %v1772, %v1772
      %v1795 = vcombine.high %v1779, %v1779
      %v1796 = vcombine.high %v1786, %v1786
      %v1797 = vcombine.high %v1793, %v1793
      %v1798 = vcombine.low %v448, %v450
      %v1800 = vunpack.c.l.s4 1966171168
      %v1801 = vunpack.c.0.s8 %v1800
      %v1802 = vlaneseq
      %v1803 = vshrl.u32 %v1802, 7
      %v1804 = vsub.s32 %v1801, %v1803
      %v1805 = vrot.slane %v1798, %v1804
      %v1807 = vunpack.c.l.s4 1966171168
      %v1808 = vunpack.c.0.s8 %v1807
      %v1809 = vlaneseq
      %v1810 = vshrl.u32 %v1809, 7
      %v1811 = vsub.s32 %v1808, %v1810
      %v1812 = vrot.slane %v452, %v1811
      %v1813 = vcombine.low %v1805, %v1812
      %v1815 = vunpack.c.l.s4 1966171168
      %v1816 = vunpack.c.0.s8 %v1815
      %v1817 = vlaneseq
      %v1818 = vshrl.u32 %v1817, 7
      %v1819 = vsub.s32 %v1816, %v1818
      %v1820 = vrot.slane %v1813, %v1819
      %v1821 = vcombine.low %v449, %v451
      %v1822 = vcombine.high %v449, %v451
      %v1823 = vcombine.high %v453, %v453
      %v1825 = vunpack.c.l.s4 1966171168
      %v1826 = vunpack.c.0.s8 %v1825
      %v1827 = vlaneseq
      %v1828 = vshrl.u32 %v1827, 7
      %v1829 = vsub.s32 %v1826, %v1828
      %v1830 = vrot.slane %v1821, %v1829
      %v1832 = vunpack.c.l.s4 1966171168
      %v1833 = vunpack.c.0.s8 %v1832
      %v1834 = vlaneseq
      %v1835 = vshrl.u32 %v1834, 7
      %v1836 = vsub.s32 %v1833, %v1835
      %v1837 = vrot.slane %v1822, %v1836
      %v1839 = vunpack.c.l.s4 1966171168
      %v1840 = vunpack.c.0.s8 %v1839
      %v1841 = vlaneseq
      %v1842 = vshrl.u32 %v1841, 7
      %v1843 = vsub.s32 %v1840, %v1842
      %v1844 = vrot.slane %v453, %v1843
      %v1846 = vunpack.c.l.s4 1966171168
      %v1847 = vunpack.c.0.s8 %v1846
      %v1848 = vlaneseq
      %v1849 = vshrl.u32 %v1848, 7
      %v1850 = vsub.s32 %v1847, %v1849
      %v1851 = vrot.slane %v1823, %v1850
      %v1852 = vcombine.low %v1830, %v1844
      %v1853 = vcombine.high %v1830, %v1844
      %v1854 = vcombine.low %v1837, %v1851
      %v1855 = vcombine.high %v1837, %v1851
      %v1857 = vunpack.c.l.s4 1966171168
      %v1858 = vunpack.c.0.s8 %v1857
      %v1859 = vlaneseq
      %v1860 = vshrl.u32 %v1859, 7
      %v1861 = vsub.s32 %v1858, %v1860
      %v1862 = vrot.slane %v1852, %v1861
      %v1864 = vunpack.c.l.s4 1966171168
      %v1865 = vunpack.c.0.s8 %v1864
      %v1866 = vlaneseq
      %v1867 = vshrl.u32 %v1866, 7
      %v1868 = vsub.s32 %v1865, %v1867
      %v1869 = vrot.slane %v1854, %v1868
      %v1871 = vunpack.c.l.s4 1966171168
      %v1872 = vunpack.c.0.s8 %v1871
      %v1873 = vlaneseq
      %v1874 = vshrl.u32 %v1873, 7
      %v1875 = vsub.s32 %v1872, %v1874
      %v1876 = vrot.slane %v1853, %v1875
      %v1878 = vunpack.c.l.s4 1966171168
      %v1879 = vunpack.c.0.s8 %v1878
      %v1880 = vlaneseq
      %v1881 = vshrl.u32 %v1880, 7
      %v1882 = vsub.s32 %v1879, %v1881
      %v1883 = vrot.slane %v1855, %v1882
      %v1884 = vcombine.high %v1862, %v1862
      %v1885 = vcombine.high %v1869, %v1869
      %v1886 = vcombine.high %v1876, %v1876
      %v1887 = vcombine.high %v1883, %v1883
      %v1888 = vcombine.low %v450, %v452
      %v1890 = vunpack.c.l.s4 1966171168
      %v1891 = vunpack.c.0.s8 %v1890
      %v1892 = vlaneseq
      %v1893 = vshrl.u32 %v1892, 7
      %v1894 = vsub.s32 %v1891, %v1893
      %v1895 = vrot.slane %v1888, %v1894
      %v1897 = vunpack.c.l.s4 1966171168
      %v1898 = vunpack.c.0.s8 %v1897
      %v1899 = vlaneseq
      %v1900 = vshrl.u32 %v1899, 7
      %v1901 = vsub.s32 %v1898, %v1900
      %v1902 = vrot.slane %v454, %v1901
      %v1903 = vcombine.low %v1895, %v1902
      %v1905 = vunpack.c.l.s4 1966171168
      %v1906 = vunpack.c.0.s8 %v1905
      %v1907 = vlaneseq
      %v1908 = vshrl.u32 %v1907, 7
      %v1909 = vsub.s32 %v1906, %v1908
      %v1910 = vrot.slane %v1903, %v1909
      %v1911 = vcombine.low %v451, %v453
      %v1912 = vcombine.high %v451, %v453
      %v1913 = vcombine.high %v461, %v461
      %v1915 = vunpack.c.l.s4 1966171168
      %v1916 = vunpack.c.0.s8 %v1915
      %v1917 = vlaneseq
      %v1918 = vshrl.u32 %v1917, 7
      %v1919 = vsub.s32 %v1916, %v1918
      %v1920 = vrot.slane %v1911, %v1919
      %v1922 = vunpack.c.l.s4 1966171168
      %v1923 = vunpack.c.0.s8 %v1922
      %v1924 = vlaneseq
      %v1925 = vshrl.u32 %v1924, 7
      %v1926 = vsub.s32 %v1923, %v1925
      %v1927 = vrot.slane %v1912, %v1926
      %v1929 = vunpack.c.l.s4 1966171168
      %v1930 = vunpack.c.0.s8 %v1929
      %v1931 = vlaneseq
      %v1932 = vshrl.u32 %v1931, 7
      %v1933 = vsub.s32 %v1930, %v1932
      %v1934 = vrot.slane %v461, %v1933
      %v1936 = vunpack.c.l.s4 1966171168
      %v1937 = vunpack.c.0.s8 %v1936
      %v1938 = vlaneseq
      %v1939 = vshrl.u32 %v1938, 7
      %v1940 = vsub.s32 %v1937, %v1939
      %v1941 = vrot.slane %v1913, %v1940
      %v1942 = vcombine.low %v1920, %v1934
      %v1943 = vcombine.high %v1920, %v1934
      %v1944 = vcombine.low %v1927, %v1941
      %v1945 = vcombine.high %v1927, %v1941
      %v1947 = vunpack.c.l.s4 1966171168
      %v1948 = vunpack.c.0.s8 %v1947
      %v1949 = vlaneseq
      %v1950 = vshrl.u32 %v1949, 7
      %v1951 = vsub.s32 %v1948, %v1950
      %v1952 = vrot.slane %v1942, %v1951
      %v1954 = vunpack.c.l.s4 1966171168
      %v1955 = vunpack.c.0.s8 %v1954
      %v1956 = vlaneseq
      %v1957 = vshrl.u32 %v1956, 7
      %v1958 = vsub.s32 %v1955, %v1957
      %v1959 = vrot.slane %v1944, %v1958
      %v1961 = vunpack.c.l.s4 1966171168
      %v1962 = vunpack.c.0.s8 %v1961
      %v1963 = vlaneseq
      %v1964 = vshrl.u32 %v1963, 7
      %v1965 = vsub.s32 %v1962, %v1964
      %v1966 = vrot.slane %v1943, %v1965
      %v1968 = vunpack.c.l.s4 1966171168
      %v1969 = vunpack.c.0.s8 %v1968
      %v1970 = vlaneseq
      %v1971 = vshrl.u32 %v1970, 7
      %v1972 = vsub.s32 %v1969, %v1971
      %v1973 = vrot.slane %v1945, %v1972
      %v1974 = vcombine.high %v1952, %v1952
      %v1975 = vcombine.high %v1959, %v1959
      %v1976 = vcombine.high %v1966, %v1966
      %v1977 = vcombine.high %v1973, %v1973
      %v1978 = vcombine.low %v452, %v454
      %v1980 = vunpack.c.l.s4 1966171168
      %v1981 = vunpack.c.0.s8 %v1980
      %v1982 = vlaneseq
      %v1983 = vshrl.u32 %v1982, 7
      %v1984 = vsub.s32 %v1981, %v1983
      %v1985 = vrot.slane %v1978, %v1984
      %v1987 = vunpack.c.l.s4 1966171168
      %v1988 = vunpack.c.0.s8 %v1987
      %v1989 = vlaneseq
      %v1990 = vshrl.u32 %v1989, 7
      %v1991 = vsub.s32 %v1988, %v1990
      %v1992 = vrot.slane %v462, %v1991
      %v1993 = vcombine.low %v1985, %v1992
      %v1995 = vunpack.c.l.s4 1966171168
      %v1996 = vunpack.c.0.s8 %v1995
      %v1997 = vlaneseq
      %v1998 = vshrl.u32 %v1997, 7
      %v1999 = vsub.s32 %v1996, %v1998
      %v2000 = vrot.slane %v1993, %v1999
      %v2001 = vcombine.low %v453, %v461
      %v2002 = vcombine.high %v453, %v461
      %v2003 = vcombine.high %v469, %v469
      %v2005 = vunpack.c.l.s4 1966171168
      %v2006 = vunpack.c.0.s8 %v2005
      %v2007 = vlaneseq
      %v2008 = vshrl.u32 %v2007, 7
      %v2009 = vsub.s32 %v2006, %v2008
      %v2010 = vrot.slane %v2001, %v2009
      %v2012 = vunpack.c.l.s4 1966171168
      %v2013 = vunpack.c.0.s8 %v2012
      %v2014 = vlaneseq
      %v2015 = vshrl.u32 %v2014, 7
      %v2016 = vsub.s32 %v2013, %v2015
      %v2017 = vrot.slane %v2002, %v2016
      %v2019 = vunpack.c.l.s4 1966171168
      %v2020 = vunpack.c.0.s8 %v2019
      %v2021 = vlaneseq
      %v2022 = vshrl.u32 %v2021, 7
      %v2023 = vsub.s32 %v2020, %v2022
      %v2024 = vrot.slane %v469, %v2023
      %v2026 = vunpack.c.l.s4 1966171168
      %v2027 = vunpack.c.0.s8 %v2026
      %v2028 = vlaneseq
      %v2029 = vshrl.u32 %v2028, 7
      %v2030 = vsub.s32 %v2027, %v2029
      %v2031 = vrot.slane %v2003, %v2030
      %v2032 = vcombine.low %v2010, %v2024
      %v2033 = vcombine.high %v2010, %v2024
      %v2034 = vcombine.low %v2017, %v2031
      %v2035 = vcombine.high %v2017, %v2031
      %v2037 = vunpack.c.l.s4 1966171168
      %v2038 = vunpack.c.0.s8 %v2037
      %v2039 = vlaneseq
      %v2040 = vshrl.u32 %v2039, 7
      %v2041 = vsub.s32 %v2038, %v2040
      %v2042 = vrot.slane %v2032, %v2041
      %v2044 = vunpack.c.l.s4 1966171168
      %v2045 = vunpack.c.0.s8 %v2044
      %v2046 = vlaneseq
      %v2047 = vshrl.u32 %v2046, 7
      %v2048 = vsub.s32 %v2045, %v2047
      %v2049 = vrot.slane %v2034, %v2048
      %v2051 = vunpack.c.l.s4 1966171168
      %v2052 = vunpack.c.0.s8 %v2051
      %v2053 = vlaneseq
      %v2054 = vshrl.u32 %v2053, 7
      %v2055 = vsub.s32 %v2052, %v2054
      %v2056 = vrot.slane %v2033, %v2055
      %v2058 = vunpack.c.l.s4 1966171168
      %v2059 = vunpack.c.0.s8 %v2058
      %v2060 = vlaneseq
      %v2061 = vshrl.u32 %v2060, 7
      %v2062 = vsub.s32 %v2059, %v2061
      %v2063 = vrot.slane %v2035, %v2062
      %v2064 = vcombine.high %v2042, %v2042
      %v2065 = vcombine.high %v2049, %v2049
      %v2066 = vcombine.high %v2056, %v2056
      %v2067 = vcombine.high %v2063, %v2063
      %v2068 = vcombine.low %v454, %v462
      %v2070 = vunpack.c.l.s4 1966171168
      %v2071 = vunpack.c.0.s8 %v2070
      %v2072 = vlaneseq
      %v2073 = vshrl.u32 %v2072, 7
      %v2074 = vsub.s32 %v2071, %v2073
      %v2075 = vrot.slane %v2068, %v2074
      %v2077 = vunpack.c.l.s4 1966171168
      %v2078 = vunpack.c.0.s8 %v2077
      %v2079 = vlaneseq
      %v2080 = vshrl.u32 %v2079, 7
      %v2081 = vsub.s32 %v2078, %v2080
      %v2082 = vrot.slane %v470, %v2081
      %v2083 = vcombine.low %v2075, %v2082
      %v2085 = vunpack.c.l.s4 1966171168
      %v2086 = vunpack.c.0.s8 %v2085
      %v2087 = vlaneseq
      %v2088 = vshrl.u32 %v2087, 7
      %v2089 = vsub.s32 %v2086, %v2088
      %v2090 = vrot.slane %v2083, %v2089
      %v2091 = vld [vmem:[%s1] sm:$0xf]
      %v2092 = vld [vmem:[%s1 + $0x4] sm:$0xf]
      %v2093 = vld [vmem:[%s1 + $0x8] sm:$0xf]
      %v2094 = vld [vmem:[%s1 + $0xc] sm:$0xf]
      %v2095 = vld [vmem:[%s1 + $0x10] sm:$0xf]
      %v2096 = vld [vmem:[%s1 + $0x14] sm:$0xf]
      %v2097 = vld [vmem:[%s1 + $0x18] sm:$0xf]
      %v2098 = vld [vmem:[%s1 + $0x1c] sm:$0xf]
      %v2099 = vld [vmem:[%s1 + $0x20] sm:$0xf]
      %v2100 = vld [vmem:[%s1 + $0x24] sm:$0xf]
      %v2101 = vld [vmem:[%s1 + $0x28] sm:$0xf]
      %v2102 = vld [vmem:[%s1 + $0x2c] sm:$0xf]
      %v2103 = vld [vmem:[%s1 + $0x30] sm:$0xf]
      %v2104 = vld [vmem:[%s1 + $0x34] sm:$0xf]
      %v2105 = vld [vmem:[%s1 + $0x38] sm:$0xf]
      %v2106 = vld [vmem:[%s1 + $0x3c] sm:$0xf]
      %v2107 = vld [vmem:[%s1 + $0x40] sm:$0xf]
      %v2108 = vld [vmem:[%s1 + $0x44] sm:$0xf]
      %v2109 = vld [vmem:[%s1 + $0x48] sm:$0xf]
      %v2110 = vld [vmem:[%s1 + $0x4c] sm:$0xf]
      %v2111 = vld [vmem:[%s1 + $0x50] sm:$0xf]
      %v2112 = vld [vmem:[%s1 + $0x54] sm:$0xf]
      %v2113 = vld [vmem:[%s1 + $0x58] sm:$0xf]
      %v2114 = vld [vmem:[%s1 + $0x5c] sm:$0xf]
      %v2115 = vld [vmem:[%s1 + $0x60] sm:$0xf]
      %v2116 = vld [vmem:[%s1 + $0x64] sm:$0xf]
      %v2117 = vld [vmem:[%s1 + $0x68] sm:$0xf]
      %v2118 = vld [vmem:[%s1 + $0x6c] sm:$0xf]
      %v2119 = vld [vmem:[%s1 + $0x70] sm:$0xf]
      %v2120 = vld [vmem:[%s1 + $0x74] sm:$0xf]
      %v2121 = vld [vmem:[%s1 + $0x78] sm:$0xf]
      %v2122 = vld [vmem:[%s1 + $0x7c] sm:$0xf]
      %v2123 = vld [vmem:[%s1 + $0x80] sm:$0xf]
      %v2124 = vld [vmem:[%s1 + $0x84] sm:$0xf]
      %v2125 = vld [vmem:[%s1 + $0x88] sm:$0xf]
      %v2126 = vld [vmem:[%s1 + $0x8c] sm:$0xf]
      %v2127 = vld [vmem:[%s1 + $0x90] sm:$0xf]
      %v2128 = vld [vmem:[%s1 + $0x94] sm:$0xf]
      %v2129 = vld [vmem:[%s1 + $0x98] sm:$0xf]
      %v2130 = vld [vmem:[%s1 + $0x9c] sm:$0xf]
      %v2131 = vld [vmem:[%s1 + $0xa0] sm:$0xf]
      %v2132 = vld [vmem:[%s1 + $0xa4] sm:$0xf]
      %v2133 = vld [vmem:[%s1 + $0xa8] sm:$0xf]
      %v2134 = vld [vmem:[%s1 + $0xac] sm:$0xf]
      %v2135 = vld [vmem:[%s1 + $0xb0] sm:$0xf]
      %v2136 = vld [vmem:[%s1 + $0xb4] sm:$0xf]
      %v2137 = vld [vmem:[%s1 + $0xb8] sm:$0xf]
      %v2138 = vld [vmem:[%s1 + $0xbc] sm:$0xf]
      %v2139 = vcombine.high %v545, %v552
      %v2141 = vunpack.c.l.s4 1966171168
      %v2142 = vunpack.c.0.s8 %v2141
      %v2143 = vlaneseq
      %v2144 = vshrl.u32 %v2143, 7
      %v2145 = vsub.s32 %v2142, %v2144
      %v2146 = vrot.slane %v2139, %v2145
      %v2147 = vcombine.high %v635, %v642
      %v2149 = vunpack.c.l.s4 1966171168
      %v2150 = vunpack.c.0.s8 %v2149
      %v2151 = vlaneseq
      %v2152 = vshrl.u32 %v2151, 7
      %v2153 = vsub.s32 %v2150, %v2152
      %v2154 = vrot.slane %v2147, %v2153
      %v2155 = vcombine.high %v725, %v732
      %v2157 = vunpack.c.l.s4 1966171168
      %v2158 = vunpack.c.0.s8 %v2157
      %v2159 = vlaneseq
      %v2160 = vshrl.u32 %v2159, 7
      %v2161 = vsub.s32 %v2158, %v2160
      %v2162 = vrot.slane %v2155, %v2161
      %v2163 = vcombine.high %v815, %v822
      %v2165 = vunpack.c.l.s4 1966171168
      %v2166 = vunpack.c.0.s8 %v2165
      %v2167 = vlaneseq
      %v2168 = vshrl.u32 %v2167, 7
      %v2169 = vsub.s32 %v2166, %v2168
      %v2170 = vrot.slane %v2163, %v2169
      %v2171 = vcombine.high %v905, %v912
      %v2173 = vunpack.c.l.s4 1966171168
      %v2174 = vunpack.c.0.s8 %v2173
      %v2175 = vlaneseq
      %v2176 = vshrl.u32 %v2175, 7
      %v2177 = vsub.s32 %v2174, %v2176
      %v2178 = vrot.slane %v2171, %v2177
      %v2179 = vcombine.high %v995, %v1002
      %v2181 = vunpack.c.l.s4 1966171168
      %v2182 = vunpack.c.0.s8 %v2181
      %v2183 = vlaneseq
      %v2184 = vshrl.u32 %v2183, 7
      %v2185 = vsub.s32 %v2182, %v2184
      %v2186 = vrot.slane %v2179, %v2185
      %v2187 = vcombine.high %v1085, %v1092
      %v2189 = vunpack.c.l.s4 1966171168
      %v2190 = vunpack.c.0.s8 %v2189
      %v2191 = vlaneseq
      %v2192 = vshrl.u32 %v2191, 7
      %v2193 = vsub.s32 %v2190, %v2192
      %v2194 = vrot.slane %v2187, %v2193
      %v2195 = vcombine.high %v1175, %v1182
      %v2197 = vunpack.c.l.s4 1966171168
      %v2198 = vunpack.c.0.s8 %v2197
      %v2199 = vlaneseq
      %v2200 = vshrl.u32 %v2199, 7
      %v2201 = vsub.s32 %v2198, %v2200
      %v2202 = vrot.slane %v2195, %v2201
      %v2203 = vcombine.high %v1265, %v1272
      %v2205 = vunpack.c.l.s4 1966171168
      %v2206 = vunpack.c.0.s8 %v2205
      %v2207 = vlaneseq
      %v2208 = vshrl.u32 %v2207, 7
      %v2209 = vsub.s32 %v2206, %v2208
      %v2210 = vrot.slane %v2203, %v2209
      %v2211 = vcombine.high %v1355, %v1362
      %v2213 = vunpack.c.l.s4 1966171168
      %v2214 = vunpack.c.0.s8 %v2213
      %v2215 = vlaneseq
      %v2216 = vshrl.u32 %v2215, 7
      %v2217 = vsub.s32 %v2214, %v2216
      %v2218 = vrot.slane %v2211, %v2217
      %v2219 = vcombine.high %v1445, %v1452
      %v2221 = vunpack.c.l.s4 1966171168
      %v2222 = vunpack.c.0.s8 %v2221
      %v2223 = vlaneseq
      %v2224 = vshrl.u32 %v2223, 7
      %v2225 = vsub.s32 %v2222, %v2224
      %v2226 = vrot.slane %v2219, %v2225
      %v2227 = vcombine.high %v1535, %v1542
      %v2229 = vunpack.c.l.s4 1966171168
      %v2230 = vunpack.c.0.s8 %v2229
      %v2231 = vlaneseq
      %v2232 = vshrl.u32 %v2231, 7
      %v2233 = vsub.s32 %v2230, %v2232
      %v2234 = vrot.slane %v2227, %v2233
      %v2235 = vcombine.high %v1625, %v1632
      %v2237 = vunpack.c.l.s4 1966171168
      %v2238 = vunpack.c.0.s8 %v2237
      %v2239 = vlaneseq
      %v2240 = vshrl.u32 %v2239, 7
      %v2241 = vsub.s32 %v2238, %v2240
      %v2242 = vrot.slane %v2235, %v2241
      %v2243 = vcombine.high %v1715, %v1722
      %v2245 = vunpack.c.l.s4 1966171168
      %v2246 = vunpack.c.0.s8 %v2245
      %v2247 = vlaneseq
      %v2248 = vshrl.u32 %v2247, 7
      %v2249 = vsub.s32 %v2246, %v2248
      %v2250 = vrot.slane %v2243, %v2249
      %v2251 = vcombine.high %v1805, %v1812
      %v2253 = vunpack.c.l.s4 1966171168
      %v2254 = vunpack.c.0.s8 %v2253
      %v2255 = vlaneseq
      %v2256 = vshrl.u32 %v2255, 7
      %v2257 = vsub.s32 %v2254, %v2256
      %v2258 = vrot.slane %v2251, %v2257
      %v2259 = vcombine.high %v1895, %v1902
      %v2261 = vunpack.c.l.s4 1966171168
      %v2262 = vunpack.c.0.s8 %v2261
      %v2263 = vlaneseq
      %v2264 = vshrl.u32 %v2263, 7
      %v2265 = vsub.s32 %v2262, %v2264
      %v2266 = vrot.slane %v2259, %v2265
      %v2267 = vcombine.high %v1985, %v1992
      %v2269 = vunpack.c.l.s4 1966171168
      %v2270 = vunpack.c.0.s8 %v2269
      %v2271 = vlaneseq
      %v2272 = vshrl.u32 %v2271, 7
      %v2273 = vsub.s32 %v2270, %v2272
      %v2274 = vrot.slane %v2267, %v2273
      %v2275 = vcombine.high %v2075, %v2082
      %v2277 = vunpack.c.l.s4 1966171168
      %v2278 = vunpack.c.0.s8 %v2277
      %v2279 = vlaneseq
      %v2280 = vshrl.u32 %v2279, 7
      %v2281 = vsub.s32 %v2278, %v2280
      %v2282 = vrot.slane %v2275, %v2281
      %vm2283 = vsmask.f32 256
      %vm2284 = vsmask.f32 1284
      %vm2285 = vmor %vm2283, %vm2284
      %vm2286 = vsmask.f32 2312
      %vm2287 = vmor %vm2285, %vm2286
      %vm2288 = vsmask.f32 3340
      %vm2289 = vmor %vm2287, %vm2288
      %vm2290 = vsmask.f32 4368
      %vm2291 = vmor %vm2289, %vm2290
      %vm2292 = vsmask.f32 5396
      %vm2293 = vmor %vm2291, %vm2292
      %vm2294 = vsmask.f32 6424
      %vm2295 = vmor %vm2293, %vm2294
      %vm2296 = vsmask.f32 7452
      %vm2297 = vmor %vm2295, %vm2296
      %v2299 = vshrl.u32 %v512, 16
      %v2301 = vrot.slane %v2299, 7
      %v2302 = vrot.slane %v2301, 1
      %v2304 = vshll.u32 %v526, 16
      %v2306 = vsel %vm2297, %v2302, %v2304
      %v2307 = vshrl.u32 %v526, 16
      %v2309 = vrot.slane %v2307, 7
      %v2310 = vrot.slane %v2309, 1
      %v2312 = vshll.u32 %v534, 16
      %v2314 = vsel %vm2297, %v2310, %v2312
      %v2315 = vshrl.u32 %v534, 16
      %v2317 = vrot.slane %v2315, 7
      %v2318 = vrot.slane %v2317, 1
      %v2320 = vshll.u32 %v536, 16
      %v2322 = vsel %vm2297, %v2318, %v2320
      %v2323 = vshrl.u32 %v536, 16
      %v2325 = vrot.slane %v2323, 7
      %v2326 = vrot.slane %v2325, 1
      %v2328 = vshll.u32 %v519, 16
      %v2330 = vsel %vm2297, %v2326, %v2328
      %v2331 = vshrl.u32 %v519, 16
      %v2333 = vrot.slane %v2331, 7
      %v2334 = vrot.slane %v2333, 1
      %v2336 = vshll.u32 %v533, 16
      %v2338 = vsel %vm2297, %v2334, %v2336
      %v2339 = vshrl.u32 %v533, 16
      %v2341 = vrot.slane %v2339, 7
      %v2342 = vrot.slane %v2341, 1
      %v2344 = vshll.u32 %v535, 16
      %v2346 = vsel %vm2297, %v2342, %v2344
      %v2347 = vshrl.u32 %v535, 16
      %v2349 = vrot.slane %v2347, 7
      %v2350 = vrot.slane %v2349, 1
      %v2352 = vshll.u32 %v537, 16
      %v2354 = vsel %vm2297, %v2350, %v2352
      %v2355 = vshrl.u32 %v537, 16
      %v2357 = vrot.slane %v2355, 7
      %v2358 = vrot.slane %v2357, 1
      %v2360 = vshll.u32 %v560, 16
      %v2362 = vsel %vm2297, %v2358, %v2360
      %v2363 = vshrl.u32 %v560, 16
      %v2365 = vrot.slane %v2363, 7
      %v2366 = vrot.slane %v2365, 1
      %v2368 = vshll.u32 %v2146, 16
      %v2370 = vsel %vm2297, %v2366, %v2368
      %v2372 = vshrl.u32 %v602, 16
      %v2374 = vrot.slane %v2372, 7
      %v2375 = vrot.slane %v2374, 1
      %v2377 = vshll.u32 %v616, 16
      %v2379 = vsel %vm2297, %v2375, %v2377
      %v2380 = vshrl.u32 %v616, 16
      %v2382 = vrot.slane %v2380, 7
      %v2383 = vrot.slane %v2382, 1
      %v2385 = vshll.u32 %v624, 16
      %v2387 = vsel %vm2297, %v2383, %v2385
      %v2388 = vshrl.u32 %v624, 16
      %v2390 = vrot.slane %v2388, 7
      %v2391 = vrot.slane %v2390, 1
      %v2393 = vshll.u32 %v626, 16
      %v2395 = vsel %vm2297, %v2391, %v2393
      %v2396 = vshrl.u32 %v626, 16
      %v2398 = vrot.slane %v2396, 7
      %v2399 = vrot.slane %v2398, 1
      %v2401 = vshll.u32 %v609, 16
      %v2403 = vsel %vm2297, %v2399, %v2401
      %v2404 = vshrl.u32 %v609, 16
      %v2406 = vrot.slane %v2404, 7
      %v2407 = vrot.slane %v2406, 1
      %v2409 = vshll.u32 %v623, 16
      %v2411 = vsel %vm2297, %v2407, %v2409
      %v2412 = vshrl.u32 %v623, 16
      %v2414 = vrot.slane %v2412, 7
      %v2415 = vrot.slane %v2414, 1
      %v2417 = vshll.u32 %v625, 16
      %v2419 = vsel %vm2297, %v2415, %v2417
      %v2420 = vshrl.u32 %v625, 16
      %v2422 = vrot.slane %v2420, 7
      %v2423 = vrot.slane %v2422, 1
      %v2425 = vshll.u32 %v627, 16
      %v2427 = vsel %vm2297, %v2423, %v2425
      %v2428 = vshrl.u32 %v627, 16
      %v2430 = vrot.slane %v2428, 7
      %v2431 = vrot.slane %v2430, 1
      %v2433 = vshll.u32 %v650, 16
      %v2435 = vsel %vm2297, %v2431, %v2433
      %v2436 = vshrl.u32 %v650, 16
      %v2438 = vrot.slane %v2436, 7
      %v2439 = vrot.slane %v2438, 1
      %v2441 = vshll.u32 %v2154, 16
      %v2443 = vsel %vm2297, %v2439, %v2441
      %v2445 = vshrl.u32 %v692, 16
      %v2447 = vrot.slane %v2445, 7
      %v2448 = vrot.slane %v2447, 1
      %v2450 = vshll.u32 %v706, 16
      %v2452 = vsel %vm2297, %v2448, %v2450
      %v2453 = vshrl.u32 %v706, 16
      %v2455 = vrot.slane %v2453, 7
      %v2456 = vrot.slane %v2455, 1
      %v2458 = vshll.u32 %v714, 16
      %v2460 = vsel %vm2297, %v2456, %v2458
      %v2461 = vshrl.u32 %v714, 16
      %v2463 = vrot.slane %v2461, 7
      %v2464 = vrot.slane %v2463, 1
      %v2466 = vshll.u32 %v716, 16
      %v2468 = vsel %vm2297, %v2464, %v2466
      %v2469 = vshrl.u32 %v716, 16
      %v2471 = vrot.slane %v2469, 7
      %v2472 = vrot.slane %v2471, 1
      %v2474 = vshll.u32 %v699, 16
      %v2476 = vsel %vm2297, %v2472, %v2474
      %v2477 = vshrl.u32 %v699, 16
      %v2479 = vrot.slane %v2477, 7
      %v2480 = vrot.slane %v2479, 1
      %v2482 = vshll.u32 %v713, 16
      %v2484 = vsel %vm2297, %v2480, %v2482
      %v2485 = vshrl.u32 %v713, 16
      %v2487 = vrot.slane %v2485, 7
      %v2488 = vrot.slane %v2487, 1
      %v2490 = vshll.u32 %v715, 16
      %v2492 = vsel %vm2297, %v2488, %v2490
      %v2493 = vshrl.u32 %v715, 16
      %v2495 = vrot.slane %v2493, 7
      %v2496 = vrot.slane %v2495, 1
      %v2498 = vshll.u32 %v717, 16
      %v2500 = vsel %vm2297, %v2496, %v2498
      %v2501 = vshrl.u32 %v717, 16
      %v2503 = vrot.slane %v2501, 7
      %v2504 = vrot.slane %v2503, 1
      %v2506 = vshll.u32 %v740, 16
      %v2508 = vsel %vm2297, %v2504, %v2506
      %v2509 = vshrl.u32 %v740, 16
      %v2511 = vrot.slane %v2509, 7
      %v2512 = vrot.slane %v2511, 1
      %v2514 = vshll.u32 %v2162, 16
      %v2516 = vsel %vm2297, %v2512, %v2514
      %v2518 = vshrl.u32 %v782, 16
      %v2520 = vrot.slane %v2518, 7
      %v2521 = vrot.slane %v2520, 1
      %v2523 = vshll.u32 %v796, 16
      %v2525 = vsel %vm2297, %v2521, %v2523
      %v2526 = vshrl.u32 %v796, 16
      %v2528 = vrot.slane %v2526, 7
      %v2529 = vrot.slane %v2528, 1
      %v2531 = vshll.u32 %v804, 16
      %v2533 = vsel %vm2297, %v2529, %v2531
      %v2534 = vshrl.u32 %v804, 16
      %v2536 = vrot.slane %v2534, 7
      %v2537 = vrot.slane %v2536, 1
      %v2539 = vshll.u32 %v806, 16
      %v2541 = vsel %vm2297, %v2537, %v2539
      %v2542 = vshrl.u32 %v806, 16
      %v2544 = vrot.slane %v2542, 7
      %v2545 = vrot.slane %v2544, 1
      %v2547 = vshll.u32 %v789, 16
      %v2549 = vsel %vm2297, %v2545, %v2547
      %v2550 = vshrl.u32 %v789, 16
      %v2552 = vrot.slane %v2550, 7
      %v2553 = vrot.slane %v2552, 1
      %v2555 = vshll.u32 %v803, 16
      %v2557 = vsel %vm2297, %v2553, %v2555
      %v2558 = vshrl.u32 %v803, 16
      %v2560 = vrot.slane %v2558, 7
      %v2561 = vrot.slane %v2560, 1
      %v2563 = vshll.u32 %v805, 16
      %v2565 = vsel %vm2297, %v2561, %v2563
      %v2566 = vshrl.u32 %v805, 16
      %v2568 = vrot.slane %v2566, 7
      %v2569 = vrot.slane %v2568, 1
      %v2571 = vshll.u32 %v807, 16
      %v2573 = vsel %vm2297, %v2569, %v2571
      %v2574 = vshrl.u32 %v807, 16
      %v2576 = vrot.slane %v2574, 7
      %v2577 = vrot.slane %v2576, 1
      %v2579 = vshll.u32 %v830, 16
      %v2581 = vsel %vm2297, %v2577, %v2579
      %v2582 = vshrl.u32 %v830, 16
      %v2584 = vrot.slane %v2582, 7
      %v2585 = vrot.slane %v2584, 1
      %v2587 = vshll.u32 %v2170, 16
      %v2589 = vsel %vm2297, %v2585, %v2587
      %v2591 = vshrl.u32 %v872, 16
      %v2593 = vrot.slane %v2591, 7
      %v2594 = vrot.slane %v2593, 1
      %v2596 = vshll.u32 %v886, 16
      %v2598 = vsel %vm2297, %v2594, %v2596
      %v2599 = vshrl.u32 %v886, 16
      %v2601 = vrot.slane %v2599, 7
      %v2602 = vrot.slane %v2601, 1
      %v2604 = vshll.u32 %v894, 16
      %v2606 = vsel %vm2297, %v2602, %v2604
      %v2607 = vshrl.u32 %v894, 16
      %v2609 = vrot.slane %v2607, 7
      %v2610 = vrot.slane %v2609, 1
      %v2612 = vshll.u32 %v896, 16
      %v2614 = vsel %vm2297, %v2610, %v2612
      %v2615 = vshrl.u32 %v896, 16
      %v2617 = vrot.slane %v2615, 7
      %v2618 = vrot.slane %v2617, 1
      %v2620 = vshll.u32 %v879, 16
      %v2622 = vsel %vm2297, %v2618, %v2620
      %v2623 = vshrl.u32 %v879, 16
      %v2625 = vrot.slane %v2623, 7
      %v2626 = vrot.slane %v2625, 1
      %v2628 = vshll.u32 %v893, 16
      %v2630 = vsel %vm2297, %v2626, %v2628
      %v2631 = vshrl.u32 %v893, 16
      %v2633 = vrot.slane %v2631, 7
      %v2634 = vrot.slane %v2633, 1
      %v2636 = vshll.u32 %v895, 16
      %v2638 = vsel %vm2297, %v2634, %v2636
      %v2639 = vshrl.u32 %v895, 16
      %v2641 = vrot.slane %v2639, 7
      %v2642 = vrot.slane %v2641, 1
      %v2644 = vshll.u32 %v897, 16
      %v2646 = vsel %vm2297, %v2642, %v2644
      %v2647 = vshrl.u32 %v897, 16
      %v2649 = vrot.slane %v2647, 7
      %v2650 = vrot.slane %v2649, 1
      %v2652 = vshll.u32 %v920, 16
      %v2654 = vsel %vm2297, %v2650, %v2652
      %v2655 = vshrl.u32 %v920, 16
      %v2657 = vrot.slane %v2655, 7
      %v2658 = vrot.slane %v2657, 1
      %v2660 = vshll.u32 %v2178, 16
      %v2662 = vsel %vm2297, %v2658, %v2660
      %v2664 = vshrl.u32 %v962, 16
      %v2666 = vrot.slane %v2664, 7
      %v2667 = vrot.slane %v2666, 1
      %v2669 = vshll.u32 %v976, 16
      %v2671 = vsel %vm2297, %v2667, %v2669
      %v2672 = vshrl.u32 %v976, 16
      %v2674 = vrot.slane %v2672, 7
      %v2675 = vrot.slane %v2674, 1
      %v2677 = vshll.u32 %v984, 16
      %v2679 = vsel %vm2297, %v2675, %v2677
      %v2680 = vshrl.u32 %v984, 16
      %v2682 = vrot.slane %v2680, 7
      %v2683 = vrot.slane %v2682, 1
      %v2685 = vshll.u32 %v986, 16
      %v2687 = vsel %vm2297, %v2683, %v2685
      %v2688 = vshrl.u32 %v986, 16
      %v2690 = vrot.slane %v2688, 7
      %v2691 = vrot.slane %v2690, 1
      %v2693 = vshll.u32 %v969, 16
      %v2695 = vsel %vm2297, %v2691, %v2693
      %v2696 = vshrl.u32 %v969, 16
      %v2698 = vrot.slane %v2696, 7
      %v2699 = vrot.slane %v2698, 1
      %v2701 = vshll.u32 %v983, 16
      %v2703 = vsel %vm2297, %v2699, %v2701
      %v2704 = vshrl.u32 %v983, 16
      %v2706 = vrot.slane %v2704, 7
      %v2707 = vrot.slane %v2706, 1
      %v2709 = vshll.u32 %v985, 16
      %v2711 = vsel %vm2297, %v2707, %v2709
      %v2712 = vshrl.u32 %v985, 16
      %v2714 = vrot.slane %v2712, 7
      %v2715 = vrot.slane %v2714, 1
      %v2717 = vshll.u32 %v987, 16
      %v2719 = vsel %vm2297, %v2715, %v2717
      %v2720 = vshrl.u32 %v987, 16
      %v2722 = vrot.slane %v2720, 7
      %v2723 = vrot.slane %v2722, 1
      %v2725 = vshll.u32 %v1010, 16
      %v2727 = vsel %vm2297, %v2723, %v2725
      %v2728 = vshrl.u32 %v1010, 16
      %v2730 = vrot.slane %v2728, 7
      %v2731 = vrot.slane %v2730, 1
      %v2733 = vshll.u32 %v2186, 16
      %v2735 = vsel %vm2297, %v2731, %v2733
      %v2737 = vshrl.u32 %v1052, 16
      %v2739 = vrot.slane %v2737, 7
      %v2740 = vrot.slane %v2739, 1
      %v2742 = vshll.u32 %v1066, 16
      %v2744 = vsel %vm2297, %v2740, %v2742
      %v2745 = vshrl.u32 %v1066, 16
      %v2747 = vrot.slane %v2745, 7
      %v2748 = vrot.slane %v2747, 1
      %v2750 = vshll.u32 %v1074, 16
      %v2752 = vsel %vm2297, %v2748, %v2750
      %v2753 = vshrl.u32 %v1074, 16
      %v2755 = vrot.slane %v2753, 7
      %v2756 = vrot.slane %v2755, 1
      %v2758 = vshll.u32 %v1076, 16
      %v2760 = vsel %vm2297, %v2756, %v2758
      %v2761 = vshrl.u32 %v1076, 16
      %v2763 = vrot.slane %v2761, 7
      %v2764 = vrot.slane %v2763, 1
      %v2766 = vshll.u32 %v1059, 16
      %v2768 = vsel %vm2297, %v2764, %v2766
      %v2769 = vshrl.u32 %v1059, 16
      %v2771 = vrot.slane %v2769, 7
      %v2772 = vrot.slane %v2771, 1
      %v2774 = vshll.u32 %v1073, 16
      %v2776 = vsel %vm2297, %v2772, %v2774
      %v2777 = vshrl.u32 %v1073, 16
      %v2779 = vrot.slane %v2777, 7
      %v2780 = vrot.slane %v2779, 1
      %v2782 = vshll.u32 %v1075, 16
      %v2784 = vsel %vm2297, %v2780, %v2782
      %v2785 = vshrl.u32 %v1075, 16
      %v2787 = vrot.slane %v2785, 7
      %v2788 = vrot.slane %v2787, 1
      %v2790 = vshll.u32 %v1077, 16
      %v2792 = vsel %vm2297, %v2788, %v2790
      %v2793 = vshrl.u32 %v1077, 16
      %v2795 = vrot.slane %v2793, 7
      %v2796 = vrot.slane %v2795, 1
      %v2798 = vshll.u32 %v1100, 16
      %v2800 = vsel %vm2297, %v2796, %v2798
      %v2801 = vshrl.u32 %v1100, 16
      %v2803 = vrot.slane %v2801, 7
      %v2804 = vrot.slane %v2803, 1
      %v2806 = vshll.u32 %v2194, 16
      %v2808 = vsel %vm2297, %v2804, %v2806
      %v2810 = vshrl.u32 %v1142, 16
      %v2812 = vrot.slane %v2810, 7
      %v2813 = vrot.slane %v2812, 1
      %v2815 = vshll.u32 %v1156, 16
      %v2817 = vsel %vm2297, %v2813, %v2815
      %v2818 = vshrl.u32 %v1156, 16
      %v2820 = vrot.slane %v2818, 7
      %v2821 = vrot.slane %v2820, 1
      %v2823 = vshll.u32 %v1164, 16
      %v2825 = vsel %vm2297, %v2821, %v2823
      %v2826 = vshrl.u32 %v1164, 16
      %v2828 = vrot.slane %v2826, 7
      %v2829 = vrot.slane %v2828, 1
      %v2831 = vshll.u32 %v1166, 16
      %v2833 = vsel %vm2297, %v2829, %v2831
      %v2834 = vshrl.u32 %v1166, 16
      %v2836 = vrot.slane %v2834, 7
      %v2837 = vrot.slane %v2836, 1
      %v2839 = vshll.u32 %v1149, 16
      %v2841 = vsel %vm2297, %v2837, %v2839
      %v2842 = vshrl.u32 %v1149, 16
      %v2844 = vrot.slane %v2842, 7
      %v2845 = vrot.slane %v2844, 1
      %v2847 = vshll.u32 %v1163, 16
      %v2849 = vsel %vm2297, %v2845, %v2847
      %v2850 = vshrl.u32 %v1163, 16
      %v2852 = vrot.slane %v2850, 7
      %v2853 = vrot.slane %v2852, 1
      %v2855 = vshll.u32 %v1165, 16
      %v2857 = vsel %vm2297, %v2853, %v2855
      %v2858 = vshrl.u32 %v1165, 16
      %v2860 = vrot.slane %v2858, 7
      %v2861 = vrot.slane %v2860, 1
      %v2863 = vshll.u32 %v1167, 16
      %v2865 = vsel %vm2297, %v2861, %v2863
      %v2866 = vshrl.u32 %v1167, 16
      %v2868 = vrot.slane %v2866, 7
      %v2869 = vrot.slane %v2868, 1
      %v2871 = vshll.u32 %v1190, 16
      %v2873 = vsel %vm2297, %v2869, %v2871
      %v2874 = vshrl.u32 %v1190, 16
      %v2876 = vrot.slane %v2874, 7
      %v2877 = vrot.slane %v2876, 1
      %v2879 = vshll.u32 %v2202, 16
      %v2881 = vsel %vm2297, %v2877, %v2879
      %v2883 = vshrl.u32 %v1232, 16
      %v2885 = vrot.slane %v2883, 7
      %v2886 = vrot.slane %v2885, 1
      %v2888 = vshll.u32 %v1246, 16
      %v2890 = vsel %vm2297, %v2886, %v2888
      %v2891 = vshrl.u32 %v1246, 16
      %v2893 = vrot.slane %v2891, 7
      %v2894 = vrot.slane %v2893, 1
      %v2896 = vshll.u32 %v1254, 16
      %v2898 = vsel %vm2297, %v2894, %v2896
      %v2899 = vshrl.u32 %v1254, 16
      %v2901 = vrot.slane %v2899, 7
      %v2902 = vrot.slane %v2901, 1
      %v2904 = vshll.u32 %v1256, 16
      %v2906 = vsel %vm2297, %v2902, %v2904
      %v2907 = vshrl.u32 %v1256, 16
      %v2909 = vrot.slane %v2907, 7
      %v2910 = vrot.slane %v2909, 1
      %v2912 = vshll.u32 %v1239, 16
      %v2914 = vsel %vm2297, %v2910, %v2912
      %v2915 = vshrl.u32 %v1239, 16
      %v2917 = vrot.slane %v2915, 7
      %v2918 = vrot.slane %v2917, 1
      %v2920 = vshll.u32 %v1253, 16
      %v2922 = vsel %vm2297, %v2918, %v2920
      %v2923 = vshrl.u32 %v1253, 16
      %v2925 = vrot.slane %v2923, 7
      %v2926 = vrot.slane %v2925, 1
      %v2928 = vshll.u32 %v1255, 16
      %v2930 = vsel %vm2297, %v2926, %v2928
      %v2931 = vshrl.u32 %v1255, 16
      %v2933 = vrot.slane %v2931, 7
      %v2934 = vrot.slane %v2933, 1
      %v2936 = vshll.u32 %v1257, 16
      %v2938 = vsel %vm2297, %v2934, %v2936
      %v2939 = vshrl.u32 %v1257, 16
      %v2941 = vrot.slane %v2939, 7
      %v2942 = vrot.slane %v2941, 1
      %v2944 = vshll.u32 %v1280, 16
      %v2946 = vsel %vm2297, %v2942, %v2944
      %v2947 = vshrl.u32 %v1280, 16
      %v2949 = vrot.slane %v2947, 7
      %v2950 = vrot.slane %v2949, 1
      %v2952 = vshll.u32 %v2210, 16
      %v2954 = vsel %vm2297, %v2950, %v2952
      %v2956 = vshrl.u32 %v1322, 16
      %v2958 = vrot.slane %v2956, 7
      %v2959 = vrot.slane %v2958, 1
      %v2961 = vshll.u32 %v1336, 16
      %v2963 = vsel %vm2297, %v2959, %v2961
      %v2964 = vshrl.u32 %v1336, 16
      %v2966 = vrot.slane %v2964, 7
      %v2967 = vrot.slane %v2966, 1
      %v2969 = vshll.u32 %v1344, 16
      %v2971 = vsel %vm2297, %v2967, %v2969
      %v2972 = vshrl.u32 %v1344, 16
      %v2974 = vrot.slane %v2972, 7
      %v2975 = vrot.slane %v2974, 1
      %v2977 = vshll.u32 %v1346, 16
      %v2979 = vsel %vm2297, %v2975, %v2977
      %v2980 = vshrl.u32 %v1346, 16
      %v2982 = vrot.slane %v2980, 7
      %v2983 = vrot.slane %v2982, 1
      %v2985 = vshll.u32 %v1329, 16
      %v2987 = vsel %vm2297, %v2983, %v2985
      %v2988 = vshrl.u32 %v1329, 16
      %v2990 = vrot.slane %v2988, 7
      %v2991 = vrot.slane %v2990, 1
      %v2993 = vshll.u32 %v1343, 16
      %v2995 = vsel %vm2297, %v2991, %v2993
      %v2996 = vshrl.u32 %v1343, 16
      %v2998 = vrot.slane %v2996, 7
      %v2999 = vrot.slane %v2998, 1
      %v3001 = vshll.u32 %v1345, 16
      %v3003 = vsel %vm2297, %v2999, %v3001
      %v3004 = vshrl.u32 %v1345, 16
      %v3006 = vrot.slane %v3004, 7
      %v3007 = vrot.slane %v3006, 1
      %v3009 = vshll.u32 %v1347, 16
      %v3011 = vsel %vm2297, %v3007, %v3009
      %v3012 = vshrl.u32 %v1347, 16
      %v3014 = vrot.slane %v3012, 7
      %v3015 = vrot.slane %v3014, 1
      %v3017 = vshll.u32 %v1370, 16
      %v3019 = vsel %vm2297, %v3015, %v3017
      %v3020 = vshrl.u32 %v1370, 16
      %v3022 = vrot.slane %v3020, 7
      %v3023 = vrot.slane %v3022, 1
      %v3025 = vshll.u32 %v2218, 16
      %v3027 = vsel %vm2297, %v3023, %v3025
      %v3029 = vshrl.u32 %v1412, 16
      %v3031 = vrot.slane %v3029, 7
      %v3032 = vrot.slane %v3031, 1
      %v3034 = vshll.u32 %v1426, 16
      %v3036 = vsel %vm2297, %v3032, %v3034
      %v3037 = vshrl.u32 %v1426, 16
      %v3039 = vrot.slane %v3037, 7
      %v3040 = vrot.slane %v3039, 1
      %v3042 = vshll.u32 %v1434, 16
      %v3044 = vsel %vm2297, %v3040, %v3042
      %v3045 = vshrl.u32 %v1434, 16
      %v3047 = vrot.slane %v3045, 7
      %v3048 = vrot.slane %v3047, 1
      %v3050 = vshll.u32 %v1436, 16
      %v3052 = vsel %vm2297, %v3048, %v3050
      %v3053 = vshrl.u32 %v1436, 16
      %v3055 = vrot.slane %v3053, 7
      %v3056 = vrot.slane %v3055, 1
      %v3058 = vshll.u32 %v1419, 16
      %v3060 = vsel %vm2297, %v3056, %v3058
      %v3061 = vshrl.u32 %v1419, 16
      %v3063 = vrot.slane %v3061, 7
      %v3064 = vrot.slane %v3063, 1
      %v3066 = vshll.u32 %v1433, 16
      %v3068 = vsel %vm2297, %v3064, %v3066
      %v3069 = vshrl.u32 %v1433, 16
      %v3071 = vrot.slane %v3069, 7
      %v3072 = vrot.slane %v3071, 1
      %v3074 = vshll.u32 %v1435, 16
      %v3076 = vsel %vm2297, %v3072, %v3074
      %v3077 = vshrl.u32 %v1435, 16
      %v3079 = vrot.slane %v3077, 7
      %v3080 = vrot.slane %v3079, 1
      %v3082 = vshll.u32 %v1437, 16
      %v3084 = vsel %vm2297, %v3080, %v3082
      %v3085 = vshrl.u32 %v1437, 16
      %v3087 = vrot.slane %v3085, 7
      %v3088 = vrot.slane %v3087, 1
      %v3090 = vshll.u32 %v1460, 16
      %v3092 = vsel %vm2297, %v3088, %v3090
      %v3093 = vshrl.u32 %v1460, 16
      %v3095 = vrot.slane %v3093, 7
      %v3096 = vrot.slane %v3095, 1
      %v3098 = vshll.u32 %v2226, 16
      %v3100 = vsel %vm2297, %v3096, %v3098
      %v3102 = vshrl.u32 %v1502, 16
      %v3104 = vrot.slane %v3102, 7
      %v3105 = vrot.slane %v3104, 1
      %v3107 = vshll.u32 %v1516, 16
      %v3109 = vsel %vm2297, %v3105, %v3107
      %v3110 = vshrl.u32 %v1516, 16
      %v3112 = vrot.slane %v3110, 7
      %v3113 = vrot.slane %v3112, 1
      %v3115 = vshll.u32 %v1524, 16
      %v3117 = vsel %vm2297, %v3113, %v3115
      %v3118 = vshrl.u32 %v1524, 16
      %v3120 = vrot.slane %v3118, 7
      %v3121 = vrot.slane %v3120, 1
      %v3123 = vshll.u32 %v1526, 16
      %v3125 = vsel %vm2297, %v3121, %v3123
      %v3126 = vshrl.u32 %v1526, 16
      %v3128 = vrot.slane %v3126, 7
      %v3129 = vrot.slane %v3128, 1
      %v3131 = vshll.u32 %v1509, 16
      %v3133 = vsel %vm2297, %v3129, %v3131
      %v3134 = vshrl.u32 %v1509, 16
      %v3136 = vrot.slane %v3134, 7
      %v3137 = vrot.slane %v3136, 1
      %v3139 = vshll.u32 %v1523, 16
      %v3141 = vsel %vm2297, %v3137, %v3139
      %v3142 = vshrl.u32 %v1523, 16
      %v3144 = vrot.slane %v3142, 7
      %v3145 = vrot.slane %v3144, 1
      %v3147 = vshll.u32 %v1525, 16
      %v3149 = vsel %vm2297, %v3145, %v3147
      %v3150 = vshrl.u32 %v1525, 16
      %v3152 = vrot.slane %v3150, 7
      %v3153 = vrot.slane %v3152, 1
      %v3155 = vshll.u32 %v1527, 16
      %v3157 = vsel %vm2297, %v3153, %v3155
      %v3158 = vshrl.u32 %v1527, 16
      %v3160 = vrot.slane %v3158, 7
      %v3161 = vrot.slane %v3160, 1
      %v3163 = vshll.u32 %v1550, 16
      %v3165 = vsel %vm2297, %v3161, %v3163
      %v3166 = vshrl.u32 %v1550, 16
      %v3168 = vrot.slane %v3166, 7
      %v3169 = vrot.slane %v3168, 1
      %v3171 = vshll.u32 %v2234, 16
      %v3173 = vsel %vm2297, %v3169, %v3171
      %v3175 = vshrl.u32 %v1592, 16
      %v3177 = vrot.slane %v3175, 7
      %v3178 = vrot.slane %v3177, 1
      %v3180 = vshll.u32 %v1606, 16
      %v3182 = vsel %vm2297, %v3178, %v3180
      %v3183 = vshrl.u32 %v1606, 16
      %v3185 = vrot.slane %v3183, 7
      %v3186 = vrot.slane %v3185, 1
      %v3188 = vshll.u32 %v1614, 16
      %v3190 = vsel %vm2297, %v3186, %v3188
      %v3191 = vshrl.u32 %v1614, 16
      %v3193 = vrot.slane %v3191, 7
      %v3194 = vrot.slane %v3193, 1
      %v3196 = vshll.u32 %v1616, 16
      %v3198 = vsel %vm2297, %v3194, %v3196
      %v3199 = vshrl.u32 %v1616, 16
      %v3201 = vrot.slane %v3199, 7
      %v3202 = vrot.slane %v3201, 1
      %v3204 = vshll.u32 %v1599, 16
      %v3206 = vsel %vm2297, %v3202, %v3204
      %v3207 = vshrl.u32 %v1599, 16
      %v3209 = vrot.slane %v3207, 7
      %v3210 = vrot.slane %v3209, 1
      %v3212 = vshll.u32 %v1613, 16
      %v3214 = vsel %vm2297, %v3210, %v3212
      %v3215 = vshrl.u32 %v1613, 16
      %v3217 = vrot.slane %v3215, 7
      %v3218 = vrot.slane %v3217, 1
      %v3220 = vshll.u32 %v1615, 16
      %v3222 = vsel %vm2297, %v3218, %v3220
      %v3223 = vshrl.u32 %v1615, 16
      %v3225 = vrot.slane %v3223, 7
      %v3226 = vrot.slane %v3225, 1
      %v3228 = vshll.u32 %v1617, 16
      %v3230 = vsel %vm2297, %v3226, %v3228
      %v3231 = vshrl.u32 %v1617, 16
      %v3233 = vrot.slane %v3231, 7
      %v3234 = vrot.slane %v3233, 1
      %v3236 = vshll.u32 %v1640, 16
      %v3238 = vsel %vm2297, %v3234, %v3236
      %v3239 = vshrl.u32 %v1640, 16
      %v3241 = vrot.slane %v3239, 7
      %v3242 = vrot.slane %v3241, 1
      %v3244 = vshll.u32 %v2242, 16
      %v3246 = vsel %vm2297, %v3242, %v3244
      %v3248 = vshrl.u32 %v1682, 16
      %v3250 = vrot.slane %v3248, 7
      %v3251 = vrot.slane %v3250, 1
      %v3253 = vshll.u32 %v1696, 16
      %v3255 = vsel %vm2297, %v3251, %v3253
      %v3256 = vshrl.u32 %v1696, 16
      %v3258 = vrot.slane %v3256, 7
      %v3259 = vrot.slane %v3258, 1
      %v3261 = vshll.u32 %v1704, 16
      %v3263 = vsel %vm2297, %v3259, %v3261
      %v3264 = vshrl.u32 %v1704, 16
      %v3266 = vrot.slane %v3264, 7
      %v3267 = vrot.slane %v3266, 1
      %v3269 = vshll.u32 %v1706, 16
      %v3271 = vsel %vm2297, %v3267, %v3269
      %v3272 = vshrl.u32 %v1706, 16
      %v3274 = vrot.slane %v3272, 7
      %v3275 = vrot.slane %v3274, 1
      %v3277 = vshll.u32 %v1689, 16
      %v3279 = vsel %vm2297, %v3275, %v3277
      %v3280 = vshrl.u32 %v1689, 16
      %v3282 = vrot.slane %v3280, 7
      %v3283 = vrot.slane %v3282, 1
      %v3285 = vshll.u32 %v1703, 16
      %v3287 = vsel %vm2297, %v3283, %v3285
      %v3288 = vshrl.u32 %v1703, 16
      %v3290 = vrot.slane %v3288, 7
      %v3291 = vrot.slane %v3290, 1
      %v3293 = vshll.u32 %v1705, 16
      %v3295 = vsel %vm2297, %v3291, %v3293
      %v3296 = vshrl.u32 %v1705, 16
      %v3298 = vrot.slane %v3296, 7
      %v3299 = vrot.slane %v3298, 1
      %v3301 = vshll.u32 %v1707, 16
      %v3303 = vsel %vm2297, %v3299, %v3301
      %v3304 = vshrl.u32 %v1707, 16
      %v3306 = vrot.slane %v3304, 7
      %v3307 = vrot.slane %v3306, 1
      %v3309 = vshll.u32 %v1730, 16
      %v3311 = vsel %vm2297, %v3307, %v3309
      %v3312 = vshrl.u32 %v1730, 16
      %v3314 = vrot.slane %v3312, 7
      %v3315 = vrot.slane %v3314, 1
      %v3317 = vshll.u32 %v2250, 16
      %v3319 = vsel %vm2297, %v3315, %v3317
      %v3321 = vshrl.u32 %v1772, 16
      %v3323 = vrot.slane %v3321, 7
      %v3324 = vrot.slane %v3323, 1
      %v3326 = vshll.u32 %v1786, 16
      %v3328 = vsel %vm2297, %v3324, %v3326
      %v3329 = vshrl.u32 %v1786, 16
      %v3331 = vrot.slane %v3329, 7
      %v3332 = vrot.slane %v3331, 1
      %v3334 = vshll.u32 %v1794, 16
      %v3336 = vsel %vm2297, %v3332, %v3334
      %v3337 = vshrl.u32 %v1794, 16
      %v3339 = vrot.slane %v3337, 7
      %v3340 = vrot.slane %v3339, 1
      %v3342 = vshll.u32 %v1796, 16
      %v3344 = vsel %vm2297, %v3340, %v3342
      %v3345 = vshrl.u32 %v1796, 16
      %v3347 = vrot.slane %v3345, 7
      %v3348 = vrot.slane %v3347, 1
      %v3350 = vshll.u32 %v1779, 16
      %v3352 = vsel %vm2297, %v3348, %v3350
      %v3353 = vshrl.u32 %v1779, 16
      %v3355 = vrot.slane %v3353, 7
      %v3356 = vrot.slane %v3355, 1
      %v3358 = vshll.u32 %v1793, 16
      %v3360 = vsel %vm2297, %v3356, %v3358
      %v3361 = vshrl.u32 %v1793, 16
      %v3363 = vrot.slane %v3361, 7
      %v3364 = vrot.slane %v3363, 1
      %v3366 = vshll.u32 %v1795, 16
      %v3368 = vsel %vm2297, %v3364, %v3366
      %v3369 = vshrl.u32 %v1795, 16
      %v3371 = vrot.slane %v3369, 7
      %v3372 = vrot.slane %v3371, 1
      %v3374 = vshll.u32 %v1797, 16
      %v3376 = vsel %vm2297, %v3372, %v3374
      %v3377 = vshrl.u32 %v1797, 16
      %v3379 = vrot.slane %v3377, 7
      %v3380 = vrot.slane %v3379, 1
      %v3382 = vshll.u32 %v1820, 16
      %v3384 = vsel %vm2297, %v3380, %v3382
      %v3385 = vshrl.u32 %v1820, 16
      %v3387 = vrot.slane %v3385, 7
      %v3388 = vrot.slane %v3387, 1
      %v3390 = vshll.u32 %v2258, 16
      %v3392 = vsel %vm2297, %v3388, %v3390
      %v3394 = vshrl.u32 %v1862, 16
      %v3396 = vrot.slane %v3394, 7
      %v3397 = vrot.slane %v3396, 1
      %v3399 = vshll.u32 %v1876, 16
      %v3401 = vsel %vm2297, %v3397, %v3399
      %v3402 = vshrl.u32 %v1876, 16
      %v3404 = vrot.slane %v3402, 7
      %v3405 = vrot.slane %v3404, 1
      %v3407 = vshll.u32 %v1884, 16
      %v3409 = vsel %vm2297, %v3405, %v3407
      %v3410 = vshrl.u32 %v1884, 16
      %v3412 = vrot.slane %v3410, 7
      %v3413 = vrot.slane %v3412, 1
      %v3415 = vshll.u32 %v1886, 16
      %v3417 = vsel %vm2297, %v3413, %v3415
      %v3418 = vshrl.u32 %v1886, 16
      %v3420 = vrot.slane %v3418, 7
      %v3421 = vrot.slane %v3420, 1
      %v3423 = vshll.u32 %v1869, 16
      %v3425 = vsel %vm2297, %v3421, %v3423
      %v3426 = vshrl.u32 %v1869, 16
      %v3428 = vrot.slane %v3426, 7
      %v3429 = vrot.slane %v3428, 1
      %v3431 = vshll.u32 %v1883, 16
      %v3433 = vsel %vm2297, %v3429, %v3431
      %v3434 = vshrl.u32 %v1883, 16
      %v3436 = vrot.slane %v3434, 7
      %v3437 = vrot.slane %v3436, 1
      %v3439 = vshll.u32 %v1885, 16
      %v3441 = vsel %vm2297, %v3437, %v3439
      %v3442 = vshrl.u32 %v1885, 16
      %v3444 = vrot.slane %v3442, 7
      %v3445 = vrot.slane %v3444, 1
      %v3447 = vshll.u32 %v1887, 16
      %v3449 = vsel %vm2297, %v3445, %v3447
      %v3450 = vshrl.u32 %v1887, 16
      %v3452 = vrot.slane %v3450, 7
      %v3453 = vrot.slane %v3452, 1
      %v3455 = vshll.u32 %v1910, 16
      %v3457 = vsel %vm2297, %v3453, %v3455
      %v3458 = vshrl.u32 %v1910, 16
      %v3460 = vrot.slane %v3458, 7
      %v3461 = vrot.slane %v3460, 1
      %v3463 = vshll.u32 %v2266, 16
      %v3465 = vsel %vm2297, %v3461, %v3463
      %v3467 = vshrl.u32 %v1952, 16
      %v3469 = vrot.slane %v3467, 7
      %v3470 = vrot.slane %v3469, 1
      %v3472 = vshll.u32 %v1966, 16
      %v3474 = vsel %vm2297, %v3470, %v3472
      %v3475 = vshrl.u32 %v1966, 16
      %v3477 = vrot.slane %v3475, 7
      %v3478 = vrot.slane %v3477, 1
      %v3480 = vshll.u32 %v1974, 16
      %v3482 = vsel %vm2297, %v3478, %v3480
      %v3483 = vshrl.u32 %v1974, 16
      %v3485 = vrot.slane %v3483, 7
      %v3486 = vrot.slane %v3485, 1
      %v3488 = vshll.u32 %v1976, 16
      %v3490 = vsel %vm2297, %v3486, %v3488
      %v3491 = vshrl.u32 %v1976, 16
      %v3493 = vrot.slane %v3491, 7
      %v3494 = vrot.slane %v3493, 1
      %v3496 = vshll.u32 %v1959, 16
      %v3498 = vsel %vm2297, %v3494, %v3496
      %v3499 = vshrl.u32 %v1959, 16
      %v3501 = vrot.slane %v3499, 7
      %v3502 = vrot.slane %v3501, 1
      %v3504 = vshll.u32 %v1973, 16
      %v3506 = vsel %vm2297, %v3502, %v3504
      %v3507 = vshrl.u32 %v1973, 16
      %v3509 = vrot.slane %v3507, 7
      %v3510 = vrot.slane %v3509, 1
      %v3512 = vshll.u32 %v1975, 16
      %v3514 = vsel %vm2297, %v3510, %v3512
      %v3515 = vshrl.u32 %v1975, 16
      %v3517 = vrot.slane %v3515, 7
      %v3518 = vrot.slane %v3517, 1
      %v3520 = vshll.u32 %v1977, 16
      %v3522 = vsel %vm2297, %v3518, %v3520
      %v3523 = vshrl.u32 %v1977, 16
      %v3525 = vrot.slane %v3523, 7
      %v3526 = vrot.slane %v3525, 1
      %v3528 = vshll.u32 %v2000, 16
      %v3530 = vsel %vm2297, %v3526, %v3528
      %v3531 = vshrl.u32 %v2000, 16
      %v3533 = vrot.slane %v3531, 7
      %v3534 = vrot.slane %v3533, 1
      %v3536 = vshll.u32 %v2274, 16
      %v3538 = vsel %vm2297, %v3534, %v3536
      %v3540 = vshrl.u32 %v2042, 16
      %v3542 = vrot.slane %v3540, 7
      %v3543 = vrot.slane %v3542, 1
      %v3545 = vshll.u32 %v2056, 16
      %v3547 = vsel %vm2297, %v3543, %v3545
      %v3548 = vshrl.u32 %v2056, 16
      %v3550 = vrot.slane %v3548, 7
      %v3551 = vrot.slane %v3550, 1
      %v3553 = vshll.u32 %v2064, 16
      %v3555 = vsel %vm2297, %v3551, %v3553
      %v3556 = vshrl.u32 %v2064, 16
      %v3558 = vrot.slane %v3556, 7
      %v3559 = vrot.slane %v3558, 1
      %v3561 = vshll.u32 %v2066, 16
      %v3563 = vsel %vm2297, %v3559, %v3561
      %v3564 = vshrl.u32 %v2066, 16
      %v3566 = vrot.slane %v3564, 7
      %v3567 = vrot.slane %v3566, 1
      %v3569 = vshll.u32 %v2049, 16
      %v3571 = vsel %vm2297, %v3567, %v3569
      %v3572 = vshrl.u32 %v2049, 16
      %v3574 = vrot.slane %v3572, 7
      %v3575 = vrot.slane %v3574, 1
      %v3577 = vshll.u32 %v2063, 16
      %v3579 = vsel %vm2297, %v3575, %v3577
      %v3580 = vshrl.u32 %v2063, 16
      %v3582 = vrot.slane %v3580, 7
      %v3583 = vrot.slane %v3582, 1
      %v3585 = vshll.u32 %v2065, 16
      %v3587 = vsel %vm2297, %v3583, %v3585
      %v3588 = vshrl.u32 %v2065, 16
      %v3590 = vrot.slane %v3588, 7
      %v3591 = vrot.slane %v3590, 1
      %v3593 = vshll.u32 %v2067, 16
      %v3595 = vsel %vm2297, %v3591, %v3593
      %v3596 = vshrl.u32 %v2067, 16
      %v3598 = vrot.slane %v3596, 7
      %v3599 = vrot.slane %v3598, 1
      %v3601 = vshll.u32 %v2090, 16
      %v3603 = vsel %vm2297, %v3599, %v3601
      %v3604 = vshrl.u32 %v2090, 16
      %v3606 = vrot.slane %v3604, 7
      %v3607 = vrot.slane %v3606, 1
      %v3609 = vshll.u32 %v2282, 16
      %v3611 = vsel %vm2297, %v3607, %v3609
      %s3612 = scalar_lea.vmem %s1, 192
      %v3613 = vld [vmem:[%s3612] sm:$0xf]
      %v3614 = vld [vmem:[%s3612 + $0x4] sm:$0xf]
      %v3615 = vld [vmem:[%s3612 + $0x8] sm:$0xf]
      %v3616 = vld [vmem:[%s3612 + $0xc] sm:$0xf]
      %v3617 = vld [vmem:[%s3612 + $0x10] sm:$0xf]
      %v3618 = vld [vmem:[%s3612 + $0x14] sm:$0xf]
      %v3619 = vld [vmem:[%s3612 + $0x18] sm:$0xf]
      %v3620 = vld [vmem:[%s3612 + $0x1c] sm:$0xf]
      %v3621 = vld [vmem:[%s3612 + $0x20] sm:$0xf]
      %v3622 = vld [vmem:[%s3612 + $0x24] sm:$0xf]
      %v3623 = vld [vmem:[%s3612 + $0x28] sm:$0xf]
      %v3624 = vld [vmem:[%s3612 + $0x2c] sm:$0xf]
      %v3625 = vld [vmem:[%s3612 + $0x30] sm:$0xf]
      %v3626 = vld [vmem:[%s3612 + $0x34] sm:$0xf]
      %v3627 = vld [vmem:[%s3612 + $0x38] sm:$0xf]
      %v3628 = vld [vmem:[%s3612 + $0x3c] sm:$0xf]
      %v3629 = vld [vmem:[%s3612 + $0x40] sm:$0xf]
      %v3630 = vld [vmem:[%s3612 + $0x44] sm:$0xf]
      %v3631 = vld [vmem:[%s3612 + $0x48] sm:$0xf]
      %v3632 = vld [vmem:[%s3612 + $0x4c] sm:$0xf]
      %v3633 = vld [vmem:[%s3612 + $0x50] sm:$0xf]
      %v3634 = vld [vmem:[%s3612 + $0x54] sm:$0xf]
      %v3635 = vld [vmem:[%s3612 + $0x58] sm:$0xf]
      %v3636 = vld [vmem:[%s3612 + $0x5c] sm:$0xf]
      %v3637 = vld [vmem:[%s3612 + $0x60] sm:$0xf]
      %v3638 = vld [vmem:[%s3612 + $0x64] sm:$0xf]
      %v3639 = vld [vmem:[%s3612 + $0x68] sm:$0xf]
      %v3640 = vld [vmem:[%s3612 + $0x6c] sm:$0xf]
      %v3641 = vld [vmem:[%s3612 + $0x70] sm:$0xf]
      %v3642 = vld [vmem:[%s3612 + $0x74] sm:$0xf]
      %v3643 = vld [vmem:[%s3612 + $0x78] sm:$0xf]
      %v3644 = vld [vmem:[%s3612 + $0x7c] sm:$0xf]
      %v3645 = vld [vmem:[%s3612 + $0x80] sm:$0xf]
      %v3646 = vld [vmem:[%s3612 + $0x84] sm:$0xf]
      %v3647 = vld [vmem:[%s3612 + $0x88] sm:$0xf]
      %v3648 = vld [vmem:[%s3612 + $0x8c] sm:$0xf]
      %v3649 = vld [vmem:[%s3612 + $0x90] sm:$0xf]
      %v3650 = vld [vmem:[%s3612 + $0x94] sm:$0xf]
      %v3651 = vld [vmem:[%s3612 + $0x98] sm:$0xf]
      %v3652 = vld [vmem:[%s3612 + $0x9c] sm:$0xf]
      %v3653 = vld [vmem:[%s3612 + $0xa0] sm:$0xf]
      %v3654 = vld [vmem:[%s3612 + $0xa4] sm:$0xf]
      %v3655 = vld [vmem:[%s3612 + $0xa8] sm:$0xf]
      %v3656 = vld [vmem:[%s3612 + $0xac] sm:$0xf]
      %v3657 = vld [vmem:[%s3612 + $0xb0] sm:$0xf]
      %v3658 = vld [vmem:[%s3612 + $0xb4] sm:$0xf]
      %v3659 = vld [vmem:[%s3612 + $0xb8] sm:$0xf]
      %v3660 = vld [vmem:[%s3612 + $0xbc] sm:$0xf]
      %v3661 = vcombine.low %v2306, %v2314
      %v3662 = vcombine.low %v2322, %v2330
      %v3663 = vcombine.low %v2338, %v2346
      %v3664 = vcombine.low %v2354, %v2362
      %v3666 = vunpack.c.l.s4 1966171168
      %v3667 = vunpack.c.0.s8 %v3666
      %v3668 = vlaneseq
      %v3669 = vshrl.u32 %v3668, 7
      %v3670 = vsub.s32 %v3667, %v3669
      %v3671 = vrot.slane %v3661, %v3670
      %v3673 = vunpack.c.l.s4 1966171168
      %v3674 = vunpack.c.0.s8 %v3673
      %v3675 = vlaneseq
      %v3676 = vshrl.u32 %v3675, 7
      %v3677 = vsub.s32 %v3674, %v3676
      %v3678 = vrot.slane %v3662, %v3677
      %v3680 = vunpack.c.l.s4 1966171168
      %v3681 = vunpack.c.0.s8 %v3680
      %v3682 = vlaneseq
      %v3683 = vshrl.u32 %v3682, 7
      %v3684 = vsub.s32 %v3681, %v3683
      %v3685 = vrot.slane %v3663, %v3684
      %v3687 = vunpack.c.l.s4 1966171168
      %v3688 = vunpack.c.0.s8 %v3687
      %v3689 = vlaneseq
      %v3690 = vshrl.u32 %v3689, 7
      %v3691 = vsub.s32 %v3688, %v3690
      %v3692 = vrot.slane %v3664, %v3691
      %v3693 = vcombine.low %v3671, %v3678
      %v3694 = vcombine.high %v3671, %v3678
      %v3695 = vcombine.low %v3685, %v3692
      %v3696 = vcombine.high %v3685, %v3692
      %v3698 = vunpack.c.l.s4 1966171168
      %v3699 = vunpack.c.0.s8 %v3698
      %v3700 = vlaneseq
      %v3701 = vshrl.u32 %v3700, 7
      %v3702 = vsub.s32 %v3699, %v3701
      %v3703 = vrot.slane %v3693, %v3702
      %v3705 = vunpack.c.l.s4 1966171168
      %v3706 = vunpack.c.0.s8 %v3705
      %v3707 = vlaneseq
      %v3708 = vshrl.u32 %v3707, 7
      %v3709 = vsub.s32 %v3706, %v3708
      %v3710 = vrot.slane %v3694, %v3709
      %v3712 = vunpack.c.l.s4 1966171168
      %v3713 = vunpack.c.0.s8 %v3712
      %v3714 = vlaneseq
      %v3715 = vshrl.u32 %v3714, 7
      %v3716 = vsub.s32 %v3713, %v3715
      %v3717 = vrot.slane %v3695, %v3716
      %v3719 = vunpack.c.l.s4 1966171168
      %v3720 = vunpack.c.0.s8 %v3719
      %v3721 = vlaneseq
      %v3722 = vshrl.u32 %v3721, 7
      %v3723 = vsub.s32 %v3720, %v3722
      %v3724 = vrot.slane %v3696, %v3723
      %v3725 = vcombine.low %v3703, %v3717
      %v3726 = vcombine.high %v3703, %v3717
      %v3727 = vcombine.low %v3710, %v3724
      %v3728 = vcombine.low %v2370, %v2379
      %v3729 = vcombine.low %v2387, %v2395
      %v3730 = vcombine.low %v2403, %v2411
      %v3731 = vcombine.low %v2419, %v2427
      %v3733 = vunpack.c.l.s4 1966171168
      %v3734 = vunpack.c.0.s8 %v3733
      %v3735 = vlaneseq
      %v3736 = vshrl.u32 %v3735, 7
      %v3737 = vsub.s32 %v3734, %v3736
      %v3738 = vrot.slane %v3728, %v3737
      %v3740 = vunpack.c.l.s4 1966171168
      %v3741 = vunpack.c.0.s8 %v3740
      %v3742 = vlaneseq
      %v3743 = vshrl.u32 %v3742, 7
      %v3744 = vsub.s32 %v3741, %v3743
      %v3745 = vrot.slane %v3729, %v3744
      %v3747 = vunpack.c.l.s4 1966171168
      %v3748 = vunpack.c.0.s8 %v3747
      %v3749 = vlaneseq
      %v3750 = vshrl.u32 %v3749, 7
      %v3751 = vsub.s32 %v3748, %v3750
      %v3752 = vrot.slane %v3730, %v3751
      %v3754 = vunpack.c.l.s4 1966171168
      %v3755 = vunpack.c.0.s8 %v3754
      %v3756 = vlaneseq
      %v3757 = vshrl.u32 %v3756, 7
      %v3758 = vsub.s32 %v3755, %v3757
      %v3759 = vrot.slane %v3731, %v3758
      %v3760 = vcombine.low %v3738, %v3745
      %v3761 = vcombine.high %v3738, %v3745
      %v3762 = vcombine.low %v3752, %v3759
      %v3763 = vcombine.high %v3752, %v3759
      %v3765 = vunpack.c.l.s4 1966171168
      %v3766 = vunpack.c.0.s8 %v3765
      %v3767 = vlaneseq
      %v3768 = vshrl.u32 %v3767, 7
      %v3769 = vsub.s32 %v3766, %v3768
      %v3770 = vrot.slane %v3760, %v3769
      %v3772 = vunpack.c.l.s4 1966171168
      %v3773 = vunpack.c.0.s8 %v3772
      %v3774 = vlaneseq
      %v3775 = vshrl.u32 %v3774, 7
      %v3776 = vsub.s32 %v3773, %v3775
      %v3777 = vrot.slane %v3761, %v3776
      %v3779 = vunpack.c.l.s4 1966171168
      %v3780 = vunpack.c.0.s8 %v3779
      %v3781 = vlaneseq
      %v3782 = vshrl.u32 %v3781, 7
      %v3783 = vsub.s32 %v3780, %v3782
      %v3784 = vrot.slane %v3762, %v3783
      %v3786 = vunpack.c.l.s4 1966171168
      %v3787 = vunpack.c.0.s8 %v3786
      %v3788 = vlaneseq
      %v3789 = vshrl.u32 %v3788, 7
      %v3790 = vsub.s32 %v3787, %v3789
      %v3791 = vrot.slane %v3763, %v3790
      %v3792 = vcombine.low %v3770, %v3784
      %v3793 = vcombine.high %v3770, %v3784
      %v3794 = vcombine.low %v3777, %v3791
      %v3795 = vcombine.low %v2435, %v2443
      %v3796 = vcombine.low %v2452, %v2460
      %v3797 = vcombine.low %v2468, %v2476
      %v3798 = vcombine.low %v2484, %v2492
      %v3800 = vunpack.c.l.s4 1966171168
      %v3801 = vunpack.c.0.s8 %v3800
      %v3802 = vlaneseq
      %v3803 = vshrl.u32 %v3802, 7
      %v3804 = vsub.s32 %v3801, %v3803
      %v3805 = vrot.slane %v3795, %v3804
      %v3807 = vunpack.c.l.s4 1966171168
      %v3808 = vunpack.c.0.s8 %v3807
      %v3809 = vlaneseq
      %v3810 = vshrl.u32 %v3809, 7
      %v3811 = vsub.s32 %v3808, %v3810
      %v3812 = vrot.slane %v3796, %v3811
      %v3814 = vunpack.c.l.s4 1966171168
      %v3815 = vunpack.c.0.s8 %v3814
      %v3816 = vlaneseq
      %v3817 = vshrl.u32 %v3816, 7
      %v3818 = vsub.s32 %v3815, %v3817
      %v3819 = vrot.slane %v3797, %v3818
      %v3821 = vunpack.c.l.s4 1966171168
      %v3822 = vunpack.c.0.s8 %v3821
      %v3823 = vlaneseq
      %v3824 = vshrl.u32 %v3823, 7
      %v3825 = vsub.s32 %v3822, %v3824
      %v3826 = vrot.slane %v3798, %v3825
      %v3827 = vcombine.low %v3805, %v3812
      %v3828 = vcombine.high %v3805, %v3812
      %v3829 = vcombine.low %v3819, %v3826
      %v3830 = vcombine.high %v3819, %v3826
      %v3832 = vunpack.c.l.s4 1966171168
      %v3833 = vunpack.c.0.s8 %v3832
      %v3834 = vlaneseq
      %v3835 = vshrl.u32 %v3834, 7
      %v3836 = vsub.s32 %v3833, %v3835
      %v3837 = vrot.slane %v3827, %v3836
      %v3839 = vunpack.c.l.s4 1966171168
      %v3840 = vunpack.c.0.s8 %v3839
      %v3841 = vlaneseq
      %v3842 = vshrl.u32 %v3841, 7
      %v3843 = vsub.s32 %v3840, %v3842
      %v3844 = vrot.slane %v3828, %v3843
      %v3846 = vunpack.c.l.s4 1966171168
      %v3847 = vunpack.c.0.s8 %v3846
      %v3848 = vlaneseq
      %v3849 = vshrl.u32 %v3848, 7
      %v3850 = vsub.s32 %v3847, %v3849
      %v3851 = vrot.slane %v3829, %v3850
      %v3853 = vunpack.c.l.s4 1966171168
      %v3854 = vunpack.c.0.s8 %v3853
      %v3855 = vlaneseq
      %v3856 = vshrl.u32 %v3855, 7
      %v3857 = vsub.s32 %v3854, %v3856
      %v3858 = vrot.slane %v3830, %v3857
      %v3859 = vcombine.low %v3837, %v3851
      %v3860 = vcombine.high %v3837, %v3851
      %v3861 = vcombine.low %v3844, %v3858
      %v3862 = vcombine.low %v2500, %v2508
      %v3863 = vcombine.low %v2516, %v2525
      %v3864 = vcombine.low %v2533, %v2541
      %v3865 = vcombine.low %v2549, %v2557
      %v3867 = vunpack.c.l.s4 1966171168
      %v3868 = vunpack.c.0.s8 %v3867
      %v3869 = vlaneseq
      %v3870 = vshrl.u32 %v3869, 7
      %v3871 = vsub.s32 %v3868, %v3870
      %v3872 = vrot.slane %v3862, %v3871
      %v3874 = vunpack.c.l.s4 1966171168
      %v3875 = vunpack.c.0.s8 %v3874
      %v3876 = vlaneseq
      %v3877 = vshrl.u32 %v3876, 7
      %v3878 = vsub.s32 %v3875, %v3877
      %v3879 = vrot.slane %v3863, %v3878
      %v3881 = vunpack.c.l.s4 1966171168
      %v3882 = vunpack.c.0.s8 %v3881
      %v3883 = vlaneseq
      %v3884 = vshrl.u32 %v3883, 7
      %v3885 = vsub.s32 %v3882, %v3884
      %v3886 = vrot.slane %v3864, %v3885
      %v3888 = vunpack.c.l.s4 1966171168
      %v3889 = vunpack.c.0.s8 %v3888
      %v3890 = vlaneseq
      %v3891 = vshrl.u32 %v3890, 7
      %v3892 = vsub.s32 %v3889, %v3891
      %v3893 = vrot.slane %v3865, %v3892
      %v3894 = vcombine.low %v3872, %v3879
      %v3895 = vcombine.high %v3872, %v3879
      %v3896 = vcombine.low %v3886, %v3893
      %v3897 = vcombine.high %v3886, %v3893
      %v3899 = vunpack.c.l.s4 1966171168
      %v3900 = vunpack.c.0.s8 %v3899
      %v3901 = vlaneseq
      %v3902 = vshrl.u32 %v3901, 7
      %v3903 = vsub.s32 %v3900, %v3902
      %v3904 = vrot.slane %v3894, %v3903
      %v3906 = vunpack.c.l.s4 1966171168
      %v3907 = vunpack.c.0.s8 %v3906
      %v3908 = vlaneseq
      %v3909 = vshrl.u32 %v3908, 7
      %v3910 = vsub.s32 %v3907, %v3909
      %v3911 = vrot.slane %v3895, %v3910
      %v3913 = vunpack.c.l.s4 1966171168
      %v3914 = vunpack.c.0.s8 %v3913
      %v3915 = vlaneseq
      %v3916 = vshrl.u32 %v3915, 7
      %v3917 = vsub.s32 %v3914, %v3916
      %v3918 = vrot.slane %v3896, %v3917
      %v3920 = vunpack.c.l.s4 1966171168
      %v3921 = vunpack.c.0.s8 %v3920
      %v3922 = vlaneseq
      %v3923 = vshrl.u32 %v3922, 7
      %v3924 = vsub.s32 %v3921, %v3923
      %v3925 = vrot.slane %v3897, %v3924
      %v3926 = vcombine.low %v3904, %v3918
      %v3927 = vcombine.high %v3904, %v3918
      %v3928 = vcombine.low %v3911, %v3925
      %v3929 = vcombine.low %v2565, %v2573
      %v3930 = vcombine.low %v2581, %v2589
      %v3931 = vcombine.low %v2598, %v2606
      %v3932 = vcombine.low %v2614, %v2622
      %v3934 = vunpack.c.l.s4 1966171168
      %v3935 = vunpack.c.0.s8 %v3934
      %v3936 = vlaneseq
      %v3937 = vshrl.u32 %v3936, 7
      %v3938 = vsub.s32 %v3935, %v3937
      %v3939 = vrot.slane %v3929, %v3938
      %v3941 = vunpack.c.l.s4 1966171168
      %v3942 = vunpack.c.0.s8 %v3941
      %v3943 = vlaneseq
      %v3944 = vshrl.u32 %v3943, 7
      %v3945 = vsub.s32 %v3942, %v3944
      %v3946 = vrot.slane %v3930, %v3945
      %v3948 = vunpack.c.l.s4 1966171168
      %v3949 = vunpack.c.0.s8 %v3948
      %v3950 = vlaneseq
      %v3951 = vshrl.u32 %v3950, 7
      %v3952 = vsub.s32 %v3949, %v3951
      %v3953 = vrot.slane %v3931, %v3952
      %v3955 = vunpack.c.l.s4 1966171168
      %v3956 = vunpack.c.0.s8 %v3955
      %v3957 = vlaneseq
      %v3958 = vshrl.u32 %v3957, 7
      %v3959 = vsub.s32 %v3956, %v3958
      %v3960 = vrot.slane %v3932, %v3959
      %v3961 = vcombine.low %v3939, %v3946
      %v3962 = vcombine.high %v3939, %v3946
      %v3963 = vcombine.low %v3953, %v3960
      %v3964 = vcombine.high %v3953, %v3960
      %v3966 = vunpack.c.l.s4 1966171168
      %v3967 = vunpack.c.0.s8 %v3966
      %v3968 = vlaneseq
      %v3969 = vshrl.u32 %v3968, 7
      %v3970 = vsub.s32 %v3967, %v3969
      %v3971 = vrot.slane %v3961, %v3970
      %v3973 = vunpack.c.l.s4 1966171168
      %v3974 = vunpack.c.0.s8 %v3973
      %v3975 = vlaneseq
      %v3976 = vshrl.u32 %v3975, 7
      %v3977 = vsub.s32 %v3974, %v3976
      %v3978 = vrot.slane %v3962, %v3977
      %v3980 = vunpack.c.l.s4 1966171168
      %v3981 = vunpack.c.0.s8 %v3980
      %v3982 = vlaneseq
      %v3983 = vshrl.u32 %v3982, 7
      %v3984 = vsub.s32 %v3981, %v3983
      %v3985 = vrot.slane %v3963, %v3984
      %v3987 = vunpack.c.l.s4 1966171168
      %v3988 = vunpack.c.0.s8 %v3987
      %v3989 = vlaneseq
      %v3990 = vshrl.u32 %v3989, 7
      %v3991 = vsub.s32 %v3988, %v3990
      %v3992 = vrot.slane %v3964, %v3991
      %v3993 = vcombine.low %v3971, %v3985
      %v3994 = vcombine.high %v3971, %v3985
      %v3995 = vcombine.low %v3978, %v3992
      %v3996 = vcombine.low %v2630, %v2638
      %v3997 = vcombine.low %v2646, %v2654
      %v3998 = vcombine.low %v2662, %v2671
      %v3999 = vcombine.low %v2679, %v2687
      %v4001 = vunpack.c.l.s4 1966171168
      %v4002 = vunpack.c.0.s8 %v4001
      %v4003 = vlaneseq
      %v4004 = vshrl.u32 %v4003, 7
      %v4005 = vsub.s32 %v4002, %v4004
      %v4006 = vrot.slane %v3996, %v4005
      %v4008 = vunpack.c.l.s4 1966171168
      %v4009 = vunpack.c.0.s8 %v4008
      %v4010 = vlaneseq
      %v4011 = vshrl.u32 %v4010, 7
      %v4012 = vsub.s32 %v4009, %v4011
      %v4013 = vrot.slane %v3997, %v4012
      %v4015 = vunpack.c.l.s4 1966171168
      %v4016 = vunpack.c.0.s8 %v4015
      %v4017 = vlaneseq
      %v4018 = vshrl.u32 %v4017, 7
      %v4019 = vsub.s32 %v4016, %v4018
      %v4020 = vrot.slane %v3998, %v4019
      %v4022 = vunpack.c.l.s4 1966171168
      %v4023 = vunpack.c.0.s8 %v4022
      %v4024 = vlaneseq
      %v4025 = vshrl.u32 %v4024, 7
      %v4026 = vsub.s32 %v4023, %v4025
      %v4027 = vrot.slane %v3999, %v4026
      %v4028 = vcombine.low %v4006, %v4013
      %v4029 = vcombine.high %v4006, %v4013
      %v4030 = vcombine.low %v4020, %v4027
      %v4031 = vcombine.high %v4020, %v4027
      %v4033 = vunpack.c.l.s4 1966171168
      %v4034 = vunpack.c.0.s8 %v4033
      %v4035 = vlaneseq
      %v4036 = vshrl.u32 %v4035, 7
      %v4037 = vsub.s32 %v4034, %v4036
      %v4038 = vrot.slane %v4028, %v4037
      %v4040 = vunpack.c.l.s4 1966171168
      %v4041 = vunpack.c.0.s8 %v4040
      %v4042 = vlaneseq
      %v4043 = vshrl.u32 %v4042, 7
      %v4044 = vsub.s32 %v4041, %v4043
      %v4045 = vrot.slane %v4029, %v4044
      %v4047 = vunpack.c.l.s4 1966171168
      %v4048 = vunpack.c.0.s8 %v4047
      %v4049 = vlaneseq
      %v4050 = vshrl.u32 %v4049, 7
      %v4051 = vsub.s32 %v4048, %v4050
      %v4052 = vrot.slane %v4030, %v4051
      %v4054 = vunpack.c.l.s4 1966171168
      %v4055 = vunpack.c.0.s8 %v4054
      %v4056 = vlaneseq
      %v4057 = vshrl.u32 %v4056, 7
      %v4058 = vsub.s32 %v4055, %v4057
      %v4059 = vrot.slane %v4031, %v4058
      %v4060 = vcombine.low %v4038, %v4052
      %v4061 = vcombine.high %v4038, %v4052
      %v4062 = vcombine.low %v4045, %v4059
      %v4063 = vcombine.low %v2695, %v2703
      %v4064 = vcombine.low %v2711, %v2719
      %v4065 = vcombine.low %v2727, %v2735
      %v4066 = vcombine.low %v2744, %v2752
      %v4068 = vunpack.c.l.s4 1966171168
      %v4069 = vunpack.c.0.s8 %v4068
      %v4070 = vlaneseq
      %v4071 = vshrl.u32 %v4070, 7
      %v4072 = vsub.s32 %v4069, %v4071
      %v4073 = vrot.slane %v4063, %v4072
      %v4075 = vunpack.c.l.s4 1966171168
      %v4076 = vunpack.c.0.s8 %v4075
      %v4077 = vlaneseq
      %v4078 = vshrl.u32 %v4077, 7
      %v4079 = vsub.s32 %v4076, %v4078
      %v4080 = vrot.slane %v4064, %v4079
      %v4082 = vunpack.c.l.s4 1966171168
      %v4083 = vunpack.c.0.s8 %v4082
      %v4084 = vlaneseq
      %v4085 = vshrl.u32 %v4084, 7
      %v4086 = vsub.s32 %v4083, %v4085
      %v4087 = vrot.slane %v4065, %v4086
      %v4089 = vunpack.c.l.s4 1966171168
      %v4090 = vunpack.c.0.s8 %v4089
      %v4091 = vlaneseq
      %v4092 = vshrl.u32 %v4091, 7
      %v4093 = vsub.s32 %v4090, %v4092
      %v4094 = vrot.slane %v4066, %v4093
      %v4095 = vcombine.low %v4073, %v4080
      %v4096 = vcombine.high %v4073, %v4080
      %v4097 = vcombine.low %v4087, %v4094
      %v4098 = vcombine.high %v4087, %v4094
      %v4100 = vunpack.c.l.s4 1966171168
      %v4101 = vunpack.c.0.s8 %v4100
      %v4102 = vlaneseq
      %v4103 = vshrl.u32 %v4102, 7
      %v4104 = vsub.s32 %v4101, %v4103
      %v4105 = vrot.slane %v4095, %v4104
      %v4107 = vunpack.c.l.s4 1966171168
      %v4108 = vunpack.c.0.s8 %v4107
      %v4109 = vlaneseq
      %v4110 = vshrl.u32 %v4109, 7
      %v4111 = vsub.s32 %v4108, %v4110
      %v4112 = vrot.slane %v4096, %v4111
      %v4114 = vunpack.c.l.s4 1966171168
      %v4115 = vunpack.c.0.s8 %v4114
      %v4116 = vlaneseq
      %v4117 = vshrl.u32 %v4116, 7
      %v4118 = vsub.s32 %v4115, %v4117
      %v4119 = vrot.slane %v4097, %v4118
      %v4121 = vunpack.c.l.s4 1966171168
      %v4122 = vunpack.c.0.s8 %v4121
      %v4123 = vlaneseq
      %v4124 = vshrl.u32 %v4123, 7
      %v4125 = vsub.s32 %v4122, %v4124
      %v4126 = vrot.slane %v4098, %v4125
      %v4127 = vcombine.low %v4105, %v4119
      %v4128 = vcombine.high %v4105, %v4119
      %v4129 = vcombine.low %v4112, %v4126
      %v4130 = vcombine.low %v2760, %v2768
      %v4131 = vcombine.low %v2776, %v2784
      %v4132 = vcombine.low %v2792, %v2800
      %v4133 = vcombine.low %v2808, %v2817
      %v4135 = vunpack.c.l.s4 1966171168
      %v4136 = vunpack.c.0.s8 %v4135
      %v4137 = vlaneseq
      %v4138 = vshrl.u32 %v4137, 7
      %v4139 = vsub.s32 %v4136, %v4138
      %v4140 = vrot.slane %v4130, %v4139
      %v4142 = vunpack.c.l.s4 1966171168
      %v4143 = vunpack.c.0.s8 %v4142
      %v4144 = vlaneseq
      %v4145 = vshrl.u32 %v4144, 7
      %v4146 = vsub.s32 %v4143, %v4145
      %v4147 = vrot.slane %v4131, %v4146
      %v4149 = vunpack.c.l.s4 1966171168
      %v4150 = vunpack.c.0.s8 %v4149
      %v4151 = vlaneseq
      %v4152 = vshrl.u32 %v4151, 7
      %v4153 = vsub.s32 %v4150, %v4152
      %v4154 = vrot.slane %v4132, %v4153
      %v4156 = vunpack.c.l.s4 1966171168
      %v4157 = vunpack.c.0.s8 %v4156
      %v4158 = vlaneseq
      %v4159 = vshrl.u32 %v4158, 7
      %v4160 = vsub.s32 %v4157, %v4159
      %v4161 = vrot.slane %v4133, %v4160
      %v4162 = vcombine.low %v4140, %v4147
      %v4163 = vcombine.high %v4140, %v4147
      %v4164 = vcombine.low %v4154, %v4161
      %v4165 = vcombine.high %v4154, %v4161
      %v4167 = vunpack.c.l.s4 1966171168
      %v4168 = vunpack.c.0.s8 %v4167
      %v4169 = vlaneseq
      %v4170 = vshrl.u32 %v4169, 7
      %v4171 = vsub.s32 %v4168, %v4170
      %v4172 = vrot.slane %v4162, %v4171
      %v4174 = vunpack.c.l.s4 1966171168
      %v4175 = vunpack.c.0.s8 %v4174
      %v4176 = vlaneseq
      %v4177 = vshrl.u32 %v4176, 7
      %v4178 = vsub.s32 %v4175, %v4177
      %v4179 = vrot.slane %v4163, %v4178
      %v4181 = vunpack.c.l.s4 1966171168
      %v4182 = vunpack.c.0.s8 %v4181
      %v4183 = vlaneseq
      %v4184 = vshrl.u32 %v4183, 7
      %v4185 = vsub.s32 %v4182, %v4184
      %v4186 = vrot.slane %v4164, %v4185
      %v4188 = vunpack.c.l.s4 1966171168
      %v4189 = vunpack.c.0.s8 %v4188
      %v4190 = vlaneseq
      %v4191 = vshrl.u32 %v4190, 7
      %v4192 = vsub.s32 %v4189, %v4191
      %v4193 = vrot.slane %v4165, %v4192
      %v4194 = vcombine.low %v4172, %v4186
      %v4195 = vcombine.high %v4172, %v4186
      %v4196 = vcombine.low %v4179, %v4193
      %v4197 = vcombine.low %v2825, %v2833
      %v4198 = vcombine.low %v2841, %v2849
      %v4199 = vcombine.low %v2857, %v2865
      %v4200 = vcombine.low %v2873, %v2881
      %v4202 = vunpack.c.l.s4 1966171168
      %v4203 = vunpack.c.0.s8 %v4202
      %v4204 = vlaneseq
      %v4205 = vshrl.u32 %v4204, 7
      %v4206 = vsub.s32 %v4203, %v4205
      %v4207 = vrot.slane %v4197, %v4206
      %v4209 = vunpack.c.l.s4 1966171168
      %v4210 = vunpack.c.0.s8 %v4209
      %v4211 = vlaneseq
      %v4212 = vshrl.u32 %v4211, 7
      %v4213 = vsub.s32 %v4210, %v4212
      %v4214 = vrot.slane %v4198, %v4213
      %v4216 = vunpack.c.l.s4 1966171168
      %v4217 = vunpack.c.0.s8 %v4216
      %v4218 = vlaneseq
      %v4219 = vshrl.u32 %v4218, 7
      %v4220 = vsub.s32 %v4217, %v4219
      %v4221 = vrot.slane %v4199, %v4220
      %v4223 = vunpack.c.l.s4 1966171168
      %v4224 = vunpack.c.0.s8 %v4223
      %v4225 = vlaneseq
      %v4226 = vshrl.u32 %v4225, 7
      %v4227 = vsub.s32 %v4224, %v4226
      %v4228 = vrot.slane %v4200, %v4227
      %v4229 = vcombine.low %v4207, %v4214
      %v4230 = vcombine.high %v4207, %v4214
      %v4231 = vcombine.low %v4221, %v4228
      %v4232 = vcombine.high %v4221, %v4228
      %v4234 = vunpack.c.l.s4 1966171168
      %v4235 = vunpack.c.0.s8 %v4234
      %v4236 = vlaneseq
      %v4237 = vshrl.u32 %v4236, 7
      %v4238 = vsub.s32 %v4235, %v4237
      %v4239 = vrot.slane %v4229, %v4238
      %v4241 = vunpack.c.l.s4 1966171168
      %v4242 = vunpack.c.0.s8 %v4241
      %v4243 = vlaneseq
      %v4244 = vshrl.u32 %v4243, 7
      %v4245 = vsub.s32 %v4242, %v4244
      %v4246 = vrot.slane %v4230, %v4245
      %v4248 = vunpack.c.l.s4 1966171168
      %v4249 = vunpack.c.0.s8 %v4248
      %v4250 = vlaneseq
      %v4251 = vshrl.u32 %v4250, 7
      %v4252 = vsub.s32 %v4249, %v4251
      %v4253 = vrot.slane %v4231, %v4252
      %v4255 = vunpack.c.l.s4 1966171168
      %v4256 = vunpack.c.0.s8 %v4255
      %v4257 = vlaneseq
      %v4258 = vshrl.u32 %v4257, 7
      %v4259 = vsub.s32 %v4256, %v4258
      %v4260 = vrot.slane %v4232, %v4259
      %v4261 = vcombine.low %v4239, %v4253
      %v4262 = vcombine.high %v4239, %v4253
      %v4263 = vcombine.low %v4246, %v4260
      %v4264 = vcombine.low %v2890, %v2898
      %v4265 = vcombine.low %v2906, %v2914
      %v4266 = vcombine.low %v2922, %v2930
      %v4267 = vcombine.low %v2938, %v2946
      %v4269 = vunpack.c.l.s4 1966171168
      %v4270 = vunpack.c.0.s8 %v4269
      %v4271 = vlaneseq
      %v4272 = vshrl.u32 %v4271, 7
      %v4273 = vsub.s32 %v4270, %v4272
      %v4274 = vrot.slane %v4264, %v4273
      %v4276 = vunpack.c.l.s4 1966171168
      %v4277 = vunpack.c.0.s8 %v4276
      %v4278 = vlaneseq
      %v4279 = vshrl.u32 %v4278, 7
      %v4280 = vsub.s32 %v4277, %v4279
      %v4281 = vrot.slane %v4265, %v4280
      %v4283 = vunpack.c.l.s4 1966171168
      %v4284 = vunpack.c.0.s8 %v4283
      %v4285 = vlaneseq
      %v4286 = vshrl.u32 %v4285, 7
      %v4287 = vsub.s32 %v4284, %v4286
      %v4288 = vrot.slane %v4266, %v4287
      %v4290 = vunpack.c.l.s4 1966171168
      %v4291 = vunpack.c.0.s8 %v4290
      %v4292 = vlaneseq
      %v4293 = vshrl.u32 %v4292, 7
      %v4294 = vsub.s32 %v4291, %v4293
      %v4295 = vrot.slane %v4267, %v4294
      %v4296 = vcombine.low %v4274, %v4281
      %v4297 = vcombine.high %v4274, %v4281
      %v4298 = vcombine.low %v4288, %v4295
      %v4299 = vcombine.high %v4288, %v4295
      %v4301 = vunpack.c.l.s4 1966171168
      %v4302 = vunpack.c.0.s8 %v4301
      %v4303 = vlaneseq
      %v4304 = vshrl.u32 %v4303, 7
      %v4305 = vsub.s32 %v4302, %v4304
      %v4306 = vrot.slane %v4296, %v4305
      %v4308 = vunpack.c.l.s4 1966171168
      %v4309 = vunpack.c.0.s8 %v4308
      %v4310 = vlaneseq
      %v4311 = vshrl.u32 %v4310, 7
      %v4312 = vsub.s32 %v4309, %v4311
      %v4313 = vrot.slane %v4297, %v4312
      %v4315 = vunpack.c.l.s4 1966171168
      %v4316 = vunpack.c.0.s8 %v4315
      %v4317 = vlaneseq
      %v4318 = vshrl.u32 %v4317, 7
      %v4319 = vsub.s32 %v4316, %v4318
      %v4320 = vrot.slane %v4298, %v4319
      %v4322 = vunpack.c.l.s4 1966171168
      %v4323 = vunpack.c.0.s8 %v4322
      %v4324 = vlaneseq
      %v4325 = vshrl.u32 %v4324, 7
      %v4326 = vsub.s32 %v4323, %v4325
      %v4327 = vrot.slane %v4299, %v4326
      %v4328 = vcombine.low %v4306, %v4320
      %v4329 = vcombine.high %v4306, %v4320
      %v4330 = vcombine.low %v4313, %v4327
      %v4331 = vcombine.low %v2954, %v2963
      %v4332 = vcombine.low %v2971, %v2979
      %v4333 = vcombine.low %v2987, %v2995
      %v4334 = vcombine.low %v3003, %v3011
      %v4336 = vunpack.c.l.s4 1966171168
      %v4337 = vunpack.c.0.s8 %v4336
      %v4338 = vlaneseq
      %v4339 = vshrl.u32 %v4338, 7
      %v4340 = vsub.s32 %v4337, %v4339
      %v4341 = vrot.slane %v4331, %v4340
      %v4343 = vunpack.c.l.s4 1966171168
      %v4344 = vunpack.c.0.s8 %v4343
      %v4345 = vlaneseq
      %v4346 = vshrl.u32 %v4345, 7
      %v4347 = vsub.s32 %v4344, %v4346
      %v4348 = vrot.slane %v4332, %v4347
      %v4350 = vunpack.c.l.s4 1966171168
      %v4351 = vunpack.c.0.s8 %v4350
      %v4352 = vlaneseq
      %v4353 = vshrl.u32 %v4352, 7
      %v4354 = vsub.s32 %v4351, %v4353
      %v4355 = vrot.slane %v4333, %v4354
      %v4357 = vunpack.c.l.s4 1966171168
      %v4358 = vunpack.c.0.s8 %v4357
      %v4359 = vlaneseq
      %v4360 = vshrl.u32 %v4359, 7
      %v4361 = vsub.s32 %v4358, %v4360
      %v4362 = vrot.slane %v4334, %v4361
      %v4363 = vcombine.low %v4341, %v4348
      %v4364 = vcombine.high %v4341, %v4348
      %v4365 = vcombine.low %v4355, %v4362
      %v4366 = vcombine.high %v4355, %v4362
      %v4368 = vunpack.c.l.s4 1966171168
      %v4369 = vunpack.c.0.s8 %v4368
      %v4370 = vlaneseq
      %v4371 = vshrl.u32 %v4370, 7
      %v4372 = vsub.s32 %v4369, %v4371
      %v4373 = vrot.slane %v4363, %v4372
      %v4375 = vunpack.c.l.s4 1966171168
      %v4376 = vunpack.c.0.s8 %v4375
      %v4377 = vlaneseq
      %v4378 = vshrl.u32 %v4377, 7
      %v4379 = vsub.s32 %v4376, %v4378
      %v4380 = vrot.slane %v4364, %v4379
      %v4382 = vunpack.c.l.s4 1966171168
      %v4383 = vunpack.c.0.s8 %v4382
      %v4384 = vlaneseq
      %v4385 = vshrl.u32 %v4384, 7
      %v4386 = vsub.s32 %v4383, %v4385
      %v4387 = vrot.slane %v4365, %v4386
      %v4389 = vunpack.c.l.s4 1966171168
      %v4390 = vunpack.c.0.s8 %v4389
      %v4391 = vlaneseq
      %v4392 = vshrl.u32 %v4391, 7
      %v4393 = vsub.s32 %v4390, %v4392
      %v4394 = vrot.slane %v4366, %v4393
      %v4395 = vcombine.low %v4373, %v4387
      %v4396 = vcombine.high %v4373, %v4387
      %v4397 = vcombine.low %v4380, %v4394
      %v4398 = vcombine.low %v3019, %v3027
      %v4399 = vcombine.low %v3036, %v3044
      %v4400 = vcombine.low %v3052, %v3060
      %v4401 = vcombine.low %v3068, %v3076
      %v4403 = vunpack.c.l.s4 1966171168
      %v4404 = vunpack.c.0.s8 %v4403
      %v4405 = vlaneseq
      %v4406 = vshrl.u32 %v4405, 7
      %v4407 = vsub.s32 %v4404, %v4406
      %v4408 = vrot.slane %v4398, %v4407
      %v4410 = vunpack.c.l.s4 1966171168
      %v4411 = vunpack.c.0.s8 %v4410
      %v4412 = vlaneseq
      %v4413 = vshrl.u32 %v4412, 7
      %v4414 = vsub.s32 %v4411, %v4413
      %v4415 = vrot.slane %v4399, %v4414
      %v4417 = vunpack.c.l.s4 1966171168
      %v4418 = vunpack.c.0.s8 %v4417
      %v4419 = vlaneseq
      %v4420 = vshrl.u32 %v4419, 7
      %v4421 = vsub.s32 %v4418, %v4420
      %v4422 = vrot.slane %v4400, %v4421
      %v4424 = vunpack.c.l.s4 1966171168
      %v4425 = vunpack.c.0.s8 %v4424
      %v4426 = vlaneseq
      %v4427 = vshrl.u32 %v4426, 7
      %v4428 = vsub.s32 %v4425, %v4427
      %v4429 = vrot.slane %v4401, %v4428
      %v4430 = vcombine.low %v4408, %v4415
      %v4431 = vcombine.high %v4408, %v4415
      %v4432 = vcombine.low %v4422, %v4429
      %v4433 = vcombine.high %v4422, %v4429
      %v4435 = vunpack.c.l.s4 1966171168
      %v4436 = vunpack.c.0.s8 %v4435
      %v4437 = vlaneseq
      %v4438 = vshrl.u32 %v4437, 7
      %v4439 = vsub.s32 %v4436, %v4438
      %v4440 = vrot.slane %v4430, %v4439
      %v4442 = vunpack.c.l.s4 1966171168
      %v4443 = vunpack.c.0.s8 %v4442
      %v4444 = vlaneseq
      %v4445 = vshrl.u32 %v4444, 7
      %v4446 = vsub.s32 %v4443, %v4445
      %v4447 = vrot.slane %v4431, %v4446
      %v4449 = vunpack.c.l.s4 1966171168
      %v4450 = vunpack.c.0.s8 %v4449
      %v4451 = vlaneseq
      %v4452 = vshrl.u32 %v4451, 7
      %v4453 = vsub.s32 %v4450, %v4452
      %v4454 = vrot.slane %v4432, %v4453
      %v4456 = vunpack.c.l.s4 1966171168
      %v4457 = vunpack.c.0.s8 %v4456
      %v4458 = vlaneseq
      %v4459 = vshrl.u32 %v4458, 7
      %v4460 = vsub.s32 %v4457, %v4459
      %v4461 = vrot.slane %v4433, %v4460
      %v4462 = vcombine.low %v4440, %v4454
      %v4463 = vcombine.high %v4440, %v4454
      %v4464 = vcombine.low %v4447, %v4461
      %v4465 = vcombine.low %v3084, %v3092
      %v4466 = vcombine.low %v3100, %v3109
      %v4467 = vcombine.low %v3117, %v3125
      %v4468 = vcombine.low %v3133, %v3141
      %v4470 = vunpack.c.l.s4 1966171168
      %v4471 = vunpack.c.0.s8 %v4470
      %v4472 = vlaneseq
      %v4473 = vshrl.u32 %v4472, 7
      %v4474 = vsub.s32 %v4471, %v4473
      %v4475 = vrot.slane %v4465, %v4474
      %v4477 = vunpack.c.l.s4 1966171168
      %v4478 = vunpack.c.0.s8 %v4477
      %v4479 = vlaneseq
      %v4480 = vshrl.u32 %v4479, 7
      %v4481 = vsub.s32 %v4478, %v4480
      %v4482 = vrot.slane %v4466, %v4481
      %v4484 = vunpack.c.l.s4 1966171168
      %v4485 = vunpack.c.0.s8 %v4484
      %v4486 = vlaneseq
      %v4487 = vshrl.u32 %v4486, 7
      %v4488 = vsub.s32 %v4485, %v4487
      %v4489 = vrot.slane %v4467, %v4488
      %v4491 = vunpack.c.l.s4 1966171168
      %v4492 = vunpack.c.0.s8 %v4491
      %v4493 = vlaneseq
      %v4494 = vshrl.u32 %v4493, 7
      %v4495 = vsub.s32 %v4492, %v4494
      %v4496 = vrot.slane %v4468, %v4495
      %v4497 = vcombine.low %v4475, %v4482
      %v4498 = vcombine.high %v4475, %v4482
      %v4499 = vcombine.low %v4489, %v4496
      %v4500 = vcombine.high %v4489, %v4496
      %v4502 = vunpack.c.l.s4 1966171168
      %v4503 = vunpack.c.0.s8 %v4502
      %v4504 = vlaneseq
      %v4505 = vshrl.u32 %v4504, 7
      %v4506 = vsub.s32 %v4503, %v4505
      %v4507 = vrot.slane %v4497, %v4506
      %v4509 = vunpack.c.l.s4 1966171168
      %v4510 = vunpack.c.0.s8 %v4509
      %v4511 = vlaneseq
      %v4512 = vshrl.u32 %v4511, 7
      %v4513 = vsub.s32 %v4510, %v4512
      %v4514 = vrot.slane %v4498, %v4513
      %v4516 = vunpack.c.l.s4 1966171168
      %v4517 = vunpack.c.0.s8 %v4516
      %v4518 = vlaneseq
      %v4519 = vshrl.u32 %v4518, 7
      %v4520 = vsub.s32 %v4517, %v4519
      %v4521 = vrot.slane %v4499, %v4520
      %v4523 = vunpack.c.l.s4 1966171168
      %v4524 = vunpack.c.0.s8 %v4523
      %v4525 = vlaneseq
      %v4526 = vshrl.u32 %v4525, 7
      %v4527 = vsub.s32 %v4524, %v4526
      %v4528 = vrot.slane %v4500, %v4527
      %v4529 = vcombine.low %v4507, %v4521
      %v4530 = vcombine.high %v4507, %v4521
      %v4531 = vcombine.low %v4514, %v4528
      %v4532 = vcombine.low %v3149, %v3157
      %v4533 = vcombine.low %v3165, %v3173
      %v4534 = vcombine.low %v3182, %v3190
      %v4535 = vcombine.low %v3198, %v3206
      %v4537 = vunpack.c.l.s4 1966171168
      %v4538 = vunpack.c.0.s8 %v4537
      %v4539 = vlaneseq
      %v4540 = vshrl.u32 %v4539, 7
      %v4541 = vsub.s32 %v4538, %v4540
      %v4542 = vrot.slane %v4532, %v4541
      %v4544 = vunpack.c.l.s4 1966171168
      %v4545 = vunpack.c.0.s8 %v4544
      %v4546 = vlaneseq
      %v4547 = vshrl.u32 %v4546, 7
      %v4548 = vsub.s32 %v4545, %v4547
      %v4549 = vrot.slane %v4533, %v4548
      %v4551 = vunpack.c.l.s4 1966171168
      %v4552 = vunpack.c.0.s8 %v4551
      %v4553 = vlaneseq
      %v4554 = vshrl.u32 %v4553, 7
      %v4555 = vsub.s32 %v4552, %v4554
      %v4556 = vrot.slane %v4534, %v4555
      %v4558 = vunpack.c.l.s4 1966171168
      %v4559 = vunpack.c.0.s8 %v4558
      %v4560 = vlaneseq
      %v4561 = vshrl.u32 %v4560, 7
      %v4562 = vsub.s32 %v4559, %v4561
      %v4563 = vrot.slane %v4535, %v4562
      %v4564 = vcombine.low %v4542, %v4549
      %v4565 = vcombine.high %v4542, %v4549
      %v4566 = vcombine.low %v4556, %v4563
      %v4567 = vcombine.high %v4556, %v4563
      %v4569 = vunpack.c.l.s4 1966171168
      %v4570 = vunpack.c.0.s8 %v4569
      %v4571 = vlaneseq
      %v4572 = vshrl.u32 %v4571, 7
      %v4573 = vsub.s32 %v4570, %v4572
      %v4574 = vrot.slane %v4564, %v4573
      %v4576 = vunpack.c.l.s4 1966171168
      %v4577 = vunpack.c.0.s8 %v4576
      %v4578 = vlaneseq
      %v4579 = vshrl.u32 %v4578, 7
      %v4580 = vsub.s32 %v4577, %v4579
      %v4581 = vrot.slane %v4565, %v4580
      %v4583 = vunpack.c.l.s4 1966171168
      %v4584 = vunpack.c.0.s8 %v4583
      %v4585 = vlaneseq
      %v4586 = vshrl.u32 %v4585, 7
      %v4587 = vsub.s32 %v4584, %v4586
      %v4588 = vrot.slane %v4566, %v4587
      %v4590 = vunpack.c.l.s4 1966171168
      %v4591 = vunpack.c.0.s8 %v4590
      %v4592 = vlaneseq
      %v4593 = vshrl.u32 %v4592, 7
      %v4594 = vsub.s32 %v4591, %v4593
      %v4595 = vrot.slane %v4567, %v4594
      %v4596 = vcombine.low %v4574, %v4588
      %v4597 = vcombine.high %v4574, %v4588
      %v4598 = vcombine.low %v4581, %v4595
      %v4599 = vcombine.low %v3214, %v3222
      %v4600 = vcombine.low %v3230, %v3238
      %v4601 = vcombine.low %v3246, %v3255
      %v4602 = vcombine.low %v3263, %v3271
      %v4604 = vunpack.c.l.s4 1966171168
      %v4605 = vunpack.c.0.s8 %v4604
      %v4606 = vlaneseq
      %v4607 = vshrl.u32 %v4606, 7
      %v4608 = vsub.s32 %v4605, %v4607
      %v4609 = vrot.slane %v4599, %v4608
      %v4611 = vunpack.c.l.s4 1966171168
      %v4612 = vunpack.c.0.s8 %v4611
      %v4613 = vlaneseq
      %v4614 = vshrl.u32 %v4613, 7
      %v4615 = vsub.s32 %v4612, %v4614
      %v4616 = vrot.slane %v4600, %v4615
      %v4618 = vunpack.c.l.s4 1966171168
      %v4619 = vunpack.c.0.s8 %v4618
      %v4620 = vlaneseq
      %v4621 = vshrl.u32 %v4620, 7
      %v4622 = vsub.s32 %v4619, %v4621
      %v4623 = vrot.slane %v4601, %v4622
      %v4625 = vunpack.c.l.s4 1966171168
      %v4626 = vunpack.c.0.s8 %v4625
      %v4627 = vlaneseq
      %v4628 = vshrl.u32 %v4627, 7
      %v4629 = vsub.s32 %v4626, %v4628
      %v4630 = vrot.slane %v4602, %v4629
      %v4631 = vcombine.low %v4609, %v4616
      %v4632 = vcombine.high %v4609, %v4616
      %v4633 = vcombine.low %v4623, %v4630
      %v4634 = vcombine.high %v4623, %v4630
      %v4636 = vunpack.c.l.s4 1966171168
      %v4637 = vunpack.c.0.s8 %v4636
      %v4638 = vlaneseq
      %v4639 = vshrl.u32 %v4638, 7
      %v4640 = vsub.s32 %v4637, %v4639
      %v4641 = vrot.slane %v4631, %v4640
      %v4643 = vunpack.c.l.s4 1966171168
      %v4644 = vunpack.c.0.s8 %v4643
      %v4645 = vlaneseq
      %v4646 = vshrl.u32 %v4645, 7
      %v4647 = vsub.s32 %v4644, %v4646
      %v4648 = vrot.slane %v4632, %v4647
      %v4650 = vunpack.c.l.s4 1966171168
      %v4651 = vunpack.c.0.s8 %v4650
      %v4652 = vlaneseq
      %v4653 = vshrl.u32 %v4652, 7
      %v4654 = vsub.s32 %v4651, %v4653
      %v4655 = vrot.slane %v4633, %v4654
      %v4657 = vunpack.c.l.s4 1966171168
      %v4658 = vunpack.c.0.s8 %v4657
      %v4659 = vlaneseq
      %v4660 = vshrl.u32 %v4659, 7
      %v4661 = vsub.s32 %v4658, %v4660
      %v4662 = vrot.slane %v4634, %v4661
      %v4663 = vcombine.low %v4641, %v4655
      %v4664 = vcombine.high %v4641, %v4655
      %v4665 = vcombine.low %v4648, %v4662
      %v4666 = vcombine.low %v3279, %v3287
      %v4667 = vcombine.low %v3295, %v3303
      %v4668 = vcombine.low %v3311, %v3319
      %v4669 = vcombine.low %v3328, %v3336
      %v4671 = vunpack.c.l.s4 1966171168
      %v4672 = vunpack.c.0.s8 %v4671
      %v4673 = vlaneseq
      %v4674 = vshrl.u32 %v4673, 7
      %v4675 = vsub.s32 %v4672, %v4674
      %v4676 = vrot.slane %v4666, %v4675
      %v4678 = vunpack.c.l.s4 1966171168
      %v4679 = vunpack.c.0.s8 %v4678
      %v4680 = vlaneseq
      %v4681 = vshrl.u32 %v4680, 7
      %v4682 = vsub.s32 %v4679, %v4681
      %v4683 = vrot.slane %v4667, %v4682
      %v4685 = vunpack.c.l.s4 1966171168
      %v4686 = vunpack.c.0.s8 %v4685
      %v4687 = vlaneseq
      %v4688 = vshrl.u32 %v4687, 7
      %v4689 = vsub.s32 %v4686, %v4688
      %v4690 = vrot.slane %v4668, %v4689
      %v4692 = vunpack.c.l.s4 1966171168
      %v4693 = vunpack.c.0.s8 %v4692
      %v4694 = vlaneseq
      %v4695 = vshrl.u32 %v4694, 7
      %v4696 = vsub.s32 %v4693, %v4695
      %v4697 = vrot.slane %v4669, %v4696
      %v4698 = vcombine.low %v4676, %v4683
      %v4699 = vcombine.high %v4676, %v4683
      %v4700 = vcombine.low %v4690, %v4697
      %v4701 = vcombine.high %v4690, %v4697
      %v4703 = vunpack.c.l.s4 1966171168
      %v4704 = vunpack.c.0.s8 %v4703
      %v4705 = vlaneseq
      %v4706 = vshrl.u32 %v4705, 7
      %v4707 = vsub.s32 %v4704, %v4706
      %v4708 = vrot.slane %v4698, %v4707
      %v4710 = vunpack.c.l.s4 1966171168
      %v4711 = vunpack.c.0.s8 %v4710
      %v4712 = vlaneseq
      %v4713 = vshrl.u32 %v4712, 7
      %v4714 = vsub.s32 %v4711, %v4713
      %v4715 = vrot.slane %v4699, %v4714
      %v4717 = vunpack.c.l.s4 1966171168
      %v4718 = vunpack.c.0.s8 %v4717
      %v4719 = vlaneseq
      %v4720 = vshrl.u32 %v4719, 7
      %v4721 = vsub.s32 %v4718, %v4720
      %v4722 = vrot.slane %v4700, %v4721
      %v4724 = vunpack.c.l.s4 1966171168
      %v4725 = vunpack.c.0.s8 %v4724
      %v4726 = vlaneseq
      %v4727 = vshrl.u32 %v4726, 7
      %v4728 = vsub.s32 %v4725, %v4727
      %v4729 = vrot.slane %v4701, %v4728
      %v4730 = vcombine.low %v4708, %v4722
      %v4731 = vcombine.high %v4708, %v4722
      %v4732 = vcombine.low %v4715, %v4729
      %v4733 = vcombine.low %v3344, %v3352
      %v4734 = vcombine.low %v3360, %v3368
      %v4735 = vcombine.low %v3376, %v3384
      %v4736 = vcombine.low %v3392, %v3401
      %v4738 = vunpack.c.l.s4 1966171168
      %v4739 = vunpack.c.0.s8 %v4738
      %v4740 = vlaneseq
      %v4741 = vshrl.u32 %v4740, 7
      %v4742 = vsub.s32 %v4739, %v4741
      %v4743 = vrot.slane %v4733, %v4742
      %v4745 = vunpack.c.l.s4 1966171168
      %v4746 = vunpack.c.0.s8 %v4745
      %v4747 = vlaneseq
      %v4748 = vshrl.u32 %v4747, 7
      %v4749 = vsub.s32 %v4746, %v4748
      %v4750 = vrot.slane %v4734, %v4749
      %v4752 = vunpack.c.l.s4 1966171168
      %v4753 = vunpack.c.0.s8 %v4752
      %v4754 = vlaneseq
      %v4755 = vshrl.u32 %v4754, 7
      %v4756 = vsub.s32 %v4753, %v4755
      %v4757 = vrot.slane %v4735, %v4756
      %v4759 = vunpack.c.l.s4 1966171168
      %v4760 = vunpack.c.0.s8 %v4759
      %v4761 = vlaneseq
      %v4762 = vshrl.u32 %v4761, 7
      %v4763 = vsub.s32 %v4760, %v4762
      %v4764 = vrot.slane %v4736, %v4763
      %v4765 = vcombine.low %v4743, %v4750
      %v4766 = vcombine.high %v4743, %v4750
      %v4767 = vcombine.low %v4757, %v4764
      %v4768 = vcombine.high %v4757, %v4764
      %v4770 = vunpack.c.l.s4 1966171168
      %v4771 = vunpack.c.0.s8 %v4770
      %v4772 = vlaneseq
      %v4773 = vshrl.u32 %v4772, 7
      %v4774 = vsub.s32 %v4771, %v4773
      %v4775 = vrot.slane %v4765, %v4774
      %v4777 = vunpack.c.l.s4 1966171168
      %v4778 = vunpack.c.0.s8 %v4777
      %v4779 = vlaneseq
      %v4780 = vshrl.u32 %v4779, 7
      %v4781 = vsub.s32 %v4778, %v4780
      %v4782 = vrot.slane %v4766, %v4781
      %v4784 = vunpack.c.l.s4 1966171168
      %v4785 = vunpack.c.0.s8 %v4784
      %v4786 = vlaneseq
      %v4787 = vshrl.u32 %v4786, 7
      %v4788 = vsub.s32 %v4785, %v4787
      %v4789 = vrot.slane %v4767, %v4788
      %v4791 = vunpack.c.l.s4 1966171168
      %v4792 = vunpack.c.0.s8 %v4791
      %v4793 = vlaneseq
      %v4794 = vshrl.u32 %v4793, 7
      %v4795 = vsub.s32 %v4792, %v4794
      %v4796 = vrot.slane %v4768, %v4795
      %v4797 = vcombine.low %v4775, %v4789
      %v4798 = vcombine.high %v4775, %v4789
      %v4799 = vcombine.low %v4782, %v4796
      %v4800 = vcombine.low %v3409, %v3417
      %v4801 = vcombine.low %v3425, %v3433
      %v4802 = vcombine.low %v3441, %v3449
      %v4803 = vcombine.low %v3457, %v3465
      %v4805 = vunpack.c.l.s4 1966171168
      %v4806 = vunpack.c.0.s8 %v4805
      %v4807 = vlaneseq
      %v4808 = vshrl.u32 %v4807, 7
      %v4809 = vsub.s32 %v4806, %v4808
      %v4810 = vrot.slane %v4800, %v4809
      %v4812 = vunpack.c.l.s4 1966171168
      %v4813 = vunpack.c.0.s8 %v4812
      %v4814 = vlaneseq
      %v4815 = vshrl.u32 %v4814, 7
      %v4816 = vsub.s32 %v4813, %v4815
      %v4817 = vrot.slane %v4801, %v4816
      %v4819 = vunpack.c.l.s4 1966171168
      %v4820 = vunpack.c.0.s8 %v4819
      %v4821 = vlaneseq
      %v4822 = vshrl.u32 %v4821, 7
      %v4823 = vsub.s32 %v4820, %v4822
      %v4824 = vrot.slane %v4802, %v4823
      %v4826 = vunpack.c.l.s4 1966171168
      %v4827 = vunpack.c.0.s8 %v4826
      %v4828 = vlaneseq
      %v4829 = vshrl.u32 %v4828, 7
      %v4830 = vsub.s32 %v4827, %v4829
      %v4831 = vrot.slane %v4803, %v4830
      %v4832 = vcombine.low %v4810, %v4817
      %v4833 = vcombine.high %v4810, %v4817
      %v4834 = vcombine.low %v4824, %v4831
      %v4835 = vcombine.high %v4824, %v4831
      %v4837 = vunpack.c.l.s4 1966171168
      %v4838 = vunpack.c.0.s8 %v4837
      %v4839 = vlaneseq
      %v4840 = vshrl.u32 %v4839, 7
      %v4841 = vsub.s32 %v4838, %v4840
      %v4842 = vrot.slane %v4832, %v4841
      %v4844 = vunpack.c.l.s4 1966171168
      %v4845 = vunpack.c.0.s8 %v4844
      %v4846 = vlaneseq
      %v4847 = vshrl.u32 %v4846, 7
      %v4848 = vsub.s32 %v4845, %v4847
      %v4849 = vrot.slane %v4833, %v4848
      %v4851 = vunpack.c.l.s4 1966171168
      %v4852 = vunpack.c.0.s8 %v4851
      %v4853 = vlaneseq
      %v4854 = vshrl.u32 %v4853, 7
      %v4855 = vsub.s32 %v4852, %v4854
      %v4856 = vrot.slane %v4834, %v4855
      %v4858 = vunpack.c.l.s4 1966171168
      %v4859 = vunpack.c.0.s8 %v4858
      %v4860 = vlaneseq
      %v4861 = vshrl.u32 %v4860, 7
      %v4862 = vsub.s32 %v4859, %v4861
      %v4863 = vrot.slane %v4835, %v4862
      %v4864 = vcombine.low %v4842, %v4856
      %v4865 = vcombine.high %v4842, %v4856
      %v4866 = vcombine.low %v4849, %v4863
      %v4867 = vcombine.low %v3474, %v3482
      %v4868 = vcombine.low %v3490, %v3498
      %v4869 = vcombine.low %v3506, %v3514
      %v4870 = vcombine.low %v3522, %v3530
      %v4872 = vunpack.c.l.s4 1966171168
      %v4873 = vunpack.c.0.s8 %v4872
      %v4874 = vlaneseq
      %v4875 = vshrl.u32 %v4874, 7
      %v4876 = vsub.s32 %v4873, %v4875
      %v4877 = vrot.slane %v4867, %v4876
      %v4879 = vunpack.c.l.s4 1966171168
      %v4880 = vunpack.c.0.s8 %v4879
      %v4881 = vlaneseq
      %v4882 = vshrl.u32 %v4881, 7
      %v4883 = vsub.s32 %v4880, %v4882
      %v4884 = vrot.slane %v4868, %v4883
      %v4886 = vunpack.c.l.s4 1966171168
      %v4887 = vunpack.c.0.s8 %v4886
      %v4888 = vlaneseq
      %v4889 = vshrl.u32 %v4888, 7
      %v4890 = vsub.s32 %v4887, %v4889
      %v4891 = vrot.slane %v4869, %v4890
      %v4893 = vunpack.c.l.s4 1966171168
      %v4894 = vunpack.c.0.s8 %v4893
      %v4895 = vlaneseq
      %v4896 = vshrl.u32 %v4895, 7
      %v4897 = vsub.s32 %v4894, %v4896
      %v4898 = vrot.slane %v4870, %v4897
      %v4899 = vcombine.low %v4877, %v4884
      %v4900 = vcombine.high %v4877, %v4884
      %v4901 = vcombine.low %v4891, %v4898
      %v4902 = vcombine.high %v4891, %v4898
      %v4904 = vunpack.c.l.s4 1966171168
      %v4905 = vunpack.c.0.s8 %v4904
      %v4906 = vlaneseq
      %v4907 = vshrl.u32 %v4906, 7
      %v4908 = vsub.s32 %v4905, %v4907
      %v4909 = vrot.slane %v4899, %v4908
      %v4911 = vunpack.c.l.s4 1966171168
      %v4912 = vunpack.c.0.s8 %v4911
      %v4913 = vlaneseq
      %v4914 = vshrl.u32 %v4913, 7
      %v4915 = vsub.s32 %v4912, %v4914
      %v4916 = vrot.slane %v4900, %v4915
      %v4918 = vunpack.c.l.s4 1966171168
      %v4919 = vunpack.c.0.s8 %v4918
      %v4920 = vlaneseq
      %v4921 = vshrl.u32 %v4920, 7
      %v4922 = vsub.s32 %v4919, %v4921
      %v4923 = vrot.slane %v4901, %v4922
      %v4925 = vunpack.c.l.s4 1966171168
      %v4926 = vunpack.c.0.s8 %v4925
      %v4927 = vlaneseq
      %v4928 = vshrl.u32 %v4927, 7
      %v4929 = vsub.s32 %v4926, %v4928
      %v4930 = vrot.slane %v4902, %v4929
      %v4931 = vcombine.low %v4909, %v4923
      %v4932 = vcombine.high %v4909, %v4923
      %v4933 = vcombine.low %v4916, %v4930
      %v4934 = vcombine.low %v3538, %v3547
      %v4935 = vcombine.low %v3555, %v3563
      %v4936 = vcombine.low %v3571, %v3579
      %v4937 = vcombine.low %v3587, %v3595
      %v4939 = vunpack.c.l.s4 1966171168
      %v4940 = vunpack.c.0.s8 %v4939
      %v4941 = vlaneseq
      %v4942 = vshrl.u32 %v4941, 7
      %v4943 = vsub.s32 %v4940, %v4942
      %v4944 = vrot.slane %v4934, %v4943
      %v4946 = vunpack.c.l.s4 1966171168
      %v4947 = vunpack.c.0.s8 %v4946
      %v4948 = vlaneseq
      %v4949 = vshrl.u32 %v4948, 7
      %v4950 = vsub.s32 %v4947, %v4949
      %v4951 = vrot.slane %v4935, %v4950
      %v4953 = vunpack.c.l.s4 1966171168
      %v4954 = vunpack.c.0.s8 %v4953
      %v4955 = vlaneseq
      %v4956 = vshrl.u32 %v4955, 7
      %v4957 = vsub.s32 %v4954, %v4956
      %v4958 = vrot.slane %v4936, %v4957
      %v4960 = vunpack.c.l.s4 1966171168
      %v4961 = vunpack.c.0.s8 %v4960
      %v4962 = vlaneseq
      %v4963 = vshrl.u32 %v4962, 7
      %v4964 = vsub.s32 %v4961, %v4963
      %v4965 = vrot.slane %v4937, %v4964
      %v4966 = vcombine.low %v4944, %v4951
      %v4967 = vcombine.high %v4944, %v4951
      %v4968 = vcombine.low %v4958, %v4965
      %v4969 = vcombine.high %v4958, %v4965
      %v4971 = vunpack.c.l.s4 1966171168
      %v4972 = vunpack.c.0.s8 %v4971
      %v4973 = vlaneseq
      %v4974 = vshrl.u32 %v4973, 7
      %v4975 = vsub.s32 %v4972, %v4974
      %v4976 = vrot.slane %v4966, %v4975
      %v4978 = vunpack.c.l.s4 1966171168
      %v4979 = vunpack.c.0.s8 %v4978
      %v4980 = vlaneseq
      %v4981 = vshrl.u32 %v4980, 7
      %v4982 = vsub.s32 %v4979, %v4981
      %v4983 = vrot.slane %v4967, %v4982
      %v4985 = vunpack.c.l.s4 1966171168
      %v4986 = vunpack.c.0.s8 %v4985
      %v4987 = vlaneseq
      %v4988 = vshrl.u32 %v4987, 7
      %v4989 = vsub.s32 %v4986, %v4988
      %v4990 = vrot.slane %v4968, %v4989
      %v4992 = vunpack.c.l.s4 1966171168
      %v4993 = vunpack.c.0.s8 %v4992
      %v4994 = vlaneseq
      %v4995 = vshrl.u32 %v4994, 7
      %v4996 = vsub.s32 %v4993, %v4995
      %v4997 = vrot.slane %v4969, %v4996
      %v4998 = vcombine.low %v4976, %v4990
      %v4999 = vcombine.high %v4976, %v4990
      %v5000 = vcombine.low %v4983, %v4997
      %v5001 = vcombine.low %v3603, %v3611
      %v5003 = vunpack.c.l.s4 1966171168
      %v5004 = vunpack.c.0.s8 %v5003
      %v5005 = vlaneseq
      %v5006 = vshrl.u32 %v5005, 7
      %v5007 = vsub.s32 %v5004, %v5006
      %v5008 = vrot.slane %v5001, %v5007
      %v5009 = vcombine.high %v5008, %v5008
      %v5011 = vunpack.c.l.s4 1966171168
      %v5012 = vunpack.c.0.s8 %v5011
      %v5013 = vlaneseq
      %v5014 = vshrl.u32 %v5013, 7
      %v5015 = vsub.s32 %v5012, %v5014
      %v5016 = vrot.slane %v5008, %v5015
      %v5018 = vunpack.c.l.s4 1966171168
      %v5019 = vunpack.c.0.s8 %v5018
      %v5020 = vlaneseq
      %v5021 = vshrl.u32 %v5020, 7
      %v5022 = vsub.s32 %v5019, %v5021
      %v5023 = vrot.slane %v5009, %v5022
      %v5024 = vcombine.high %v5016, %v5016
      %v5136 = vunpack.c.l.b16 %v3613
      %v5137 = vunpack.c.l.b16 %v3614
      %v5138 = vunpack.c.l.b16 %v3615
      %v5139 = vunpack.c.l.b16 %v3616
      %v5140 = vunpack.c.l.b16 %v3617
      %v5141 = vunpack.c.l.b16 %v3618
      %v5142 = vunpack.c.l.b16 %v3619
      %v5143 = vunpack.c.l.b16 %v3620
      %v5144 = vunpack.c.l.b16 %v3621
      %v5145 = vunpack.c.l.b16 %v3622
      %v5146 = vunpack.c.l.b16 %v3623
      %v5147 = vunpack.c.l.b16 %v3624
      %v5148 = vunpack.c.l.b16 %v3625
      %v5149 = vunpack.c.l.b16 %v3626
      %v5150 = vunpack.c.l.b16 %v3627
      %v5151 = vunpack.c.l.b16 %v3628
      %v5152 = vunpack.c.l.b16 %v3629
      %v5153 = vunpack.c.l.b16 %v3630
      %v5154 = vunpack.c.l.b16 %v3631
      %v5155 = vunpack.c.l.b16 %v3632
      %v5156 = vunpack.c.l.b16 %v3633
      %v5157 = vunpack.c.l.b16 %v3634
      %v5158 = vunpack.c.l.b16 %v3635
      %v5159 = vunpack.c.l.b16 %v3636
      %v5160 = vunpack.c.l.b16 %v3637
      %v5161 = vunpack.c.l.b16 %v3638
      %v5162 = vunpack.c.l.b16 %v3639
      %v5163 = vunpack.c.l.b16 %v3640
      %v5164 = vunpack.c.l.b16 %v3641
      %v5165 = vunpack.c.l.b16 %v3642
      %v5166 = vunpack.c.l.b16 %v3643
      %v5167 = vunpack.c.l.b16 %v3644
      %v5168 = vunpack.c.l.b16 %v3645
      %v5169 = vunpack.c.l.b16 %v3646
      %v5170 = vunpack.c.l.b16 %v3647
      %v5171 = vunpack.c.l.b16 %v3648
      %v5172 = vunpack.c.l.b16 %v3649
      %v5173 = vunpack.c.l.b16 %v3650
      %v5174 = vunpack.c.l.b16 %v3651
      %v5175 = vunpack.c.l.b16 %v3652
      %v5176 = vunpack.c.l.b16 %v3653
      %v5177 = vunpack.c.l.b16 %v3654
      %v5178 = vunpack.c.l.b16 %v3655
      %v5179 = vunpack.c.l.b16 %v3656
      %v5180 = vunpack.c.l.b16 %v3657
      %v5181 = vunpack.c.l.b16 %v3658
      %v5182 = vunpack.c.l.b16 %v3659
      %v5183 = vunpack.c.l.b16 %v3660
      %v5184 = vpack.c.b16 %v5137, %v5136
      %v5185 = vpack.c.b16 %v5139, %v5138
      %v5186 = vpack.c.b16 %v5141, %v5140
      %v5187 = vpack.c.b16 %v5143, %v5142
      %v5188 = vpack.c.b16 %v5145, %v5144
      %v5189 = vpack.c.b16 %v5147, %v5146
      %v5190 = vpack.c.b16 %v5149, %v5148
      %v5191 = vpack.c.b16 %v5151, %v5150
      %v5192 = vpack.c.b16 %v5153, %v5152
      %v5193 = vpack.c.b16 %v5155, %v5154
      %v5194 = vpack.c.b16 %v5157, %v5156
      %v5195 = vpack.c.b16 %v5159, %v5158
      %v5196 = vpack.c.b16 %v5161, %v5160
      %v5197 = vpack.c.b16 %v5163, %v5162
      %v5198 = vpack.c.b16 %v5165, %v5164
      %v5199 = vpack.c.b16 %v5167, %v5166
      %v5200 = vpack.c.b16 %v5169, %v5168
      %v5201 = vpack.c.b16 %v5171, %v5170
      %v5202 = vpack.c.b16 %v5173, %v5172
      %v5203 = vpack.c.b16 %v5175, %v5174
      %v5204 = vpack.c.b16 %v5177, %v5176
      %v5205 = vpack.c.b16 %v5179, %v5178
      %v5206 = vpack.c.b16 %v5181, %v5180
      %v5207 = vpack.c.b16 %v5183, %v5182
      %5232 = vmatprep.subr.bf16.mxu0 0
      %5233 = vmatpush1.bf16.msra.mxu0 %v5184
      %5234 = vmatprep.subr.bf16.mxu0 0
      %5235 = vmatpush1.bf16.msra.mxu0 %v5185
      %5236 = vmatprep.subr.bf16.mxu0 0
      %5237 = vmatpush1.bf16.msra.mxu0 %v5186
      %5238 = vmatprep.subr.bf16.mxu0 0
      %5239 = vmatpush1.bf16.msra.mxu0 %v5187
      %5240 = vmatprep.subr.bf16.mxu0 0
      %5241 = vmatpush1.bf16.msra.mxu0 %v5188
      %5242 = vmatprep.subr.bf16.mxu0 0
      %5243 = vmatpush1.bf16.msra.mxu0 %v5189
      %5244 = vmatprep.subr.bf16.mxu0 0
      %5245 = vmatpush1.bf16.msra.mxu0 %v5190
      %5246 = vmatprep.subr.bf16.mxu0 0
      %5247 = vmatpush1.bf16.msra.mxu0 %v5191
      %5248 = vmatprep.subr.bf16.mxu0 0
      %5249 = vmatpush1.bf16.msra.mxu0 %v5192
      %5250 = vmatprep.subr.bf16.mxu0 0
      %5251 = vmatpush1.bf16.msra.mxu0 %v5193
      %5252 = vmatprep.subr.bf16.mxu0 0
      %5253 = vmatpush1.bf16.msra.mxu0 %v5194
      %5254 = vmatprep.subr.bf16.mxu0 0
      %5255 = vmatpush1.bf16.msra.mxu0 %v5195
      %5256 = vmatprep.subr.bf16.mxu0 0
      %5257 = vmatpush1.bf16.msra.mxu0 %v5196
      %5258 = vmatprep.subr.bf16.mxu0 0
      %5259 = vmatpush1.bf16.msra.mxu0 %v5197
      %5260 = vmatprep.subr.bf16.mxu0 0
      %5261 = vmatpush1.bf16.msra.mxu0 %v5198
      %5262 = vmatprep.subr.bf16.mxu0 0
      %5263 = vmatpush1.bf16.msra.mxu0 %v5199
      %5264 = vmatprep.mubr.bf16.mxu0 %v3727
      %5265 = vmatmul.mubr.bf16.gmra.mrb[0].mxu0 %v3725
      %v5266 = vpop.f32.mrb[0].mxu0
      %v5267 = vadd.f32 0.0, %v5266
      %v5268 = vpop.f32.mrb[0].mxu0
      %v5269 = vpop.f32.mrb[0].mxu0
      %v5270 = vadd.f32 0.0, %v5269
      %v5271 = vpop.f32.mrb[0].mxu0
      %5272 = vmatprep.mubr.bf16.mxu0 %v3794
      %5273 = vmatmul.mubr.bf16.gmra.mrb[0].mxu0 %v3792
      %v5274 = vpop.f32.mrb[0].mxu0
      %v5275 = vadd.f32 0.0, %v5274
      %v5276 = vpop.f32.mrb[0].mxu0
      %v5277 = vpop.f32.mrb[0].mxu0
      %v5278 = vadd.f32 0.0, %v5277
      %v5279 = vpop.f32.mrb[0].mxu0
      %5280 = vmatprep.mubr.bf16.mxu0 %v3861
      %5281 = vmatmul.mubr.bf16.gmra.mrb[0].mxu0 %v3859
      %v5282 = vpop.f32.mrb[0].mxu0
      %v5283 = vadd.f32 0.0, %v5282
      %v5284 = vpop.f32.mrb[0].mxu0
      %v5285 = vpop.f32.mrb[0].mxu0
      %v5286 = vadd.f32 0.0, %v5285
      %v5287 = vpop.f32.mrb[0].mxu0
      %5288 = vmatprep.mubr.bf16.mxu0 %v3928
      %5289 = vmatmul.mubr.bf16.gmra.mrb[0].mxu0 %v3926
      %v5290 = vpop.f32.mrb[0].mxu0
      %v5291 = vadd.f32 0.0, %v5290
      %v5292 = vpop.f32.mrb[0].mxu0
      %v5293 = vpop.f32.mrb[0].mxu0
      %v5294 = vadd.f32 0.0, %v5293
      %v5295 = vpop.f32.mrb[0].mxu0
      %5296 = vmatprep.mubr.bf16.mxu0 %v3995
      %5297 = vmatmul.mubr.bf16.gmra.mrb[0].mxu0 %v3993
      %v5298 = vpop.f32.mrb[0].mxu0
      %v5299 = vadd.f32 0.0, %v5298
      %v5300 = vpop.f32.mrb[0].mxu0
      %v5301 = vpop.f32.mrb[0].mxu0
      %v5302 = vadd.f32 0.0, %v5301
      %v5303 = vpop.f32.mrb[0].mxu0
      %5304 = vmatprep.mubr.bf16.mxu0 %v4062
      %5305 = vmatmul.mubr.bf16.gmra.mrb[0].mxu0 %v4060
      %v5306 = vpop.f32.mrb[0].mxu0
      %v5307 = vadd.f32 0.0, %v5306
      %v5308 = vpop.f32.mrb[0].mxu0
      %v5309 = vpop.f32.mrb[0].mxu0
      %v5310 = vadd.f32 0.0, %v5309
      %v5311 = vpop.f32.mrb[0].mxu0
      %5312 = vmatprep.mubr.bf16.mxu0 %v4129
      %5313 = vmatmul.mubr.bf16.gmra.mrb[0].mxu0 %v4127
      %v5314 = vpop.f32.mrb[0].mxu0
      %v5315 = vadd.f32 0.0, %v5314
      %v5316 = vpop.f32.mrb[0].mxu0
      %v5317 = vpop.f32.mrb[0].mxu0
      %v5318 = vadd.f32 0.0, %v5317
      %v5319 = vpop.f32.mrb[0].mxu0
      %5320 = vmatprep.mubr.bf16.mxu0 %v4196
      %5321 = vmatmul.mubr.bf16.gmra.mrb[0].mxu0 %v4194
      %v5322 = vpop.f32.mrb[0].mxu0
      %v5323 = vadd.f32 0.0, %v5322
      %v5324 = vpop.f32.mrb[0].mxu0
      %v5325 = vpop.f32.mrb[0].mxu0
      %v5326 = vadd.f32 0.0, %v5325
      %v5327 = vpop.f32.mrb[0].mxu0
      %5328 = vmatprep.mubr.bf16.mxu0 %v4263
      %5329 = vmatmul.mubr.bf16.gmra.mrb[0].mxu0 %v4261
      %v5330 = vpop.f32.mrb[0].mxu0
      %v5331 = vadd.f32 0.0, %v5330
      %v5332 = vpop.f32.mrb[0].mxu0
      %v5333 = vpop.f32.mrb[0].mxu0
      %v5334 = vadd.f32 0.0, %v5333
      %v5335 = vpop.f32.mrb[0].mxu0
      %5336 = vmatprep.mubr.bf16.mxu0 %v4330
      %5337 = vmatmul.mubr.bf16.gmra.mrb[0].mxu0 %v4328
      %v5338 = vpop.f32.mrb[0].mxu0
      %v5339 = vadd.f32 0.0, %v5338
      %v5340 = vpop.f32.mrb[0].mxu0
      %v5341 = vpop.f32.mrb[0].mxu0
      %v5342 = vadd.f32 0.0, %v5341
      %v5343 = vpop.f32.mrb[0].mxu0
      %5344 = vmatprep.mubr.bf16.mxu0 %v4397
      %5345 = vmatmul.mubr.bf16.gmra.mrb[0].mxu0 %v4395
      %v5346 = vpop.f32.mrb[0].mxu0
      %v5347 = vadd.f32 0.0, %v5346
      %v5348 = vpop.f32.mrb[0].mxu0
      %v5349 = vpop.f32.mrb[0].mxu0
      %v5350 = vadd.f32 0.0, %v5349
      %v5351 = vpop.f32.mrb[0].mxu0
      %5352 = vmatprep.mubr.bf16.mxu0 %v4464
      %5353 = vmatmul.mubr.bf16.gmra.mrb[0].mxu0 %v4462
      %v5354 = vpop.f32.mrb[0].mxu0
      %v5355 = vadd.f32 0.0, %v5354
      %v5356 = vpop.f32.mrb[0].mxu0
      %v5357 = vpop.f32.mrb[0].mxu0
      %v5358 = vadd.f32 0.0, %v5357
      %v5359 = vpop.f32.mrb[0].mxu0
      %5360 = vmatprep.mubr.bf16.mxu0 %v4531
      %5361 = vmatmul.mubr.bf16.gmra.mrb[0].mxu0 %v4529
      %v5362 = vpop.f32.mrb[0].mxu0
      %v5363 = vadd.f32 0.0, %v5362
      %v5364 = vpop.f32.mrb[0].mxu0
      %v5365 = vpop.f32.mrb[0].mxu0
      %v5366 = vadd.f32 0.0, %v5365
      %v5367 = vpop.f32.mrb[0].mxu0
      %5368 = vmatprep.mubr.bf16.mxu0 %v4598
      %5369 = vmatmul.mubr.bf16.gmra.mrb[0].mxu0 %v4596
      %v5370 = vpop.f32.mrb[0].mxu0
      %v5371 = vadd.f32 0.0, %v5370
      %v5372 = vpop.f32.mrb[0].mxu0
      %v5373 = vpop.f32.mrb[0].mxu0
      %v5374 = vadd.f32 0.0, %v5373
      %v5375 = vpop.f32.mrb[0].mxu0
      %5376 = vmatprep.mubr.bf16.mxu0 %v4665
      %5377 = vmatmul.mubr.bf16.gmra.mrb[0].mxu0 %v4663
      %v5378 = vpop.f32.mrb[0].mxu0
      %v5379 = vadd.f32 0.0, %v5378
      %v5380 = vpop.f32.mrb[0].mxu0
      %v5381 = vpop.f32.mrb[0].mxu0
      %v5382 = vadd.f32 0.0, %v5381
      %v5383 = vpop.f32.mrb[0].mxu0
      %5384 = vmatprep.mubr.bf16.mxu0 %v4732
      %5385 = vmatmul.mubr.bf16.gmra.mrb[0].mxu0 %v4730
      %v5386 = vpop.f32.mrb[0].mxu0
      %v5387 = vadd.f32 0.0, %v5386
      %v5388 = vpop.f32.mrb[0].mxu0
      %v5389 = vpop.f32.mrb[0].mxu0
      %v5390 = vadd.f32 0.0, %v5389
      %v5391 = vpop.f32.mrb[0].mxu0
      %5392 = vmatprep.mubr.bf16.mxu0 %v4799
      %5393 = vmatmul.mubr.bf16.gmra.mrb[0].mxu0 %v4797
      %v5394 = vpop.f32.mrb[0].mxu0
      %v5395 = vadd.f32 0.0, %v5394
      %v5396 = vpop.f32.mrb[0].mxu0
      %v5397 = vpop.f32.mrb[0].mxu0
      %v5398 = vadd.f32 0.0, %v5397
      %v5399 = vpop.f32.mrb[0].mxu0
      %5400 = vmatprep.mubr.bf16.mxu0 %v4866
      %5401 = vmatmul.mubr.bf16.gmra.mrb[0].mxu0 %v4864
      %v5402 = vpop.f32.mrb[0].mxu0
      %v5403 = vadd.f32 0.0, %v5402
      %v5404 = vpop.f32.mrb[0].mxu0
      %v5405 = vpop.f32.mrb[0].mxu0
      %v5406 = vadd.f32 0.0, %v5405
      %v5407 = vpop.f32.mrb[0].mxu0
      %5408 = vmatprep.mubr.bf16.mxu0 %v4933
      %5409 = vmatmul.mubr.bf16.gmra.mrb[0].mxu0 %v4931
      %v5410 = vpop.f32.mrb[0].mxu0
      %v5411 = vadd.f32 0.0, %v5410
      %v5412 = vpop.f32.mrb[0].mxu0
      %v5413 = vpop.f32.mrb[0].mxu0
      %v5414 = vadd.f32 0.0, %v5413
      %v5415 = vpop.f32.mrb[0].mxu0
      %5416 = vmatprep.mubr.bf16.mxu0 %v5000
      %5417 = vmatmul.mubr.bf16.gmra.mrb[0].mxu0 %v4998
      %v5418 = vpop.f32.mrb[0].mxu0
      %v5419 = vadd.f32 0.0, %v5418
      %v5420 = vpop.f32.mrb[0].mxu0
      %v5421 = vpop.f32.mrb[0].mxu0
      %v5422 = vadd.f32 0.0, %v5421
      %v5423 = vpop.f32.mrb[0].mxu0
      %5424 = vmatprep.mubr.bf16.mxu0 %v5023
      %5425 = vmatmul.mubr.bf16.gmra.mrb[0].mxu0 %v5016
      %v5426 = vpop.f32.mrb[0].mxu0
      %v5427 = vadd.f32 0.0, %v5426
      %v5428 = vpop.f32.mrb[0].mxu0
      %v5429 = vpop.f32.mrb[0].mxu0
      %v5430 = vpop.f32.mrb[0].mxu0
      %5431 = vdwg.mxu0
      %5432 = vmatprep.subr.bf16.mxu0 0
      %5433 = vmatpush1.bf16.msra.mxu0 %v5200
      %5434 = vmatprep.subr.bf16.mxu0 0
      %5435 = vmatpush1.bf16.msra.mxu0 %v5201
      %5436 = vmatprep.subr.bf16.mxu0 0
      %5437 = vmatpush1.bf16.msra.mxu0 %v5202
      %5438 = vmatprep.subr.bf16.mxu0 0
      %5439 = vmatpush1.bf16.msra.mxu0 %v5203
      %5440 = vmatprep.subr.bf16.mxu0 0
      %5441 = vmatpush1.bf16.msra.mxu0 %v5204
      %5442 = vmatprep.subr.bf16.mxu0 0
      %5443 = vmatpush1.bf16.msra.mxu0 %v5205
      %5444 = vmatprep.subr.bf16.mxu0 0
      %5445 = vmatpush1.bf16.msra.mxu0 %v5206
      %5446 = vmatprep.subr.bf16.mxu0 0
      %5447 = vmatpush1.bf16.msra.mxu0 %v5207
      %5448 = vmatprep.subr.bf16.mxu0 0
      %5449 = vmatpush1.bf16.msra.mxu0 0
      %5450 = vmatprep.subr.bf16.mxu0 0
      %5451 = vmatpush1.bf16.msra.mxu0 0
      %5452 = vmatprep.subr.bf16.mxu0 0
      %5453 = vmatpush1.bf16.msra.mxu0 0
      %5454 = vmatprep.subr.bf16.mxu0 0
      %5455 = vmatpush1.bf16.msra.mxu0 0
      %5456 = vmatprep.subr.bf16.mxu0 0
      %5457 = vmatpush1.bf16.msra.mxu0 0
      %5458 = vmatprep.subr.bf16.mxu0 0
      %5459 = vmatpush1.bf16.msra.mxu0 0
      %5460 = vmatprep.subr.bf16.mxu0 0
      %5461 = vmatpush1.bf16.msra.mxu0 0
      %5462 = vmatprep.subr.bf16.mxu0 0
      %5463 = vmatpush1.bf16.msra.mxu0 0
      %5464 = vmatprep.mubr.bf16.mxu0 0
      %5465 = vmatmul.mubr.bf16.gmra.mrb[0].mxu0 %v3726
      %v5466 = vpop.f32.mrb[0].mxu0
      %v5467 = vadd.f32 %v5267, %v5466
      %v5468 = vpop.f32.mrb[0].mxu0
      %v5469 = vpop.f32.mrb[0].mxu0
      %v5470 = vadd.f32 %v5270, %v5469
      %v5471 = vpop.f32.mrb[0].mxu0
      %5472 = vmatprep.mubr.bf16.mxu0 0
      %5473 = vmatmul.mubr.bf16.gmra.mrb[0].mxu0 %v3793
      %v5474 = vpop.f32.mrb[0].mxu0
      %v5475 = vadd.f32 %v5275, %v5474
      %v5476 = vpop.f32.mrb[0].mxu0
      %v5477 = vpop.f32.mrb[0].mxu0
      %v5478 = vadd.f32 %v5278, %v5477
      %v5479 = vpop.f32.mrb[0].mxu0
      %5480 = vmatprep.mubr.bf16.mxu0 0
      %5481 = vmatmul.mubr.bf16.gmra.mrb[0].mxu0 %v3860
      %v5482 = vpop.f32.mrb[0].mxu0
      %v5483 = vadd.f32 %v5283, %v5482
      %v5484 = vpop.f32.mrb[0].mxu0
      %v5485 = vpop.f32.mrb[0].mxu0
      %v5486 = vadd.f32 %v5286, %v5485
      %v5487 = vpop.f32.mrb[0].mxu0
      %5488 = vmatprep.mubr.bf16.mxu0 0
      %5489 = vmatmul.mubr.bf16.gmra.mrb[0].mxu0 %v3927
      %v5490 = vpop.f32.mrb[0].mxu0
      %v5491 = vadd.f32 %v5291, %v5490
      %v5492 = vpop.f32.mrb[0].mxu0
      %v5493 = vpop.f32.mrb[0].mxu0
      %v5494 = vadd.f32 %v5294, %v5493
      %v5495 = vpop.f32.mrb[0].mxu0
      %5496 = vmatprep.mubr.bf16.mxu0 0
      %5497 = vmatmul.mubr.bf16.gmra.mrb[0].mxu0 %v3994
      %v5498 = vpop.f32.mrb[0].mxu0
      %v5499 = vadd.f32 %v5299, %v5498
      %v5500 = vpop.f32.mrb[0].mxu0
      %v5501 = vpop.f32.mrb[0].mxu0
      %v5502 = vadd.f32 %v5302, %v5501
      %v5503 = vpop.f32.mrb[0].mxu0
      %5504 = vmatprep.mubr.bf16.mxu0 0
      %5505 = vmatmul.mubr.bf16.gmra.mrb[0].mxu0 %v4061
      %v5506 = vpop.f32.mrb[0].mxu0
      %v5507 = vadd.f32 %v5307, %v5506
      %v5508 = vpop.f32.mrb[0].mxu0
      %v5509 = vpop.f32.mrb[0].mxu0
      %v5510 = vadd.f32 %v5310, %v5509
      %v5511 = vpop.f32.mrb[0].mxu0
      %5512 = vmatprep.mubr.bf16.mxu0 0
      %5513 = vmatmul.mubr.bf16.gmra.mrb[0].mxu0 %v4128
      %v5514 = vpop.f32.mrb[0].mxu0
      %v5515 = vadd.f32 %v5315, %v5514
      %v5516 = vpop.f32.mrb[0].mxu0
      %v5517 = vpop.f32.mrb[0].mxu0
      %v5518 = vadd.f32 %v5318, %v5517
      %v5519 = vpop.f32.mrb[0].mxu0
      %5520 = vmatprep.mubr.bf16.mxu0 0
      %5521 = vmatmul.mubr.bf16.gmra.mrb[0].mxu0 %v4195
      %v5522 = vpop.f32.mrb[0].mxu0
      %v5523 = vadd.f32 %v5323, %v5522
      %v5524 = vpop.f32.mrb[0].mxu0
      %v5525 = vpop.f32.mrb[0].mxu0
      %v5526 = vadd.f32 %v5326, %v5525
      %v5527 = vpop.f32.mrb[0].mxu0
      %5528 = vmatprep.mubr.bf16.mxu0 0
      %5529 = vmatmul.mubr.bf16.gmra.mrb[0].mxu0 %v4262
      %v5530 = vpop.f32.mrb[0].mxu0
      %v5531 = vadd.f32 %v5331, %v5530
      %v5532 = vpop.f32.mrb[0].mxu0
      %v5533 = vpop.f32.mrb[0].mxu0
      %v5534 = vadd.f32 %v5334, %v5533
      %v5535 = vpop.f32.mrb[0].mxu0
      %5536 = vmatprep.mubr.bf16.mxu0 0
      %5537 = vmatmul.mubr.bf16.gmra.mrb[0].mxu0 %v4329
      %v5538 = vpop.f32.mrb[0].mxu0
      %v5539 = vadd.f32 %v5339, %v5538
      %v5540 = vpop.f32.mrb[0].mxu0
      %v5541 = vpop.f32.mrb[0].mxu0
      %v5542 = vadd.f32 %v5342, %v5541
      %v5543 = vpop.f32.mrb[0].mxu0
      %5544 = vmatprep.mubr.bf16.mxu0 0
      %5545 = vmatmul.mubr.bf16.gmra.mrb[0].mxu0 %v4396
      %v5546 = vpop.f32.mrb[0].mxu0
      %v5547 = vadd.f32 %v5347, %v5546
      %v5548 = vpop.f32.mrb[0].mxu0
      %v5549 = vpop.f32.mrb[0].mxu0
      %v5550 = vadd.f32 %v5350, %v5549
      %v5551 = vpop.f32.mrb[0].mxu0
      %5552 = vmatprep.mubr.bf16.mxu0 0
      %5553 = vmatmul.mubr.bf16.gmra.mrb[0].mxu0 %v4463
      %v5554 = vpop.f32.mrb[0].mxu0
      %v5555 = vadd.f32 %v5355, %v5554
      %v5556 = vpop.f32.mrb[0].mxu0
      %v5557 = vpop.f32.mrb[0].mxu0
      %v5558 = vadd.f32 %v5358, %v5557
      %v5559 = vpop.f32.mrb[0].mxu0
      %5560 = vmatprep.mubr.bf16.mxu0 0
      %5561 = vmatmul.mubr.bf16.gmra.mrb[0].mxu0 %v4530
      %v5562 = vpop.f32.mrb[0].mxu0
      %v5563 = vadd.f32 %v5363, %v5562
      %v5564 = vpop.f32.mrb[0].mxu0
      %v5565 = vpop.f32.mrb[0].mxu0
      %v5566 = vadd.f32 %v5366, %v5565
      %v5567 = vpop.f32.mrb[0].mxu0
      %5568 = vmatprep.mubr.bf16.mxu0 0
      %5569 = vmatmul.mubr.bf16.gmra.mrb[0].mxu0 %v4597
      %v5570 = vpop.f32.mrb[0].mxu0
      %v5571 = vadd.f32 %v5371, %v5570
      %v5572 = vpop.f32.mrb[0].mxu0
      %v5573 = vpop.f32.mrb[0].mxu0
      %v5574 = vadd.f32 %v5374, %v5573
      %v5575 = vpop.f32.mrb[0].mxu0
      %5576 = vmatprep.mubr.bf16.mxu0 0
      %5577 = vmatmul.mubr.bf16.gmra.mrb[0].mxu0 %v4664
      %v5578 = vpop.f32.mrb[0].mxu0
      %v5579 = vadd.f32 %v5379, %v5578
      %v5580 = vpop.f32.mrb[0].mxu0
      %v5581 = vpop.f32.mrb[0].mxu0
      %v5582 = vadd.f32 %v5382, %v5581
      %v5583 = vpop.f32.mrb[0].mxu0
      %5584 = vmatprep.mubr.bf16.mxu0 0
      %5585 = vmatmul.mubr.bf16.gmra.mrb[0].mxu0 %v4731
      %v5586 = vpop.f32.mrb[0].mxu0
      %v5587 = vadd.f32 %v5387, %v5586
      %v5588 = vpop.f32.mrb[0].mxu0
      %v5589 = vpop.f32.mrb[0].mxu0
      %v5590 = vadd.f32 %v5390, %v5589
      %v5591 = vpop.f32.mrb[0].mxu0
      %5592 = vmatprep.mubr.bf16.mxu0 0
      %5593 = vmatmul.mubr.bf16.gmra.mrb[0].mxu0 %v4798
      %v5594 = vpop.f32.mrb[0].mxu0
      %v5595 = vadd.f32 %v5395, %v5594
      %v5596 = vpop.f32.mrb[0].mxu0
      %v5597 = vpop.f32.mrb[0].mxu0
      %v5598 = vadd.f32 %v5398, %v5597
      %v5599 = vpop.f32.mrb[0].mxu0
      %5600 = vmatprep.mubr.bf16.mxu0 0
      %5601 = vmatmul.mubr.bf16.gmra.mrb[0].mxu0 %v4865
      %v5602 = vpop.f32.mrb[0].mxu0
      %v5603 = vadd.f32 %v5403, %v5602
      %v5604 = vpop.f32.mrb[0].mxu0
      %v5605 = vpop.f32.mrb[0].mxu0
      %v5606 = vadd.f32 %v5406, %v5605
      %v5607 = vpop.f32.mrb[0].mxu0
      %5608 = vmatprep.mubr.bf16.mxu0 0
      %5609 = vmatmul.mubr.bf16.gmra.mrb[0].mxu0 %v4932
      %v5610 = vpop.f32.mrb[0].mxu0
      %v5611 = vadd.f32 %v5411, %v5610
      %v5612 = vpop.f32.mrb[0].mxu0
      %v5613 = vpop.f32.mrb[0].mxu0
      %v5614 = vadd.f32 %v5414, %v5613
      %v5615 = vpop.f32.mrb[0].mxu0
      %5616 = vmatprep.mubr.bf16.mxu0 0
      %5617 = vmatmul.mubr.bf16.gmra.mrb[0].mxu0 %v4999
      %v5618 = vpop.f32.mrb[0].mxu0
      %v5619 = vadd.f32 %v5419, %v5618
      %v5620 = vpop.f32.mrb[0].mxu0
      %v5621 = vpop.f32.mrb[0].mxu0
      %v5622 = vadd.f32 %v5422, %v5621
      %v5623 = vpop.f32.mrb[0].mxu0
      %5624 = vmatprep.mubr.bf16.mxu0 0
      %5625 = vmatmul.mubr.bf16.gmra.mrb[0].mxu0 %v5024
      %v5626 = vpop.f32.mrb[0].mxu0
      %v5627 = vadd.f32 %v5427, %v5626
      %v5628 = vpop.f32.mrb[0].mxu0
      %v5629 = vpop.f32.mrb[0].mxu0
      %v5630 = vpop.f32.mrb[0].mxu0
      %5631 = vdwg.mxu0
      %v5632 = vcombine.low %v512, %v526
      %v5633 = vcombine.low %v534, %v536
      %v5634 = vcombine.low %v519, %v533
      %v5635 = vcombine.low %v535, %v537
      %v5637 = vunpack.c.l.s4 1966171168
      %v5638 = vunpack.c.0.s8 %v5637
      %v5639 = vlaneseq
      %v5640 = vshrl.u32 %v5639, 7
      %v5641 = vsub.s32 %v5638, %v5640
      %v5642 = vrot.slane %v5632, %v5641
      %v5644 = vunpack.c.l.s4 1966171168
      %v5645 = vunpack.c.0.s8 %v5644
      %v5646 = vlaneseq
      %v5647 = vshrl.u32 %v5646, 7
      %v5648 = vsub.s32 %v5645, %v5647
      %v5649 = vrot.slane %v5633, %v5648
      %v5651 = vunpack.c.l.s4 1966171168
      %v5652 = vunpack.c.0.s8 %v5651
      %v5653 = vlaneseq
      %v5654 = vshrl.u32 %v5653, 7
      %v5655 = vsub.s32 %v5652, %v5654
      %v5656 = vrot.slane %v5634, %v5655
      %v5658 = vunpack.c.l.s4 1966171168
      %v5659 = vunpack.c.0.s8 %v5658
      %v5660 = vlaneseq
      %v5661 = vshrl.u32 %v5660, 7
      %v5662 = vsub.s32 %v5659, %v5661
      %v5663 = vrot.slane %v5635, %v5662
      %v5664 = vcombine.low %v5642, %v5649
      %v5665 = vcombine.high %v5642, %v5649
      %v5666 = vcombine.low %v5656, %v5663
      %v5667 = vcombine.high %v5656, %v5663
      %v5669 = vunpack.c.l.s4 1966171168
      %v5670 = vunpack.c.0.s8 %v5669
      %v5671 = vlaneseq
      %v5672 = vshrl.u32 %v5671, 7
      %v5673 = vsub.s32 %v5670, %v5672
      %v5674 = vrot.slane %v5664, %v5673
      %v5676 = vunpack.c.l.s4 1966171168
      %v5677 = vunpack.c.0.s8 %v5676
      %v5678 = vlaneseq
      %v5679 = vshrl.u32 %v5678, 7
      %v5680 = vsub.s32 %v5677, %v5679
      %v5681 = vrot.slane %v5665, %v5680
      %v5683 = vunpack.c.l.s4 1966171168
      %v5684 = vunpack.c.0.s8 %v5683
      %v5685 = vlaneseq
      %v5686 = vshrl.u32 %v5685, 7
      %v5687 = vsub.s32 %v5684, %v5686
      %v5688 = vrot.slane %v5666, %v5687
      %v5690 = vunpack.c.l.s4 1966171168
      %v5691 = vunpack.c.0.s8 %v5690
      %v5692 = vlaneseq
      %v5693 = vshrl.u32 %v5692, 7
      %v5694 = vsub.s32 %v5691, %v5693
      %v5695 = vrot.slane %v5667, %v5694
      %v5696 = vcombine.low %v5674, %v5688
      %v5697 = vcombine.high %v5674, %v5688
      %v5698 = vcombine.low %v5681, %v5695
      %v5699 = vcombine.low %v560, %v602
      %v5700 = vcombine.low %v616, %v624
      %v5701 = vcombine.low %v626, %v609
      %v5702 = vcombine.low %v623, %v625
      %v5704 = vunpack.c.l.s4 1966171168
      %v5705 = vunpack.c.0.s8 %v5704
      %v5706 = vlaneseq
      %v5707 = vshrl.u32 %v5706, 7
      %v5708 = vsub.s32 %v5705, %v5707
      %v5709 = vrot.slane %v5699, %v5708
      %v5711 = vunpack.c.l.s4 1966171168
      %v5712 = vunpack.c.0.s8 %v5711
      %v5713 = vlaneseq
      %v5714 = vshrl.u32 %v5713, 7
      %v5715 = vsub.s32 %v5712, %v5714
      %v5716 = vrot.slane %v5700, %v5715
      %v5718 = vunpack.c.l.s4 1966171168
      %v5719 = vunpack.c.0.s8 %v5718
      %v5720 = vlaneseq
      %v5721 = vshrl.u32 %v5720, 7
      %v5722 = vsub.s32 %v5719, %v5721
      %v5723 = vrot.slane %v5701, %v5722
      %v5725 = vunpack.c.l.s4 1966171168
      %v5726 = vunpack.c.0.s8 %v5725
      %v5727 = vlaneseq
      %v5728 = vshrl.u32 %v5727, 7
      %v5729 = vsub.s32 %v5726, %v5728
      %v5730 = vrot.slane %v5702, %v5729
      %v5731 = vcombine.low %v5709, %v5716
      %v5732 = vcombine.high %v5709, %v5716
      %v5733 = vcombine.low %v5723, %v5730
      %v5734 = vcombine.high %v5723, %v5730
      %v5736 = vunpack.c.l.s4 1966171168
      %v5737 = vunpack.c.0.s8 %v5736
      %v5738 = vlaneseq
      %v5739 = vshrl.u32 %v5738, 7
      %v5740 = vsub.s32 %v5737, %v5739
      %v5741 = vrot.slane %v5731, %v5740
      %v5743 = vunpack.c.l.s4 1966171168
      %v5744 = vunpack.c.0.s8 %v5743
      %v5745 = vlaneseq
      %v5746 = vshrl.u32 %v5745, 7
      %v5747 = vsub.s32 %v5744, %v5746
      %v5748 = vrot.slane %v5732, %v5747
      %v5750 = vunpack.c.l.s4 1966171168
      %v5751 = vunpack.c.0.s8 %v5750
      %v5752 = vlaneseq
      %v5753 = vshrl.u32 %v5752, 7
      %v5754 = vsub.s32 %v5751, %v5753
      %v5755 = vrot.slane %v5733, %v5754
      %v5757 = vunpack.c.l.s4 1966171168
      %v5758 = vunpack.c.0.s8 %v5757
      %v5759 = vlaneseq
      %v5760 = vshrl.u32 %v5759, 7
      %v5761 = vsub.s32 %v5758, %v5760
      %v5762 = vrot.slane %v5734, %v5761
      %v5763 = vcombine.low %v5741, %v5755
      %v5764 = vcombine.high %v5741, %v5755
      %v5765 = vcombine.low %v5748, %v5762
      %v5766 = vcombine.low %v627, %v650
      %v5767 = vcombine.low %v692, %v706
      %v5768 = vcombine.low %v714, %v716
      %v5769 = vcombine.low %v699, %v713
      %v5771 = vunpack.c.l.s4 1966171168
      %v5772 = vunpack.c.0.s8 %v5771
      %v5773 = vlaneseq
      %v5774 = vshrl.u32 %v5773, 7
      %v5775 = vsub.s32 %v5772, %v5774
      %v5776 = vrot.slane %v5766, %v5775
      %v5778 = vunpack.c.l.s4 1966171168
      %v5779 = vunpack.c.0.s8 %v5778
      %v5780 = vlaneseq
      %v5781 = vshrl.u32 %v5780, 7
      %v5782 = vsub.s32 %v5779, %v5781
      %v5783 = vrot.slane %v5767, %v5782
      %v5785 = vunpack.c.l.s4 1966171168
      %v5786 = vunpack.c.0.s8 %v5785
      %v5787 = vlaneseq
      %v5788 = vshrl.u32 %v5787, 7
      %v5789 = vsub.s32 %v5786, %v5788
      %v5790 = vrot.slane %v5768, %v5789
      %v5792 = vunpack.c.l.s4 1966171168
      %v5793 = vunpack.c.0.s8 %v5792
      %v5794 = vlaneseq
      %v5795 = vshrl.u32 %v5794, 7
      %v5796 = vsub.s32 %v5793, %v5795
      %v5797 = vrot.slane %v5769, %v5796
      %v5798 = vcombine.low %v5776, %v5783
      %v5799 = vcombine.high %v5776, %v5783
      %v5800 = vcombine.low %v5790, %v5797
      %v5801 = vcombine.high %v5790, %v5797
      %v5803 = vunpack.c.l.s4 1966171168
      %v5804 = vunpack.c.0.s8 %v5803
      %v5805 = vlaneseq
      %v5806 = vshrl.u32 %v5805, 7
      %v5807 = vsub.s32 %v5804, %v5806
      %v5808 = vrot.slane %v5798, %v5807
      %v5810 = vunpack.c.l.s4 1966171168
      %v5811 = vunpack.c.0.s8 %v5810
      %v5812 = vlaneseq
      %v5813 = vshrl.u32 %v5812, 7
      %v5814 = vsub.s32 %v5811, %v5813
      %v5815 = vrot.slane %v5799, %v5814
      %v5817 = vunpack.c.l.s4 1966171168
      %v5818 = vunpack.c.0.s8 %v5817
      %v5819 = vlaneseq
      %v5820 = vshrl.u32 %v5819, 7
      %v5821 = vsub.s32 %v5818, %v5820
      %v5822 = vrot.slane %v5800, %v5821
      %v5824 = vunpack.c.l.s4 1966171168
      %v5825 = vunpack.c.0.s8 %v5824
      %v5826 = vlaneseq
      %v5827 = vshrl.u32 %v5826, 7
      %v5828 = vsub.s32 %v5825, %v5827
      %v5829 = vrot.slane %v5801, %v5828
      %v5830 = vcombine.low %v5808, %v5822
      %v5831 = vcombine.high %v5808, %v5822
      %v5832 = vcombine.low %v5815, %v5829
      %v5833 = vcombine.low %v715, %v717
      %v5834 = vcombine.low %v740, %v782
      %v5835 = vcombine.low %v796, %v804
      %v5836 = vcombine.low %v806, %v789
      %v5838 = vunpack.c.l.s4 1966171168
      %v5839 = vunpack.c.0.s8 %v5838
      %v5840 = vlaneseq
      %v5841 = vshrl.u32 %v5840, 7
      %v5842 = vsub.s32 %v5839, %v5841
      %v5843 = vrot.slane %v5833, %v5842
      %v5845 = vunpack.c.l.s4 1966171168
      %v5846 = vunpack.c.0.s8 %v5845
      %v5847 = vlaneseq
      %v5848 = vshrl.u32 %v5847, 7
      %v5849 = vsub.s32 %v5846, %v5848
      %v5850 = vrot.slane %v5834, %v5849
      %v5852 = vunpack.c.l.s4 1966171168
      %v5853 = vunpack.c.0.s8 %v5852
      %v5854 = vlaneseq
      %v5855 = vshrl.u32 %v5854, 7
      %v5856 = vsub.s32 %v5853, %v5855
      %v5857 = vrot.slane %v5835, %v5856
      %v5859 = vunpack.c.l.s4 1966171168
      %v5860 = vunpack.c.0.s8 %v5859
      %v5861 = vlaneseq
      %v5862 = vshrl.u32 %v5861, 7
      %v5863 = vsub.s32 %v5860, %v5862
      %v5864 = vrot.slane %v5836, %v5863
      %v5865 = vcombine.low %v5843, %v5850
      %v5866 = vcombine.high %v5843, %v5850
      %v5867 = vcombine.low %v5857, %v5864
      %v5868 = vcombine.high %v5857, %v5864
      %v5870 = vunpack.c.l.s4 1966171168
      %v5871 = vunpack.c.0.s8 %v5870
      %v5872 = vlaneseq
      %v5873 = vshrl.u32 %v5872, 7
      %v5874 = vsub.s32 %v5871, %v5873
      %v5875 = vrot.slane %v5865, %v5874
      %v5877 = vunpack.c.l.s4 1966171168
      %v5878 = vunpack.c.0.s8 %v5877
      %v5879 = vlaneseq
      %v5880 = vshrl.u32 %v5879, 7
      %v5881 = vsub.s32 %v5878, %v5880
      %v5882 = vrot.slane %v5866, %v5881
      %v5884 = vunpack.c.l.s4 1966171168
      %v5885 = vunpack.c.0.s8 %v5884
      %v5886 = vlaneseq
      %v5887 = vshrl.u32 %v5886, 7
      %v5888 = vsub.s32 %v5885, %v5887
      %v5889 = vrot.slane %v5867, %v5888
      %v5891 = vunpack.c.l.s4 1966171168
      %v5892 = vunpack.c.0.s8 %v5891
      %v5893 = vlaneseq
      %v5894 = vshrl.u32 %v5893, 7
      %v5895 = vsub.s32 %v5892, %v5894
      %v5896 = vrot.slane %v5868, %v5895
      %v5897 = vcombine.low %v5875, %v5889
      %v5898 = vcombine.high %v5875, %v5889
      %v5899 = vcombine.low %v5882, %v5896
      %v5900 = vcombine.low %v803, %v805
      %v5901 = vcombine.low %v807, %v830
      %v5902 = vcombine.low %v872, %v886
      %v5903 = vcombine.low %v894, %v896
      %v5905 = vunpack.c.l.s4 1966171168
      %v5906 = vunpack.c.0.s8 %v5905
      %v5907 = vlaneseq
      %v5908 = vshrl.u32 %v5907, 7
      %v5909 = vsub.s32 %v5906, %v5908
      %v5910 = vrot.slane %v5900, %v5909
      %v5912 = vunpack.c.l.s4 1966171168
      %v5913 = vunpack.c.0.s8 %v5912
      %v5914 = vlaneseq
      %v5915 = vshrl.u32 %v5914, 7
      %v5916 = vsub.s32 %v5913, %v5915
      %v5917 = vrot.slane %v5901, %v5916
      %v5919 = vunpack.c.l.s4 1966171168
      %v5920 = vunpack.c.0.s8 %v5919
      %v5921 = vlaneseq
      %v5922 = vshrl.u32 %v5921, 7
      %v5923 = vsub.s32 %v5920, %v5922
      %v5924 = vrot.slane %v5902, %v5923
      %v5926 = vunpack.c.l.s4 1966171168
      %v5927 = vunpack.c.0.s8 %v5926
      %v5928 = vlaneseq
      %v5929 = vshrl.u32 %v5928, 7
      %v5930 = vsub.s32 %v5927, %v5929
      %v5931 = vrot.slane %v5903, %v5930
      %v5932 = vcombine.low %v5910, %v5917
      %v5933 = vcombine.high %v5910, %v5917
      %v5934 = vcombine.low %v5924, %v5931
      %v5935 = vcombine.high %v5924, %v5931
      %v5937 = vunpack.c.l.s4 1966171168
      %v5938 = vunpack.c.0.s8 %v5937
      %v5939 = vlaneseq
      %v5940 = vshrl.u32 %v5939, 7
      %v5941 = vsub.s32 %v5938, %v5940
      %v5942 = vrot.slane %v5932, %v5941
      %v5944 = vunpack.c.l.s4 1966171168
      %v5945 = vunpack.c.0.s8 %v5944
      %v5946 = vlaneseq
      %v5947 = vshrl.u32 %v5946, 7
      %v5948 = vsub.s32 %v5945, %v5947
      %v5949 = vrot.slane %v5933, %v5948
      %v5951 = vunpack.c.l.s4 1966171168
      %v5952 = vunpack.c.0.s8 %v5951
      %v5953 = vlaneseq
      %v5954 = vshrl.u32 %v5953, 7
      %v5955 = vsub.s32 %v5952, %v5954
      %v5956 = vrot.slane %v5934, %v5955
      %v5958 = vunpack.c.l.s4 1966171168
      %v5959 = vunpack.c.0.s8 %v5958
      %v5960 = vlaneseq
      %v5961 = vshrl.u32 %v5960, 7
      %v5962 = vsub.s32 %v5959, %v5961
      %v5963 = vrot.slane %v5935, %v5962
      %v5964 = vcombine.low %v5942, %v5956
      %v5965 = vcombine.high %v5942, %v5956
      %v5966 = vcombine.low %v5949, %v5963
      %v5967 = vcombine.low %v879, %v893
      %v5968 = vcombine.low %v895, %v897
      %v5969 = vcombine.low %v920, %v962
      %v5970 = vcombine.low %v976, %v984
      %v5972 = vunpack.c.l.s4 1966171168
      %v5973 = vunpack.c.0.s8 %v5972
      %v5974 = vlaneseq
      %v5975 = vshrl.u32 %v5974, 7
      %v5976 = vsub.s32 %v5973, %v5975
      %v5977 = vrot.slane %v5967, %v5976
      %v5979 = vunpack.c.l.s4 1966171168
      %v5980 = vunpack.c.0.s8 %v5979
      %v5981 = vlaneseq
      %v5982 = vshrl.u32 %v5981, 7
      %v5983 = vsub.s32 %v5980, %v5982
      %v5984 = vrot.slane %v5968, %v5983
      %v5986 = vunpack.c.l.s4 1966171168
      %v5987 = vunpack.c.0.s8 %v5986
      %v5988 = vlaneseq
      %v5989 = vshrl.u32 %v5988, 7
      %v5990 = vsub.s32 %v5987, %v5989
      %v5991 = vrot.slane %v5969, %v5990
      %v5993 = vunpack.c.l.s4 1966171168
      %v5994 = vunpack.c.0.s8 %v5993
      %v5995 = vlaneseq
      %v5996 = vshrl.u32 %v5995, 7
      %v5997 = vsub.s32 %v5994, %v5996
      %v5998 = vrot.slane %v5970, %v5997
      %v5999 = vcombine.low %v5977, %v5984
      %v6000 = vcombine.high %v5977, %v5984
      %v6001 = vcombine.low %v5991, %v5998
      %v6002 = vcombine.high %v5991, %v5998
      %v6004 = vunpack.c.l.s4 1966171168
      %v6005 = vunpack.c.0.s8 %v6004
      %v6006 = vlaneseq
      %v6007 = vshrl.u32 %v6006, 7
      %v6008 = vsub.s32 %v6005, %v6007
      %v6009 = vrot.slane %v5999, %v6008
      %v6011 = vunpack.c.l.s4 1966171168
      %v6012 = vunpack.c.0.s8 %v6011
      %v6013 = vlaneseq
      %v6014 = vshrl.u32 %v6013, 7
      %v6015 = vsub.s32 %v6012, %v6014
      %v6016 = vrot.slane %v6000, %v6015
      %v6018 = vunpack.c.l.s4 1966171168
      %v6019 = vunpack.c.0.s8 %v6018
      %v6020 = vlaneseq
      %v6021 = vshrl.u32 %v6020, 7
      %v6022 = vsub.s32 %v6019, %v6021
      %v6023 = vrot.slane %v6001, %v6022
      %v6025 = vunpack.c.l.s4 1966171168
      %v6026 = vunpack.c.0.s8 %v6025
      %v6027 = vlaneseq
      %v6028 = vshrl.u32 %v6027, 7
      %v6029 = vsub.s32 %v6026, %v6028
      %v6030 = vrot.slane %v6002, %v6029
      %v6031 = vcombine.low %v6009, %v6023
      %v6032 = vcombine.high %v6009, %v6023
      %v6033 = vcombine.low %v6016, %v6030
      %v6034 = vcombine.low %v986, %v969
      %v6035 = vcombine.low %v983, %v985
      %v6036 = vcombine.low %v987, %v1010
      %v6037 = vcombine.low %v1052, %v1066
      %v6039 = vunpack.c.l.s4 1966171168
      %v6040 = vunpack.c.0.s8 %v6039
      %v6041 = vlaneseq
      %v6042 = vshrl.u32 %v6041, 7
      %v6043 = vsub.s32 %v6040, %v6042
      %v6044 = vrot.slane %v6034, %v6043
      %v6046 = vunpack.c.l.s4 1966171168
      %v6047 = vunpack.c.0.s8 %v6046
      %v6048 = vlaneseq
      %v6049 = vshrl.u32 %v6048, 7
      %v6050 = vsub.s32 %v6047, %v6049
      %v6051 = vrot.slane %v6035, %v6050
      %v6053 = vunpack.c.l.s4 1966171168
      %v6054 = vunpack.c.0.s8 %v6053
      %v6055 = vlaneseq
      %v6056 = vshrl.u32 %v6055, 7
      %v6057 = vsub.s32 %v6054, %v6056
      %v6058 = vrot.slane %v6036, %v6057
      %v6060 = vunpack.c.l.s4 1966171168
      %v6061 = vunpack.c.0.s8 %v6060
      %v6062 = vlaneseq
      %v6063 = vshrl.u32 %v6062, 7
      %v6064 = vsub.s32 %v6061, %v6063
      %v6065 = vrot.slane %v6037, %v6064
      %v6066 = vcombine.low %v6044, %v6051
      %v6067 = vcombine.high %v6044, %v6051
      %v6068 = vcombine.low %v6058, %v6065
      %v6069 = vcombine.high %v6058, %v6065
      %v6071 = vunpack.c.l.s4 1966171168
      %v6072 = vunpack.c.0.s8 %v6071
      %v6073 = vlaneseq
      %v6074 = vshrl.u32 %v6073, 7
      %v6075 = vsub.s32 %v6072, %v6074
      %v6076 = vrot.slane %v6066, %v6075
      %v6078 = vunpack.c.l.s4 1966171168
      %v6079 = vunpack.c.0.s8 %v6078
      %v6080 = vlaneseq
      %v6081 = vshrl.u32 %v6080, 7
      %v6082 = vsub.s32 %v6079, %v6081
      %v6083 = vrot.slane %v6067, %v6082
      %v6085 = vunpack.c.l.s4 1966171168
      %v6086 = vunpack.c.0.s8 %v6085
      %v6087 = vlaneseq
      %v6088 = vshrl.u32 %v6087, 7
      %v6089 = vsub.s32 %v6086, %v6088
      %v6090 = vrot.slane %v6068, %v6089
      %v6092 = vunpack.c.l.s4 1966171168
      %v6093 = vunpack.c.0.s8 %v6092
      %v6094 = vlaneseq
      %v6095 = vshrl.u32 %v6094, 7
      %v6096 = vsub.s32 %v6093, %v6095
      %v6097 = vrot.slane %v6069, %v6096
      %v6098 = vcombine.low %v6076, %v6090
      %v6099 = vcombine.high %v6076, %v6090
      %v6100 = vcombine.low %v6083, %v6097
      %v6101 = vcombine.low %v1074, %v1076
      %v6102 = vcombine.low %v1059, %v1073
      %v6103 = vcombine.low %v1075, %v1077
      %v6104 = vcombine.low %v1100, %v1142
      %v6106 = vunpack.c.l.s4 1966171168
      %v6107 = vunpack.c.0.s8 %v6106
      %v6108 = vlaneseq
      %v6109 = vshrl.u32 %v6108, 7
      %v6110 = vsub.s32 %v6107, %v6109
      %v6111 = vrot.slane %v6101, %v6110
      %v6113 = vunpack.c.l.s4 1966171168
      %v6114 = vunpack.c.0.s8 %v6113
      %v6115 = vlaneseq
      %v6116 = vshrl.u32 %v6115, 7
      %v6117 = vsub.s32 %v6114, %v6116
      %v6118 = vrot.slane %v6102, %v6117
      %v6120 = vunpack.c.l.s4 1966171168
      %v6121 = vunpack.c.0.s8 %v6120
      %v6122 = vlaneseq
      %v6123 = vshrl.u32 %v6122, 7
      %v6124 = vsub.s32 %v6121, %v6123
      %v6125 = vrot.slane %v6103, %v6124
      %v6127 = vunpack.c.l.s4 1966171168
      %v6128 = vunpack.c.0.s8 %v6127
      %v6129 = vlaneseq
      %v6130 = vshrl.u32 %v6129, 7
      %v6131 = vsub.s32 %v6128, %v6130
      %v6132 = vrot.slane %v6104, %v6131
      %v6133 = vcombine.low %v6111, %v6118
      %v6134 = vcombine.high %v6111, %v6118
      %v6135 = vcombine.low %v6125, %v6132
      %v6136 = vcombine.high %v6125, %v6132
      %v6138 = vunpack.c.l.s4 1966171168
      %v6139 = vunpack.c.0.s8 %v6138
      %v6140 = vlaneseq
      %v6141 = vshrl.u32 %v6140, 7
      %v6142 = vsub.s32 %v6139, %v6141
      %v6143 = vrot.slane %v6133, %v6142
      %v6145 = vunpack.c.l.s4 1966171168
      %v6146 = vunpack.c.0.s8 %v6145
      %v6147 = vlaneseq
      %v6148 = vshrl.u32 %v6147, 7
      %v6149 = vsub.s32 %v6146, %v6148
      %v6150 = vrot.slane %v6134, %v6149
      %v6152 = vunpack.c.l.s4 1966171168
      %v6153 = vunpack.c.0.s8 %v6152
      %v6154 = vlaneseq
      %v6155 = vshrl.u32 %v6154, 7
      %v6156 = vsub.s32 %v6153, %v6155
      %v6157 = vrot.slane %v6135, %v6156
      %v6159 = vunpack.c.l.s4 1966171168
      %v6160 = vunpack.c.0.s8 %v6159
      %v6161 = vlaneseq
      %v6162 = vshrl.u32 %v6161, 7
      %v6163 = vsub.s32 %v6160, %v6162
      %v6164 = vrot.slane %v6136, %v6163
      %v6165 = vcombine.low %v6143, %v6157
      %v6166 = vcombine.high %v6143, %v6157
      %v6167 = vcombine.low %v6150, %v6164
      %v6168 = vcombine.low %v1156, %v1164
      %v6169 = vcombine.low %v1166, %v1149
      %v6170 = vcombine.low %v1163, %v1165
      %v6171 = vcombine.low %v1167, %v1190
      %v6173 = vunpack.c.l.s4 1966171168
      %v6174 = vunpack.c.0.s8 %v6173
      %v6175 = vlaneseq
      %v6176 = vshrl.u32 %v6175, 7
      %v6177 = vsub.s32 %v6174, %v6176
      %v6178 = vrot.slane %v6168, %v6177
      %v6180 = vunpack.c.l.s4 1966171168
      %v6181 = vunpack.c.0.s8 %v6180
      %v6182 = vlaneseq
      %v6183 = vshrl.u32 %v6182, 7
      %v6184 = vsub.s32 %v6181, %v6183
      %v6185 = vrot.slane %v6169, %v6184
      %v6187 = vunpack.c.l.s4 1966171168
      %v6188 = vunpack.c.0.s8 %v6187
      %v6189 = vlaneseq
      %v6190 = vshrl.u32 %v6189, 7
      %v6191 = vsub.s32 %v6188, %v6190
      %v6192 = vrot.slane %v6170, %v6191
      %v6194 = vunpack.c.l.s4 1966171168
      %v6195 = vunpack.c.0.s8 %v6194
      %v6196 = vlaneseq
      %v6197 = vshrl.u32 %v6196, 7
      %v6198 = vsub.s32 %v6195, %v6197
      %v6199 = vrot.slane %v6171, %v6198
      %v6200 = vcombine.low %v6178, %v6185
      %v6201 = vcombine.high %v6178, %v6185
      %v6202 = vcombine.low %v6192, %v6199
      %v6203 = vcombine.high %v6192, %v6199
      %v6205 = vunpack.c.l.s4 1966171168
      %v6206 = vunpack.c.0.s8 %v6205
      %v6207 = vlaneseq
      %v6208 = vshrl.u32 %v6207, 7
      %v6209 = vsub.s32 %v6206, %v6208
      %v6210 = vrot.slane %v6200, %v6209
      %v6212 = vunpack.c.l.s4 1966171168
      %v6213 = vunpack.c.0.s8 %v6212
      %v6214 = vlaneseq
      %v6215 = vshrl.u32 %v6214, 7
      %v6216 = vsub.s32 %v6213, %v6215
      %v6217 = vrot.slane %v6201, %v6216
      %v6219 = vunpack.c.l.s4 1966171168
      %v6220 = vunpack.c.0.s8 %v6219
      %v6221 = vlaneseq
      %v6222 = vshrl.u32 %v6221, 7
      %v6223 = vsub.s32 %v6220, %v6222
      %v6224 = vrot.slane %v6202, %v6223
      %v6226 = vunpack.c.l.s4 1966171168
      %v6227 = vunpack.c.0.s8 %v6226
      %v6228 = vlaneseq
      %v6229 = vshrl.u32 %v6228, 7
      %v6230 = vsub.s32 %v6227, %v6229
      %v6231 = vrot.slane %v6203, %v6230
      %v6232 = vcombine.low %v6210, %v6224
      %v6233 = vcombine.high %v6210, %v6224
      %v6234 = vcombine.low %v6217, %v6231
      %v6235 = vcombine.low %v1232, %v1246
      %v6236 = vcombine.low %v1254, %v1256
      %v6237 = vcombine.low %v1239, %v1253
      %v6238 = vcombine.low %v1255, %v1257
      %v6240 = vunpack.c.l.s4 1966171168
      %v6241 = vunpack.c.0.s8 %v6240
      %v6242 = vlaneseq
      %v6243 = vshrl.u32 %v6242, 7
      %v6244 = vsub.s32 %v6241, %v6243
      %v6245 = vrot.slane %v6235, %v6244
      %v6247 = vunpack.c.l.s4 1966171168
      %v6248 = vunpack.c.0.s8 %v6247
      %v6249 = vlaneseq
      %v6250 = vshrl.u32 %v6249, 7
      %v6251 = vsub.s32 %v6248, %v6250
      %v6252 = vrot.slane %v6236, %v6251
      %v6254 = vunpack.c.l.s4 1966171168
      %v6255 = vunpack.c.0.s8 %v6254
      %v6256 = vlaneseq
      %v6257 = vshrl.u32 %v6256, 7
      %v6258 = vsub.s32 %v6255, %v6257
      %v6259 = vrot.slane %v6237, %v6258
      %v6261 = vunpack.c.l.s4 1966171168
      %v6262 = vunpack.c.0.s8 %v6261
      %v6263 = vlaneseq
      %v6264 = vshrl.u32 %v6263, 7
      %v6265 = vsub.s32 %v6262, %v6264
      %v6266 = vrot.slane %v6238, %v6265
      %v6267 = vcombine.low %v6245, %v6252
      %v6268 = vcombine.high %v6245, %v6252
      %v6269 = vcombine.low %v6259, %v6266
      %v6270 = vcombine.high %v6259, %v6266
      %v6272 = vunpack.c.l.s4 1966171168
      %v6273 = vunpack.c.0.s8 %v6272
      %v6274 = vlaneseq
      %v6275 = vshrl.u32 %v6274, 7
      %v6276 = vsub.s32 %v6273, %v6275
      %v6277 = vrot.slane %v6267, %v6276
      %v6279 = vunpack.c.l.s4 1966171168
      %v6280 = vunpack.c.0.s8 %v6279
      %v6281 = vlaneseq
      %v6282 = vshrl.u32 %v6281, 7
      %v6283 = vsub.s32 %v6280, %v6282
      %v6284 = vrot.slane %v6268, %v6283
      %v6286 = vunpack.c.l.s4 1966171168
      %v6287 = vunpack.c.0.s8 %v6286
      %v6288 = vlaneseq
      %v6289 = vshrl.u32 %v6288, 7
      %v6290 = vsub.s32 %v6287, %v6289
      %v6291 = vrot.slane %v6269, %v6290
      %v6293 = vunpack.c.l.s4 1966171168
      %v6294 = vunpack.c.0.s8 %v6293
      %v6295 = vlaneseq
      %v6296 = vshrl.u32 %v6295, 7
      %v6297 = vsub.s32 %v6294, %v6296
      %v6298 = vrot.slane %v6270, %v6297
      %v6299 = vcombine.low %v6277, %v6291
      %v6300 = vcombine.high %v6277, %v6291
      %v6301 = vcombine.low %v6284, %v6298
      %v6302 = vcombine.low %v1280, %v1322
      %v6303 = vcombine.low %v1336, %v1344
      %v6304 = vcombine.low %v1346, %v1329
      %v6305 = vcombine.low %v1343, %v1345
      %v6307 = vunpack.c.l.s4 1966171168
      %v6308 = vunpack.c.0.s8 %v6307
      %v6309 = vlaneseq
      %v6310 = vshrl.u32 %v6309, 7
      %v6311 = vsub.s32 %v6308, %v6310
      %v6312 = vrot.slane %v6302, %v6311
      %v6314 = vunpack.c.l.s4 1966171168
      %v6315 = vunpack.c.0.s8 %v6314
      %v6316 = vlaneseq
      %v6317 = vshrl.u32 %v6316, 7
      %v6318 = vsub.s32 %v6315, %v6317
      %v6319 = vrot.slane %v6303, %v6318
      %v6321 = vunpack.c.l.s4 1966171168
      %v6322 = vunpack.c.0.s8 %v6321
      %v6323 = vlaneseq
      %v6324 = vshrl.u32 %v6323, 7
      %v6325 = vsub.s32 %v6322, %v6324
      %v6326 = vrot.slane %v6304, %v6325
      %v6328 = vunpack.c.l.s4 1966171168
      %v6329 = vunpack.c.0.s8 %v6328
      %v6330 = vlaneseq
      %v6331 = vshrl.u32 %v6330, 7
      %v6332 = vsub.s32 %v6329, %v6331
      %v6333 = vrot.slane %v6305, %v6332
      %v6334 = vcombine.low %v6312, %v6319
      %v6335 = vcombine.high %v6312, %v6319
      %v6336 = vcombine.low %v6326, %v6333
      %v6337 = vcombine.high %v6326, %v6333
      %v6339 = vunpack.c.l.s4 1966171168
      %v6340 = vunpack.c.0.s8 %v6339
      %v6341 = vlaneseq
      %v6342 = vshrl.u32 %v6341, 7
      %v6343 = vsub.s32 %v6340, %v6342
      %v6344 = vrot.slane %v6334, %v6343
      %v6346 = vunpack.c.l.s4 1966171168
      %v6347 = vunpack.c.0.s8 %v6346
      %v6348 = vlaneseq
      %v6349 = vshrl.u32 %v6348, 7
      %v6350 = vsub.s32 %v6347, %v6349
      %v6351 = vrot.slane %v6335, %v6350
      %v6353 = vunpack.c.l.s4 1966171168
      %v6354 = vunpack.c.0.s8 %v6353
      %v6355 = vlaneseq
      %v6356 = vshrl.u32 %v6355, 7
      %v6357 = vsub.s32 %v6354, %v6356
      %v6358 = vrot.slane %v6336, %v6357
      %v6360 = vunpack.c.l.s4 1966171168
      %v6361 = vunpack.c.0.s8 %v6360
      %v6362 = vlaneseq
      %v6363 = vshrl.u32 %v6362, 7
      %v6364 = vsub.s32 %v6361, %v6363
      %v6365 = vrot.slane %v6337, %v6364
      %v6366 = vcombine.low %v6344, %v6358
      %v6367 = vcombine.high %v6344, %v6358
      %v6368 = vcombine.low %v6351, %v6365
      %v6369 = vcombine.low %v1347, %v1370
      %v6370 = vcombine.low %v1412, %v1426
      %v6371 = vcombine.low %v1434, %v1436
      %v6372 = vcombine.low %v1419, %v1433
      %v6374 = vunpack.c.l.s4 1966171168
      %v6375 = vunpack.c.0.s8 %v6374
      %v6376 = vlaneseq
      %v6377 = vshrl.u32 %v6376, 7
      %v6378 = vsub.s32 %v6375, %v6377
      %v6379 = vrot.slane %v6369, %v6378
      %v6381 = vunpack.c.l.s4 1966171168
      %v6382 = vunpack.c.0.s8 %v6381
      %v6383 = vlaneseq
      %v6384 = vshrl.u32 %v6383, 7
      %v6385 = vsub.s32 %v6382, %v6384
      %v6386 = vrot.slane %v6370, %v6385
      %v6388 = vunpack.c.l.s4 1966171168
      %v6389 = vunpack.c.0.s8 %v6388
      %v6390 = vlaneseq
      %v6391 = vshrl.u32 %v6390, 7
      %v6392 = vsub.s32 %v6389, %v6391
      %v6393 = vrot.slane %v6371, %v6392
      %v6395 = vunpack.c.l.s4 1966171168
      %v6396 = vunpack.c.0.s8 %v6395
      %v6397 = vlaneseq
      %v6398 = vshrl.u32 %v6397, 7
      %v6399 = vsub.s32 %v6396, %v6398
      %v6400 = vrot.slane %v6372, %v6399
      %v6401 = vcombine.low %v6379, %v6386
      %v6402 = vcombine.high %v6379, %v6386
      %v6403 = vcombine.low %v6393, %v6400
      %v6404 = vcombine.high %v6393, %v6400
      %v6406 = vunpack.c.l.s4 1966171168
      %v6407 = vunpack.c.0.s8 %v6406
      %v6408 = vlaneseq
      %v6409 = vshrl.u32 %v6408, 7
      %v6410 = vsub.s32 %v6407, %v6409
      %v6411 = vrot.slane %v6401, %v6410
      %v6413 = vunpack.c.l.s4 1966171168
      %v6414 = vunpack.c.0.s8 %v6413
      %v6415 = vlaneseq
      %v6416 = vshrl.u32 %v6415, 7
      %v6417 = vsub.s32 %v6414, %v6416
      %v6418 = vrot.slane %v6402, %v6417
      %v6420 = vunpack.c.l.s4 1966171168
      %v6421 = vunpack.c.0.s8 %v6420
      %v6422 = vlaneseq
      %v6423 = vshrl.u32 %v6422, 7
      %v6424 = vsub.s32 %v6421, %v6423
      %v6425 = vrot.slane %v6403, %v6424
      %v6427 = vunpack.c.l.s4 1966171168
      %v6428 = vunpack.c.0.s8 %v6427
      %v6429 = vlaneseq
      %v6430 = vshrl.u32 %v6429, 7
      %v6431 = vsub.s32 %v6428, %v6430
      %v6432 = vrot.slane %v6404, %v6431
      %v6433 = vcombine.low %v6411, %v6425
      %v6434 = vcombine.high %v6411, %v6425
      %v6435 = vcombine.low %v6418, %v6432
      %v6436 = vcombine.low %v1435, %v1437
      %v6437 = vcombine.low %v1460, %v1502
      %v6438 = vcombine.low %v1516, %v1524
      %v6439 = vcombine.low %v1526, %v1509
      %v6441 = vunpack.c.l.s4 1966171168
      %v6442 = vunpack.c.0.s8 %v6441
      %v6443 = vlaneseq
      %v6444 = vshrl.u32 %v6443, 7
      %v6445 = vsub.s32 %v6442, %v6444
      %v6446 = vrot.slane %v6436, %v6445
      %v6448 = vunpack.c.l.s4 1966171168
      %v6449 = vunpack.c.0.s8 %v6448
      %v6450 = vlaneseq
      %v6451 = vshrl.u32 %v6450, 7
      %v6452 = vsub.s32 %v6449, %v6451
      %v6453 = vrot.slane %v6437, %v6452
      %v6455 = vunpack.c.l.s4 1966171168
      %v6456 = vunpack.c.0.s8 %v6455
      %v6457 = vlaneseq
      %v6458 = vshrl.u32 %v6457, 7
      %v6459 = vsub.s32 %v6456, %v6458
      %v6460 = vrot.slane %v6438, %v6459
      %v6462 = vunpack.c.l.s4 1966171168
      %v6463 = vunpack.c.0.s8 %v6462
      %v6464 = vlaneseq
      %v6465 = vshrl.u32 %v6464, 7
      %v6466 = vsub.s32 %v6463, %v6465
      %v6467 = vrot.slane %v6439, %v6466
      %v6468 = vcombine.low %v6446, %v6453
      %v6469 = vcombine.high %v6446, %v6453
      %v6470 = vcombine.low %v6460, %v6467
      %v6471 = vcombine.high %v6460, %v6467
      %v6473 = vunpack.c.l.s4 1966171168
      %v6474 = vunpack.c.0.s8 %v6473
      %v6475 = vlaneseq
      %v6476 = vshrl.u32 %v6475, 7
      %v6477 = vsub.s32 %v6474, %v6476
      %v6478 = vrot.slane %v6468, %v6477
      %v6480 = vunpack.c.l.s4 1966171168
      %v6481 = vunpack.c.0.s8 %v6480
      %v6482 = vlaneseq
      %v6483 = vshrl.u32 %v6482, 7
      %v6484 = vsub.s32 %v6481, %v6483
      %v6485 = vrot.slane %v6469, %v6484
      %v6487 = vunpack.c.l.s4 1966171168
      %v6488 = vunpack.c.0.s8 %v6487
      %v6489 = vlaneseq
      %v6490 = vshrl.u32 %v6489, 7
      %v6491 = vsub.s32 %v6488, %v6490
      %v6492 = vrot.slane %v6470, %v6491
      %v6494 = vunpack.c.l.s4 1966171168
      %v6495 = vunpack.c.0.s8 %v6494
      %v6496 = vlaneseq
      %v6497 = vshrl.u32 %v6496, 7
      %v6498 = vsub.s32 %v6495, %v6497
      %v6499 = vrot.slane %v6471, %v6498
      %v6500 = vcombine.low %v6478, %v6492
      %v6501 = vcombine.high %v6478, %v6492
      %v6502 = vcombine.low %v6485, %v6499
      %v6503 = vcombine.low %v1523, %v1525
      %v6504 = vcombine.low %v1527, %v1550
      %v6505 = vcombine.low %v1592, %v1606
      %v6506 = vcombine.low %v1614, %v1616
      %v6508 = vunpack.c.l.s4 1966171168
      %v6509 = vunpack.c.0.s8 %v6508
      %v6510 = vlaneseq
      %v6511 = vshrl.u32 %v6510, 7
      %v6512 = vsub.s32 %v6509, %v6511
      %v6513 = vrot.slane %v6503, %v6512
      %v6515 = vunpack.c.l.s4 1966171168
      %v6516 = vunpack.c.0.s8 %v6515
      %v6517 = vlaneseq
      %v6518 = vshrl.u32 %v6517, 7
      %v6519 = vsub.s32 %v6516, %v6518
      %v6520 = vrot.slane %v6504, %v6519
      %v6522 = vunpack.c.l.s4 1966171168
      %v6523 = vunpack.c.0.s8 %v6522
      %v6524 = vlaneseq
      %v6525 = vshrl.u32 %v6524, 7
      %v6526 = vsub.s32 %v6523, %v6525
      %v6527 = vrot.slane %v6505, %v6526
      %v6529 = vunpack.c.l.s4 1966171168
      %v6530 = vunpack.c.0.s8 %v6529
      %v6531 = vlaneseq
      %v6532 = vshrl.u32 %v6531, 7
      %v6533 = vsub.s32 %v6530, %v6532
      %v6534 = vrot.slane %v6506, %v6533
      %v6535 = vcombine.low %v6513, %v6520
      %v6536 = vcombine.high %v6513, %v6520
      %v6537 = vcombine.low %v6527, %v6534
      %v6538 = vcombine.high %v6527, %v6534
      %v6540 = vunpack.c.l.s4 1966171168
      %v6541 = vunpack.c.0.s8 %v6540
      %v6542 = vlaneseq
      %v6543 = vshrl.u32 %v6542, 7
      %v6544 = vsub.s32 %v6541, %v6543
      %v6545 = vrot.slane %v6535, %v6544
      %v6547 = vunpack.c.l.s4 1966171168
      %v6548 = vunpack.c.0.s8 %v6547
      %v6549 = vlaneseq
      %v6550 = vshrl.u32 %v6549, 7
      %v6551 = vsub.s32 %v6548, %v6550
      %v6552 = vrot.slane %v6536, %v6551
      %v6554 = vunpack.c.l.s4 1966171168
      %v6555 = vunpack.c.0.s8 %v6554
      %v6556 = vlaneseq
      %v6557 = vshrl.u32 %v6556, 7
      %v6558 = vsub.s32 %v6555, %v6557
      %v6559 = vrot.slane %v6537, %v6558
      %v6561 = vunpack.c.l.s4 1966171168
      %v6562 = vunpack.c.0.s8 %v6561
      %v6563 = vlaneseq
      %v6564 = vshrl.u32 %v6563, 7
      %v6565 = vsub.s32 %v6562, %v6564
      %v6566 = vrot.slane %v6538, %v6565
      %v6567 = vcombine.low %v6545, %v6559
      %v6568 = vcombine.high %v6545, %v6559
      %v6569 = vcombine.low %v6552, %v6566
      %v6570 = vcombine.low %v1599, %v1613
      %v6571 = vcombine.low %v1615, %v1617
      %v6572 = vcombine.low %v1640, %v1682
      %v6573 = vcombine.low %v1696, %v1704
      %v6575 = vunpack.c.l.s4 1966171168
      %v6576 = vunpack.c.0.s8 %v6575
      %v6577 = vlaneseq
      %v6578 = vshrl.u32 %v6577, 7
      %v6579 = vsub.s32 %v6576, %v6578
      %v6580 = vrot.slane %v6570, %v6579
      %v6582 = vunpack.c.l.s4 1966171168
      %v6583 = vunpack.c.0.s8 %v6582
      %v6584 = vlaneseq
      %v6585 = vshrl.u32 %v6584, 7
      %v6586 = vsub.s32 %v6583, %v6585
      %v6587 = vrot.slane %v6571, %v6586
      %v6589 = vunpack.c.l.s4 1966171168
      %v6590 = vunpack.c.0.s8 %v6589
      %v6591 = vlaneseq
      %v6592 = vshrl.u32 %v6591, 7
      %v6593 = vsub.s32 %v6590, %v6592
      %v6594 = vrot.slane %v6572, %v6593
      %v6596 = vunpack.c.l.s4 1966171168
      %v6597 = vunpack.c.0.s8 %v6596
      %v6598 = vlaneseq
      %v6599 = vshrl.u32 %v6598, 7
      %v6600 = vsub.s32 %v6597, %v6599
      %v6601 = vrot.slane %v6573, %v6600
      %v6602 = vcombine.low %v6580, %v6587
      %v6603 = vcombine.high %v6580, %v6587
      %v6604 = vcombine.low %v6594, %v6601
      %v6605 = vcombine.high %v6594, %v6601
      %v6607 = vunpack.c.l.s4 1966171168
      %v6608 = vunpack.c.0.s8 %v6607
      %v6609 = vlaneseq
      %v6610 = vshrl.u32 %v6609, 7
      %v6611 = vsub.s32 %v6608, %v6610
      %v6612 = vrot.slane %v6602, %v6611
      %v6614 = vunpack.c.l.s4 1966171168
      %v6615 = vunpack.c.0.s8 %v6614
      %v6616 = vlaneseq
      %v6617 = vshrl.u32 %v6616, 7
      %v6618 = vsub.s32 %v6615, %v6617
      %v6619 = vrot.slane %v6603, %v6618
      %v6621 = vunpack.c.l.s4 1966171168
      %v6622 = vunpack.c.0.s8 %v6621
      %v6623 = vlaneseq
      %v6624 = vshrl.u32 %v6623, 7
      %v6625 = vsub.s32 %v6622, %v6624
      %v6626 = vrot.slane %v6604, %v6625
      %v6628 = vunpack.c.l.s4 1966171168
      %v6629 = vunpack.c.0.s8 %v6628
      %v6630 = vlaneseq
      %v6631 = vshrl.u32 %v6630, 7
      %v6632 = vsub.s32 %v6629, %v6631
      %v6633 = vrot.slane %v6605, %v6632
      %v6634 = vcombine.low %v6612, %v6626
      %v6635 = vcombine.high %v6612, %v6626
      %v6636 = vcombine.low %v6619, %v6633
      %v6637 = vcombine.low %v1706, %v1689
      %v6638 = vcombine.low %v1703, %v1705
      %v6639 = vcombine.low %v1707, %v1730
      %v6640 = vcombine.low %v1772, %v1786
      %v6642 = vunpack.c.l.s4 1966171168
      %v6643 = vunpack.c.0.s8 %v6642
      %v6644 = vlaneseq
      %v6645 = vshrl.u32 %v6644, 7
      %v6646 = vsub.s32 %v6643, %v6645
      %v6647 = vrot.slane %v6637, %v6646
      %v6649 = vunpack.c.l.s4 1966171168
      %v6650 = vunpack.c.0.s8 %v6649
      %v6651 = vlaneseq
      %v6652 = vshrl.u32 %v6651, 7
      %v6653 = vsub.s32 %v6650, %v6652
      %v6654 = vrot.slane %v6638, %v6653
      %v6656 = vunpack.c.l.s4 1966171168
      %v6657 = vunpack.c.0.s8 %v6656
      %v6658 = vlaneseq
      %v6659 = vshrl.u32 %v6658, 7
      %v6660 = vsub.s32 %v6657, %v6659
      %v6661 = vrot.slane %v6639, %v6660
      %v6663 = vunpack.c.l.s4 1966171168
      %v6664 = vunpack.c.0.s8 %v6663
      %v6665 = vlaneseq
      %v6666 = vshrl.u32 %v6665, 7
      %v6667 = vsub.s32 %v6664, %v6666
      %v6668 = vrot.slane %v6640, %v6667
      %v6669 = vcombine.low %v6647, %v6654
      %v6670 = vcombine.high %v6647, %v6654
      %v6671 = vcombine.low %v6661, %v6668
      %v6672 = vcombine.high %v6661, %v6668
      %v6674 = vunpack.c.l.s4 1966171168
      %v6675 = vunpack.c.0.s8 %v6674
      %v6676 = vlaneseq
      %v6677 = vshrl.u32 %v6676, 7
      %v6678 = vsub.s32 %v6675, %v6677
      %v6679 = vrot.slane %v6669, %v6678
      %v6681 = vunpack.c.l.s4 1966171168
      %v6682 = vunpack.c.0.s8 %v6681
      %v6683 = vlaneseq
      %v6684 = vshrl.u32 %v6683, 7
      %v6685 = vsub.s32 %v6682, %v6684
      %v6686 = vrot.slane %v6670, %v6685
      %v6688 = vunpack.c.l.s4 1966171168
      %v6689 = vunpack.c.0.s8 %v6688
      %v6690 = vlaneseq
      %v6691 = vshrl.u32 %v6690, 7
      %v6692 = vsub.s32 %v6689, %v6691
      %v6693 = vrot.slane %v6671, %v6692
      %v6695 = vunpack.c.l.s4 1966171168
      %v6696 = vunpack.c.0.s8 %v6695
      %v6697 = vlaneseq
      %v6698 = vshrl.u32 %v6697, 7
      %v6699 = vsub.s32 %v6696, %v6698
      %v6700 = vrot.slane %v6672, %v6699
      %v6701 = vcombine.low %v6679, %v6693
      %v6702 = vcombine.high %v6679, %v6693
      %v6703 = vcombine.low %v6686, %v6700
      %v6704 = vcombine.low %v1794, %v1796
      %v6705 = vcombine.low %v1779, %v1793
      %v6706 = vcombine.low %v1795, %v1797
      %v6707 = vcombine.low %v1820, %v1862
      %v6709 = vunpack.c.l.s4 1966171168
      %v6710 = vunpack.c.0.s8 %v6709
      %v6711 = vlaneseq
      %v6712 = vshrl.u32 %v6711, 7
      %v6713 = vsub.s32 %v6710, %v6712
      %v6714 = vrot.slane %v6704, %v6713
      %v6716 = vunpack.c.l.s4 1966171168
      %v6717 = vunpack.c.0.s8 %v6716
      %v6718 = vlaneseq
      %v6719 = vshrl.u32 %v6718, 7
      %v6720 = vsub.s32 %v6717, %v6719
      %v6721 = vrot.slane %v6705, %v6720
      %v6723 = vunpack.c.l.s4 1966171168
      %v6724 = vunpack.c.0.s8 %v6723
      %v6725 = vlaneseq
      %v6726 = vshrl.u32 %v6725, 7
      %v6727 = vsub.s32 %v6724, %v6726
      %v6728 = vrot.slane %v6706, %v6727
      %v6730 = vunpack.c.l.s4 1966171168
      %v6731 = vunpack.c.0.s8 %v6730
      %v6732 = vlaneseq
      %v6733 = vshrl.u32 %v6732, 7
      %v6734 = vsub.s32 %v6731, %v6733
      %v6735 = vrot.slane %v6707, %v6734
      %v6736 = vcombine.low %v6714, %v6721
      %v6737 = vcombine.high %v6714, %v6721
      %v6738 = vcombine.low %v6728, %v6735
      %v6739 = vcombine.high %v6728, %v6735
      %v6741 = vunpack.c.l.s4 1966171168
      %v6742 = vunpack.c.0.s8 %v6741
      %v6743 = vlaneseq
      %v6744 = vshrl.u32 %v6743, 7
      %v6745 = vsub.s32 %v6742, %v6744
      %v6746 = vrot.slane %v6736, %v6745
      %v6748 = vunpack.c.l.s4 1966171168
      %v6749 = vunpack.c.0.s8 %v6748
      %v6750 = vlaneseq
      %v6751 = vshrl.u32 %v6750, 7
      %v6752 = vsub.s32 %v6749, %v6751
      %v6753 = vrot.slane %v6737, %v6752
      %v6755 = vunpack.c.l.s4 1966171168
      %v6756 = vunpack.c.0.s8 %v6755
      %v6757 = vlaneseq
      %v6758 = vshrl.u32 %v6757, 7
      %v6759 = vsub.s32 %v6756, %v6758
      %v6760 = vrot.slane %v6738, %v6759
      %v6762 = vunpack.c.l.s4 1966171168
      %v6763 = vunpack.c.0.s8 %v6762
      %v6764 = vlaneseq
      %v6765 = vshrl.u32 %v6764, 7
      %v6766 = vsub.s32 %v6763, %v6765
      %v6767 = vrot.slane %v6739, %v6766
      %v6768 = vcombine.low %v6746, %v6760
      %v6769 = vcombine.high %v6746, %v6760
      %v6770 = vcombine.low %v6753, %v6767
      %v6771 = vcombine.low %v1876, %v1884
      %v6772 = vcombine.low %v1886, %v1869
      %v6773 = vcombine.low %v1883, %v1885
      %v6774 = vcombine.low %v1887, %v1910
      %v6776 = vunpack.c.l.s4 1966171168
      %v6777 = vunpack.c.0.s8 %v6776
      %v6778 = vlaneseq
      %v6779 = vshrl.u32 %v6778, 7
      %v6780 = vsub.s32 %v6777, %v6779
      %v6781 = vrot.slane %v6771, %v6780
      %v6783 = vunpack.c.l.s4 1966171168
      %v6784 = vunpack.c.0.s8 %v6783
      %v6785 = vlaneseq
      %v6786 = vshrl.u32 %v6785, 7
      %v6787 = vsub.s32 %v6784, %v6786
      %v6788 = vrot.slane %v6772, %v6787
      %v6790 = vunpack.c.l.s4 1966171168
      %v6791 = vunpack.c.0.s8 %v6790
      %v6792 = vlaneseq
      %v6793 = vshrl.u32 %v6792, 7
      %v6794 = vsub.s32 %v6791, %v6793
      %v6795 = vrot.slane %v6773, %v6794
      %v6797 = vunpack.c.l.s4 1966171168
      %v6798 = vunpack.c.0.s8 %v6797
      %v6799 = vlaneseq
      %v6800 = vshrl.u32 %v6799, 7
      %v6801 = vsub.s32 %v6798, %v6800
      %v6802 = vrot.slane %v6774, %v6801
      %v6803 = vcombine.low %v6781, %v6788
      %v6804 = vcombine.high %v6781, %v6788
      %v6805 = vcombine.low %v6795, %v6802
      %v6806 = vcombine.high %v6795, %v6802
      %v6808 = vunpack.c.l.s4 1966171168
      %v6809 = vunpack.c.0.s8 %v6808
      %v6810 = vlaneseq
      %v6811 = vshrl.u32 %v6810, 7
      %v6812 = vsub.s32 %v6809, %v6811
      %v6813 = vrot.slane %v6803, %v6812
      %v6815 = vunpack.c.l.s4 1966171168
      %v6816 = vunpack.c.0.s8 %v6815
      %v6817 = vlaneseq
      %v6818 = vshrl.u32 %v6817, 7
      %v6819 = vsub.s32 %v6816, %v6818
      %v6820 = vrot.slane %v6804, %v6819
      %v6822 = vunpack.c.l.s4 1966171168
      %v6823 = vunpack.c.0.s8 %v6822
      %v6824 = vlaneseq
      %v6825 = vshrl.u32 %v6824, 7
      %v6826 = vsub.s32 %v6823, %v6825
      %v6827 = vrot.slane %v6805, %v6826
      %v6829 = vunpack.c.l.s4 1966171168
      %v6830 = vunpack.c.0.s8 %v6829
      %v6831 = vlaneseq
      %v6832 = vshrl.u32 %v6831, 7
      %v6833 = vsub.s32 %v6830, %v6832
      %v6834 = vrot.slane %v6806, %v6833
      %v6835 = vcombine.low %v6813, %v6827
      %v6836 = vcombine.high %v6813, %v6827
      %v6837 = vcombine.low %v6820, %v6834
      %v6838 = vcombine.low %v1952, %v1966
      %v6839 = vcombine.low %v1974, %v1976
      %v6840 = vcombine.low %v1959, %v1973
      %v6841 = vcombine.low %v1975, %v1977
      %v6843 = vunpack.c.l.s4 1966171168
      %v6844 = vunpack.c.0.s8 %v6843
      %v6845 = vlaneseq
      %v6846 = vshrl.u32 %v6845, 7
      %v6847 = vsub.s32 %v6844, %v6846
      %v6848 = vrot.slane %v6838, %v6847
      %v6850 = vunpack.c.l.s4 1966171168
      %v6851 = vunpack.c.0.s8 %v6850
      %v6852 = vlaneseq
      %v6853 = vshrl.u32 %v6852, 7
      %v6854 = vsub.s32 %v6851, %v6853
      %v6855 = vrot.slane %v6839, %v6854
      %v6857 = vunpack.c.l.s4 1966171168
      %v6858 = vunpack.c.0.s8 %v6857
      %v6859 = vlaneseq
      %v6860 = vshrl.u32 %v6859, 7
      %v6861 = vsub.s32 %v6858, %v6860
      %v6862 = vrot.slane %v6840, %v6861
      %v6864 = vunpack.c.l.s4 1966171168
      %v6865 = vunpack.c.0.s8 %v6864
      %v6866 = vlaneseq
      %v6867 = vshrl.u32 %v6866, 7
      %v6868 = vsub.s32 %v6865, %v6867
      %v6869 = vrot.slane %v6841, %v6868
      %v6870 = vcombine.low %v6848, %v6855
      %v6871 = vcombine.high %v6848, %v6855
      %v6872 = vcombine.low %v6862, %v6869
      %v6873 = vcombine.high %v6862, %v6869
      %v6875 = vunpack.c.l.s4 1966171168
      %v6876 = vunpack.c.0.s8 %v6875
      %v6877 = vlaneseq
      %v6878 = vshrl.u32 %v6877, 7
      %v6879 = vsub.s32 %v6876, %v6878
      %v6880 = vrot.slane %v6870, %v6879
      %v6882 = vunpack.c.l.s4 1966171168
      %v6883 = vunpack.c.0.s8 %v6882
      %v6884 = vlaneseq
      %v6885 = vshrl.u32 %v6884, 7
      %v6886 = vsub.s32 %v6883, %v6885
      %v6887 = vrot.slane %v6871, %v6886
      %v6889 = vunpack.c.l.s4 1966171168
      %v6890 = vunpack.c.0.s8 %v6889
      %v6891 = vlaneseq
      %v6892 = vshrl.u32 %v6891, 7
      %v6893 = vsub.s32 %v6890, %v6892
      %v6894 = vrot.slane %v6872, %v6893
      %v6896 = vunpack.c.l.s4 1966171168
      %v6897 = vunpack.c.0.s8 %v6896
      %v6898 = vlaneseq
      %v6899 = vshrl.u32 %v6898, 7
      %v6900 = vsub.s32 %v6897, %v6899
      %v6901 = vrot.slane %v6873, %v6900
      %v6902 = vcombine.low %v6880, %v6894
      %v6903 = vcombine.high %v6880, %v6894
      %v6904 = vcombine.low %v6887, %v6901
      %v6905 = vcombine.low %v2000, %v2042
      %v6906 = vcombine.low %v2056, %v2064
      %v6907 = vcombine.low %v2066, %v2049
      %v6908 = vcombine.low %v2063, %v2065
      %v6910 = vunpack.c.l.s4 1966171168
      %v6911 = vunpack.c.0.s8 %v6910
      %v6912 = vlaneseq
      %v6913 = vshrl.u32 %v6912, 7
      %v6914 = vsub.s32 %v6911, %v6913
      %v6915 = vrot.slane %v6905, %v6914
      %v6917 = vunpack.c.l.s4 1966171168
      %v6918 = vunpack.c.0.s8 %v6917
      %v6919 = vlaneseq
      %v6920 = vshrl.u32 %v6919, 7
      %v6921 = vsub.s32 %v6918, %v6920
      %v6922 = vrot.slane %v6906, %v6921
      %v6924 = vunpack.c.l.s4 1966171168
      %v6925 = vunpack.c.0.s8 %v6924
      %v6926 = vlaneseq
      %v6927 = vshrl.u32 %v6926, 7
      %v6928 = vsub.s32 %v6925, %v6927
      %v6929 = vrot.slane %v6907, %v6928
      %v6931 = vunpack.c.l.s4 1966171168
      %v6932 = vunpack.c.0.s8 %v6931
      %v6933 = vlaneseq
      %v6934 = vshrl.u32 %v6933, 7
      %v6935 = vsub.s32 %v6932, %v6934
      %v6936 = vrot.slane %v6908, %v6935
      %v6937 = vcombine.low %v6915, %v6922
      %v6938 = vcombine.high %v6915, %v6922
      %v6939 = vcombine.low %v6929, %v6936
      %v6940 = vcombine.high %v6929, %v6936
      %v6942 = vunpack.c.l.s4 1966171168
      %v6943 = vunpack.c.0.s8 %v6942
      %v6944 = vlaneseq
      %v6945 = vshrl.u32 %v6944, 7
      %v6946 = vsub.s32 %v6943, %v6945
      %v6947 = vrot.slane %v6937, %v6946
      %v6949 = vunpack.c.l.s4 1966171168
      %v6950 = vunpack.c.0.s8 %v6949
      %v6951 = vlaneseq
      %v6952 = vshrl.u32 %v6951, 7
      %v6953 = vsub.s32 %v6950, %v6952
      %v6954 = vrot.slane %v6938, %v6953
      %v6956 = vunpack.c.l.s4 1966171168
      %v6957 = vunpack.c.0.s8 %v6956
      %v6958 = vlaneseq
      %v6959 = vshrl.u32 %v6958, 7
      %v6960 = vsub.s32 %v6957, %v6959
      %v6961 = vrot.slane %v6939, %v6960
      %v6963 = vunpack.c.l.s4 1966171168
      %v6964 = vunpack.c.0.s8 %v6963
      %v6965 = vlaneseq
      %v6966 = vshrl.u32 %v6965, 7
      %v6967 = vsub.s32 %v6964, %v6966
      %v6968 = vrot.slane %v6940, %v6967
      %v6969 = vcombine.low %v6947, %v6961
      %v6970 = vcombine.high %v6947, %v6961
      %v6971 = vcombine.low %v6954, %v6968
      %v6972 = vcombine.low %v2067, %v2090
      %v6974 = vunpack.c.l.s4 1966171168
      %v6975 = vunpack.c.0.s8 %v6974
      %v6976 = vlaneseq
      %v6977 = vshrl.u32 %v6976, 7
      %v6978 = vsub.s32 %v6975, %v6977
      %v6979 = vrot.slane %v6972, %v6978
      %v6980 = vcombine.high %v6979, %v6979
      %v6982 = vunpack.c.l.s4 1966171168
      %v6983 = vunpack.c.0.s8 %v6982
      %v6984 = vlaneseq
      %v6985 = vshrl.u32 %v6984, 7
      %v6986 = vsub.s32 %v6983, %v6985
      %v6987 = vrot.slane %v6979, %v6986
      %v6989 = vunpack.c.l.s4 1966171168
      %v6990 = vunpack.c.0.s8 %v6989
      %v6991 = vlaneseq
      %v6992 = vshrl.u32 %v6991, 7
      %v6993 = vsub.s32 %v6990, %v6992
      %v6994 = vrot.slane %v6980, %v6993
      %v6995 = vcombine.high %v6987, %v6987
      %v7107 = vunpack.c.l.b16 %v2091
      %v7108 = vunpack.c.l.b16 %v2092
      %v7109 = vunpack.c.l.b16 %v2093
      %v7110 = vunpack.c.l.b16 %v2094
      %v7111 = vunpack.c.l.b16 %v2095
      %v7112 = vunpack.c.l.b16 %v2096
      %v7113 = vunpack.c.l.b16 %v2097
      %v7114 = vunpack.c.l.b16 %v2098
      %v7115 = vunpack.c.l.b16 %v2099
      %v7116 = vunpack.c.l.b16 %v2100
      %v7117 = vunpack.c.l.b16 %v2101
      %v7118 = vunpack.c.l.b16 %v2102
      %v7119 = vunpack.c.l.b16 %v2103
      %v7120 = vunpack.c.l.b16 %v2104
      %v7121 = vunpack.c.l.b16 %v2105
      %v7122 = vunpack.c.l.b16 %v2106
      %v7123 = vunpack.c.l.b16 %v2107
      %v7124 = vunpack.c.l.b16 %v2108
      %v7125 = vunpack.c.l.b16 %v2109
      %v7126 = vunpack.c.l.b16 %v2110
      %v7127 = vunpack.c.l.b16 %v2111
      %v7128 = vunpack.c.l.b16 %v2112
      %v7129 = vunpack.c.l.b16 %v2113
      %v7130 = vunpack.c.l.b16 %v2114
      %v7131 = vunpack.c.l.b16 %v2115
      %v7132 = vunpack.c.l.b16 %v2116
      %v7133 = vunpack.c.l.b16 %v2117
      %v7134 = vunpack.c.l.b16 %v2118
      %v7135 = vunpack.c.l.b16 %v2119
      %v7136 = vunpack.c.l.b16 %v2120
      %v7137 = vunpack.c.l.b16 %v2121
      %v7138 = vunpack.c.l.b16 %v2122
      %v7139 = vunpack.c.l.b16 %v2123
      %v7140 = vunpack.c.l.b16 %v2124
      %v7141 = vunpack.c.l.b16 %v2125
      %v7142 = vunpack.c.l.b16 %v2126
      %v7143 = vunpack.c.l.b16 %v2127
      %v7144 = vunpack.c.l.b16 %v2128
      %v7145 = vunpack.c.l.b16 %v2129
      %v7146 = vunpack.c.l.b16 %v2130
      %v7147 = vunpack.c.l.b16 %v2131
      %v7148 = vunpack.c.l.b16 %v2132
      %v7149 = vunpack.c.l.b16 %v2133
      %v7150 = vunpack.c.l.b16 %v2134
      %v7151 = vunpack.c.l.b16 %v2135
      %v7152 = vunpack.c.l.b16 %v2136
      %v7153 = vunpack.c.l.b16 %v2137
      %v7154 = vunpack.c.l.b16 %v2138
      %v7155 = vpack.c.b16 %v7108, %v7107
      %v7156 = vpack.c.b16 %v7110, %v7109
      %v7157 = vpack.c.b16 %v7112, %v7111
      %v7158 = vpack.c.b16 %v7114, %v7113
      %v7159 = vpack.c.b16 %v7116, %v7115
      %v7160 = vpack.c.b16 %v7118, %v7117
      %v7161 = vpack.c.b16 %v7120, %v7119
      %v7162 = vpack.c.b16 %v7122, %v7121
      %v7163 = vpack.c.b16 %v7124, %v7123
      %v7164 = vpack.c.b16 %v7126, %v7125
      %v7165 = vpack.c.b16 %v7128, %v7127
      %v7166 = vpack.c.b16 %v7130, %v7129
      %v7167 = vpack.c.b16 %v7132, %v7131
      %v7168 = vpack.c.b16 %v7134, %v7133
      %v7169 = vpack.c.b16 %v7136, %v7135
      %v7170 = vpack.c.b16 %v7138, %v7137
      %v7171 = vpack.c.b16 %v7140, %v7139
      %v7172 = vpack.c.b16 %v7142, %v7141
      %v7173 = vpack.c.b16 %v7144, %v7143
      %v7174 = vpack.c.b16 %v7146, %v7145
      %v7175 = vpack.c.b16 %v7148, %v7147
      %v7176 = vpack.c.b16 %v7150, %v7149
      %v7177 = vpack.c.b16 %v7152, %v7151
      %v7178 = vpack.c.b16 %v7154, %v7153
      %7203 = vmatprep.subr.bf16.mxu0 0
      %7204 = vmatpush1.bf16.msra.mxu0 %v7155
      %7205 = vmatprep.subr.bf16.mxu0 0
      %7206 = vmatpush1.bf16.msra.mxu0 %v7156
      %7207 = vmatprep.subr.bf16.mxu0 0
      %7208 = vmatpush1.bf16.msra.mxu0 %v7157
      %7209 = vmatprep.subr.bf16.mxu0 0
      %7210 = vmatpush1.bf16.msra.mxu0 %v7158
      %7211 = vmatprep.subr.bf16.mxu0 0
      %7212 = vmatpush1.bf16.msra.mxu0 %v7159
      %7213 = vmatprep.subr.bf16.mxu0 0
      %7214 = vmatpush1.bf16.msra.mxu0 %v7160
      %7215 = vmatprep.subr.bf16.mxu0 0
      %7216 = vmatpush1.bf16.msra.mxu0 %v7161
      %7217 = vmatprep.subr.bf16.mxu0 0
      %7218 = vmatpush1.bf16.msra.mxu0 %v7162
      %7219 = vmatprep.subr.bf16.mxu0 0
      %7220 = vmatpush1.bf16.msra.mxu0 %v7163
      %7221 = vmatprep.subr.bf16.mxu0 0
      %7222 = vmatpush1.bf16.msra.mxu0 %v7164
      %7223 = vmatprep.subr.bf16.mxu0 0
      %7224 = vmatpush1.bf16.msra.mxu0 %v7165
      %7225 = vmatprep.subr.bf16.mxu0 0
      %7226 = vmatpush1.bf16.msra.mxu0 %v7166
      %7227 = vmatprep.subr.bf16.mxu0 0
      %7228 = vmatpush1.bf16.msra.mxu0 %v7167
      %7229 = vmatprep.subr.bf16.mxu0 0
      %7230 = vmatpush1.bf16.msra.mxu0 %v7168
      %7231 = vmatprep.subr.bf16.mxu0 0
      %7232 = vmatpush1.bf16.msra.mxu0 %v7169
      %7233 = vmatprep.subr.bf16.mxu0 0
      %7234 = vmatpush1.bf16.msra.mxu0 %v7170
      %7235 = vmatprep.mubr.bf16.mxu0 %v5698
      %7236 = vmatmul.mubr.bf16.gmra.mrb[0].mxu0 %v5696
      %v7237 = vpop.f32.mrb[0].mxu0
      %v7238 = vadd.f32 %v5467, %v7237
      %v7239 = vpop.f32.mrb[0].mxu0
      %v7240 = vpop.f32.mrb[0].mxu0
      %v7241 = vadd.f32 %v5470, %v7240
      %v7242 = vpop.f32.mrb[0].mxu0
      %7243 = vmatprep.mubr.bf16.mxu0 %v5765
      %7244 = vmatmul.mubr.bf16.gmra.mrb[0].mxu0 %v5763
      %v7245 = vpop.f32.mrb[0].mxu0
      %v7246 = vadd.f32 %v5475, %v7245
      %v7247 = vpop.f32.mrb[0].mxu0
      %v7248 = vpop.f32.mrb[0].mxu0
      %v7249 = vadd.f32 %v5478, %v7248
      %v7250 = vpop.f32.mrb[0].mxu0
      %7251 = vmatprep.mubr.bf16.mxu0 %v5832
      %7252 = vmatmul.mubr.bf16.gmra.mrb[0].mxu0 %v5830
      %v7253 = vpop.f32.mrb[0].mxu0
      %v7254 = vadd.f32 %v5483, %v7253
      %v7255 = vpop.f32.mrb[0].mxu0
      %v7256 = vpop.f32.mrb[0].mxu0
      %v7257 = vadd.f32 %v5486, %v7256
      %v7258 = vpop.f32.mrb[0].mxu0
      %7259 = vmatprep.mubr.bf16.mxu0 %v5899
      %7260 = vmatmul.mubr.bf16.gmra.mrb[0].mxu0 %v5897
      %v7261 = vpop.f32.mrb[0].mxu0
      %v7262 = vadd.f32 %v5491, %v7261
      %v7263 = vpop.f32.mrb[0].mxu0
      %v7264 = vpop.f32.mrb[0].mxu0
      %v7265 = vadd.f32 %v5494, %v7264
      %v7266 = vpop.f32.mrb[0].mxu0
      %7267 = vmatprep.mubr.bf16.mxu0 %v5966
      %7268 = vmatmul.mubr.bf16.gmra.mrb[0].mxu0 %v5964
      %v7269 = vpop.f32.mrb[0].mxu0
      %v7270 = vadd.f32 %v5499, %v7269
      %v7271 = vpop.f32.mrb[0].mxu0
      %v7272 = vpop.f32.mrb[0].mxu0
      %v7273 = vadd.f32 %v5502, %v7272
      %v7274 = vpop.f32.mrb[0].mxu0
      %7275 = vmatprep.mubr.bf16.mxu0 %v6033
      %7276 = vmatmul.mubr.bf16.gmra.mrb[0].mxu0 %v6031
      %v7277 = vpop.f32.mrb[0].mxu0
      %v7278 = vadd.f32 %v5507, %v7277
      %v7279 = vpop.f32.mrb[0].mxu0
      %v7280 = vpop.f32.mrb[0].mxu0
      %v7281 = vadd.f32 %v5510, %v7280
      %v7282 = vpop.f32.mrb[0].mxu0
      %7283 = vmatprep.mubr.bf16.mxu0 %v6100
      %7284 = vmatmul.mubr.bf16.gmra.mrb[0].mxu0 %v6098
      %v7285 = vpop.f32.mrb[0].mxu0
      %v7286 = vadd.f32 %v5515, %v7285
      %v7287 = vpop.f32.mrb[0].mxu0
      %v7288 = vpop.f32.mrb[0].mxu0
      %v7289 = vadd.f32 %v5518, %v7288
      %v7290 = vpop.f32.mrb[0].mxu0
      %7291 = vmatprep.mubr.bf16.mxu0 %v6167
      %7292 = vmatmul.mubr.bf16.gmra.mrb[0].mxu0 %v6165
      %v7293 = vpop.f32.mrb[0].mxu0
      %v7294 = vadd.f32 %v5523, %v7293
      %v7295 = vpop.f32.mrb[0].mxu0
      %v7296 = vpop.f32.mrb[0].mxu0
      %v7297 = vadd.f32 %v5526, %v7296
      %v7298 = vpop.f32.mrb[0].mxu0
      %7299 = vmatprep.mubr.bf16.mxu0 %v6234
      %7300 = vmatmul.mubr.bf16.gmra.mrb[0].mxu0 %v6232
      %v7301 = vpop.f32.mrb[0].mxu0
      %v7302 = vadd.f32 %v5531, %v7301
      %v7303 = vpop.f32.mrb[0].mxu0
      %v7304 = vpop.f32.mrb[0].mxu0
      %v7305 = vadd.f32 %v5534, %v7304
      %v7306 = vpop.f32.mrb[0].mxu0
      %7307 = vmatprep.mubr.bf16.mxu0 %v6301
      %7308 = vmatmul.mubr.bf16.gmra.mrb[0].mxu0 %v6299
      %v7309 = vpop.f32.mrb[0].mxu0
      %v7310 = vadd.f32 %v5539, %v7309
      %v7311 = vpop.f32.mrb[0].mxu0
      %v7312 = vpop.f32.mrb[0].mxu0
      %v7313 = vadd.f32 %v5542, %v7312
      %v7314 = vpop.f32.mrb[0].mxu0
      %7315 = vmatprep.mubr.bf16.mxu0 %v6368
      %7316 = vmatmul.mubr.bf16.gmra.mrb[0].mxu0 %v6366
      %v7317 = vpop.f32.mrb[0].mxu0
      %v7318 = vadd.f32 %v5547, %v7317
      %v7319 = vpop.f32.mrb[0].mxu0
      %v7320 = vpop.f32.mrb[0].mxu0
      %v7321 = vadd.f32 %v5550, %v7320
      %v7322 = vpop.f32.mrb[0].mxu0
      %7323 = vmatprep.mubr.bf16.mxu0 %v6435
      %7324 = vmatmul.mubr.bf16.gmra.mrb[0].mxu0 %v6433
      %v7325 = vpop.f32.mrb[0].mxu0
      %v7326 = vadd.f32 %v5555, %v7325
      %v7327 = vpop.f32.mrb[0].mxu0
      %v7328 = vpop.f32.mrb[0].mxu0
      %v7329 = vadd.f32 %v5558, %v7328
      %v7330 = vpop.f32.mrb[0].mxu0
      %7331 = vmatprep.mubr.bf16.mxu0 %v6502
      %7332 = vmatmul.mubr.bf16.gmra.mrb[0].mxu0 %v6500
      %v7333 = vpop.f32.mrb[0].mxu0
      %v7334 = vadd.f32 %v5563, %v7333
      %v7335 = vpop.f32.mrb[0].mxu0
      %v7336 = vpop.f32.mrb[0].mxu0
      %v7337 = vadd.f32 %v5566, %v7336
      %v7338 = vpop.f32.mrb[0].mxu0
      %7339 = vmatprep.mubr.bf16.mxu0 %v6569
      %7340 = vmatmul.mubr.bf16.gmra.mrb[0].mxu0 %v6567
      %v7341 = vpop.f32.mrb[0].mxu0
      %v7342 = vadd.f32 %v5571, %v7341
      %v7343 = vpop.f32.mrb[0].mxu0
      %v7344 = vpop.f32.mrb[0].mxu0
      %v7345 = vadd.f32 %v5574, %v7344
      %v7346 = vpop.f32.mrb[0].mxu0
      %7347 = vmatprep.mubr.bf16.mxu0 %v6636
      %7348 = vmatmul.mubr.bf16.gmra.mrb[0].mxu0 %v6634
      %v7349 = vpop.f32.mrb[0].mxu0
      %v7350 = vadd.f32 %v5579, %v7349
      %v7351 = vpop.f32.mrb[0].mxu0
      %v7352 = vpop.f32.mrb[0].mxu0
      %v7353 = vadd.f32 %v5582, %v7352
      %v7354 = vpop.f32.mrb[0].mxu0
      %7355 = vmatprep.mubr.bf16.mxu0 %v6703
      %7356 = vmatmul.mubr.bf16.gmra.mrb[0].mxu0 %v6701
      %v7357 = vpop.f32.mrb[0].mxu0
      %v7358 = vadd.f32 %v5587, %v7357
      %v7359 = vpop.f32.mrb[0].mxu0
      %v7360 = vpop.f32.mrb[0].mxu0
      %v7361 = vadd.f32 %v5590, %v7360
      %v7362 = vpop.f32.mrb[0].mxu0
      %7363 = vmatprep.mubr.bf16.mxu0 %v6770
      %7364 = vmatmul.mubr.bf16.gmra.mrb[0].mxu0 %v6768
      %v7365 = vpop.f32.mrb[0].mxu0
      %v7366 = vadd.f32 %v5595, %v7365
      %v7367 = vpop.f32.mrb[0].mxu0
      %v7368 = vpop.f32.mrb[0].mxu0
      %v7369 = vadd.f32 %v5598, %v7368
      %v7370 = vpop.f32.mrb[0].mxu0
      %7371 = vmatprep.mubr.bf16.mxu0 %v6837
      %7372 = vmatmul.mubr.bf16.gmra.mrb[0].mxu0 %v6835
      %v7373 = vpop.f32.mrb[0].mxu0
      %v7374 = vadd.f32 %v5603, %v7373
      %v7375 = vpop.f32.mrb[0].mxu0
      %v7376 = vpop.f32.mrb[0].mxu0
      %v7377 = vadd.f32 %v5606, %v7376
      %v7378 = vpop.f32.mrb[0].mxu0
      %7379 = vmatprep.mubr.bf16.mxu0 %v6904
      %7380 = vmatmul.mubr.bf16.gmra.mrb[0].mxu0 %v6902
      %v7381 = vpop.f32.mrb[0].mxu0
      %v7382 = vadd.f32 %v5611, %v7381
      %v7383 = vpop.f32.mrb[0].mxu0
      %v7384 = vpop.f32.mrb[0].mxu0
      %v7385 = vadd.f32 %v5614, %v7384
      %v7386 = vpop.f32.mrb[0].mxu0
      %7387 = vmatprep.mubr.bf16.mxu0 %v6971
      %7388 = vmatmul.mubr.bf16.gmra.mrb[0].mxu0 %v6969
      %v7389 = vpop.f32.mrb[0].mxu0
      %v7390 = vadd.f32 %v5619, %v7389
      %v7391 = vpop.f32.mrb[0].mxu0
      %v7392 = vpop.f32.mrb[0].mxu0
      %v7393 = vadd.f32 %v5622, %v7392
      %v7394 = vpop.f32.mrb[0].mxu0
      %7395 = vmatprep.mubr.bf16.mxu0 %v6994
      %7396 = vmatmul.mubr.bf16.gmra.mrb[0].mxu0 %v6987
      %v7397 = vpop.f32.mrb[0].mxu0
      %v7398 = vadd.f32 %v5627, %v7397
      %v7399 = vpop.f32.mrb[0].mxu0
      %v7400 = vpop.f32.mrb[0].mxu0
      %v7401 = vpop.f32.mrb[0].mxu0
      %7402 = vdwg.mxu0
      %7403 = vmatprep.subr.bf16.mxu0 0
      %7404 = vmatpush1.bf16.msra.mxu0 %v7171
      %7405 = vmatprep.subr.bf16.mxu0 0
      %7406 = vmatpush1.bf16.msra.mxu0 %v7172
      %7407 = vmatprep.subr.bf16.mxu0 0
      %7408 = vmatpush1.bf16.msra.mxu0 %v7173
      %7409 = vmatprep.subr.bf16.mxu0 0
      %7410 = vmatpush1.bf16.msra.mxu0 %v7174
      %7411 = vmatprep.subr.bf16.mxu0 0
      %7412 = vmatpush1.bf16.msra.mxu0 %v7175
      %7413 = vmatprep.subr.bf16.mxu0 0
      %7414 = vmatpush1.bf16.msra.mxu0 %v7176
      %7415 = vmatprep.subr.bf16.mxu0 0
      %7416 = vmatpush1.bf16.msra.mxu0 %v7177
      %7417 = vmatprep.subr.bf16.mxu0 0
      %7418 = vmatpush1.bf16.msra.mxu0 %v7178
      %7419 = vmatprep.subr.bf16.mxu0 0
      %7420 = vmatpush1.bf16.msra.mxu0 0
      %7421 = vmatprep.subr.bf16.mxu0 0
      %7422 = vmatpush1.bf16.msra.mxu0 0
      %7423 = vmatprep.subr.bf16.mxu0 0
      %7424 = vmatpush1.bf16.msra.mxu0 0
      %7425 = vmatprep.subr.bf16.mxu0 0
      %7426 = vmatpush1.bf16.msra.mxu0 0
      %7427 = vmatprep.subr.bf16.mxu0 0
      %7428 = vmatpush1.bf16.msra.mxu0 0
      %7429 = vmatprep.subr.bf16.mxu0 0
      %7430 = vmatpush1.bf16.msra.mxu0 0
      %7431 = vmatprep.subr.bf16.mxu0 0
      %7432 = vmatpush1.bf16.msra.mxu0 0
      %7433 = vmatprep.subr.bf16.mxu0 0
      %7434 = vmatpush1.bf16.msra.mxu0 0
      %7435 = vmatprep.mubr.bf16.mxu0 0
      %7436 = vmatmul.mubr.bf16.gmra.mrb[0].mxu0 %v5697
      %v7437 = vpop.f32.mrb[0].mxu0
      %v7438 = vadd.f32 %v7238, %v7437
      %v7439 = vpop.f32.mrb[0].mxu0
      %v7440 = vpop.f32.mrb[0].mxu0
      %v7441 = vadd.f32 %v7241, %v7440
      %v7442 = vpop.f32.mrb[0].mxu0
      %7443 = vmatprep.mubr.bf16.mxu0 0
      %7444 = vmatmul.mubr.bf16.gmra.mrb[0].mxu0 %v5764
      %v7445 = vpop.f32.mrb[0].mxu0
      %v7446 = vadd.f32 %v7246, %v7445
      %v7447 = vpop.f32.mrb[0].mxu0
      %v7448 = vpop.f32.mrb[0].mxu0
      %v7449 = vadd.f32 %v7249, %v7448
      %v7450 = vpop.f32.mrb[0].mxu0
      %7451 = vmatprep.mubr.bf16.mxu0 0
      %7452 = vmatmul.mubr.bf16.gmra.mrb[0].mxu0 %v5831
      %v7453 = vpop.f32.mrb[0].mxu0
      %v7454 = vadd.f32 %v7254, %v7453
      %v7455 = vpop.f32.mrb[0].mxu0
      %v7456 = vpop.f32.mrb[0].mxu0
      %v7457 = vadd.f32 %v7257, %v7456
      %v7458 = vpop.f32.mrb[0].mxu0
      %7459 = vmatprep.mubr.bf16.mxu0 0
      %7460 = vmatmul.mubr.bf16.gmra.mrb[0].mxu0 %v5898
      %v7461 = vpop.f32.mrb[0].mxu0
      %v7462 = vadd.f32 %v7262, %v7461
      %v7463 = vpop.f32.mrb[0].mxu0
      %v7464 = vpop.f32.mrb[0].mxu0
      %v7465 = vadd.f32 %v7265, %v7464
      %v7466 = vpop.f32.mrb[0].mxu0
      %7467 = vmatprep.mubr.bf16.mxu0 0
      %7468 = vmatmul.mubr.bf16.gmra.mrb[0].mxu0 %v5965
      %v7469 = vpop.f32.mrb[0].mxu0
      %v7470 = vadd.f32 %v7270, %v7469
      %v7471 = vpop.f32.mrb[0].mxu0
      %v7472 = vpop.f32.mrb[0].mxu0
      %v7473 = vadd.f32 %v7273, %v7472
      %v7474 = vpop.f32.mrb[0].mxu0
      %7475 = vmatprep.mubr.bf16.mxu0 0
      %7476 = vmatmul.mubr.bf16.gmra.mrb[0].mxu0 %v6032
      %v7477 = vpop.f32.mrb[0].mxu0
      %v7478 = vadd.f32 %v7278, %v7477
      %v7479 = vpop.f32.mrb[0].mxu0
      %v7480 = vpop.f32.mrb[0].mxu0
      %v7481 = vadd.f32 %v7281, %v7480
      %v7482 = vpop.f32.mrb[0].mxu0
      %7483 = vmatprep.mubr.bf16.mxu0 0
      %7484 = vmatmul.mubr.bf16.gmra.mrb[0].mxu0 %v6099
      %v7485 = vpop.f32.mrb[0].mxu0
      %v7486 = vadd.f32 %v7286, %v7485
      %v7487 = vpop.f32.mrb[0].mxu0
      %v7488 = vpop.f32.mrb[0].mxu0
      %v7489 = vadd.f32 %v7289, %v7488
      %v7490 = vpop.f32.mrb[0].mxu0
      %7491 = vmatprep.mubr.bf16.mxu0 0
      %7492 = vmatmul.mubr.bf16.gmra.mrb[0].mxu0 %v6166
      %v7493 = vpop.f32.mrb[0].mxu0
      %v7494 = vadd.f32 %v7294, %v7493
      %v7495 = vpop.f32.mrb[0].mxu0
      %v7496 = vpop.f32.mrb[0].mxu0
      %v7497 = vadd.f32 %v7297, %v7496
      %v7498 = vpop.f32.mrb[0].mxu0
      %7499 = vmatprep.mubr.bf16.mxu0 0
      %7500 = vmatmul.mubr.bf16.gmra.mrb[0].mxu0 %v6233
      %v7501 = vpop.f32.mrb[0].mxu0
      %v7502 = vadd.f32 %v7302, %v7501
      %v7503 = vpop.f32.mrb[0].mxu0
      %v7504 = vpop.f32.mrb[0].mxu0
      %v7505 = vadd.f32 %v7305, %v7504
      %v7506 = vpop.f32.mrb[0].mxu0
      %7507 = vmatprep.mubr.bf16.mxu0 0
      %7508 = vmatmul.mubr.bf16.gmra.mrb[0].mxu0 %v6300
      %v7509 = vpop.f32.mrb[0].mxu0
      %v7510 = vadd.f32 %v7310, %v7509
      %v7511 = vpop.f32.mrb[0].mxu0
      %v7512 = vpop.f32.mrb[0].mxu0
      %v7513 = vadd.f32 %v7313, %v7512
      %v7514 = vpop.f32.mrb[0].mxu0
      %7515 = vmatprep.mubr.bf16.mxu0 0
      %7516 = vmatmul.mubr.bf16.gmra.mrb[0].mxu0 %v6367
      %v7517 = vpop.f32.mrb[0].mxu0
      %v7518 = vadd.f32 %v7318, %v7517
      %v7519 = vpop.f32.mrb[0].mxu0
      %v7520 = vpop.f32.mrb[0].mxu0
      %v7521 = vadd.f32 %v7321, %v7520
      %v7522 = vpop.f32.mrb[0].mxu0
      %7523 = vmatprep.mubr.bf16.mxu0 0
      %7524 = vmatmul.mubr.bf16.gmra.mrb[0].mxu0 %v6434
      %v7525 = vpop.f32.mrb[0].mxu0
      %v7526 = vadd.f32 %v7326, %v7525
      %v7527 = vpop.f32.mrb[0].mxu0
      %v7528 = vpop.f32.mrb[0].mxu0
      %v7529 = vadd.f32 %v7329, %v7528
      %v7530 = vpop.f32.mrb[0].mxu0
      %7531 = vmatprep.mubr.bf16.mxu0 0
      %7532 = vmatmul.mubr.bf16.gmra.mrb[0].mxu0 %v6501
      %v7533 = vpop.f32.mrb[0].mxu0
      %v7534 = vadd.f32 %v7334, %v7533
      %v7535 = vpop.f32.mrb[0].mxu0
      %v7536 = vpop.f32.mrb[0].mxu0
      %v7537 = vadd.f32 %v7337, %v7536
      %v7538 = vpop.f32.mrb[0].mxu0
      %7539 = vmatprep.mubr.bf16.mxu0 0
      %7540 = vmatmul.mubr.bf16.gmra.mrb[0].mxu0 %v6568
      %v7541 = vpop.f32.mrb[0].mxu0
      %v7542 = vadd.f32 %v7342, %v7541
      %v7543 = vpop.f32.mrb[0].mxu0
      %v7544 = vpop.f32.mrb[0].mxu0
      %v7545 = vadd.f32 %v7345, %v7544
      %v7546 = vpop.f32.mrb[0].mxu0
      %7547 = vmatprep.mubr.bf16.mxu0 0
      %7548 = vmatmul.mubr.bf16.gmra.mrb[0].mxu0 %v6635
      %v7549 = vpop.f32.mrb[0].mxu0
      %v7550 = vadd.f32 %v7350, %v7549
      %v7551 = vpop.f32.mrb[0].mxu0
      %v7552 = vpop.f32.mrb[0].mxu0
      %v7553 = vadd.f32 %v7353, %v7552
      %v7554 = vpop.f32.mrb[0].mxu0
      %7555 = vmatprep.mubr.bf16.mxu0 0
      %7556 = vmatmul.mubr.bf16.gmra.mrb[0].mxu0 %v6702
      %v7557 = vpop.f32.mrb[0].mxu0
      %v7558 = vadd.f32 %v7358, %v7557
      %v7559 = vpop.f32.mrb[0].mxu0
      %v7560 = vpop.f32.mrb[0].mxu0
      %v7561 = vadd.f32 %v7361, %v7560
      %v7562 = vpop.f32.mrb[0].mxu0
      %7563 = vmatprep.mubr.bf16.mxu0 0
      %7564 = vmatmul.mubr.bf16.gmra.mrb[0].mxu0 %v6769
      %v7565 = vpop.f32.mrb[0].mxu0
      %v7566 = vadd.f32 %v7366, %v7565
      %v7567 = vpop.f32.mrb[0].mxu0
      %v7568 = vpop.f32.mrb[0].mxu0
      %v7569 = vadd.f32 %v7369, %v7568
      %v7570 = vpop.f32.mrb[0].mxu0
      %7571 = vmatprep.mubr.bf16.mxu0 0
      %7572 = vmatmul.mubr.bf16.gmra.mrb[0].mxu0 %v6836
      %v7573 = vpop.f32.mrb[0].mxu0
      %v7574 = vadd.f32 %v7374, %v7573
      %v7575 = vpop.f32.mrb[0].mxu0
      %v7576 = vpop.f32.mrb[0].mxu0
      %v7577 = vadd.f32 %v7377, %v7576
      %v7578 = vpop.f32.mrb[0].mxu0
      %7579 = vmatprep.mubr.bf16.mxu0 0
      %7580 = vmatmul.mubr.bf16.gmra.mrb[0].mxu0 %v6903
      %v7581 = vpop.f32.mrb[0].mxu0
      %v7582 = vadd.f32 %v7382, %v7581
      %v7583 = vpop.f32.mrb[0].mxu0
      %v7584 = vpop.f32.mrb[0].mxu0
      %v7585 = vadd.f32 %v7385, %v7584
      %v7586 = vpop.f32.mrb[0].mxu0
      %7587 = vmatprep.mubr.bf16.mxu0 0
      %7588 = vmatmul.mubr.bf16.gmra.mrb[0].mxu0 %v6970
      %v7589 = vpop.f32.mrb[0].mxu0
      %v7590 = vadd.f32 %v7390, %v7589
      %v7591 = vpop.f32.mrb[0].mxu0
      %v7592 = vpop.f32.mrb[0].mxu0
      %v7593 = vadd.f32 %v7393, %v7592
      %v7594 = vpop.f32.mrb[0].mxu0
      %7595 = vmatprep.mubr.bf16.mxu0 0
      %7596 = vmatmul.mubr.bf16.gmra.mrb[0].mxu0 %v6995
      %v7597 = vpop.f32.mrb[0].mxu0
      %v7598 = vadd.f32 %v7398, %v7597
      %v7599 = vpop.f32.mrb[0].mxu0
      %v7600 = vpop.f32.mrb[0].mxu0
      %v7601 = vpop.f32.mrb[0].mxu0
      %7602 = vdwg.mxu0
      %s7603 = scalar_lea.vmem %s1, 384
      %v7604 = vld [vmem:[%s7603] sm:$0xf]
      %v7605 = vld [vmem:[%s7603 + $0x4] sm:$0xf]
      %v7606 = vld [vmem:[%s7603 + $0x8] sm:$0xf]
      %v7607 = vld [vmem:[%s7603 + $0xc] sm:$0xf]
      %v7608 = vld [vmem:[%s7603 + $0x10] sm:$0xf]
      %v7609 = vld [vmem:[%s7603 + $0x14] sm:$0xf]
      %v7610 = vld [vmem:[%s7603 + $0x18] sm:$0xf]
      %v7611 = vld [vmem:[%s7603 + $0x1c] sm:$0xf]
      %v7612 = vld [vmem:[%s7603 + $0x20] sm:$0xf]
      %v7613 = vld [vmem:[%s7603 + $0x24] sm:$0xf]
      %v7614 = vld [vmem:[%s7603 + $0x28] sm:$0xf]
      %v7615 = vld [vmem:[%s7603 + $0x2c] sm:$0xf]
      %v7616 = vld [vmem:[%s7603 + $0x30] sm:$0xf]
      %v7617 = vld [vmem:[%s7603 + $0x34] sm:$0xf]
      %v7618 = vld [vmem:[%s7603 + $0x38] sm:$0xf]
      %v7619 = vld [vmem:[%s7603 + $0x3c] sm:$0xf]
      %v7620 = vld [vmem:[%s7603 + $0x40] sm:$0xf]
      %v7621 = vld [vmem:[%s7603 + $0x44] sm:$0xf]
      %v7622 = vld [vmem:[%s7603 + $0x48] sm:$0xf]
      %v7623 = vld [vmem:[%s7603 + $0x4c] sm:$0xf]
      %v7624 = vld [vmem:[%s7603 + $0x50] sm:$0xf]
      %v7625 = vld [vmem:[%s7603 + $0x54] sm:$0xf]
      %v7626 = vld [vmem:[%s7603 + $0x58] sm:$0xf]
      %v7627 = vld [vmem:[%s7603 + $0x5c] sm:$0xf]
      %v7628 = vld [vmem:[%s7603 + $0x60] sm:$0xf]
      %v7629 = vld [vmem:[%s7603 + $0x64] sm:$0xf]
      %v7630 = vld [vmem:[%s7603 + $0x68] sm:$0xf]
      %v7631 = vld [vmem:[%s7603 + $0x6c] sm:$0xf]
      %v7632 = vld [vmem:[%s7603 + $0x70] sm:$0xf]
      %v7633 = vld [vmem:[%s7603 + $0x74] sm:$0xf]
      %v7634 = vld [vmem:[%s7603 + $0x78] sm:$0xf]
      %v7635 = vld [vmem:[%s7603 + $0x7c] sm:$0xf]
      %v7636 = vld [vmem:[%s7603 + $0x80] sm:$0xf]
      %v7637 = vld [vmem:[%s7603 + $0x84] sm:$0xf]
      %v7638 = vld [vmem:[%s7603 + $0x88] sm:$0xf]
      %v7639 = vld [vmem:[%s7603 + $0x8c] sm:$0xf]
      %v7640 = vld [vmem:[%s7603 + $0x90] sm:$0xf]
      %v7641 = vld [vmem:[%s7603 + $0x94] sm:$0xf]
      %v7642 = vld [vmem:[%s7603 + $0x98] sm:$0xf]
      %v7643 = vld [vmem:[%s7603 + $0x9c] sm:$0xf]
      %v7644 = vld [vmem:[%s7603 + $0xa0] sm:$0xf]
      %v7645 = vld [vmem:[%s7603 + $0xa4] sm:$0xf]
      %v7646 = vld [vmem:[%s7603 + $0xa8] sm:$0xf]
      %v7647 = vld [vmem:[%s7603 + $0xac] sm:$0xf]
      %v7648 = vld [vmem:[%s7603 + $0xb0] sm:$0xf]
      %v7649 = vld [vmem:[%s7603 + $0xb4] sm:$0xf]
      %v7650 = vld [vmem:[%s7603 + $0xb8] sm:$0xf]
      %v7651 = vld [vmem:[%s7603 + $0xbc] sm:$0xf]
      %v7652 = vcombine.low %v526, %v534
      %v7653 = vcombine.low %v536, %v519
      %v7654 = vcombine.low %v533, %v535
      %v7655 = vcombine.low %v537, %v560
      %v7657 = vunpack.c.l.s4 1966171168
      %v7658 = vunpack.c.0.s8 %v7657
      %v7659 = vlaneseq
      %v7660 = vshrl.u32 %v7659, 7
      %v7661 = vsub.s32 %v7658, %v7660
      %v7662 = vrot.slane %v7652, %v7661
      %v7664 = vunpack.c.l.s4 1966171168
      %v7665 = vunpack.c.0.s8 %v7664
      %v7666 = vlaneseq
      %v7667 = vshrl.u32 %v7666, 7
      %v7668 = vsub.s32 %v7665, %v7667
      %v7669 = vrot.slane %v7653, %v7668
      %v7671 = vunpack.c.l.s4 1966171168
      %v7672 = vunpack.c.0.s8 %v7671
      %v7673 = vlaneseq
      %v7674 = vshrl.u32 %v7673, 7
      %v7675 = vsub.s32 %v7672, %v7674
      %v7676 = vrot.slane %v7654, %v7675
      %v7678 = vunpack.c.l.s4 1966171168
      %v7679 = vunpack.c.0.s8 %v7678
      %v7680 = vlaneseq
      %v7681 = vshrl.u32 %v7680, 7
      %v7682 = vsub.s32 %v7679, %v7681
      %v7683 = vrot.slane %v7655, %v7682
      %v7684 = vcombine.low %v7662, %v7669
      %v7685 = vcombine.high %v7662, %v7669
      %v7686 = vcombine.low %v7676, %v7683
      %v7687 = vcombine.high %v7676, %v7683
      %v7689 = vunpack.c.l.s4 1966171168
      %v7690 = vunpack.c.0.s8 %v7689
      %v7691 = vlaneseq
      %v7692 = vshrl.u32 %v7691, 7
      %v7693 = vsub.s32 %v7690, %v7692
      %v7694 = vrot.slane %v7684, %v7693
      %v7696 = vunpack.c.l.s4 1966171168
      %v7697 = vunpack.c.0.s8 %v7696
      %v7698 = vlaneseq
      %v7699 = vshrl.u32 %v7698, 7
      %v7700 = vsub.s32 %v7697, %v7699
      %v7701 = vrot.slane %v7685, %v7700
      %v7703 = vunpack.c.l.s4 1966171168
      %v7704 = vunpack.c.0.s8 %v7703
      %v7705 = vlaneseq
      %v7706 = vshrl.u32 %v7705, 7
      %v7707 = vsub.s32 %v7704, %v7706
      %v7708 = vrot.slane %v7686, %v7707
      %v7710 = vunpack.c.l.s4 1966171168
      %v7711 = vunpack.c.0.s8 %v7710
      %v7712 = vlaneseq
      %v7713 = vshrl.u32 %v7712, 7
      %v7714 = vsub.s32 %v7711, %v7713
      %v7715 = vrot.slane %v7687, %v7714
      %v7716 = vcombine.low %v7694, %v7708
      %v7717 = vcombine.high %v7694, %v7708
      %v7718 = vcombine.low %v7701, %v7715
      %v7719 = vcombine.low %v2146, %v616
      %v7720 = vcombine.low %v624, %v626
      %v7721 = vcombine.low %v609, %v623
      %v7722 = vcombine.low %v625, %v627
      %v7724 = vunpack.c.l.s4 1966171168
      %v7725 = vunpack.c.0.s8 %v7724
      %v7726 = vlaneseq
      %v7727 = vshrl.u32 %v7726, 7
      %v7728 = vsub.s32 %v7725, %v7727
      %v7729 = vrot.slane %v7719, %v7728
      %v7731 = vunpack.c.l.s4 1966171168
      %v7732 = vunpack.c.0.s8 %v7731
      %v7733 = vlaneseq
      %v7734 = vshrl.u32 %v7733, 7
      %v7735 = vsub.s32 %v7732, %v7734
      %v7736 = vrot.slane %v7720, %v7735
      %v7738 = vunpack.c.l.s4 1966171168
      %v7739 = vunpack.c.0.s8 %v7738
      %v7740 = vlaneseq
      %v7741 = vshrl.u32 %v7740, 7
      %v7742 = vsub.s32 %v7739, %v7741
      %v7743 = vrot.slane %v7721, %v7742
      %v7745 = vunpack.c.l.s4 1966171168
      %v7746 = vunpack.c.0.s8 %v7745
      %v7747 = vlaneseq
      %v7748 = vshrl.u32 %v7747, 7
      %v7749 = vsub.s32 %v7746, %v7748
      %v7750 = vrot.slane %v7722, %v7749
      %v7751 = vcombine.low %v7729, %v7736
      %v7752 = vcombine.high %v7729, %v7736
      %v7753 = vcombine.low %v7743, %v7750
      %v7754 = vcombine.high %v7743, %v7750
      %v7756 = vunpack.c.l.s4 1966171168
      %v7757 = vunpack.c.0.s8 %v7756
      %v7758 = vlaneseq
      %v7759 = vshrl.u32 %v7758, 7
      %v7760 = vsub.s32 %v7757, %v7759
      %v7761 = vrot.slane %v7751, %v7760
      %v7763 = vunpack.c.l.s4 1966171168
      %v7764 = vunpack.c.0.s8 %v7763
      %v7765 = vlaneseq
      %v7766 = vshrl.u32 %v7765, 7
      %v7767 = vsub.s32 %v7764, %v7766
      %v7768 = vrot.slane %v7752, %v7767
      %v7770 = vunpack.c.l.s4 1966171168
      %v7771 = vunpack.c.0.s8 %v7770
      %v7772 = vlaneseq
      %v7773 = vshrl.u32 %v7772, 7
      %v7774 = vsub.s32 %v7771, %v7773
      %v7775 = vrot.slane %v7753, %v7774
      %v7777 = vunpack.c.l.s4 1966171168
      %v7778 = vunpack.c.0.s8 %v7777
      %v7779 = vlaneseq
      %v7780 = vshrl.u32 %v7779, 7
      %v7781 = vsub.s32 %v7778, %v7780
      %v7782 = vrot.slane %v7754, %v7781
      %v7783 = vcombine.low %v7761, %v7775
      %v7784 = vcombine.high %v7761, %v7775
      %v7785 = vcombine.low %v7768, %v7782
      %v7786 = vcombine.low %v650, %v2154
      %v7787 = vcombine.low %v706, %v714
      %v7788 = vcombine.low %v716, %v699
      %v7789 = vcombine.low %v713, %v715
      %v7791 = vunpack.c.l.s4 1966171168
      %v7792 = vunpack.c.0.s8 %v7791
      %v7793 = vlaneseq
      %v7794 = vshrl.u32 %v7793, 7
      %v7795 = vsub.s32 %v7792, %v7794
      %v7796 = vrot.slane %v7786, %v7795
      %v7798 = vunpack.c.l.s4 1966171168
      %v7799 = vunpack.c.0.s8 %v7798
      %v7800 = vlaneseq
      %v7801 = vshrl.u32 %v7800, 7
      %v7802 = vsub.s32 %v7799, %v7801
      %v7803 = vrot.slane %v7787, %v7802
      %v7805 = vunpack.c.l.s4 1966171168
      %v7806 = vunpack.c.0.s8 %v7805
      %v7807 = vlaneseq
      %v7808 = vshrl.u32 %v7807, 7
      %v7809 = vsub.s32 %v7806, %v7808
      %v7810 = vrot.slane %v7788, %v7809
      %v7812 = vunpack.c.l.s4 1966171168
      %v7813 = vunpack.c.0.s8 %v7812
      %v7814 = vlaneseq
      %v7815 = vshrl.u32 %v7814, 7
      %v7816 = vsub.s32 %v7813, %v7815
      %v7817 = vrot.slane %v7789, %v7816
      %v7818 = vcombine.low %v7796, %v7803
      %v7819 = vcombine.high %v7796, %v7803
      %v7820 = vcombine.low %v7810, %v7817
      %v7821 = vcombine.high %v7810, %v7817
      %v7823 = vunpack.c.l.s4 1966171168
      %v7824 = vunpack.c.0.s8 %v7823
      %v7825 = vlaneseq
      %v7826 = vshrl.u32 %v7825, 7
      %v7827 = vsub.s32 %v7824, %v7826
      %v7828 = vrot.slane %v7818, %v7827
      %v7830 = vunpack.c.l.s4 1966171168
      %v7831 = vunpack.c.0.s8 %v7830
      %v7832 = vlaneseq
      %v7833 = vshrl.u32 %v7832, 7
      %v7834 = vsub.s32 %v7831, %v7833
      %v7835 = vrot.slane %v7819, %v7834
      %v7837 = vunpack.c.l.s4 1966171168
      %v7838 = vunpack.c.0.s8 %v7837
      %v7839 = vlaneseq
      %v7840 = vshrl.u32 %v7839, 7
      %v7841 = vsub.s32 %v7838, %v7840
      %v7842 = vrot.slane %v7820, %v7841
      %v7844 = vunpack.c.l.s4 1966171168
      %v7845 = vunpack.c.0.s8 %v7844
      %v7846 = vlaneseq
      %v7847 = vshrl.u32 %v7846, 7
      %v7848 = vsub.s32 %v7845, %v7847
      %v7849 = vrot.slane %v7821, %v7848
      %v7850 = vcombine.low %v7828, %v7842
      %v7851 = vcombine.high %v7828, %v7842
      %v7852 = vcombine.low %v7835, %v7849
      %v7853 = vcombine.low %v717, %v740
      %v7854 = vcombine.low %v2162, %v796
      %v7855 = vcombine.low %v804, %v806
      %v7856 = vcombine.low %v789, %v803
      %v7858 = vunpack.c.l.s4 1966171168
      %v7859 = vunpack.c.0.s8 %v7858
      %v7860 = vlaneseq
      %v7861 = vshrl.u32 %v7860, 7
      %v7862 = vsub.s32 %v7859, %v7861
      %v7863 = vrot.slane %v7853, %v7862
      %v7865 = vunpack.c.l.s4 1966171168
      %v7866 = vunpack.c.0.s8 %v7865
      %v7867 = vlaneseq
      %v7868 = vshrl.u32 %v7867, 7
      %v7869 = vsub.s32 %v7866, %v7868
      %v7870 = vrot.slane %v7854, %v7869
      %v7872 = vunpack.c.l.s4 1966171168
      %v7873 = vunpack.c.0.s8 %v7872
      %v7874 = vlaneseq
      %v7875 = vshrl.u32 %v7874, 7
      %v7876 = vsub.s32 %v7873, %v7875
      %v7877 = vrot.slane %v7855, %v7876
      %v7879 = vunpack.c.l.s4 1966171168
      %v7880 = vunpack.c.0.s8 %v7879
      %v7881 = vlaneseq
      %v7882 = vshrl.u32 %v7881, 7
      %v7883 = vsub.s32 %v7880, %v7882
      %v7884 = vrot.slane %v7856, %v7883
      %v7885 = vcombine.low %v7863, %v7870
      %v7886 = vcombine.high %v7863, %v7870
      %v7887 = vcombine.low %v7877, %v7884
      %v7888 = vcombine.high %v7877, %v7884
      %v7890 = vunpack.c.l.s4 1966171168
      %v7891 = vunpack.c.0.s8 %v7890
      %v7892 = vlaneseq
      %v7893 = vshrl.u32 %v7892, 7
      %v7894 = vsub.s32 %v7891, %v7893
      %v7895 = vrot.slane %v7885, %v7894
      %v7897 = vunpack.c.l.s4 1966171168
      %v7898 = vunpack.c.0.s8 %v7897
      %v7899 = vlaneseq
      %v7900 = vshrl.u32 %v7899, 7
      %v7901 = vsub.s32 %v7898, %v7900
      %v7902 = vrot.slane %v7886, %v7901
      %v7904 = vunpack.c.l.s4 1966171168
      %v7905 = vunpack.c.0.s8 %v7904
      %v7906 = vlaneseq
      %v7907 = vshrl.u32 %v7906, 7
      %v7908 = vsub.s32 %v7905, %v7907
      %v7909 = vrot.slane %v7887, %v7908
      %v7911 = vunpack.c.l.s4 1966171168
      %v7912 = vunpack.c.0.s8 %v7911
      %v7913 = vlaneseq
      %v7914 = vshrl.u32 %v7913, 7
      %v7915 = vsub.s32 %v7912, %v7914
      %v7916 = vrot.slane %v7888, %v7915
      %v7917 = vcombine.low %v7895, %v7909
      %v7918 = vcombine.high %v7895, %v7909
      %v7919 = vcombine.low %v7902, %v7916
      %v7920 = vcombine.low %v805, %v807
      %v7921 = vcombine.low %v830, %v2170
      %v7922 = vcombine.low %v886, %v894
      %v7923 = vcombine.low %v896, %v879
      %v7925 = vunpack.c.l.s4 1966171168
      %v7926 = vunpack.c.0.s8 %v7925
      %v7927 = vlaneseq
      %v7928 = vshrl.u32 %v7927, 7
      %v7929 = vsub.s32 %v7926, %v7928
      %v7930 = vrot.slane %v7920, %v7929
      %v7932 = vunpack.c.l.s4 1966171168
      %v7933 = vunpack.c.0.s8 %v7932
      %v7934 = vlaneseq
      %v7935 = vshrl.u32 %v7934, 7
      %v7936 = vsub.s32 %v7933, %v7935
      %v7937 = vrot.slane %v7921, %v7936
      %v7939 = vunpack.c.l.s4 1966171168
      %v7940 = vunpack.c.0.s8 %v7939
      %v7941 = vlaneseq
      %v7942 = vshrl.u32 %v7941, 7
      %v7943 = vsub.s32 %v7940, %v7942
      %v7944 = vrot.slane %v7922, %v7943
      %v7946 = vunpack.c.l.s4 1966171168
      %v7947 = vunpack.c.0.s8 %v7946
      %v7948 = vlaneseq
      %v7949 = vshrl.u32 %v7948, 7
      %v7950 = vsub.s32 %v7947, %v7949
      %v7951 = vrot.slane %v7923, %v7950
      %v7952 = vcombine.low %v7930, %v7937
      %v7953 = vcombine.high %v7930, %v7937
      %v7954 = vcombine.low %v7944, %v7951
      %v7955 = vcombine.high %v7944, %v7951
      %v7957 = vunpack.c.l.s4 1966171168
      %v7958 = vunpack.c.0.s8 %v7957
      %v7959 = vlaneseq
      %v7960 = vshrl.u32 %v7959, 7
      %v7961 = vsub.s32 %v7958, %v7960
      %v7962 = vrot.slane %v7952, %v7961
      %v7964 = vunpack.c.l.s4 1966171168
      %v7965 = vunpack.c.0.s8 %v7964
      %v7966 = vlaneseq
      %v7967 = vshrl.u32 %v7966, 7
      %v7968 = vsub.s32 %v7965, %v7967
      %v7969 = vrot.slane %v7953, %v7968
      %v7971 = vunpack.c.l.s4 1966171168
      %v7972 = vunpack.c.0.s8 %v7971
      %v7973 = vlaneseq
      %v7974 = vshrl.u32 %v7973, 7
      %v7975 = vsub.s32 %v7972, %v7974
      %v7976 = vrot.slane %v7954, %v7975
      %v7978 = vunpack.c.l.s4 1966171168
      %v7979 = vunpack.c.0.s8 %v7978
      %v7980 = vlaneseq
      %v7981 = vshrl.u32 %v7980, 7
      %v7982 = vsub.s32 %v7979, %v7981
      %v7983 = vrot.slane %v7955, %v7982
      %v7984 = vcombine.low %v7962, %v7976
      %v7985 = vcombine.high %v7962, %v7976
      %v7986 = vcombine.low %v7969, %v7983
      %v7987 = vcombine.low %v893, %v895
      %v7988 = vcombine.low %v897, %v920
      %v7989 = vcombine.low %v2178, %v976
      %v7990 = vcombine.low %v984, %v986
      %v7992 = vunpack.c.l.s4 1966171168
      %v7993 = vunpack.c.0.s8 %v7992
      %v7994 = vlaneseq
      %v7995 = vshrl.u32 %v7994, 7
      %v7996 = vsub.s32 %v7993, %v7995
      %v7997 = vrot.slane %v7987, %v7996
      %v7999 = vunpack.c.l.s4 1966171168
      %v8000 = vunpack.c.0.s8 %v7999
      %v8001 = vlaneseq
      %v8002 = vshrl.u32 %v8001, 7
      %v8003 = vsub.s32 %v8000, %v8002
      %v8004 = vrot.slane %v7988, %v8003
      %v8006 = vunpack.c.l.s4 1966171168
      %v8007 = vunpack.c.0.s8 %v8006
      %v8008 = vlaneseq
      %v8009 = vshrl.u32 %v8008, 7
      %v8010 = vsub.s32 %v8007, %v8009
      %v8011 = vrot.slane %v7989, %v8010
      %v8013 = vunpack.c.l.s4 1966171168
      %v8014 = vunpack.c.0.s8 %v8013
      %v8015 = vlaneseq
      %v8016 = vshrl.u32 %v8015, 7
      %v8017 = vsub.s32 %v8014, %v8016
      %v8018 = vrot.slane %v7990, %v8017
      %v8019 = vcombine.low %v7997, %v8004
      %v8020 = vcombine.high %v7997, %v8004
      %v8021 = vcombine.low %v8011, %v8018
      %v8022 = vcombine.high %v8011, %v8018
      %v8024 = vunpack.c.l.s4 1966171168
      %v8025 = vunpack.c.0.s8 %v8024
      %v8026 = vlaneseq
      %v8027 = vshrl.u32 %v8026, 7
      %v8028 = vsub.s32 %v8025, %v8027
      %v8029 = vrot.slane %v8019, %v8028
      %v8031 = vunpack.c.l.s4 1966171168
      %v8032 = vunpack.c.0.s8 %v8031
      %v8033 = vlaneseq
      %v8034 = vshrl.u32 %v8033, 7
      %v8035 = vsub.s32 %v8032, %v8034
      %v8036 = vrot.slane %v8020, %v8035
      %v8038 = vunpack.c.l.s4 1966171168
      %v8039 = vunpack.c.0.s8 %v8038
      %v8040 = vlaneseq
      %v8041 = vshrl.u32 %v8040, 7
      %v8042 = vsub.s32 %v8039, %v8041
      %v8043 = vrot.slane %v8021, %v8042
      %v8045 = vunpack.c.l.s4 1966171168
      %v8046 = vunpack.c.0.s8 %v8045
      %v8047 = vlaneseq
      %v8048 = vshrl.u32 %v8047, 7
      %v8049 = vsub.s32 %v8046, %v8048
      %v8050 = vrot.slane %v8022, %v8049
      %v8051 = vcombine.low %v8029, %v8043
      %v8052 = vcombine.high %v8029, %v8043
      %v8053 = vcombine.low %v8036, %v8050
      %v8054 = vcombine.low %v969, %v983
      %v8055 = vcombine.low %v985, %v987
      %v8056 = vcombine.low %v1010, %v2186
      %v8057 = vcombine.low %v1066, %v1074
      %v8059 = vunpack.c.l.s4 1966171168
      %v8060 = vunpack.c.0.s8 %v8059
      %v8061 = vlaneseq
      %v8062 = vshrl.u32 %v8061, 7
      %v8063 = vsub.s32 %v8060, %v8062
      %v8064 = vrot.slane %v8054, %v8063
      %v8066 = vunpack.c.l.s4 1966171168
      %v8067 = vunpack.c.0.s8 %v8066
      %v8068 = vlaneseq
      %v8069 = vshrl.u32 %v8068, 7
      %v8070 = vsub.s32 %v8067, %v8069
      %v8071 = vrot.slane %v8055, %v8070
      %v8073 = vunpack.c.l.s4 1966171168
      %v8074 = vunpack.c.0.s8 %v8073
      %v8075 = vlaneseq
      %v8076 = vshrl.u32 %v8075, 7
      %v8077 = vsub.s32 %v8074, %v8076
      %v8078 = vrot.slane %v8056, %v8077
      %v8080 = vunpack.c.l.s4 1966171168
      %v8081 = vunpack.c.0.s8 %v8080
      %v8082 = vlaneseq
      %v8083 = vshrl.u32 %v8082, 7
      %v8084 = vsub.s32 %v8081, %v8083
      %v8085 = vrot.slane %v8057, %v8084
      %v8086 = vcombine.low %v8064, %v8071
      %v8087 = vcombine.high %v8064, %v8071
      %v8088 = vcombine.low %v8078, %v8085
      %v8089 = vcombine.high %v8078, %v8085
      %v8091 = vunpack.c.l.s4 1966171168
      %v8092 = vunpack.c.0.s8 %v8091
      %v8093 = vlaneseq
      %v8094 = vshrl.u32 %v8093, 7
      %v8095 = vsub.s32 %v8092, %v8094
      %v8096 = vrot.slane %v8086, %v8095
      %v8098 = vunpack.c.l.s4 1966171168
      %v8099 = vunpack.c.0.s8 %v8098
      %v8100 = vlaneseq
      %v8101 = vshrl.u32 %v8100, 7
      %v8102 = vsub.s32 %v8099, %v8101
      %v8103 = vrot.slane %v8087, %v8102
      %v8105 = vunpack.c.l.s4 1966171168
      %v8106 = vunpack.c.0.s8 %v8105
      %v8107 = vlaneseq
      %v8108 = vshrl.u32 %v8107, 7
      %v8109 = vsub.s32 %v8106, %v8108
      %v8110 = vrot.slane %v8088, %v8109
      %v8112 = vunpack.c.l.s4 1966171168
      %v8113 = vunpack.c.0.s8 %v8112
      %v8114 = vlaneseq
      %v8115 = vshrl.u32 %v8114, 7
      %v8116 = vsub.s32 %v8113, %v8115
      %v8117 = vrot.slane %v8089, %v8116
      %v8118 = vcombine.low %v8096, %v8110
      %v8119 = vcombine.high %v8096, %v8110
      %v8120 = vcombine.low %v8103, %v8117
      %v8121 = vcombine.low %v1076, %v1059
      %v8122 = vcombine.low %v1073, %v1075
      %v8123 = vcombine.low %v1077, %v1100
      %v8124 = vcombine.low %v2194, %v1156
      %v8126 = vunpack.c.l.s4 1966171168
      %v8127 = vunpack.c.0.s8 %v8126
      %v8128 = vlaneseq
      %v8129 = vshrl.u32 %v8128, 7
      %v8130 = vsub.s32 %v8127, %v8129
      %v8131 = vrot.slane %v8121, %v8130
      %v8133 = vunpack.c.l.s4 1966171168
      %v8134 = vunpack.c.0.s8 %v8133
      %v8135 = vlaneseq
      %v8136 = vshrl.u32 %v8135, 7
      %v8137 = vsub.s32 %v8134, %v8136
      %v8138 = vrot.slane %v8122, %v8137
      %v8140 = vunpack.c.l.s4 1966171168
      %v8141 = vunpack.c.0.s8 %v8140
      %v8142 = vlaneseq
      %v8143 = vshrl.u32 %v8142, 7
      %v8144 = vsub.s32 %v8141, %v8143
      %v8145 = vrot.slane %v8123, %v8144
      %v8147 = vunpack.c.l.s4 1966171168
      %v8148 = vunpack.c.0.s8 %v8147
      %v8149 = vlaneseq
      %v8150 = vshrl.u32 %v8149, 7
      %v8151 = vsub.s32 %v8148, %v8150
      %v8152 = vrot.slane %v8124, %v8151
      %v8153 = vcombine.low %v8131, %v8138
      %v8154 = vcombine.high %v8131, %v8138
      %v8155 = vcombine.low %v8145, %v8152
      %v8156 = vcombine.high %v8145, %v8152
      %v8158 = vunpack.c.l.s4 1966171168
      %v8159 = vunpack.c.0.s8 %v8158
      %v8160 = vlaneseq
      %v8161 = vshrl.u32 %v8160, 7
      %v8162 = vsub.s32 %v8159, %v8161
      %v8163 = vrot.slane %v8153, %v8162
      %v8165 = vunpack.c.l.s4 1966171168
      %v8166 = vunpack.c.0.s8 %v8165
      %v8167 = vlaneseq
      %v8168 = vshrl.u32 %v8167, 7
      %v8169 = vsub.s32 %v8166, %v8168
      %v8170 = vrot.slane %v8154, %v8169
      %v8172 = vunpack.c.l.s4 1966171168
      %v8173 = vunpack.c.0.s8 %v8172
      %v8174 = vlaneseq
      %v8175 = vshrl.u32 %v8174, 7
      %v8176 = vsub.s32 %v8173, %v8175
      %v8177 = vrot.slane %v8155, %v8176
      %v8179 = vunpack.c.l.s4 1966171168
      %v8180 = vunpack.c.0.s8 %v8179
      %v8181 = vlaneseq
      %v8182 = vshrl.u32 %v8181, 7
      %v8183 = vsub.s32 %v8180, %v8182
      %v8184 = vrot.slane %v8156, %v8183
      %v8185 = vcombine.low %v8163, %v8177
      %v8186 = vcombine.high %v8163, %v8177
      %v8187 = vcombine.low %v8170, %v8184
      %v8188 = vcombine.low %v1164, %v1166
      %v8189 = vcombine.low %v1149, %v1163
      %v8190 = vcombine.low %v1165, %v1167
      %v8191 = vcombine.low %v1190, %v2202
      %v8193 = vunpack.c.l.s4 1966171168
      %v8194 = vunpack.c.0.s8 %v8193
      %v8195 = vlaneseq
      %v8196 = vshrl.u32 %v8195, 7
      %v8197 = vsub.s32 %v8194, %v8196
      %v8198 = vrot.slane %v8188, %v8197
      %v8200 = vunpack.c.l.s4 1966171168
      %v8201 = vunpack.c.0.s8 %v8200
      %v8202 = vlaneseq
      %v8203 = vshrl.u32 %v8202, 7
      %v8204 = vsub.s32 %v8201, %v8203
      %v8205 = vrot.slane %v8189, %v8204
      %v8207 = vunpack.c.l.s4 1966171168
      %v8208 = vunpack.c.0.s8 %v8207
      %v8209 = vlaneseq
      %v8210 = vshrl.u32 %v8209, 7
      %v8211 = vsub.s32 %v8208, %v8210
      %v8212 = vrot.slane %v8190, %v8211
      %v8214 = vunpack.c.l.s4 1966171168
      %v8215 = vunpack.c.0.s8 %v8214
      %v8216 = vlaneseq
      %v8217 = vshrl.u32 %v8216, 7
      %v8218 = vsub.s32 %v8215, %v8217
      %v8219 = vrot.slane %v8191, %v8218
      %v8220 = vcombine.low %v8198, %v8205
      %v8221 = vcombine.high %v8198, %v8205
      %v8222 = vcombine.low %v8212, %v8219
      %v8223 = vcombine.high %v8212, %v8219
      %v8225 = vunpack.c.l.s4 1966171168
      %v8226 = vunpack.c.0.s8 %v8225
      %v8227 = vlaneseq
      %v8228 = vshrl.u32 %v8227, 7
      %v8229 = vsub.s32 %v8226, %v8228
      %v8230 = vrot.slane %v8220, %v8229
      %v8232 = vunpack.c.l.s4 1966171168
      %v8233 = vunpack.c.0.s8 %v8232
      %v8234 = vlaneseq
      %v8235 = vshrl.u32 %v8234, 7
      %v8236 = vsub.s32 %v8233, %v8235
      %v8237 = vrot.slane %v8221, %v8236
      %v8239 = vunpack.c.l.s4 1966171168
      %v8240 = vunpack.c.0.s8 %v8239
      %v8241 = vlaneseq
      %v8242 = vshrl.u32 %v8241, 7
      %v8243 = vsub.s32 %v8240, %v8242
      %v8244 = vrot.slane %v8222, %v8243
      %v8246 = vunpack.c.l.s4 1966171168
      %v8247 = vunpack.c.0.s8 %v8246
      %v8248 = vlaneseq
      %v8249 = vshrl.u32 %v8248, 7
      %v8250 = vsub.s32 %v8247, %v8249
      %v8251 = vrot.slane %v8223, %v8250
      %v8252 = vcombine.low %v8230, %v8244
      %v8253 = vcombine.high %v8230, %v8244
      %v8254 = vcombine.low %v8237, %v8251
      %v8255 = vcombine.low %v1246, %v1254
      %v8256 = vcombine.low %v1256, %v1239
      %v8257 = vcombine.low %v1253, %v1255
      %v8258 = vcombine.low %v1257, %v1280
      %v8260 = vunpack.c.l.s4 1966171168
      %v8261 = vunpack.c.0.s8 %v8260
      %v8262 = vlaneseq
      %v8263 = vshrl.u32 %v8262, 7
      %v8264 = vsub.s32 %v8261, %v8263
      %v8265 = vrot.slane %v8255, %v8264
      %v8267 = vunpack.c.l.s4 1966171168
      %v8268 = vunpack.c.0.s8 %v8267
      %v8269 = vlaneseq
      %v8270 = vshrl.u32 %v8269, 7
      %v8271 = vsub.s32 %v8268, %v8270
      %v8272 = vrot.slane %v8256, %v8271
      %v8274 = vunpack.c.l.s4 1966171168
      %v8275 = vunpack.c.0.s8 %v8274
      %v8276 = vlaneseq
      %v8277 = vshrl.u32 %v8276, 7
      %v8278 = vsub.s32 %v8275, %v8277
      %v8279 = vrot.slane %v8257, %v8278
      %v8281 = vunpack.c.l.s4 1966171168
      %v8282 = vunpack.c.0.s8 %v8281
      %v8283 = vlaneseq
      %v8284 = vshrl.u32 %v8283, 7
      %v8285 = vsub.s32 %v8282, %v8284
      %v8286 = vrot.slane %v8258, %v8285
      %v8287 = vcombine.low %v8265, %v8272
      %v8288 = vcombine.high %v8265, %v8272
      %v8289 = vcombine.low %v8279, %v8286
      %v8290 = vcombine.high %v8279, %v8286
      %v8292 = vunpack.c.l.s4 1966171168
      %v8293 = vunpack.c.0.s8 %v8292
      %v8294 = vlaneseq
      %v8295 = vshrl.u32 %v8294, 7
      %v8296 = vsub.s32 %v8293, %v8295
      %v8297 = vrot.slane %v8287, %v8296
      %v8299 = vunpack.c.l.s4 1966171168
      %v8300 = vunpack.c.0.s8 %v8299
      %v8301 = vlaneseq
      %v8302 = vshrl.u32 %v8301, 7
      %v8303 = vsub.s32 %v8300, %v8302
      %v8304 = vrot.slane %v8288, %v8303
      %v8306 = vunpack.c.l.s4 1966171168
      %v8307 = vunpack.c.0.s8 %v8306
      %v8308 = vlaneseq
      %v8309 = vshrl.u32 %v8308, 7
      %v8310 = vsub.s32 %v8307, %v8309
      %v8311 = vrot.slane %v8289, %v8310
      %v8313 = vunpack.c.l.s4 1966171168
      %v8314 = vunpack.c.0.s8 %v8313
      %v8315 = vlaneseq
      %v8316 = vshrl.u32 %v8315, 7
      %v8317 = vsub.s32 %v8314, %v8316
      %v8318 = vrot.slane %v8290, %v8317
      %v8319 = vcombine.low %v8297, %v8311
      %v8320 = vcombine.high %v8297, %v8311
      %v8321 = vcombine.low %v8304, %v8318
      %v8322 = vcombine.low %v2210, %v1336
      %v8323 = vcombine.low %v1344, %v1346
      %v8324 = vcombine.low %v1329, %v1343
      %v8325 = vcombine.low %v1345, %v1347
      %v8327 = vunpack.c.l.s4 1966171168
      %v8328 = vunpack.c.0.s8 %v8327
      %v8329 = vlaneseq
      %v8330 = vshrl.u32 %v8329, 7
      %v8331 = vsub.s32 %v8328, %v8330
      %v8332 = vrot.slane %v8322, %v8331
      %v8334 = vunpack.c.l.s4 1966171168
      %v8335 = vunpack.c.0.s8 %v8334
      %v8336 = vlaneseq
      %v8337 = vshrl.u32 %v8336, 7
      %v8338 = vsub.s32 %v8335, %v8337
      %v8339 = vrot.slane %v8323, %v8338
      %v8341 = vunpack.c.l.s4 1966171168
      %v8342 = vunpack.c.0.s8 %v8341
      %v8343 = vlaneseq
      %v8344 = vshrl.u32 %v8343, 7
      %v8345 = vsub.s32 %v8342, %v8344
      %v8346 = vrot.slane %v8324, %v8345
      %v8348 = vunpack.c.l.s4 1966171168
      %v8349 = vunpack.c.0.s8 %v8348
      %v8350 = vlaneseq
      %v8351 = vshrl.u32 %v8350, 7
      %v8352 = vsub.s32 %v8349, %v8351
      %v8353 = vrot.slane %v8325, %v8352
      %v8354 = vcombine.low %v8332, %v8339
      %v8355 = vcombine.high %v8332, %v8339
      %v8356 = vcombine.low %v8346, %v8353
      %v8357 = vcombine.high %v8346, %v8353
      %v8359 = vunpack.c.l.s4 1966171168
      %v8360 = vunpack.c.0.s8 %v8359
      %v8361 = vlaneseq
      %v8362 = vshrl.u32 %v8361, 7
      %v8363 = vsub.s32 %v8360, %v8362
      %v8364 = vrot.slane %v8354, %v8363
      %v8366 = vunpack.c.l.s4 1966171168
      %v8367 = vunpack.c.0.s8 %v8366
      %v8368 = vlaneseq
      %v8369 = vshrl.u32 %v8368, 7
      %v8370 = vsub.s32 %v8367, %v8369
      %v8371 = vrot.slane %v8355, %v8370
      %v8373 = vunpack.c.l.s4 1966171168
      %v8374 = vunpack.c.0.s8 %v8373
      %v8375 = vlaneseq
      %v8376 = vshrl.u32 %v8375, 7
      %v8377 = vsub.s32 %v8374, %v8376
      %v8378 = vrot.slane %v8356, %v8377
      %v8380 = vunpack.c.l.s4 1966171168
      %v8381 = vunpack.c.0.s8 %v8380
      %v8382 = vlaneseq
      %v8383 = vshrl.u32 %v8382, 7
      %v8384 = vsub.s32 %v8381, %v8383
      %v8385 = vrot.slane %v8357, %v8384
      %v8386 = vcombine.low %v8364, %v8378
      %v8387 = vcombine.high %v8364, %v8378
      %v8388 = vcombine.low %v8371, %v8385
      %v8389 = vcombine.low %v1370, %v2218
      %v8390 = vcombine.low %v1426, %v1434
      %v8391 = vcombine.low %v1436, %v1419
      %v8392 = vcombine.low %v1433, %v1435
      %v8394 = vunpack.c.l.s4 1966171168
      %v8395 = vunpack.c.0.s8 %v8394
      %v8396 = vlaneseq
      %v8397 = vshrl.u32 %v8396, 7
      %v8398 = vsub.s32 %v8395, %v8397
      %v8399 = vrot.slane %v8389, %v8398
      %v8401 = vunpack.c.l.s4 1966171168
      %v8402 = vunpack.c.0.s8 %v8401
      %v8403 = vlaneseq
      %v8404 = vshrl.u32 %v8403, 7
      %v8405 = vsub.s32 %v8402, %v8404
      %v8406 = vrot.slane %v8390, %v8405
      %v8408 = vunpack.c.l.s4 1966171168
      %v8409 = vunpack.c.0.s8 %v8408
      %v8410 = vlaneseq
      %v8411 = vshrl.u32 %v8410, 7
      %v8412 = vsub.s32 %v8409, %v8411
      %v8413 = vrot.slane %v8391, %v8412
      %v8415 = vunpack.c.l.s4 1966171168
      %v8416 = vunpack.c.0.s8 %v8415
      %v8417 = vlaneseq
      %v8418 = vshrl.u32 %v8417, 7
      %v8419 = vsub.s32 %v8416, %v8418
      %v8420 = vrot.slane %v8392, %v8419
      %v8421 = vcombine.low %v8399, %v8406
      %v8422 = vcombine.high %v8399, %v8406
      %v8423 = vcombine.low %v8413, %v8420
      %v8424 = vcombine.high %v8413, %v8420
      %v8426 = vunpack.c.l.s4 1966171168
      %v8427 = vunpack.c.0.s8 %v8426
      %v8428 = vlaneseq
      %v8429 = vshrl.u32 %v8428, 7
      %v8430 = vsub.s32 %v8427, %v8429
      %v8431 = vrot.slane %v8421, %v8430
      %v8433 = vunpack.c.l.s4 1966171168
      %v8434 = vunpack.c.0.s8 %v8433
      %v8435 = vlaneseq
      %v8436 = vshrl.u32 %v8435, 7
      %v8437 = vsub.s32 %v8434, %v8436
      %v8438 = vrot.slane %v8422, %v8437
      %v8440 = vunpack.c.l.s4 1966171168
      %v8441 = vunpack.c.0.s8 %v8440
      %v8442 = vlaneseq
      %v8443 = vshrl.u32 %v8442, 7
      %v8444 = vsub.s32 %v8441, %v8443
      %v8445 = vrot.slane %v8423, %v8444
      %v8447 = vunpack.c.l.s4 1966171168
      %v8448 = vunpack.c.0.s8 %v8447
      %v8449 = vlaneseq
      %v8450 = vshrl.u32 %v8449, 7
      %v8451 = vsub.s32 %v8448, %v8450
      %v8452 = vrot.slane %v8424, %v8451
      %v8453 = vcombine.low %v8431, %v8445
      %v8454 = vcombine.high %v8431, %v8445
      %v8455 = vcombine.low %v8438, %v8452
      %v8456 = vcombine.low %v1437, %v1460
      %v8457 = vcombine.low %v2226, %v1516
      %v8458 = vcombine.low %v1524, %v1526
      %v8459 = vcombine.low %v1509, %v1523
      %v8461 = vunpack.c.l.s4 1966171168
      %v8462 = vunpack.c.0.s8 %v8461
      %v8463 = vlaneseq
      %v8464 = vshrl.u32 %v8463, 7
      %v8465 = vsub.s32 %v8462, %v8464
      %v8466 = vrot.slane %v8456, %v8465
      %v8468 = vunpack.c.l.s4 1966171168
      %v8469 = vunpack.c.0.s8 %v8468
      %v8470 = vlaneseq
      %v8471 = vshrl.u32 %v8470, 7
      %v8472 = vsub.s32 %v8469, %v8471
      %v8473 = vrot.slane %v8457, %v8472
      %v8475 = vunpack.c.l.s4 1966171168
      %v8476 = vunpack.c.0.s8 %v8475
      %v8477 = vlaneseq
      %v8478 = vshrl.u32 %v8477, 7
      %v8479 = vsub.s32 %v8476, %v8478
      %v8480 = vrot.slane %v8458, %v8479
      %v8482 = vunpack.c.l.s4 1966171168
      %v8483 = vunpack.c.0.s8 %v8482
      %v8484 = vlaneseq
      %v8485 = vshrl.u32 %v8484, 7
      %v8486 = vsub.s32 %v8483, %v8485
      %v8487 = vrot.slane %v8459, %v8486
      %v8488 = vcombine.low %v8466, %v8473
      %v8489 = vcombine.high %v8466, %v8473
      %v8490 = vcombine.low %v8480, %v8487
      %v8491 = vcombine.high %v8480, %v8487
      %v8493 = vunpack.c.l.s4 1966171168
      %v8494 = vunpack.c.0.s8 %v8493
      %v8495 = vlaneseq
      %v8496 = vshrl.u32 %v8495, 7
      %v8497 = vsub.s32 %v8494, %v8496
      %v8498 = vrot.slane %v8488, %v8497
      %v8500 = vunpack.c.l.s4 1966171168
      %v8501 = vunpack.c.0.s8 %v8500
      %v8502 = vlaneseq
      %v8503 = vshrl.u32 %v8502, 7
      %v8504 = vsub.s32 %v8501, %v8503
      %v8505 = vrot.slane %v8489, %v8504
      %v8507 = vunpack.c.l.s4 1966171168
      %v8508 = vunpack.c.0.s8 %v8507
      %v8509 = vlaneseq
      %v8510 = vshrl.u32 %v8509, 7
      %v8511 = vsub.s32 %v8508, %v8510
      %v8512 = vrot.slane %v8490, %v8511
      %v8514 = vunpack.c.l.s4 1966171168
      %v8515 = vunpack.c.0.s8 %v8514
      %v8516 = vlaneseq
      %v8517 = vshrl.u32 %v8516, 7
      %v8518 = vsub.s32 %v8515, %v8517
      %v8519 = vrot.slane %v8491, %v8518
      %v8520 = vcombine.low %v8498, %v8512
      %v8521 = vcombine.high %v8498, %v8512
      %v8522 = vcombine.low %v8505, %v8519
      %v8523 = vcombine.low %v1525, %v1527
      %v8524 = vcombine.low %v1550, %v2234
      %v8525 = vcombine.low %v1606, %v1614
      %v8526 = vcombine.low %v1616, %v1599
      %v8528 = vunpack.c.l.s4 1966171168
      %v8529 = vunpack.c.0.s8 %v8528
      %v8530 = vlaneseq
      %v8531 = vshrl.u32 %v8530, 7
      %v8532 = vsub.s32 %v8529, %v8531
      %v8533 = vrot.slane %v8523, %v8532
      %v8535 = vunpack.c.l.s4 1966171168
      %v8536 = vunpack.c.0.s8 %v8535
      %v8537 = vlaneseq
      %v8538 = vshrl.u32 %v8537, 7
      %v8539 = vsub.s32 %v8536, %v8538
      %v8540 = vrot.slane %v8524, %v8539
      %v8542 = vunpack.c.l.s4 1966171168
      %v8543 = vunpack.c.0.s8 %v8542
      %v8544 = vlaneseq
      %v8545 = vshrl.u32 %v8544, 7
      %v8546 = vsub.s32 %v8543, %v8545
      %v8547 = vrot.slane %v8525, %v8546
      %v8549 = vunpack.c.l.s4 1966171168
      %v8550 = vunpack.c.0.s8 %v8549
      %v8551 = vlaneseq
      %v8552 = vshrl.u32 %v8551, 7
      %v8553 = vsub.s32 %v8550, %v8552
      %v8554 = vrot.slane %v8526, %v8553
      %v8555 = vcombine.low %v8533, %v8540
      %v8556 = vcombine.high %v8533, %v8540
      %v8557 = vcombine.low %v8547, %v8554
      %v8558 = vcombine.high %v8547, %v8554
      %v8560 = vunpack.c.l.s4 1966171168
      %v8561 = vunpack.c.0.s8 %v8560
      %v8562 = vlaneseq
      %v8563 = vshrl.u32 %v8562, 7
      %v8564 = vsub.s32 %v8561, %v8563
      %v8565 = vrot.slane %v8555, %v8564
      %v8567 = vunpack.c.l.s4 1966171168
      %v8568 = vunpack.c.0.s8 %v8567
      %v8569 = vlaneseq
      %v8570 = vshrl.u32 %v8569, 7
      %v8571 = vsub.s32 %v8568, %v8570
      %v8572 = vrot.slane %v8556, %v8571
      %v8574 = vunpack.c.l.s4 1966171168
      %v8575 = vunpack.c.0.s8 %v8574
      %v8576 = vlaneseq
      %v8577 = vshrl.u32 %v8576, 7
      %v8578 = vsub.s32 %v8575, %v8577
      %v8579 = vrot.slane %v8557, %v8578
      %v8581 = vunpack.c.l.s4 1966171168
      %v8582 = vunpack.c.0.s8 %v8581
      %v8583 = vlaneseq
      %v8584 = vshrl.u32 %v8583, 7
      %v8585 = vsub.s32 %v8582, %v8584
      %v8586 = vrot.slane %v8558, %v8585
      %v8587 = vcombine.low %v8565, %v8579
      %v8588 = vcombine.high %v8565, %v8579
      %v8589 = vcombine.low %v8572, %v8586
      %v8590 = vcombine.low %v1613, %v1615
      %v8591 = vcombine.low %v1617, %v1640
      %v8592 = vcombine.low %v2242, %v1696
      %v8593 = vcombine.low %v1704, %v1706
      %v8595 = vunpack.c.l.s4 1966171168
      %v8596 = vunpack.c.0.s8 %v8595
      %v8597 = vlaneseq
      %v8598 = vshrl.u32 %v8597, 7
      %v8599 = vsub.s32 %v8596, %v8598
      %v8600 = vrot.slane %v8590, %v8599
      %v8602 = vunpack.c.l.s4 1966171168
      %v8603 = vunpack.c.0.s8 %v8602
      %v8604 = vlaneseq
      %v8605 = vshrl.u32 %v8604, 7
      %v8606 = vsub.s32 %v8603, %v8605
      %v8607 = vrot.slane %v8591, %v8606
      %v8609 = vunpack.c.l.s4 1966171168
      %v8610 = vunpack.c.0.s8 %v8609
      %v8611 = vlaneseq
      %v8612 = vshrl.u32 %v8611, 7
      %v8613 = vsub.s32 %v8610, %v8612
      %v8614 = vrot.slane %v8592, %v8613
      %v8616 = vunpack.c.l.s4 1966171168
      %v8617 = vunpack.c.0.s8 %v8616
      %v8618 = vlaneseq
      %v8619 = vshrl.u32 %v8618, 7
      %v8620 = vsub.s32 %v8617, %v8619
      %v8621 = vrot.slane %v8593, %v8620
      %v8622 = vcombine.low %v8600, %v8607
      %v8623 = vcombine.high %v8600, %v8607
      %v8624 = vcombine.low %v8614, %v8621
      %v8625 = vcombine.high %v8614, %v8621
      %v8627 = vunpack.c.l.s4 1966171168
      %v8628 = vunpack.c.0.s8 %v8627
      %v8629 = vlaneseq
      %v8630 = vshrl.u32 %v8629, 7
      %v8631 = vsub.s32 %v8628, %v8630
      %v8632 = vrot.slane %v8622, %v8631
      %v8634 = vunpack.c.l.s4 1966171168
      %v8635 = vunpack.c.0.s8 %v8634
      %v8636 = vlaneseq
      %v8637 = vshrl.u32 %v8636, 7
      %v8638 = vsub.s32 %v8635, %v8637
      %v8639 = vrot.slane %v8623, %v8638
      %v8641 = vunpack.c.l.s4 1966171168
      %v8642 = vunpack.c.0.s8 %v8641
      %v8643 = vlaneseq
      %v8644 = vshrl.u32 %v8643, 7
      %v8645 = vsub.s32 %v8642, %v8644
      %v8646 = vrot.slane %v8624, %v8645
      %v8648 = vunpack.c.l.s4 1966171168
      %v8649 = vunpack.c.0.s8 %v8648
      %v8650 = vlaneseq
      %v8651 = vshrl.u32 %v8650, 7
      %v8652 = vsub.s32 %v8649, %v8651
      %v8653 = vrot.slane %v8625, %v8652
      %v8654 = vcombine.low %v8632, %v8646
      %v8655 = vcombine.high %v8632, %v8646
      %v8656 = vcombine.low %v8639, %v8653
      %v8657 = vcombine.low %v1689, %v1703
      %v8658 = vcombine.low %v1705, %v1707
      %v8659 = vcombine.low %v1730, %v2250
      %v8660 = vcombine.low %v1786, %v1794
      %v8662 = vunpack.c.l.s4 1966171168
      %v8663 = vunpack.c.0.s8 %v8662
      %v8664 = vlaneseq
      %v8665 = vshrl.u32 %v8664, 7
      %v8666 = vsub.s32 %v8663, %v8665
      %v8667 = vrot.slane %v8657, %v8666
      %v8669 = vunpack.c.l.s4 1966171168
      %v8670 = vunpack.c.0.s8 %v8669
      %v8671 = vlaneseq
      %v8672 = vshrl.u32 %v8671, 7
      %v8673 = vsub.s32 %v8670, %v8672
      %v8674 = vrot.slane %v8658, %v8673
      %v8676 = vunpack.c.l.s4 1966171168
      %v8677 = vunpack.c.0.s8 %v8676
      %v8678 = vlaneseq
      %v8679 = vshrl.u32 %v8678, 7
      %v8680 = vsub.s32 %v8677, %v8679
      %v8681 = vrot.slane %v8659, %v8680
      %v8683 = vunpack.c.l.s4 1966171168
      %v8684 = vunpack.c.0.s8 %v8683
      %v8685 = vlaneseq
      %v8686 = vshrl.u32 %v8685, 7
      %v8687 = vsub.s32 %v8684, %v8686
      %v8688 = vrot.slane %v8660, %v8687
      %v8689 = vcombine.low %v8667, %v8674
      %v8690 = vcombine.high %v8667, %v8674
      %v8691 = vcombine.low %v8681, %v8688
      %v8692 = vcombine.high %v8681, %v8688
      %v8694 = vunpack.c.l.s4 1966171168
      %v8695 = vunpack.c.0.s8 %v8694
      %v8696 = vlaneseq
      %v8697 = vshrl.u32 %v8696, 7
      %v8698 = vsub.s32 %v8695, %v8697
      %v8699 = vrot.slane %v8689, %v8698
      %v8701 = vunpack.c.l.s4 1966171168
      %v8702 = vunpack.c.0.s8 %v8701
      %v8703 = vlaneseq
      %v8704 = vshrl.u32 %v8703, 7
      %v8705 = vsub.s32 %v8702, %v8704
      %v8706 = vrot.slane %v8690, %v8705
      %v8708 = vunpack.c.l.s4 1966171168
      %v8709 = vunpack.c.0.s8 %v8708
      %v8710 = vlaneseq
      %v8711 = vshrl.u32 %v8710, 7
      %v8712 = vsub.s32 %v8709, %v8711
      %v8713 = vrot.slane %v8691, %v8712
      %v8715 = vunpack.c.l.s4 1966171168
      %v8716 = vunpack.c.0.s8 %v8715
      %v8717 = vlaneseq
      %v8718 = vshrl.u32 %v8717, 7
      %v8719 = vsub.s32 %v8716, %v8718
      %v8720 = vrot.slane %v8692, %v8719
      %v8721 = vcombine.low %v8699, %v8713
      %v8722 = vcombine.high %v8699, %v8713
      %v8723 = vcombine.low %v8706, %v8720
      %v8724 = vcombine.low %v1796, %v1779
      %v8725 = vcombine.low %v1793, %v1795
      %v8726 = vcombine.low %v1797, %v1820
      %v8727 = vcombine.low %v2258, %v1876
      %v8729 = vunpack.c.l.s4 1966171168
      %v8730 = vunpack.c.0.s8 %v8729
      %v8731 = vlaneseq
      %v8732 = vshrl.u32 %v8731, 7
      %v8733 = vsub.s32 %v8730, %v8732
      %v8734 = vrot.slane %v8724, %v8733
      %v8736 = vunpack.c.l.s4 1966171168
      %v8737 = vunpack.c.0.s8 %v8736
      %v8738 = vlaneseq
      %v8739 = vshrl.u32 %v8738, 7
      %v8740 = vsub.s32 %v8737, %v8739
      %v8741 = vrot.slane %v8725, %v8740
      %v8743 = vunpack.c.l.s4 1966171168
      %v8744 = vunpack.c.0.s8 %v8743
      %v8745 = vlaneseq
      %v8746 = vshrl.u32 %v8745, 7
      %v8747 = vsub.s32 %v8744, %v8746
      %v8748 = vrot.slane %v8726, %v8747
      %v8750 = vunpack.c.l.s4 1966171168
      %v8751 = vunpack.c.0.s8 %v8750
      %v8752 = vlaneseq
      %v8753 = vshrl.u32 %v8752, 7
      %v8754 = vsub.s32 %v8751, %v8753
      %v8755 = vrot.slane %v8727, %v8754
      %v8756 = vcombine.low %v8734, %v8741
      %v8757 = vcombine.high %v8734, %v8741
      %v8758 = vcombine.low %v8748, %v8755
      %v8759 = vcombine.high %v8748, %v8755
      %v8761 = vunpack.c.l.s4 1966171168
      %v8762 = vunpack.c.0.s8 %v8761
      %v8763 = vlaneseq
      %v8764 = vshrl.u32 %v8763, 7
      %v8765 = vsub.s32 %v8762, %v8764
      %v8766 = vrot.slane %v8756, %v8765
      %v8768 = vunpack.c.l.s4 1966171168
      %v8769 = vunpack.c.0.s8 %v8768
      %v8770 = vlaneseq
      %v8771 = vshrl.u32 %v8770, 7
      %v8772 = vsub.s32 %v8769, %v8771
      %v8773 = vrot.slane %v8757, %v8772
      %v8775 = vunpack.c.l.s4 1966171168
      %v8776 = vunpack.c.0.s8 %v8775
      %v8777 = vlaneseq
      %v8778 = vshrl.u32 %v8777, 7
      %v8779 = vsub.s32 %v8776, %v8778
      %v8780 = vrot.slane %v8758, %v8779
      %v8782 = vunpack.c.l.s4 1966171168
      %v8783 = vunpack.c.0.s8 %v8782
      %v8784 = vlaneseq
      %v8785 = vshrl.u32 %v8784, 7
      %v8786 = vsub.s32 %v8783, %v8785
      %v8787 = vrot.slane %v8759, %v8786
      %v8788 = vcombine.low %v8766, %v8780
      %v8789 = vcombine.high %v8766, %v8780
      %v8790 = vcombine.low %v8773, %v8787
      %v8791 = vcombine.low %v1884, %v1886
      %v8792 = vcombine.low %v1869, %v1883
      %v8793 = vcombine.low %v1885, %v1887
      %v8794 = vcombine.low %v1910, %v2266
      %v8796 = vunpack.c.l.s4 1966171168
      %v8797 = vunpack.c.0.s8 %v8796
      %v8798 = vlaneseq
      %v8799 = vshrl.u32 %v8798, 7
      %v8800 = vsub.s32 %v8797, %v8799
      %v8801 = vrot.slane %v8791, %v8800
      %v8803 = vunpack.c.l.s4 1966171168
      %v8804 = vunpack.c.0.s8 %v8803
      %v8805 = vlaneseq
      %v8806 = vshrl.u32 %v8805, 7
      %v8807 = vsub.s32 %v8804, %v8806
      %v8808 = vrot.slane %v8792, %v8807
      %v8810 = vunpack.c.l.s4 1966171168
      %v8811 = vunpack.c.0.s8 %v8810
      %v8812 = vlaneseq
      %v8813 = vshrl.u32 %v8812, 7
      %v8814 = vsub.s32 %v8811, %v8813
      %v8815 = vrot.slane %v8793, %v8814
      %v8817 = vunpack.c.l.s4 1966171168
      %v8818 = vunpack.c.0.s8 %v8817
      %v8819 = vlaneseq
      %v8820 = vshrl.u32 %v8819, 7
      %v8821 = vsub.s32 %v8818, %v8820
      %v8822 = vrot.slane %v8794, %v8821
      %v8823 = vcombine.low %v8801, %v8808
      %v8824 = vcombine.high %v8801, %v8808
      %v8825 = vcombine.low %v8815, %v8822
      %v8826 = vcombine.high %v8815, %v8822
      %v8828 = vunpack.c.l.s4 1966171168
      %v8829 = vunpack.c.0.s8 %v8828
      %v8830 = vlaneseq
      %v8831 = vshrl.u32 %v8830, 7
      %v8832 = vsub.s32 %v8829, %v8831
      %v8833 = vrot.slane %v8823, %v8832
      %v8835 = vunpack.c.l.s4 1966171168
      %v8836 = vunpack.c.0.s8 %v8835
      %v8837 = vlaneseq
      %v8838 = vshrl.u32 %v8837, 7
      %v8839 = vsub.s32 %v8836, %v8838
      %v8840 = vrot.slane %v8824, %v8839
      %v8842 = vunpack.c.l.s4 1966171168
      %v8843 = vunpack.c.0.s8 %v8842
      %v8844 = vlaneseq
      %v8845 = vshrl.u32 %v8844, 7
      %v8846 = vsub.s32 %v8843, %v8845
      %v8847 = vrot.slane %v8825, %v8846
      %v8849 = vunpack.c.l.s4 1966171168
      %v8850 = vunpack.c.0.s8 %v8849
      %v8851 = vlaneseq
      %v8852 = vshrl.u32 %v8851, 7
      %v8853 = vsub.s32 %v8850, %v8852
      %v8854 = vrot.slane %v8826, %v8853
      %v8855 = vcombine.low %v8833, %v8847
      %v8856 = vcombine.high %v8833, %v8847
      %v8857 = vcombine.low %v8840, %v8854
      %v8858 = vcombine.low %v1966, %v1974
      %v8859 = vcombine.low %v1976, %v1959
      %v8860 = vcombine.low %v1973, %v1975
      %v8861 = vcombine.low %v1977, %v2000
      %v8863 = vunpack.c.l.s4 1966171168
      %v8864 = vunpack.c.0.s8 %v8863
      %v8865 = vlaneseq
      %v8866 = vshrl.u32 %v8865, 7
      %v8867 = vsub.s32 %v8864, %v8866
      %v8868 = vrot.slane %v8858, %v8867
      %v8870 = vunpack.c.l.s4 1966171168
      %v8871 = vunpack.c.0.s8 %v8870
      %v8872 = vlaneseq
      %v8873 = vshrl.u32 %v8872, 7
      %v8874 = vsub.s32 %v8871, %v8873
      %v8875 = vrot.slane %v8859, %v8874
      %v8877 = vunpack.c.l.s4 1966171168
      %v8878 = vunpack.c.0.s8 %v8877
      %v8879 = vlaneseq
      %v8880 = vshrl.u32 %v8879, 7
      %v8881 = vsub.s32 %v8878, %v8880
      %v8882 = vrot.slane %v8860, %v8881
      %v8884 = vunpack.c.l.s4 1966171168
      %v8885 = vunpack.c.0.s8 %v8884
      %v8886 = vlaneseq
      %v8887 = vshrl.u32 %v8886, 7
      %v8888 = vsub.s32 %v8885, %v8887
      %v8889 = vrot.slane %v8861, %v8888
      %v8890 = vcombine.low %v8868, %v8875
      %v8891 = vcombine.high %v8868, %v8875
      %v8892 = vcombine.low %v8882, %v8889
      %v8893 = vcombine.high %v8882, %v8889
      %v8895 = vunpack.c.l.s4 1966171168
      %v8896 = vunpack.c.0.s8 %v8895
      %v8897 = vlaneseq
      %v8898 = vshrl.u32 %v8897, 7
      %v8899 = vsub.s32 %v8896, %v8898
      %v8900 = vrot.slane %v8890, %v8899
      %v8902 = vunpack.c.l.s4 1966171168
      %v8903 = vunpack.c.0.s8 %v8902
      %v8904 = vlaneseq
      %v8905 = vshrl.u32 %v8904, 7
      %v8906 = vsub.s32 %v8903, %v8905
      %v8907 = vrot.slane %v8891, %v8906
      %v8909 = vunpack.c.l.s4 1966171168
      %v8910 = vunpack.c.0.s8 %v8909
      %v8911 = vlaneseq
      %v8912 = vshrl.u32 %v8911, 7
      %v8913 = vsub.s32 %v8910, %v8912
      %v8914 = vrot.slane %v8892, %v8913
      %v8916 = vunpack.c.l.s4 1966171168
      %v8917 = vunpack.c.0.s8 %v8916
      %v8918 = vlaneseq
      %v8919 = vshrl.u32 %v8918, 7
      %v8920 = vsub.s32 %v8917, %v8919
      %v8921 = vrot.slane %v8893, %v8920
      %v8922 = vcombine.low %v8900, %v8914
      %v8923 = vcombine.high %v8900, %v8914
      %v8924 = vcombine.low %v8907, %v8921
      %v8925 = vcombine.low %v2274, %v2056
      %v8926 = vcombine.low %v2064, %v2066
      %v8927 = vcombine.low %v2049, %v2063
      %v8928 = vcombine.low %v2065, %v2067
      %v8930 = vunpack.c.l.s4 1966171168
      %v8931 = vunpack.c.0.s8 %v8930
      %v8932 = vlaneseq
      %v8933 = vshrl.u32 %v8932, 7
      %v8934 = vsub.s32 %v8931, %v8933
      %v8935 = vrot.slane %v8925, %v8934
      %v8937 = vunpack.c.l.s4 1966171168
      %v8938 = vunpack.c.0.s8 %v8937
      %v8939 = vlaneseq
      %v8940 = vshrl.u32 %v8939, 7
      %v8941 = vsub.s32 %v8938, %v8940
      %v8942 = vrot.slane %v8926, %v8941
      %v8944 = vunpack.c.l.s4 1966171168
      %v8945 = vunpack.c.0.s8 %v8944
      %v8946 = vlaneseq
      %v8947 = vshrl.u32 %v8946, 7
      %v8948 = vsub.s32 %v8945, %v8947
      %v8949 = vrot.slane %v8927, %v8948
      %v8951 = vunpack.c.l.s4 1966171168
      %v8952 = vunpack.c.0.s8 %v8951
      %v8953 = vlaneseq
      %v8954 = vshrl.u32 %v8953, 7
      %v8955 = vsub.s32 %v8952, %v8954
      %v8956 = vrot.slane %v8928, %v8955
      %v8957 = vcombine.low %v8935, %v8942
      %v8958 = vcombine.high %v8935, %v8942
      %v8959 = vcombine.low %v8949, %v8956
      %v8960 = vcombine.high %v8949, %v8956
      %v8962 = vunpack.c.l.s4 1966171168
      %v8963 = vunpack.c.0.s8 %v8962
      %v8964 = vlaneseq
      %v8965 = vshrl.u32 %v8964, 7
      %v8966 = vsub.s32 %v8963, %v8965
      %v8967 = vrot.slane %v8957, %v8966
      %v8969 = vunpack.c.l.s4 1966171168
      %v8970 = vunpack.c.0.s8 %v8969
      %v8971 = vlaneseq
      %v8972 = vshrl.u32 %v8971, 7
      %v8973 = vsub.s32 %v8970, %v8972
      %v8974 = vrot.slane %v8958, %v8973
      %v8976 = vunpack.c.l.s4 1966171168
      %v8977 = vunpack.c.0.s8 %v8976
      %v8978 = vlaneseq
      %v8979 = vshrl.u32 %v8978, 7
      %v8980 = vsub.s32 %v8977, %v8979
      %v8981 = vrot.slane %v8959, %v8980
      %v8983 = vunpack.c.l.s4 1966171168
      %v8984 = vunpack.c.0.s8 %v8983
      %v8985 = vlaneseq
      %v8986 = vshrl.u32 %v8985, 7
      %v8987 = vsub.s32 %v8984, %v8986
      %v8988 = vrot.slane %v8960, %v8987
      %v8989 = vcombine.low %v8967, %v8981
      %v8990 = vcombine.high %v8967, %v8981
      %v8991 = vcombine.low %v8974, %v8988
      %v8992 = vcombine.low %v2090, %v2282
      %v8994 = vunpack.c.l.s4 1966171168
      %v8995 = vunpack.c.0.s8 %v8994
      %v8996 = vlaneseq
      %v8997 = vshrl.u32 %v8996, 7
      %v8998 = vsub.s32 %v8995, %v8997
      %v8999 = vrot.slane %v8992, %v8998
      %v9000 = vcombine.high %v8999, %v8999
      %v9002 = vunpack.c.l.s4 1966171168
      %v9003 = vunpack.c.0.s8 %v9002
      %v9004 = vlaneseq
      %v9005 = vshrl.u32 %v9004, 7
      %v9006 = vsub.s32 %v9003, %v9005
      %v9007 = vrot.slane %v8999, %v9006
      %v9009 = vunpack.c.l.s4 1966171168
      %v9010 = vunpack.c.0.s8 %v9009
      %v9011 = vlaneseq
      %v9012 = vshrl.u32 %v9011, 7
      %v9013 = vsub.s32 %v9010, %v9012
      %v9014 = vrot.slane %v9000, %v9013
      %v9015 = vcombine.high %v9007, %v9007
      %v9127 = vunpack.c.l.b16 %v7604
      %v9128 = vunpack.c.l.b16 %v7605
      %v9129 = vunpack.c.l.b16 %v7606
      %v9130 = vunpack.c.l.b16 %v7607
      %v9131 = vunpack.c.l.b16 %v7608
      %v9132 = vunpack.c.l.b16 %v7609
      %v9133 = vunpack.c.l.b16 %v7610
      %v9134 = vunpack.c.l.b16 %v7611
      %v9135 = vunpack.c.l.b16 %v7612
      %v9136 = vunpack.c.l.b16 %v7613
      %v9137 = vunpack.c.l.b16 %v7614
      %v9138 = vunpack.c.l.b16 %v7615
      %v9139 = vunpack.c.l.b16 %v7616
      %v9140 = vunpack.c.l.b16 %v7617
      %v9141 = vunpack.c.l.b16 %v7618
      %v9142 = vunpack.c.l.b16 %v7619
      %v9143 = vunpack.c.l.b16 %v7620
      %v9144 = vunpack.c.l.b16 %v7621
      %v9145 = vunpack.c.l.b16 %v7622
      %v9146 = vunpack.c.l.b16 %v7623
      %v9147 = vunpack.c.l.b16 %v7624
      %v9148 = vunpack.c.l.b16 %v7625
      %v9149 = vunpack.c.l.b16 %v7626
      %v9150 = vunpack.c.l.b16 %v7627
      %v9151 = vunpack.c.l.b16 %v7628
      %v9152 = vunpack.c.l.b16 %v7629
      %v9153 = vunpack.c.l.b16 %v7630
      %v9154 = vunpack.c.l.b16 %v7631
      %v9155 = vunpack.c.l.b16 %v7632
      %v9156 = vunpack.c.l.b16 %v7633
      %v9157 = vunpack.c.l.b16 %v7634
      %v9158 = vunpack.c.l.b16 %v7635
      %v9159 = vunpack.c.l.b16 %v7636
      %v9160 = vunpack.c.l.b16 %v7637
      %v9161 = vunpack.c.l.b16 %v7638
      %v9162 = vunpack.c.l.b16 %v7639
      %v9163 = vunpack.c.l.b16 %v7640
      %v9164 = vunpack.c.l.b16 %v7641
      %v9165 = vunpack.c.l.b16 %v7642
      %v9166 = vunpack.c.l.b16 %v7643
      %v9167 = vunpack.c.l.b16 %v7644
      %v9168 = vunpack.c.l.b16 %v7645
      %v9169 = vunpack.c.l.b16 %v7646
      %v9170 = vunpack.c.l.b16 %v7647
      %v9171 = vunpack.c.l.b16 %v7648
      %v9172 = vunpack.c.l.b16 %v7649
      %v9173 = vunpack.c.l.b16 %v7650
      %v9174 = vunpack.c.l.b16 %v7651
      %v9175 = vpack.c.b16 %v9128, %v9127
      %v9176 = vpack.c.b16 %v9130, %v9129
      %v9177 = vpack.c.b16 %v9132, %v9131
      %v9178 = vpack.c.b16 %v9134, %v9133
      %v9179 = vpack.c.b16 %v9136, %v9135
      %v9180 = vpack.c.b16 %v9138, %v9137
      %v9181 = vpack.c.b16 %v9140, %v9139
      %v9182 = vpack.c.b16 %v9142, %v9141
      %v9183 = vpack.c.b16 %v9144, %v9143
      %v9184 = vpack.c.b16 %v9146, %v9145
      %v9185 = vpack.c.b16 %v9148, %v9147
      %v9186 = vpack.c.b16 %v9150, %v9149
      %v9187 = vpack.c.b16 %v9152, %v9151
      %v9188 = vpack.c.b16 %v9154, %v9153
      %v9189 = vpack.c.b16 %v9156, %v9155
      %v9190 = vpack.c.b16 %v9158, %v9157
      %v9191 = vpack.c.b16 %v9160, %v9159
      %v9192 = vpack.c.b16 %v9162, %v9161
      %v9193 = vpack.c.b16 %v9164, %v9163
      %v9194 = vpack.c.b16 %v9166, %v9165
      %v9195 = vpack.c.b16 %v9168, %v9167
      %v9196 = vpack.c.b16 %v9170, %v9169
      %v9197 = vpack.c.b16 %v9172, %v9171
      %v9198 = vpack.c.b16 %v9174, %v9173
      %9223 = vmatprep.subr.bf16.mxu0 0
      %9224 = vmatpush1.bf16.msra.mxu0 %v9175
      %9225 = vmatprep.subr.bf16.mxu0 0
      %9226 = vmatpush1.bf16.msra.mxu0 %v9176
      %9227 = vmatprep.subr.bf16.mxu0 0
      %9228 = vmatpush1.bf16.msra.mxu0 %v9177
      %9229 = vmatprep.subr.bf16.mxu0 0
      %9230 = vmatpush1.bf16.msra.mxu0 %v9178
      %9231 = vmatprep.subr.bf16.mxu0 0
      %9232 = vmatpush1.bf16.msra.mxu0 %v9179
      %9233 = vmatprep.subr.bf16.mxu0 0
      %9234 = vmatpush1.bf16.msra.mxu0 %v9180
      %9235 = vmatprep.subr.bf16.mxu0 0
      %9236 = vmatpush1.bf16.msra.mxu0 %v9181
      %9237 = vmatprep.subr.bf16.mxu0 0
      %9238 = vmatpush1.bf16.msra.mxu0 %v9182
      %9239 = vmatprep.subr.bf16.mxu0 0
      %9240 = vmatpush1.bf16.msra.mxu0 %v9183
      %9241 = vmatprep.subr.bf16.mxu0 0
      %9242 = vmatpush1.bf16.msra.mxu0 %v9184
      %9243 = vmatprep.subr.bf16.mxu0 0
      %9244 = vmatpush1.bf16.msra.mxu0 %v9185
      %9245 = vmatprep.subr.bf16.mxu0 0
      %9246 = vmatpush1.bf16.msra.mxu0 %v9186
      %9247 = vmatprep.subr.bf16.mxu0 0
      %9248 = vmatpush1.bf16.msra.mxu0 %v9187
      %9249 = vmatprep.subr.bf16.mxu0 0
      %9250 = vmatpush1.bf16.msra.mxu0 %v9188
      %9251 = vmatprep.subr.bf16.mxu0 0
      %9252 = vmatpush1.bf16.msra.mxu0 %v9189
      %9253 = vmatprep.subr.bf16.mxu0 0
      %9254 = vmatpush1.bf16.msra.mxu0 %v9190
      %9255 = vmatprep.mubr.bf16.mxu0 %v7718
      %9256 = vmatmul.mubr.bf16.gmra.mrb[0].mxu0 %v7716
      %v9257 = vpop.f32.mrb[0].mxu0
      %v9258 = vadd.f32 0.0, %v9257
      %v9259 = vpop.f32.mrb[0].mxu0
      %v9260 = vpop.f32.mrb[0].mxu0
      %v9261 = vadd.f32 0.0, %v9260
      %v9262 = vpop.f32.mrb[0].mxu0
      %9263 = vmatprep.mubr.bf16.mxu0 %v7785
      %9264 = vmatmul.mubr.bf16.gmra.mrb[0].mxu0 %v7783
      %v9265 = vpop.f32.mrb[0].mxu0
      %v9266 = vadd.f32 0.0, %v9265
      %v9267 = vpop.f32.mrb[0].mxu0
      %v9268 = vpop.f32.mrb[0].mxu0
      %v9269 = vadd.f32 0.0, %v9268
      %v9270 = vpop.f32.mrb[0].mxu0
      %9271 = vmatprep.mubr.bf16.mxu0 %v7852
      %9272 = vmatmul.mubr.bf16.gmra.mrb[0].mxu0 %v7850
      %v9273 = vpop.f32.mrb[0].mxu0
      %v9274 = vadd.f32 0.0, %v9273
      %v9275 = vpop.f32.mrb[0].mxu0
      %v9276 = vpop.f32.mrb[0].mxu0
      %v9277 = vadd.f32 0.0, %v9276
      %v9278 = vpop.f32.mrb[0].mxu0
      %9279 = vmatprep.mubr.bf16.mxu0 %v7919
      %9280 = vmatmul.mubr.bf16.gmra.mrb[0].mxu0 %v7917
      %v9281 = vpop.f32.mrb[0].mxu0
      %v9282 = vadd.f32 0.0, %v9281
      %v9283 = vpop.f32.mrb[0].mxu0
      %v9284 = vpop.f32.mrb[0].mxu0
      %v9285 = vadd.f32 0.0, %v9284
      %v9286 = vpop.f32.mrb[0].mxu0
      %9287 = vmatprep.mubr.bf16.mxu0 %v7986
      %9288 = vmatmul.mubr.bf16.gmra.mrb[0].mxu0 %v7984
      %v9289 = vpop.f32.mrb[0].mxu0
      %v9290 = vadd.f32 0.0, %v9289
      %v9291 = vpop.f32.mrb[0].mxu0
      %v9292 = vpop.f32.mrb[0].mxu0
      %v9293 = vadd.f32 0.0, %v9292
      %v9294 = vpop.f32.mrb[0].mxu0
      %9295 = vmatprep.mubr.bf16.mxu0 %v8053
      %9296 = vmatmul.mubr.bf16.gmra.mrb[0].mxu0 %v8051
      %v9297 = vpop.f32.mrb[0].mxu0
      %v9298 = vadd.f32 0.0, %v9297
      %v9299 = vpop.f32.mrb[0].mxu0
      %v9300 = vpop.f32.mrb[0].mxu0
      %v9301 = vadd.f32 0.0, %v9300
      %v9302 = vpop.f32.mrb[0].mxu0
      %9303 = vmatprep.mubr.bf16.mxu0 %v8120
      %9304 = vmatmul.mubr.bf16.gmra.mrb[0].mxu0 %v8118
      %v9305 = vpop.f32.mrb[0].mxu0
      %v9306 = vadd.f32 0.0, %v9305
      %v9307 = vpop.f32.mrb[0].mxu0
      %v9308 = vpop.f32.mrb[0].mxu0
      %v9309 = vadd.f32 0.0, %v9308
      %v9310 = vpop.f32.mrb[0].mxu0
      %9311 = vmatprep.mubr.bf16.mxu0 %v8187
      %9312 = vmatmul.mubr.bf16.gmra.mrb[0].mxu0 %v8185
      %v9313 = vpop.f32.mrb[0].mxu0
      %v9314 = vadd.f32 0.0, %v9313
      %v9315 = vpop.f32.mrb[0].mxu0
      %v9316 = vpop.f32.mrb[0].mxu0
      %v9317 = vadd.f32 0.0, %v9316
      %v9318 = vpop.f32.mrb[0].mxu0
      %9319 = vmatprep.mubr.bf16.mxu0 %v8254
      %9320 = vmatmul.mubr.bf16.gmra.mrb[0].mxu0 %v8252
      %v9321 = vpop.f32.mrb[0].mxu0
      %v9322 = vadd.f32 0.0, %v9321
      %v9323 = vpop.f32.mrb[0].mxu0
      %v9324 = vpop.f32.mrb[0].mxu0
      %v9325 = vadd.f32 0.0, %v9324
      %v9326 = vpop.f32.mrb[0].mxu0
      %9327 = vmatprep.mubr.bf16.mxu0 %v8321
      %9328 = vmatmul.mubr.bf16.gmra.mrb[0].mxu0 %v8319
      %v9329 = vpop.f32.mrb[0].mxu0
      %v9330 = vadd.f32 0.0, %v9329
      %v9331 = vpop.f32.mrb[0].mxu0
      %v9332 = vpop.f32.mrb[0].mxu0
      %v9333 = vadd.f32 0.0, %v9332
      %v9334 = vpop.f32.mrb[0].mxu0
      %9335 = vmatprep.mubr.bf16.mxu0 %v8388
      %9336 = vmatmul.mubr.bf16.gmra.mrb[0].mxu0 %v8386
      %v9337 = vpop.f32.mrb[0].mxu0
      %v9338 = vadd.f32 0.0, %v9337
      %v9339 = vpop.f32.mrb[0].mxu0
      %v9340 = vpop.f32.mrb[0].mxu0
      %v9341 = vadd.f32 0.0, %v9340
      %v9342 = vpop.f32.mrb[0].mxu0
      %9343 = vmatprep.mubr.bf16.mxu0 %v8455
      %9344 = vmatmul.mubr.bf16.gmra.mrb[0].mxu0 %v8453
      %v9345 = vpop.f32.mrb[0].mxu0
      %v9346 = vadd.f32 0.0, %v9345
      %v9347 = vpop.f32.mrb[0].mxu0
      %v9348 = vpop.f32.mrb[0].mxu0
      %v9349 = vadd.f32 0.0, %v9348
      %v9350 = vpop.f32.mrb[0].mxu0
      %9351 = vmatprep.mubr.bf16.mxu0 %v8522
      %9352 = vmatmul.mubr.bf16.gmra.mrb[0].mxu0 %v8520
      %v9353 = vpop.f32.mrb[0].mxu0
      %v9354 = vadd.f32 0.0, %v9353
      %v9355 = vpop.f32.mrb[0].mxu0
      %v9356 = vpop.f32.mrb[0].mxu0
      %v9357 = vadd.f32 0.0, %v9356
      %v9358 = vpop.f32.mrb[0].mxu0
      %9359 = vmatprep.mubr.bf16.mxu0 %v8589
      %9360 = vmatmul.mubr.bf16.gmra.mrb[0].mxu0 %v8587
      %v9361 = vpop.f32.mrb[0].mxu0
      %v9362 = vadd.f32 0.0, %v9361
      %v9363 = vpop.f32.mrb[0].mxu0
      %v9364 = vpop.f32.mrb[0].mxu0
      %v9365 = vadd.f32 0.0, %v9364
      %v9366 = vpop.f32.mrb[0].mxu0
      %9367 = vmatprep.mubr.bf16.mxu0 %v8656
      %9368 = vmatmul.mubr.bf16.gmra.mrb[0].mxu0 %v8654
      %v9369 = vpop.f32.mrb[0].mxu0
      %v9370 = vadd.f32 0.0, %v9369
      %v9371 = vpop.f32.mrb[0].mxu0
      %v9372 = vpop.f32.mrb[0].mxu0
      %v9373 = vadd.f32 0.0, %v9372
      %v9374 = vpop.f32.mrb[0].mxu0
      %9375 = vmatprep.mubr.bf16.mxu0 %v8723
      %9376 = vmatmul.mubr.bf16.gmra.mrb[0].mxu0 %v8721
      %v9377 = vpop.f32.mrb[0].mxu0
      %v9378 = vadd.f32 0.0, %v9377
      %v9379 = vpop.f32.mrb[0].mxu0
      %v9380 = vpop.f32.mrb[0].mxu0
      %v9381 = vadd.f32 0.0, %v9380
      %v9382 = vpop.f32.mrb[0].mxu0
      %9383 = vmatprep.mubr.bf16.mxu0 %v8790
      %9384 = vmatmul.mubr.bf16.gmra.mrb[0].mxu0 %v8788
      %v9385 = vpop.f32.mrb[0].mxu0
      %v9386 = vadd.f32 0.0, %v9385
      %v9387 = vpop.f32.mrb[0].mxu0
      %v9388 = vpop.f32.mrb[0].mxu0
      %v9389 = vadd.f32 0.0, %v9388
      %v9390 = vpop.f32.mrb[0].mxu0
      %9391 = vmatprep.mubr.bf16.mxu0 %v8857
      %9392 = vmatmul.mubr.bf16.gmra.mrb[0].mxu0 %v8855
      %v9393 = vpop.f32.mrb[0].mxu0
      %v9394 = vadd.f32 0.0, %v9393
      %v9395 = vpop.f32.mrb[0].mxu0
      %v9396 = vpop.f32.mrb[0].mxu0
      %v9397 = vadd.f32 0.0, %v9396
      %v9398 = vpop.f32.mrb[0].mxu0
      %9399 = vmatprep.mubr.bf16.mxu0 %v8924
      %9400 = vmatmul.mubr.bf16.gmra.mrb[0].mxu0 %v8922
      %v9401 = vpop.f32.mrb[0].mxu0
      %v9402 = vadd.f32 0.0, %v9401
      %v9403 = vpop.f32.mrb[0].mxu0
      %v9404 = vpop.f32.mrb[0].mxu0
      %v9405 = vadd.f32 0.0, %v9404
      %v9406 = vpop.f32.mrb[0].mxu0
      %9407 = vmatprep.mubr.bf16.mxu0 %v8991
      %9408 = vmatmul.mubr.bf16.gmra.mrb[0].mxu0 %v8989
      %v9409 = vpop.f32.mrb[0].mxu0
      %v9410 = vadd.f32 0.0, %v9409
      %v9411 = vpop.f32.mrb[0].mxu0
      %v9412 = vpop.f32.mrb[0].mxu0
      %v9413 = vadd.f32 0.0, %v9412
      %v9414 = vpop.f32.mrb[0].mxu0
      %9415 = vmatprep.mubr.bf16.mxu0 %v9014
      %9416 = vmatmul.mubr.bf16.gmra.mrb[0].mxu0 %v9007
      %v9417 = vpop.f32.mrb[0].mxu0
      %v9418 = vadd.f32 0.0, %v9417
      %v9419 = vpop.f32.mrb[0].mxu0
      %v9420 = vpop.f32.mrb[0].mxu0
      %v9421 = vpop.f32.mrb[0].mxu0
      %9422 = vdwg.mxu0
      %9423 = vmatprep.subr.bf16.mxu0 0
      %9424 = vmatpush1.bf16.msra.mxu0 %v9191
      %9425 = vmatprep.subr.bf16.mxu0 0
      %9426 = vmatpush1.bf16.msra.mxu0 %v9192
      %9427 = vmatprep.subr.bf16.mxu0 0
      %9428 = vmatpush1.bf16.msra.mxu0 %v9193
      %9429 = vmatprep.subr.bf16.mxu0 0
      %9430 = vmatpush1.bf16.msra.mxu0 %v9194
      %9431 = vmatprep.subr.bf16.mxu0 0
      %9432 = vmatpush1.bf16.msra.mxu0 %v9195
      %9433 = vmatprep.subr.bf16.mxu0 0
      %9434 = vmatpush1.bf16.msra.mxu0 %v9196
      %9435 = vmatprep.subr.bf16.mxu0 0
      %9436 = vmatpush1.bf16.msra.mxu0 %v9197
      %9437 = vmatprep.subr.bf16.mxu0 0
      %9438 = vmatpush1.bf16.msra.mxu0 %v9198
      %9439 = vmatprep.subr.bf16.mxu0 0
      %9440 = vmatpush1.bf16.msra.mxu0 0
      %9441 = vmatprep.subr.bf16.mxu0 0
      %9442 = vmatpush1.bf16.msra.mxu0 0
      %9443 = vmatprep.subr.bf16.mxu0 0
      %9444 = vmatpush1.bf16.msra.mxu0 0
      %9445 = vmatprep.subr.bf16.mxu0 0
      %9446 = vmatpush1.bf16.msra.mxu0 0
      %9447 = vmatprep.subr.bf16.mxu0 0
      %9448 = vmatpush1.bf16.msra.mxu0 0
      %9449 = vmatprep.subr.bf16.mxu0 0
      %9450 = vmatpush1.bf16.msra.mxu0 0
      %9451 = vmatprep.subr.bf16.mxu0 0
      %9452 = vmatpush1.bf16.msra.mxu0 0
      %9453 = vmatprep.subr.bf16.mxu0 0
      %9454 = vmatpush1.bf16.msra.mxu0 0
      %9455 = vmatprep.mubr.bf16.mxu0 0
      %9456 = vmatmul.mubr.bf16.gmra.mrb[0].mxu0 %v7717
      %v9457 = vpop.f32.mrb[0].mxu0
      %v9458 = vadd.f32 %v9258, %v9457
      %v9459 = vpop.f32.mrb[0].mxu0
      %v9460 = vpop.f32.mrb[0].mxu0
      %v9461 = vadd.f32 %v9261, %v9460
      %v9462 = vpop.f32.mrb[0].mxu0
      %9463 = vmatprep.mubr.bf16.mxu0 0
      %9464 = vmatmul.mubr.bf16.gmra.mrb[0].mxu0 %v7784
      %v9465 = vpop.f32.mrb[0].mxu0
      %v9466 = vadd.f32 %v9266, %v9465
      %v9467 = vpop.f32.mrb[0].mxu0
      %v9468 = vpop.f32.mrb[0].mxu0
      %v9469 = vadd.f32 %v9269, %v9468
      %v9470 = vpop.f32.mrb[0].mxu0
      %9471 = vmatprep.mubr.bf16.mxu0 0
      %9472 = vmatmul.mubr.bf16.gmra.mrb[0].mxu0 %v7851
      %v9473 = vpop.f32.mrb[0].mxu0
      %v9474 = vadd.f32 %v9274, %v9473
      %v9475 = vpop.f32.mrb[0].mxu0
      %v9476 = vpop.f32.mrb[0].mxu0
      %v9477 = vadd.f32 %v9277, %v9476
      %v9478 = vpop.f32.mrb[0].mxu0
      %9479 = vmatprep.mubr.bf16.mxu0 0
      %9480 = vmatmul.mubr.bf16.gmra.mrb[0].mxu0 %v7918
      %v9481 = vpop.f32.mrb[0].mxu0
      %v9482 = vadd.f32 %v9282, %v9481
      %v9483 = vpop.f32.mrb[0].mxu0
      %v9484 = vpop.f32.mrb[0].mxu0
      %v9485 = vadd.f32 %v9285, %v9484
      %v9486 = vpop.f32.mrb[0].mxu0
      %9487 = vmatprep.mubr.bf16.mxu0 0
      %9488 = vmatmul.mubr.bf16.gmra.mrb[0].mxu0 %v7985
      %v9489 = vpop.f32.mrb[0].mxu0
      %v9490 = vadd.f32 %v9290, %v9489
      %v9491 = vpop.f32.mrb[0].mxu0
      %v9492 = vpop.f32.mrb[0].mxu0
      %v9493 = vadd.f32 %v9293, %v9492
      %v9494 = vpop.f32.mrb[0].mxu0
      %9495 = vmatprep.mubr.bf16.mxu0 0
      %9496 = vmatmul.mubr.bf16.gmra.mrb[0].mxu0 %v8052
      %v9497 = vpop.f32.mrb[0].mxu0
      %v9498 = vadd.f32 %v9298, %v9497
      %v9499 = vpop.f32.mrb[0].mxu0
      %v9500 = vpop.f32.mrb[0].mxu0
      %v9501 = vadd.f32 %v9301, %v9500
      %v9502 = vpop.f32.mrb[0].mxu0
      %9503 = vmatprep.mubr.bf16.mxu0 0
      %9504 = vmatmul.mubr.bf16.gmra.mrb[0].mxu0 %v8119
      %v9505 = vpop.f32.mrb[0].mxu0
      %v9506 = vadd.f32 %v9306, %v9505
      %v9507 = vpop.f32.mrb[0].mxu0
      %v9508 = vpop.f32.mrb[0].mxu0
      %v9509 = vadd.f32 %v9309, %v9508
      %v9510 = vpop.f32.mrb[0].mxu0
      %9511 = vmatprep.mubr.bf16.mxu0 0
      %9512 = vmatmul.mubr.bf16.gmra.mrb[0].mxu0 %v8186
      %v9513 = vpop.f32.mrb[0].mxu0
      %v9514 = vadd.f32 %v9314, %v9513
      %v9515 = vpop.f32.mrb[0].mxu0
      %v9516 = vpop.f32.mrb[0].mxu0
      %v9517 = vadd.f32 %v9317, %v9516
      %v9518 = vpop.f32.mrb[0].mxu0
      %9519 = vmatprep.mubr.bf16.mxu0 0
      %9520 = vmatmul.mubr.bf16.gmra.mrb[0].mxu0 %v8253
      %v9521 = vpop.f32.mrb[0].mxu0
      %v9522 = vadd.f32 %v9322, %v9521
      %v9523 = vpop.f32.mrb[0].mxu0
      %v9524 = vpop.f32.mrb[0].mxu0
      %v9525 = vadd.f32 %v9325, %v9524
      %v9526 = vpop.f32.mrb[0].mxu0
      %9527 = vmatprep.mubr.bf16.mxu0 0
      %9528 = vmatmul.mubr.bf16.gmra.mrb[0].mxu0 %v8320
      %v9529 = vpop.f32.mrb[0].mxu0
      %v9530 = vadd.f32 %v9330, %v9529
      %v9531 = vpop.f32.mrb[0].mxu0
      %v9532 = vpop.f32.mrb[0].mxu0
      %v9533 = vadd.f32 %v9333, %v9532
      %v9534 = vpop.f32.mrb[0].mxu0
      %9535 = vmatprep.mubr.bf16.mxu0 0
      %9536 = vmatmul.mubr.bf16.gmra.mrb[0].mxu0 %v8387
      %v9537 = vpop.f32.mrb[0].mxu0
      %v9538 = vadd.f32 %v9338, %v9537
      %v9539 = vpop.f32.mrb[0].mxu0
      %v9540 = vpop.f32.mrb[0].mxu0
      %v9541 = vadd.f32 %v9341, %v9540
      %v9542 = vpop.f32.mrb[0].mxu0
      %9543 = vmatprep.mubr.bf16.mxu0 0
      %9544 = vmatmul.mubr.bf16.gmra.mrb[0].mxu0 %v8454
      %v9545 = vpop.f32.mrb[0].mxu0
      %v9546 = vadd.f32 %v9346, %v9545
      %v9547 = vpop.f32.mrb[0].mxu0
      %v9548 = vpop.f32.mrb[0].mxu0
      %v9549 = vadd.f32 %v9349, %v9548
      %v9550 = vpop.f32.mrb[0].mxu0
      %9551 = vmatprep.mubr.bf16.mxu0 0
      %9552 = vmatmul.mubr.bf16.gmra.mrb[0].mxu0 %v8521
      %v9553 = vpop.f32.mrb[0].mxu0
      %v9554 = vadd.f32 %v9354, %v9553
      %v9555 = vpop.f32.mrb[0].mxu0
      %v9556 = vpop.f32.mrb[0].mxu0
      %v9557 = vadd.f32 %v9357, %v9556
      %v9558 = vpop.f32.mrb[0].mxu0
      %9559 = vmatprep.mubr.bf16.mxu0 0
      %9560 = vmatmul.mubr.bf16.gmra.mrb[0].mxu0 %v8588
      %v9561 = vpop.f32.mrb[0].mxu0
      %v9562 = vadd.f32 %v9362, %v9561
      %v9563 = vpop.f32.mrb[0].mxu0
      %v9564 = vpop.f32.mrb[0].mxu0
      %v9565 = vadd.f32 %v9365, %v9564
      %v9566 = vpop.f32.mrb[0].mxu0
      %9567 = vmatprep.mubr.bf16.mxu0 0
      %9568 = vmatmul.mubr.bf16.gmra.mrb[0].mxu0 %v8655
      %v9569 = vpop.f32.mrb[0].mxu0
      %v9570 = vadd.f32 %v9370, %v9569
      %v9571 = vpop.f32.mrb[0].mxu0
      %v9572 = vpop.f32.mrb[0].mxu0
      %v9573 = vadd.f32 %v9373, %v9572
      %v9574 = vpop.f32.mrb[0].mxu0
      %9575 = vmatprep.mubr.bf16.mxu0 0
      %9576 = vmatmul.mubr.bf16.gmra.mrb[0].mxu0 %v8722
      %v9577 = vpop.f32.mrb[0].mxu0
      %v9578 = vadd.f32 %v9378, %v9577
      %v9579 = vpop.f32.mrb[0].mxu0
      %v9580 = vpop.f32.mrb[0].mxu0
      %v9581 = vadd.f32 %v9381, %v9580
      %v9582 = vpop.f32.mrb[0].mxu0
      %9583 = vmatprep.mubr.bf16.mxu0 0
      %9584 = vmatmul.mubr.bf16.gmra.mrb[0].mxu0 %v8789
      %v9585 = vpop.f32.mrb[0].mxu0
      %v9586 = vadd.f32 %v9386, %v9585
      %v9587 = vpop.f32.mrb[0].mxu0
      %v9588 = vpop.f32.mrb[0].mxu0
      %v9589 = vadd.f32 %v9389, %v9588
      %v9590 = vpop.f32.mrb[0].mxu0
      %9591 = vmatprep.mubr.bf16.mxu0 0
      %9592 = vmatmul.mubr.bf16.gmra.mrb[0].mxu0 %v8856
      %v9593 = vpop.f32.mrb[0].mxu0
      %v9594 = vadd.f32 %v9394, %v9593
      %v9595 = vpop.f32.mrb[0].mxu0
      %v9596 = vpop.f32.mrb[0].mxu0
      %v9597 = vadd.f32 %v9397, %v9596
      %v9598 = vpop.f32.mrb[0].mxu0
      %9599 = vmatprep.mubr.bf16.mxu0 0
      %9600 = vmatmul.mubr.bf16.gmra.mrb[0].mxu0 %v8923
      %v9601 = vpop.f32.mrb[0].mxu0
      %v9602 = vadd.f32 %v9402, %v9601
      %v9603 = vpop.f32.mrb[0].mxu0
      %v9604 = vpop.f32.mrb[0].mxu0
      %v9605 = vadd.f32 %v9405, %v9604
      %v9606 = vpop.f32.mrb[0].mxu0
      %9607 = vmatprep.mubr.bf16.mxu0 0
      %9608 = vmatmul.mubr.bf16.gmra.mrb[0].mxu0 %v8990
      %v9609 = vpop.f32.mrb[0].mxu0
      %v9610 = vadd.f32 %v9410, %v9609
      %v9611 = vpop.f32.mrb[0].mxu0
      %v9612 = vpop.f32.mrb[0].mxu0
      %v9613 = vadd.f32 %v9413, %v9612
      %v9614 = vpop.f32.mrb[0].mxu0
      %9615 = vmatprep.mubr.bf16.mxu0 0
      %9616 = vmatmul.mubr.bf16.gmra.mrb[0].mxu0 %v9015
      %v9617 = vpop.f32.mrb[0].mxu0
      %v9618 = vadd.f32 %v9418, %v9617
      %v9619 = vpop.f32.mrb[0].mxu0
      %v9620 = vpop.f32.mrb[0].mxu0
      %v9621 = vpop.f32.mrb[0].mxu0
      %9622 = vdwg.mxu0
      %v9623 = vadd.f32 %v7438, %v9458
      %v9624 = vadd.f32 %v7441, %v9461
      %v9625 = vadd.f32 %v7446, %v9466
      %v9626 = vadd.f32 %v7449, %v9469
      %v9627 = vadd.f32 %v7454, %v9474
      %v9628 = vadd.f32 %v7457, %v9477
      %v9629 = vadd.f32 %v7462, %v9482
      %v9630 = vadd.f32 %v7465, %v9485
      %v9631 = vadd.f32 %v7470, %v9490
      %v9632 = vadd.f32 %v7473, %v9493
      %v9633 = vadd.f32 %v7478, %v9498
      %v9634 = vadd.f32 %v7481, %v9501
      %v9635 = vadd.f32 %v7486, %v9506
      %v9636 = vadd.f32 %v7489, %v9509
      %v9637 = vadd.f32 %v7494, %v9514
      %v9638 = vadd.f32 %v7497, %v9517
      %v9639 = vadd.f32 %v7502, %v9522
      %v9640 = vadd.f32 %v7505, %v9525
      %v9641 = vadd.f32 %v7510, %v9530
      %v9642 = vadd.f32 %v7513, %v9533
      %v9643 = vadd.f32 %v7518, %v9538
      %v9644 = vadd.f32 %v7521, %v9541
      %v9645 = vadd.f32 %v7526, %v9546
      %v9646 = vadd.f32 %v7529, %v9549
      %v9647 = vadd.f32 %v7534, %v9554
      %v9648 = vadd.f32 %v7537, %v9557
      %v9649 = vadd.f32 %v7542, %v9562
      %v9650 = vadd.f32 %v7545, %v9565
      %v9651 = vadd.f32 %v7550, %v9570
      %v9652 = vadd.f32 %v7553, %v9573
      %v9653 = vadd.f32 %v7558, %v9578
      %v9654 = vadd.f32 %v7561, %v9581
      %v9655 = vadd.f32 %v7566, %v9586
      %v9656 = vadd.f32 %v7569, %v9589
      %v9657 = vadd.f32 %v7574, %v9594
      %v9658 = vadd.f32 %v7577, %v9597
      %v9659 = vadd.f32 %v7582, %v9602
      %v9660 = vadd.f32 %v7585, %v9605
      %v9661 = vadd.f32 %v7590, %v9610
      %v9662 = vadd.f32 %v7593, %v9613
      %v9663 = vadd.f32 %v7598, %v9618
      %v9664 = vld [vmem:[%s2] sm:$0x1]
      %v9666 = vlaneseq
      %v9667 = vshrl.u32 %v9666, 7
      %v9668 = vsub.s32 0, %v9667
      %v9669 = vrot.slane %v9664, %v9668
      %v9671 = vadd.f32 %v9623, %v9669
      %v9672 = vadd.f32 %v9624, %v9669
      %v9673 = vadd.f32 %v9625, %v9669
      %v9674 = vadd.f32 %v9626, %v9669
      %v9675 = vadd.f32 %v9627, %v9669
      %v9676 = vadd.f32 %v9628, %v9669
      %v9677 = vadd.f32 %v9629, %v9669
      %v9678 = vadd.f32 %v9630, %v9669
      %v9679 = vadd.f32 %v9631, %v9669
      %v9680 = vadd.f32 %v9632, %v9669
      %v9681 = vadd.f32 %v9633, %v9669
      %v9682 = vadd.f32 %v9634, %v9669
      %v9683 = vadd.f32 %v9635, %v9669
      %v9684 = vadd.f32 %v9636, %v9669
      %v9685 = vadd.f32 %v9637, %v9669
      %v9686 = vadd.f32 %v9638, %v9669
      %v9687 = vadd.f32 %v9639, %v9669
      %v9688 = vadd.f32 %v9640, %v9669
      %v9689 = vadd.f32 %v9641, %v9669
      %v9690 = vadd.f32 %v9642, %v9669
      %v9691 = vadd.f32 %v9643, %v9669
      %v9692 = vadd.f32 %v9644, %v9669
      %v9693 = vadd.f32 %v9645, %v9669
      %v9694 = vadd.f32 %v9646, %v9669
      %v9695 = vadd.f32 %v9647, %v9669
      %v9696 = vadd.f32 %v9648, %v9669
      %v9697 = vadd.f32 %v9649, %v9669
      %v9698 = vadd.f32 %v9650, %v9669
      %v9699 = vadd.f32 %v9651, %v9669
      %v9700 = vadd.f32 %v9652, %v9669
      %v9701 = vadd.f32 %v9653, %v9669
      %v9702 = vadd.f32 %v9654, %v9669
      %v9703 = vadd.f32 %v9655, %v9669
      %v9704 = vadd.f32 %v9656, %v9669
      %v9705 = vadd.f32 %v9657, %v9669
      %v9706 = vadd.f32 %v9658, %v9669
      %v9707 = vadd.f32 %v9659, %v9669
      %v9708 = vadd.f32 %v9660, %v9669
      %v9709 = vadd.f32 %v9661, %v9669
      %v9710 = vadd.f32 %v9662, %v9669
      %v9711 = vadd.f32 %v9663, %v9669
      %v9712 = vmax.f32 %v9671, 0.0
      %v9713 = vmax.f32 %v9672, 0.0
      %v9714 = vmax.f32 %v9673, 0.0
      %v9715 = vmax.f32 %v9674, 0.0
      %v9716 = vmax.f32 %v9675, 0.0
      %v9717 = vmax.f32 %v9676, 0.0
      %v9718 = vmax.f32 %v9677, 0.0
      %v9719 = vmax.f32 %v9678, 0.0
      %v9720 = vmax.f32 %v9679, 0.0
      %v9721 = vmax.f32 %v9680, 0.0
      %v9722 = vmax.f32 %v9681, 0.0
      %v9723 = vmax.f32 %v9682, 0.0
      %v9724 = vmax.f32 %v9683, 0.0
      %v9725 = vmax.f32 %v9684, 0.0
      %v9726 = vmax.f32 %v9685, 0.0
      %v9727 = vmax.f32 %v9686, 0.0
      %v9728 = vmax.f32 %v9687, 0.0
      %v9729 = vmax.f32 %v9688, 0.0
      %v9730 = vmax.f32 %v9689, 0.0
      %v9731 = vmax.f32 %v9690, 0.0
      %v9732 = vmax.f32 %v9691, 0.0
      %v9733 = vmax.f32 %v9692, 0.0
      %v9734 = vmax.f32 %v9693, 0.0
      %v9735 = vmax.f32 %v9694, 0.0
      %v9736 = vmax.f32 %v9695, 0.0
      %v9737 = vmax.f32 %v9696, 0.0
      %v9738 = vmax.f32 %v9697, 0.0
      %v9739 = vmax.f32 %v9698, 0.0
      %v9740 = vmax.f32 %v9699, 0.0
      %v9741 = vmax.f32 %v9700, 0.0
      %v9742 = vmax.f32 %v9701, 0.0
      %v9743 = vmax.f32 %v9702, 0.0
      %v9744 = vmax.f32 %v9703, 0.0
      %v9745 = vmax.f32 %v9704, 0.0
      %v9746 = vmax.f32 %v9705, 0.0
      %v9747 = vmax.f32 %v9706, 0.0
      %v9748 = vmax.f32 %v9707, 0.0
      %v9749 = vmax.f32 %v9708, 0.0
      %v9750 = vmax.f32 %v9709, 0.0
      %v9751 = vmax.f32 %v9710, 0.0
      %v9752 = vmax.f32 %v9711, 0.0
      %v9794 = vcombine.high %v9712, %v9712
      %v9796 = vunpack.c.l.s4 1983009808
      %v9797 = vunpack.c.0.s8 %v9796
      %v9798 = vlaneseq
      %v9799 = vshrl.u32 %v9798, 7
      %v9800 = vsub.s32 %v9797, %v9799
      %v9801 = vrot.slane %v9712, %v9800
      %v9803 = vunpack.c.l.s4 1983009808
      %v9804 = vunpack.c.0.s8 %v9803
      %v9805 = vlaneseq
      %v9806 = vshrl.u32 %v9805, 7
      %v9807 = vsub.s32 %v9804, %v9806
      %v9808 = vrot.slane %v9794, %v9807
      %v9809 = vcombine.high %v9801, %v9801
      %v9810 = vcombine.high %v9808, %v9808
      %v9811 = vcombine.high %v9713, %v9713
      %v9813 = vunpack.c.l.s4 1983009808
      %v9814 = vunpack.c.0.s8 %v9813
      %v9815 = vlaneseq
      %v9816 = vshrl.u32 %v9815, 7
      %v9817 = vsub.s32 %v9814, %v9816
      %v9818 = vrot.slane %v9713, %v9817
      %v9820 = vunpack.c.l.s4 1983009808
      %v9821 = vunpack.c.0.s8 %v9820
      %v9822 = vlaneseq
      %v9823 = vshrl.u32 %v9822, 7
      %v9824 = vsub.s32 %v9821, %v9823
      %v9825 = vrot.slane %v9811, %v9824
      %v9826 = vcombine.high %v9818, %v9818
      %v9827 = vcombine.high %v9825, %v9825
      %v9828 = vcombine.high %v9714, %v9714
      %v9830 = vunpack.c.l.s4 1983009808
      %v9831 = vunpack.c.0.s8 %v9830
      %v9832 = vlaneseq
      %v9833 = vshrl.u32 %v9832, 7
      %v9834 = vsub.s32 %v9831, %v9833
      %v9835 = vrot.slane %v9714, %v9834
      %v9837 = vunpack.c.l.s4 1983009808
      %v9838 = vunpack.c.0.s8 %v9837
      %v9839 = vlaneseq
      %v9840 = vshrl.u32 %v9839, 7
      %v9841 = vsub.s32 %v9838, %v9840
      %v9842 = vrot.slane %v9828, %v9841
      %v9843 = vcombine.high %v9835, %v9835
      %v9844 = vcombine.high %v9842, %v9842
      %v9845 = vcombine.high %v9715, %v9715
      %v9847 = vunpack.c.l.s4 1983009808
      %v9848 = vunpack.c.0.s8 %v9847
      %v9849 = vlaneseq
      %v9850 = vshrl.u32 %v9849, 7
      %v9851 = vsub.s32 %v9848, %v9850
      %v9852 = vrot.slane %v9715, %v9851
      %v9854 = vunpack.c.l.s4 1983009808
      %v9855 = vunpack.c.0.s8 %v9854
      %v9856 = vlaneseq
      %v9857 = vshrl.u32 %v9856, 7
      %v9858 = vsub.s32 %v9855, %v9857
      %v9859 = vrot.slane %v9845, %v9858
      %v9860 = vcombine.high %v9852, %v9852
      %v9861 = vcombine.high %v9859, %v9859
      %v9862 = vcombine.high %v9716, %v9716
      %v9864 = vunpack.c.l.s4 1983009808
      %v9865 = vunpack.c.0.s8 %v9864
      %v9866 = vlaneseq
      %v9867 = vshrl.u32 %v9866, 7
      %v9868 = vsub.s32 %v9865, %v9867
      %v9869 = vrot.slane %v9716, %v9868
      %v9871 = vunpack.c.l.s4 1983009808
      %v9872 = vunpack.c.0.s8 %v9871
      %v9873 = vlaneseq
      %v9874 = vshrl.u32 %v9873, 7
      %v9875 = vsub.s32 %v9872, %v9874
      %v9876 = vrot.slane %v9862, %v9875
      %v9877 = vcombine.high %v9869, %v9869
      %v9878 = vcombine.high %v9876, %v9876
      %v9879 = vcombine.high %v9717, %v9717
      %v9881 = vunpack.c.l.s4 1983009808
      %v9882 = vunpack.c.0.s8 %v9881
      %v9883 = vlaneseq
      %v9884 = vshrl.u32 %v9883, 7
      %v9885 = vsub.s32 %v9882, %v9884
      %v9886 = vrot.slane %v9717, %v9885
      %v9888 = vunpack.c.l.s4 1983009808
      %v9889 = vunpack.c.0.s8 %v9888
      %v9890 = vlaneseq
      %v9891 = vshrl.u32 %v9890, 7
      %v9892 = vsub.s32 %v9889, %v9891
      %v9893 = vrot.slane %v9879, %v9892
      %v9894 = vcombine.high %v9886, %v9886
      %v9895 = vcombine.high %v9893, %v9893
      %v9896 = vcombine.high %v9718, %v9718
      %v9898 = vunpack.c.l.s4 1983009808
      %v9899 = vunpack.c.0.s8 %v9898
      %v9900 = vlaneseq
      %v9901 = vshrl.u32 %v9900, 7
      %v9902 = vsub.s32 %v9899, %v9901
      %v9903 = vrot.slane %v9718, %v9902
      %v9905 = vunpack.c.l.s4 1983009808
      %v9906 = vunpack.c.0.s8 %v9905
      %v9907 = vlaneseq
      %v9908 = vshrl.u32 %v9907, 7
      %v9909 = vsub.s32 %v9906, %v9908
      %v9910 = vrot.slane %v9896, %v9909
      %v9911 = vcombine.high %v9903, %v9903
      %v9912 = vcombine.high %v9910, %v9910
      %v9913 = vcombine.high %v9719, %v9719
      %v9915 = vunpack.c.l.s4 1983009808
      %v9916 = vunpack.c.0.s8 %v9915
      %v9917 = vlaneseq
      %v9918 = vshrl.u32 %v9917, 7
      %v9919 = vsub.s32 %v9916, %v9918
      %v9920 = vrot.slane %v9719, %v9919
      %v9922 = vunpack.c.l.s4 1983009808
      %v9923 = vunpack.c.0.s8 %v9922
      %v9924 = vlaneseq
      %v9925 = vshrl.u32 %v9924, 7
      %v9926 = vsub.s32 %v9923, %v9925
      %v9927 = vrot.slane %v9913, %v9926
      %v9928 = vcombine.high %v9920, %v9920
      %v9929 = vcombine.high %v9927, %v9927
      %v9930 = vcombine.high %v9720, %v9720
      %v9932 = vunpack.c.l.s4 1983009808
      %v9933 = vunpack.c.0.s8 %v9932
      %v9934 = vlaneseq
      %v9935 = vshrl.u32 %v9934, 7
      %v9936 = vsub.s32 %v9933, %v9935
      %v9937 = vrot.slane %v9720, %v9936
      %v9939 = vunpack.c.l.s4 1983009808
      %v9940 = vunpack.c.0.s8 %v9939
      %v9941 = vlaneseq
      %v9942 = vshrl.u32 %v9941, 7
      %v9943 = vsub.s32 %v9940, %v9942
      %v9944 = vrot.slane %v9930, %v9943
      %v9945 = vcombine.high %v9937, %v9937
      %v9946 = vcombine.high %v9944, %v9944
      %v9947 = vcombine.high %v9721, %v9721
      %v9949 = vunpack.c.l.s4 1983009808
      %v9950 = vunpack.c.0.s8 %v9949
      %v9951 = vlaneseq
      %v9952 = vshrl.u32 %v9951, 7
      %v9953 = vsub.s32 %v9950, %v9952
      %v9954 = vrot.slane %v9721, %v9953
      %v9956 = vunpack.c.l.s4 1983009808
      %v9957 = vunpack.c.0.s8 %v9956
      %v9958 = vlaneseq
      %v9959 = vshrl.u32 %v9958, 7
      %v9960 = vsub.s32 %v9957, %v9959
      %v9961 = vrot.slane %v9947, %v9960
      %v9962 = vcombine.high %v9954, %v9954
      %v9963 = vcombine.high %v9961, %v9961
      %v9964 = vcombine.high %v9722, %v9722
      %v9966 = vunpack.c.l.s4 1983009808
      %v9967 = vunpack.c.0.s8 %v9966
      %v9968 = vlaneseq
      %v9969 = vshrl.u32 %v9968, 7
      %v9970 = vsub.s32 %v9967, %v9969
      %v9971 = vrot.slane %v9722, %v9970
      %v9973 = vunpack.c.l.s4 1983009808
      %v9974 = vunpack.c.0.s8 %v9973
      %v9975 = vlaneseq
      %v9976 = vshrl.u32 %v9975, 7
      %v9977 = vsub.s32 %v9974, %v9976
      %v9978 = vrot.slane %v9964, %v9977
      %v9979 = vcombine.high %v9971, %v9971
      %v9980 = vcombine.high %v9978, %v9978
      %v9981 = vcombine.high %v9723, %v9723
      %v9983 = vunpack.c.l.s4 1983009808
      %v9984 = vunpack.c.0.s8 %v9983
      %v9985 = vlaneseq
      %v9986 = vshrl.u32 %v9985, 7
      %v9987 = vsub.s32 %v9984, %v9986
      %v9988 = vrot.slane %v9723, %v9987
      %v9990 = vunpack.c.l.s4 1983009808
      %v9991 = vunpack.c.0.s8 %v9990
      %v9992 = vlaneseq
      %v9993 = vshrl.u32 %v9992, 7
      %v9994 = vsub.s32 %v9991, %v9993
      %v9995 = vrot.slane %v9981, %v9994
      %v9996 = vcombine.high %v9988, %v9988
      %v9997 = vcombine.high %v9995, %v9995
      %v9998 = vcombine.high %v9724, %v9724
      %v10000 = vunpack.c.l.s4 1983009808
      %v10001 = vunpack.c.0.s8 %v10000
      %v10002 = vlaneseq
      %v10003 = vshrl.u32 %v10002, 7
      %v10004 = vsub.s32 %v10001, %v10003
      %v10005 = vrot.slane %v9724, %v10004
      %v10007 = vunpack.c.l.s4 1983009808
      %v10008 = vunpack.c.0.s8 %v10007
      %v10009 = vlaneseq
      %v10010 = vshrl.u32 %v10009, 7
      %v10011 = vsub.s32 %v10008, %v10010
      %v10012 = vrot.slane %v9998, %v10011
      %v10013 = vcombine.high %v10005, %v10005
      %v10014 = vcombine.high %v10012, %v10012
      %v10015 = vcombine.high %v9725, %v9725
      %v10017 = vunpack.c.l.s4 1983009808
      %v10018 = vunpack.c.0.s8 %v10017
      %v10019 = vlaneseq
      %v10020 = vshrl.u32 %v10019, 7
      %v10021 = vsub.s32 %v10018, %v10020
      %v10022 = vrot.slane %v9725, %v10021
      %v10024 = vunpack.c.l.s4 1983009808
      %v10025 = vunpack.c.0.s8 %v10024
      %v10026 = vlaneseq
      %v10027 = vshrl.u32 %v10026, 7
      %v10028 = vsub.s32 %v10025, %v10027
      %v10029 = vrot.slane %v10015, %v10028
      %v10030 = vcombine.high %v10022, %v10022
      %v10031 = vcombine.high %v10029, %v10029
      %v10032 = vcombine.high %v9726, %v9726
      %v10034 = vunpack.c.l.s4 1983009808
      %v10035 = vunpack.c.0.s8 %v10034
      %v10036 = vlaneseq
      %v10037 = vshrl.u32 %v10036, 7
      %v10038 = vsub.s32 %v10035, %v10037
      %v10039 = vrot.slane %v9726, %v10038
      %v10041 = vunpack.c.l.s4 1983009808
      %v10042 = vunpack.c.0.s8 %v10041
      %v10043 = vlaneseq
      %v10044 = vshrl.u32 %v10043, 7
      %v10045 = vsub.s32 %v10042, %v10044
      %v10046 = vrot.slane %v10032, %v10045
      %v10047 = vcombine.high %v10039, %v10039
      %v10048 = vcombine.high %v10046, %v10046
      %v10049 = vcombine.high %v9727, %v9727
      %v10051 = vunpack.c.l.s4 1983009808
      %v10052 = vunpack.c.0.s8 %v10051
      %v10053 = vlaneseq
      %v10054 = vshrl.u32 %v10053, 7
      %v10055 = vsub.s32 %v10052, %v10054
      %v10056 = vrot.slane %v9727, %v10055
      %v10058 = vunpack.c.l.s4 1983009808
      %v10059 = vunpack.c.0.s8 %v10058
      %v10060 = vlaneseq
      %v10061 = vshrl.u32 %v10060, 7
      %v10062 = vsub.s32 %v10059, %v10061
      %v10063 = vrot.slane %v10049, %v10062
      %v10064 = vcombine.high %v10056, %v10056
      %v10065 = vcombine.high %v10063, %v10063
      %v10066 = vcombine.high %v9728, %v9728
      %v10068 = vunpack.c.l.s4 1983009808
      %v10069 = vunpack.c.0.s8 %v10068
      %v10070 = vlaneseq
      %v10071 = vshrl.u32 %v10070, 7
      %v10072 = vsub.s32 %v10069, %v10071
      %v10073 = vrot.slane %v9728, %v10072
      %v10075 = vunpack.c.l.s4 1983009808
      %v10076 = vunpack.c.0.s8 %v10075
      %v10077 = vlaneseq
      %v10078 = vshrl.u32 %v10077, 7
      %v10079 = vsub.s32 %v10076, %v10078
      %v10080 = vrot.slane %v10066, %v10079
      %v10081 = vcombine.high %v10073, %v10073
      %v10082 = vcombine.high %v10080, %v10080
      %v10083 = vcombine.high %v9729, %v9729
      %v10085 = vunpack.c.l.s4 1983009808
      %v10086 = vunpack.c.0.s8 %v10085
      %v10087 = vlaneseq
      %v10088 = vshrl.u32 %v10087, 7
      %v10089 = vsub.s32 %v10086, %v10088
      %v10090 = vrot.slane %v9729, %v10089
      %v10092 = vunpack.c.l.s4 1983009808
      %v10093 = vunpack.c.0.s8 %v10092
      %v10094 = vlaneseq
      %v10095 = vshrl.u32 %v10094, 7
      %v10096 = vsub.s32 %v10093, %v10095
      %v10097 = vrot.slane %v10083, %v10096
      %v10098 = vcombine.high %v10090, %v10090
      %v10099 = vcombine.high %v10097, %v10097
      %v10100 = vcombine.high %v9730, %v9730
      %v10102 = vunpack.c.l.s4 1983009808
      %v10103 = vunpack.c.0.s8 %v10102
      %v10104 = vlaneseq
      %v10105 = vshrl.u32 %v10104, 7
      %v10106 = vsub.s32 %v10103, %v10105
      %v10107 = vrot.slane %v9730, %v10106
      %v10109 = vunpack.c.l.s4 1983009808
      %v10110 = vunpack.c.0.s8 %v10109
      %v10111 = vlaneseq
      %v10112 = vshrl.u32 %v10111, 7
      %v10113 = vsub.s32 %v10110, %v10112
      %v10114 = vrot.slane %v10100, %v10113
      %v10115 = vcombine.high %v10107, %v10107
      %v10116 = vcombine.high %v10114, %v10114
      %v10117 = vcombine.high %v9731, %v9731
      %v10119 = vunpack.c.l.s4 1983009808
      %v10120 = vunpack.c.0.s8 %v10119
      %v10121 = vlaneseq
      %v10122 = vshrl.u32 %v10121, 7
      %v10123 = vsub.s32 %v10120, %v10122
      %v10124 = vrot.slane %v9731, %v10123
      %v10126 = vunpack.c.l.s4 1983009808
      %v10127 = vunpack.c.0.s8 %v10126
      %v10128 = vlaneseq
      %v10129 = vshrl.u32 %v10128, 7
      %v10130 = vsub.s32 %v10127, %v10129
      %v10131 = vrot.slane %v10117, %v10130
      %v10132 = vcombine.high %v10124, %v10124
      %v10133 = vcombine.high %v10131, %v10131
      %v10134 = vcombine.high %v9732, %v9732
      %v10136 = vunpack.c.l.s4 1983009808
      %v10137 = vunpack.c.0.s8 %v10136
      %v10138 = vlaneseq
      %v10139 = vshrl.u32 %v10138, 7
      %v10140 = vsub.s32 %v10137, %v10139
      %v10141 = vrot.slane %v9732, %v10140
      %v10143 = vunpack.c.l.s4 1983009808
      %v10144 = vunpack.c.0.s8 %v10143
      %v10145 = vlaneseq
      %v10146 = vshrl.u32 %v10145, 7
      %v10147 = vsub.s32 %v10144, %v10146
      %v10148 = vrot.slane %v10134, %v10147
      %v10149 = vcombine.high %v10141, %v10141
      %v10150 = vcombine.high %v10148, %v10148
      %v10151 = vcombine.high %v9733, %v9733
      %v10153 = vunpack.c.l.s4 1983009808
      %v10154 = vunpack.c.0.s8 %v10153
      %v10155 = vlaneseq
      %v10156 = vshrl.u32 %v10155, 7
      %v10157 = vsub.s32 %v10154, %v10156
      %v10158 = vrot.slane %v9733, %v10157
      %v10160 = vunpack.c.l.s4 1983009808
      %v10161 = vunpack.c.0.s8 %v10160
      %v10162 = vlaneseq
      %v10163 = vshrl.u32 %v10162, 7
      %v10164 = vsub.s32 %v10161, %v10163
      %v10165 = vrot.slane %v10151, %v10164
      %v10166 = vcombine.high %v10158, %v10158
      %v10167 = vcombine.high %v10165, %v10165
      %v10168 = vcombine.high %v9734, %v9734
      %v10170 = vunpack.c.l.s4 1983009808
      %v10171 = vunpack.c.0.s8 %v10170
      %v10172 = vlaneseq
      %v10173 = vshrl.u32 %v10172, 7
      %v10174 = vsub.s32 %v10171, %v10173
      %v10175 = vrot.slane %v9734, %v10174
      %v10177 = vunpack.c.l.s4 1983009808
      %v10178 = vunpack.c.0.s8 %v10177
      %v10179 = vlaneseq
      %v10180 = vshrl.u32 %v10179, 7
      %v10181 = vsub.s32 %v10178, %v10180
      %v10182 = vrot.slane %v10168, %v10181
      %v10183 = vcombine.high %v10175, %v10175
      %v10184 = vcombine.high %v10182, %v10182
      %v10185 = vcombine.high %v9735, %v9735
      %v10187 = vunpack.c.l.s4 1983009808
      %v10188 = vunpack.c.0.s8 %v10187
      %v10189 = vlaneseq
      %v10190 = vshrl.u32 %v10189, 7
      %v10191 = vsub.s32 %v10188, %v10190
      %v10192 = vrot.slane %v9735, %v10191
      %v10194 = vunpack.c.l.s4 1983009808
      %v10195 = vunpack.c.0.s8 %v10194
      %v10196 = vlaneseq
      %v10197 = vshrl.u32 %v10196, 7
      %v10198 = vsub.s32 %v10195, %v10197
      %v10199 = vrot.slane %v10185, %v10198
      %v10200 = vcombine.high %v10192, %v10192
      %v10201 = vcombine.high %v10199, %v10199
      %v10202 = vcombine.high %v9736, %v9736
      %v10204 = vunpack.c.l.s4 1983009808
      %v10205 = vunpack.c.0.s8 %v10204
      %v10206 = vlaneseq
      %v10207 = vshrl.u32 %v10206, 7
      %v10208 = vsub.s32 %v10205, %v10207
      %v10209 = vrot.slane %v9736, %v10208
      %v10211 = vunpack.c.l.s4 1983009808
      %v10212 = vunpack.c.0.s8 %v10211
      %v10213 = vlaneseq
      %v10214 = vshrl.u32 %v10213, 7
      %v10215 = vsub.s32 %v10212, %v10214
      %v10216 = vrot.slane %v10202, %v10215
      %v10217 = vcombine.high %v10209, %v10209
      %v10218 = vcombine.high %v10216, %v10216
      %v10219 = vcombine.high %v9737, %v9737
      %v10221 = vunpack.c.l.s4 1983009808
      %v10222 = vunpack.c.0.s8 %v10221
      %v10223 = vlaneseq
      %v10224 = vshrl.u32 %v10223, 7
      %v10225 = vsub.s32 %v10222, %v10224
      %v10226 = vrot.slane %v9737, %v10225
      %v10228 = vunpack.c.l.s4 1983009808
      %v10229 = vunpack.c.0.s8 %v10228
      %v10230 = vlaneseq
      %v10231 = vshrl.u32 %v10230, 7
      %v10232 = vsub.s32 %v10229, %v10231
      %v10233 = vrot.slane %v10219, %v10232
      %v10234 = vcombine.high %v10226, %v10226
      %v10235 = vcombine.high %v10233, %v10233
      %v10236 = vcombine.high %v9738, %v9738
      %v10238 = vunpack.c.l.s4 1983009808
      %v10239 = vunpack.c.0.s8 %v10238
      %v10240 = vlaneseq
      %v10241 = vshrl.u32 %v10240, 7
      %v10242 = vsub.s32 %v10239, %v10241
      %v10243 = vrot.slane %v9738, %v10242
      %v10245 = vunpack.c.l.s4 1983009808
      %v10246 = vunpack.c.0.s8 %v10245
      %v10247 = vlaneseq
      %v10248 = vshrl.u32 %v10247, 7
      %v10249 = vsub.s32 %v10246, %v10248
      %v10250 = vrot.slane %v10236, %v10249
      %v10251 = vcombine.high %v10243, %v10243
      %v10252 = vcombine.high %v10250, %v10250
      %v10253 = vcombine.high %v9739, %v9739
      %v10255 = vunpack.c.l.s4 1983009808
      %v10256 = vunpack.c.0.s8 %v10255
      %v10257 = vlaneseq
      %v10258 = vshrl.u32 %v10257, 7
      %v10259 = vsub.s32 %v10256, %v10258
      %v10260 = vrot.slane %v9739, %v10259
      %v10262 = vunpack.c.l.s4 1983009808
      %v10263 = vunpack.c.0.s8 %v10262
      %v10264 = vlaneseq
      %v10265 = vshrl.u32 %v10264, 7
      %v10266 = vsub.s32 %v10263, %v10265
      %v10267 = vrot.slane %v10253, %v10266
      %v10268 = vcombine.high %v10260, %v10260
      %v10269 = vcombine.high %v10267, %v10267
      %v10270 = vcombine.high %v9740, %v9740
      %v10272 = vunpack.c.l.s4 1983009808
      %v10273 = vunpack.c.0.s8 %v10272
      %v10274 = vlaneseq
      %v10275 = vshrl.u32 %v10274, 7
      %v10276 = vsub.s32 %v10273, %v10275
      %v10277 = vrot.slane %v9740, %v10276
      %v10279 = vunpack.c.l.s4 1983009808
      %v10280 = vunpack.c.0.s8 %v10279
      %v10281 = vlaneseq
      %v10282 = vshrl.u32 %v10281, 7
      %v10283 = vsub.s32 %v10280, %v10282
      %v10284 = vrot.slane %v10270, %v10283
      %v10285 = vcombine.high %v10277, %v10277
      %v10286 = vcombine.high %v10284, %v10284
      %v10287 = vcombine.high %v9741, %v9741
      %v10289 = vunpack.c.l.s4 1983009808
      %v10290 = vunpack.c.0.s8 %v10289
      %v10291 = vlaneseq
      %v10292 = vshrl.u32 %v10291, 7
      %v10293 = vsub.s32 %v10290, %v10292
      %v10294 = vrot.slane %v9741, %v10293
      %v10296 = vunpack.c.l.s4 1983009808
      %v10297 = vunpack.c.0.s8 %v10296
      %v10298 = vlaneseq
      %v10299 = vshrl.u32 %v10298, 7
      %v10300 = vsub.s32 %v10297, %v10299
      %v10301 = vrot.slane %v10287, %v10300
      %v10302 = vcombine.high %v10294, %v10294
      %v10303 = vcombine.high %v10301, %v10301
      %v10304 = vcombine.high %v9742, %v9742
      %v10306 = vunpack.c.l.s4 1983009808
      %v10307 = vunpack.c.0.s8 %v10306
      %v10308 = vlaneseq
      %v10309 = vshrl.u32 %v10308, 7
      %v10310 = vsub.s32 %v10307, %v10309
      %v10311 = vrot.slane %v9742, %v10310
      %v10313 = vunpack.c.l.s4 1983009808
      %v10314 = vunpack.c.0.s8 %v10313
      %v10315 = vlaneseq
      %v10316 = vshrl.u32 %v10315, 7
      %v10317 = vsub.s32 %v10314, %v10316
      %v10318 = vrot.slane %v10304, %v10317
      %v10319 = vcombine.high %v10311, %v10311
      %v10320 = vcombine.high %v10318, %v10318
      %v10321 = vcombine.high %v9743, %v9743
      %v10323 = vunpack.c.l.s4 1983009808
      %v10324 = vunpack.c.0.s8 %v10323
      %v10325 = vlaneseq
      %v10326 = vshrl.u32 %v10325, 7
      %v10327 = vsub.s32 %v10324, %v10326
      %v10328 = vrot.slane %v9743, %v10327
      %v10330 = vunpack.c.l.s4 1983009808
      %v10331 = vunpack.c.0.s8 %v10330
      %v10332 = vlaneseq
      %v10333 = vshrl.u32 %v10332, 7
      %v10334 = vsub.s32 %v10331, %v10333
      %v10335 = vrot.slane %v10321, %v10334
      %v10336 = vcombine.high %v10328, %v10328
      %v10337 = vcombine.high %v10335, %v10335
      %v10338 = vcombine.high %v9744, %v9744
      %v10340 = vunpack.c.l.s4 1983009808
      %v10341 = vunpack.c.0.s8 %v10340
      %v10342 = vlaneseq
      %v10343 = vshrl.u32 %v10342, 7
      %v10344 = vsub.s32 %v10341, %v10343
      %v10345 = vrot.slane %v9744, %v10344
      %v10347 = vunpack.c.l.s4 1983009808
      %v10348 = vunpack.c.0.s8 %v10347
      %v10349 = vlaneseq
      %v10350 = vshrl.u32 %v10349, 7
      %v10351 = vsub.s32 %v10348, %v10350
      %v10352 = vrot.slane %v10338, %v10351
      %v10353 = vcombine.high %v10345, %v10345
      %v10354 = vcombine.high %v10352, %v10352
      %v10355 = vcombine.high %v9745, %v9745
      %v10357 = vunpack.c.l.s4 1983009808
      %v10358 = vunpack.c.0.s8 %v10357
      %v10359 = vlaneseq
      %v10360 = vshrl.u32 %v10359, 7
      %v10361 = vsub.s32 %v10358, %v10360
      %v10362 = vrot.slane %v9745, %v10361
      %v10364 = vunpack.c.l.s4 1983009808
      %v10365 = vunpack.c.0.s8 %v10364
      %v10366 = vlaneseq
      %v10367 = vshrl.u32 %v10366, 7
      %v10368 = vsub.s32 %v10365, %v10367
      %v10369 = vrot.slane %v10355, %v10368
      %v10370 = vcombine.high %v10362, %v10362
      %v10371 = vcombine.high %v10369, %v10369
      %v10372 = vcombine.high %v9746, %v9746
      %v10374 = vunpack.c.l.s4 1983009808
      %v10375 = vunpack.c.0.s8 %v10374
      %v10376 = vlaneseq
      %v10377 = vshrl.u32 %v10376, 7
      %v10378 = vsub.s32 %v10375, %v10377
      %v10379 = vrot.slane %v9746, %v10378
      %v10381 = vunpack.c.l.s4 1983009808
      %v10382 = vunpack.c.0.s8 %v10381
      %v10383 = vlaneseq
      %v10384 = vshrl.u32 %v10383, 7
      %v10385 = vsub.s32 %v10382, %v10384
      %v10386 = vrot.slane %v10372, %v10385
      %v10387 = vcombine.high %v10379, %v10379
      %v10388 = vcombine.high %v10386, %v10386
      %v10389 = vcombine.high %v9747, %v9747
      %v10391 = vunpack.c.l.s4 1983009808
      %v10392 = vunpack.c.0.s8 %v10391
      %v10393 = vlaneseq
      %v10394 = vshrl.u32 %v10393, 7
      %v10395 = vsub.s32 %v10392, %v10394
      %v10396 = vrot.slane %v9747, %v10395
      %v10398 = vunpack.c.l.s4 1983009808
      %v10399 = vunpack.c.0.s8 %v10398
      %v10400 = vlaneseq
      %v10401 = vshrl.u32 %v10400, 7
      %v10402 = vsub.s32 %v10399, %v10401
      %v10403 = vrot.slane %v10389, %v10402
      %v10404 = vcombine.high %v10396, %v10396
      %v10405 = vcombine.high %v10403, %v10403
      %v10406 = vcombine.high %v9748, %v9748
      %v10408 = vunpack.c.l.s4 1983009808
      %v10409 = vunpack.c.0.s8 %v10408
      %v10410 = vlaneseq
      %v10411 = vshrl.u32 %v10410, 7
      %v10412 = vsub.s32 %v10409, %v10411
      %v10413 = vrot.slane %v9748, %v10412
      %v10415 = vunpack.c.l.s4 1983009808
      %v10416 = vunpack.c.0.s8 %v10415
      %v10417 = vlaneseq
      %v10418 = vshrl.u32 %v10417, 7
      %v10419 = vsub.s32 %v10416, %v10418
      %v10420 = vrot.slane %v10406, %v10419
      %v10421 = vcombine.high %v10413, %v10413
      %v10422 = vcombine.high %v10420, %v10420
      %v10423 = vcombine.high %v9749, %v9749
      %v10425 = vunpack.c.l.s4 1983009808
      %v10426 = vunpack.c.0.s8 %v10425
      %v10427 = vlaneseq
      %v10428 = vshrl.u32 %v10427, 7
      %v10429 = vsub.s32 %v10426, %v10428
      %v10430 = vrot.slane %v9749, %v10429
      %v10432 = vunpack.c.l.s4 1983009808
      %v10433 = vunpack.c.0.s8 %v10432
      %v10434 = vlaneseq
      %v10435 = vshrl.u32 %v10434, 7
      %v10436 = vsub.s32 %v10433, %v10435
      %v10437 = vrot.slane %v10423, %v10436
      %v10438 = vcombine.high %v10430, %v10430
      %v10439 = vcombine.high %v10437, %v10437
      %v10440 = vcombine.high %v9750, %v9750
      %v10442 = vunpack.c.l.s4 1983009808
      %v10443 = vunpack.c.0.s8 %v10442
      %v10444 = vlaneseq
      %v10445 = vshrl.u32 %v10444, 7
      %v10446 = vsub.s32 %v10443, %v10445
      %v10447 = vrot.slane %v9750, %v10446
      %v10449 = vunpack.c.l.s4 1983009808
      %v10450 = vunpack.c.0.s8 %v10449
      %v10451 = vlaneseq
      %v10452 = vshrl.u32 %v10451, 7
      %v10453 = vsub.s32 %v10450, %v10452
      %v10454 = vrot.slane %v10440, %v10453
      %v10455 = vcombine.high %v10447, %v10447
      %v10456 = vcombine.high %v10454, %v10454
      %v10457 = vcombine.high %v9751, %v9751
      %v10459 = vunpack.c.l.s4 1983009808
      %v10460 = vunpack.c.0.s8 %v10459
      %v10461 = vlaneseq
      %v10462 = vshrl.u32 %v10461, 7
      %v10463 = vsub.s32 %v10460, %v10462
      %v10464 = vrot.slane %v9751, %v10463
      %v10466 = vunpack.c.l.s4 1983009808
      %v10467 = vunpack.c.0.s8 %v10466
      %v10468 = vlaneseq
      %v10469 = vshrl.u32 %v10468, 7
      %v10470 = vsub.s32 %v10467, %v10469
      %v10471 = vrot.slane %v10457, %v10470
      %v10472 = vcombine.high %v10464, %v10464
      %v10473 = vcombine.high %v10471, %v10471
      %v10475 = vunpack.c.l.s4 1983009808
      %v10476 = vunpack.c.0.s8 %v10475
      %v10477 = vlaneseq
      %v10478 = vshrl.u32 %v10477, 7
      %v10479 = vsub.s32 %v10476, %v10478
      %v10480 = vrot.slane %v9752, %v10479
      %v10481 = vcombine.high %v10480, %v10480
      %v10482 = vlaneseq
      %v10483 = vshrl.u32 %v10482, 7
      %v10484 = vadd.s32 %v10483, 8
      %v10485 = vadd.s32 %v10483, 16
      %vm10486 = vcmp.ge.s32.totalorder %v10483, 1
      %vm10487 = vcmp.ge.s32.totalorder %v10484, 1
      %vm10488 = vcmp.ge.s32.totalorder %v10485, 1
      %vm10489 = vcmp.le.s32.totalorder %v10483, 16
      %vm10490 = vcmp.le.s32.totalorder %v10484, 16
      %vm10491 = vcmp.le.s32.totalorder %v10485, 16
      %vm10492 = vmand %vm10486, %vm10489
      %vm10493 = vmand %vm10487, %vm10490
      %vm10494 = vmand %vm10488, %vm10491
      %p10495 = scmp.gt.s32.totalorder %s21, 0
      %s10496 = scalar_select %p10495, 1, 0
      %v10497 = vstv %s10496
      %vm10498 = vcmp.eq.s32.totalorder %v10497, 1
      %vm10499 = vmand %vm10492, %vm10498
      %vm10500 = vmand %vm10493, %vm10498
      %vm10501 = vmand %vm10494, %vm10498
      %vm10502 = vmand %vm10492, 1
      %vm10503 = vmand %vm10493, 1
      %vm10504 = vmand %vm10494, 1
      %p10505 = scmp.lt.s32.totalorder %s21, 0
      %s10506 = scalar_select %p10505, 1, 0
      %v10507 = vstv %s10506
      %vm10508 = vcmp.eq.s32.totalorder %v10507, 1
      %vm10509 = vmand %vm10499, 1
      %vm10510 = vmand %vm10500, 1
      %vm10511 = vmand %vm10501, 1
      %vm10512 = vmand %vm10502, %vm10508
      %vm10513 = vmand %vm10503, %vm10508
      %vm10514 = vmand %vm10504, %vm10508
      %v10515 = vsel %vm10509, 1, 0
      %v10516 = vsel %vm10510, 1, 0
      %v10517 = vsel %vm10511, 1, 0
      %v10518 = vsel %vm10502, 1, 0
      %v10519 = vsel %vm10503, 1, 0
      %v10520 = vsel %vm10504, 1, 0
      %v10521 = vsel %vm10512, 1, 0
      %v10522 = vsel %vm10513, 1, 0
      %v10523 = vsel %vm10514, 1, 0
      %vm10524 = vcmp.eq.s32.totalorder %v10515, 1
      %vm10525 = vcmp.eq.s32.totalorder %v10516, 1
      %vm10526 = vcmp.eq.s32.totalorder %v10517, 1
      %vm10527 = vcmp.eq.s32.totalorder %v10518, 1
      %vm10528 = vcmp.eq.s32.totalorder %v10519, 1
      %vm10529 = vcmp.eq.s32.totalorder %v10520, 1
      %vm10530 = vcmp.eq.s32.totalorder %v10521, 1
      %vm10531 = vcmp.eq.s32.totalorder %v10522, 1
      %vm10532 = vcmp.eq.s32.totalorder %v10523, 1
      %v10533 = vcombine.low %v9801, %v9809
      %v10534 = vcombine.low %v9808, %v9810
      %v10536 = vunpack.c.l.s4 1983009808
      %v10537 = vunpack.c.0.s8 %v10536
      %v10538 = vlaneseq
      %v10539 = vshrl.u32 %v10538, 7
      %v10540 = vsub.s32 %v10537, %v10539
      %v10541 = vrot.slane %v10533, %v10540
      %v10543 = vunpack.c.l.s4 1983009808
      %v10544 = vunpack.c.0.s8 %v10543
      %v10545 = vlaneseq
      %v10546 = vshrl.u32 %v10545, 7
      %v10547 = vsub.s32 %v10544, %v10546
      %v10548 = vrot.slane %v10534, %v10547
      %v10549 = vcombine.low %v10541, %v10548
      %v10550 = vcombine.low %v9818, %v9826
      %v10551 = vcombine.low %v9825, %v9827
      %v10553 = vunpack.c.l.s4 1983009808
      %v10554 = vunpack.c.0.s8 %v10553
      %v10555 = vlaneseq
      %v10556 = vshrl.u32 %v10555, 7
      %v10557 = vsub.s32 %v10554, %v10556
      %v10558 = vrot.slane %v10550, %v10557
      %v10560 = vunpack.c.l.s4 1983009808
      %v10561 = vunpack.c.0.s8 %v10560
      %v10562 = vlaneseq
      %v10563 = vshrl.u32 %v10562, 7
      %v10564 = vsub.s32 %v10561, %v10563
      %v10565 = vrot.slane %v10551, %v10564
      %v10566 = vcombine.low %v10558, %v10565
      %v10568 = vunpack.c.l.s4 1983009808
      %v10569 = vunpack.c.0.s8 %v10568
      %v10570 = vlaneseq
      %v10571 = vshrl.u32 %v10570, 7
      %v10572 = vsub.s32 %v10569, %v10571
      %v10573 = vrot.slane %v9835, %v10572
      %v10574 = vcombine.low %v9843, %v9842
      %v10575 = vcombine.low %v9844, %v9852
      %v10577 = vunpack.c.l.s4 1983009808
      %v10578 = vunpack.c.0.s8 %v10577
      %v10579 = vlaneseq
      %v10580 = vshrl.u32 %v10579, 7
      %v10581 = vsub.s32 %v10578, %v10580
      %v10582 = vrot.slane %v10574, %v10581
      %v10584 = vunpack.c.l.s4 1983009808
      %v10585 = vunpack.c.0.s8 %v10584
      %v10586 = vlaneseq
      %v10587 = vshrl.u32 %v10586, 7
      %v10588 = vsub.s32 %v10585, %v10587
      %v10589 = vrot.slane %v10575, %v10588
      %v10590 = vcombine.low %v10582, %v10589
      %v10591 = vcombine.low %v9860, %v9859
      %v10592 = vcombine.low %v9861, %v9869
      %v10594 = vunpack.c.l.s4 1983009808
      %v10595 = vunpack.c.0.s8 %v10594
      %v10596 = vlaneseq
      %v10597 = vshrl.u32 %v10596, 7
      %v10598 = vsub.s32 %v10595, %v10597
      %v10599 = vrot.slane %v10591, %v10598
      %v10601 = vunpack.c.l.s4 1983009808
      %v10602 = vunpack.c.0.s8 %v10601
      %v10603 = vlaneseq
      %v10604 = vshrl.u32 %v10603, 7
      %v10605 = vsub.s32 %v10602, %v10604
      %v10606 = vrot.slane %v10592, %v10605
      %v10607 = vcombine.low %v10599, %v10606
      %v10609 = vunpack.c.l.s4 1983009808
      %v10610 = vunpack.c.0.s8 %v10609
      %v10611 = vlaneseq
      %v10612 = vshrl.u32 %v10611, 7
      %v10613 = vsub.s32 %v10610, %v10612
      %v10614 = vrot.slane %v9877, %v10613
      %v10615 = vcombine.low %v9876, %v9878
      %v10616 = vcombine.low %v9886, %v9894
      %v10618 = vunpack.c.l.s4 1983009808
      %v10619 = vunpack.c.0.s8 %v10618
      %v10620 = vlaneseq
      %v10621 = vshrl.u32 %v10620, 7
      %v10622 = vsub.s32 %v10619, %v10621
      %v10623 = vrot.slane %v10615, %v10622
      %v10625 = vunpack.c.l.s4 1983009808
      %v10626 = vunpack.c.0.s8 %v10625
      %v10627 = vlaneseq
      %v10628 = vshrl.u32 %v10627, 7
      %v10629 = vsub.s32 %v10626, %v10628
      %v10630 = vrot.slane %v10616, %v10629
      %v10631 = vcombine.low %v10623, %v10630
      %v10632 = vcombine.low %v9893, %v9895
      %v10633 = vcombine.low %v9903, %v9911
      %v10635 = vunpack.c.l.s4 1983009808
      %v10636 = vunpack.c.0.s8 %v10635
      %v10637 = vlaneseq
      %v10638 = vshrl.u32 %v10637, 7
      %v10639 = vsub.s32 %v10636, %v10638
      %v10640 = vrot.slane %v10632, %v10639
      %v10642 = vunpack.c.l.s4 1983009808
      %v10643 = vunpack.c.0.s8 %v10642
      %v10644 = vlaneseq
      %v10645 = vshrl.u32 %v10644, 7
      %v10646 = vsub.s32 %v10643, %v10645
      %v10647 = vrot.slane %v10633, %v10646
      %v10648 = vcombine.low %v10640, %v10647
      %v10650 = vunpack.c.l.s4 1983009808
      %v10651 = vunpack.c.0.s8 %v10650
      %v10652 = vlaneseq
      %v10653 = vshrl.u32 %v10652, 7
      %v10654 = vsub.s32 %v10651, %v10653
      %v10655 = vrot.slane %v9910, %v10654
      %v10656 = vcombine.low %v9912, %v9920
      %v10657 = vcombine.low %v9928, %v9927
      %v10659 = vunpack.c.l.s4 1983009808
      %v10660 = vunpack.c.0.s8 %v10659
      %v10661 = vlaneseq
      %v10662 = vshrl.u32 %v10661, 7
      %v10663 = vsub.s32 %v10660, %v10662
      %v10664 = vrot.slane %v10656, %v10663
      %v10666 = vunpack.c.l.s4 1983009808
      %v10667 = vunpack.c.0.s8 %v10666
      %v10668 = vlaneseq
      %v10669 = vshrl.u32 %v10668, 7
      %v10670 = vsub.s32 %v10667, %v10669
      %v10671 = vrot.slane %v10657, %v10670
      %v10672 = vcombine.low %v10664, %v10671
      %v10673 = vcombine.low %v9929, %v9937
      %v10674 = vcombine.low %v9945, %v9944
      %v10676 = vunpack.c.l.s4 1983009808
      %v10677 = vunpack.c.0.s8 %v10676
      %v10678 = vlaneseq
      %v10679 = vshrl.u32 %v10678, 7
      %v10680 = vsub.s32 %v10677, %v10679
      %v10681 = vrot.slane %v10673, %v10680
      %v10683 = vunpack.c.l.s4 1983009808
      %v10684 = vunpack.c.0.s8 %v10683
      %v10685 = vlaneseq
      %v10686 = vshrl.u32 %v10685, 7
      %v10687 = vsub.s32 %v10684, %v10686
      %v10688 = vrot.slane %v10674, %v10687
      %v10689 = vcombine.low %v10681, %v10688
      %v10691 = vunpack.c.l.s4 1983009808
      %v10692 = vunpack.c.0.s8 %v10691
      %v10693 = vlaneseq
      %v10694 = vshrl.u32 %v10693, 7
      %v10695 = vsub.s32 %v10692, %v10694
      %v10696 = vrot.slane %v9946, %v10695
      %v10697 = vcombine.low %v9954, %v9962
      %v10698 = vcombine.low %v9961, %v9963
      %v10700 = vunpack.c.l.s4 1983009808
      %v10701 = vunpack.c.0.s8 %v10700
      %v10702 = vlaneseq
      %v10703 = vshrl.u32 %v10702, 7
      %v10704 = vsub.s32 %v10701, %v10703
      %v10705 = vrot.slane %v10697, %v10704
      %v10707 = vunpack.c.l.s4 1983009808
      %v10708 = vunpack.c.0.s8 %v10707
      %v10709 = vlaneseq
      %v10710 = vshrl.u32 %v10709, 7
      %v10711 = vsub.s32 %v10708, %v10710
      %v10712 = vrot.slane %v10698, %v10711
      %v10713 = vcombine.low %v10705, %v10712
      %v10714 = vcombine.low %v9971, %v9979
      %v10715 = vcombine.low %v9978, %v9980
      %v10717 = vunpack.c.l.s4 1983009808
      %v10718 = vunpack.c.0.s8 %v10717
      %v10719 = vlaneseq
      %v10720 = vshrl.u32 %v10719, 7
      %v10721 = vsub.s32 %v10718, %v10720
      %v10722 = vrot.slane %v10714, %v10721
      %v10724 = vunpack.c.l.s4 1983009808
      %v10725 = vunpack.c.0.s8 %v10724
      %v10726 = vlaneseq
      %v10727 = vshrl.u32 %v10726, 7
      %v10728 = vsub.s32 %v10725, %v10727
      %v10729 = vrot.slane %v10715, %v10728
      %v10730 = vcombine.low %v10722, %v10729
      %v10732 = vunpack.c.l.s4 1983009808
      %v10733 = vunpack.c.0.s8 %v10732
      %v10734 = vlaneseq
      %v10735 = vshrl.u32 %v10734, 7
      %v10736 = vsub.s32 %v10733, %v10735
      %v10737 = vrot.slane %v9988, %v10736
      %v10738 = vcombine.low %v9996, %v9995
      %v10739 = vcombine.low %v9997, %v10005
      %v10741 = vunpack.c.l.s4 1983009808
      %v10742 = vunpack.c.0.s8 %v10741
      %v10743 = vlaneseq
      %v10744 = vshrl.u32 %v10743, 7
      %v10745 = vsub.s32 %v10742, %v10744
      %v10746 = vrot.slane %v10738, %v10745
      %v10748 = vunpack.c.l.s4 1983009808
      %v10749 = vunpack.c.0.s8 %v10748
      %v10750 = vlaneseq
      %v10751 = vshrl.u32 %v10750, 7
      %v10752 = vsub.s32 %v10749, %v10751
      %v10753 = vrot.slane %v10739, %v10752
      %v10754 = vcombine.low %v10746, %v10753
      %v10755 = vcombine.low %v10013, %v10012
      %v10756 = vcombine.low %v10014, %v10022
      %v10758 = vunpack.c.l.s4 1983009808
      %v10759 = vunpack.c.0.s8 %v10758
      %v10760 = vlaneseq
      %v10761 = vshrl.u32 %v10760, 7
      %v10762 = vsub.s32 %v10759, %v10761
      %v10763 = vrot.slane %v10755, %v10762
      %v10765 = vunpack.c.l.s4 1983009808
      %v10766 = vunpack.c.0.s8 %v10765
      %v10767 = vlaneseq
      %v10768 = vshrl.u32 %v10767, 7
      %v10769 = vsub.s32 %v10766, %v10768
      %v10770 = vrot.slane %v10756, %v10769
      %v10771 = vcombine.low %v10763, %v10770
      %v10773 = vunpack.c.l.s4 1983009808
      %v10774 = vunpack.c.0.s8 %v10773
      %v10775 = vlaneseq
      %v10776 = vshrl.u32 %v10775, 7
      %v10777 = vsub.s32 %v10774, %v10776
      %v10778 = vrot.slane %v10030, %v10777
      %v10779 = vcombine.low %v10029, %v10031
      %v10780 = vcombine.low %v10039, %v10047
      %v10782 = vunpack.c.l.s4 1983009808
      %v10783 = vunpack.c.0.s8 %v10782
      %v10784 = vlaneseq
      %v10785 = vshrl.u32 %v10784, 7
      %v10786 = vsub.s32 %v10783, %v10785
      %v10787 = vrot.slane %v10779, %v10786
      %v10789 = vunpack.c.l.s4 1983009808
      %v10790 = vunpack.c.0.s8 %v10789
      %v10791 = vlaneseq
      %v10792 = vshrl.u32 %v10791, 7
      %v10793 = vsub.s32 %v10790, %v10792
      %v10794 = vrot.slane %v10780, %v10793
      %v10795 = vcombine.low %v10787, %v10794
      %v10796 = vcombine.low %v10046, %v10048
      %v10797 = vcombine.low %v10056, %v10064
      %v10799 = vunpack.c.l.s4 1983009808
      %v10800 = vunpack.c.0.s8 %v10799
      %v10801 = vlaneseq
      %v10802 = vshrl.u32 %v10801, 7
      %v10803 = vsub.s32 %v10800, %v10802
      %v10804 = vrot.slane %v10796, %v10803
      %v10806 = vunpack.c.l.s4 1983009808
      %v10807 = vunpack.c.0.s8 %v10806
      %v10808 = vlaneseq
      %v10809 = vshrl.u32 %v10808, 7
      %v10810 = vsub.s32 %v10807, %v10809
      %v10811 = vrot.slane %v10797, %v10810
      %v10812 = vcombine.low %v10804, %v10811
      %v10814 = vunpack.c.l.s4 1983009808
      %v10815 = vunpack.c.0.s8 %v10814
      %v10816 = vlaneseq
      %v10817 = vshrl.u32 %v10816, 7
      %v10818 = vsub.s32 %v10815, %v10817
      %v10819 = vrot.slane %v10063, %v10818
      %v10820 = vcombine.low %v10065, %v10073
      %v10821 = vcombine.low %v10081, %v10080
      %v10823 = vunpack.c.l.s4 1983009808
      %v10824 = vunpack.c.0.s8 %v10823
      %v10825 = vlaneseq
      %v10826 = vshrl.u32 %v10825, 7
      %v10827 = vsub.s32 %v10824, %v10826
      %v10828 = vrot.slane %v10820, %v10827
      %v10830 = vunpack.c.l.s4 1983009808
      %v10831 = vunpack.c.0.s8 %v10830
      %v10832 = vlaneseq
      %v10833 = vshrl.u32 %v10832, 7
      %v10834 = vsub.s32 %v10831, %v10833
      %v10835 = vrot.slane %v10821, %v10834
      %v10836 = vcombine.low %v10828, %v10835
      %v10837 = vcombine.low %v10082, %v10090
      %v10838 = vcombine.low %v10098, %v10097
      %v10840 = vunpack.c.l.s4 1983009808
      %v10841 = vunpack.c.0.s8 %v10840
      %v10842 = vlaneseq
      %v10843 = vshrl.u32 %v10842, 7
      %v10844 = vsub.s32 %v10841, %v10843
      %v10845 = vrot.slane %v10837, %v10844
      %v10847 = vunpack.c.l.s4 1983009808
      %v10848 = vunpack.c.0.s8 %v10847
      %v10849 = vlaneseq
      %v10850 = vshrl.u32 %v10849, 7
      %v10851 = vsub.s32 %v10848, %v10850
      %v10852 = vrot.slane %v10838, %v10851
      %v10853 = vcombine.low %v10845, %v10852
      %v10855 = vunpack.c.l.s4 1983009808
      %v10856 = vunpack.c.0.s8 %v10855
      %v10857 = vlaneseq
      %v10858 = vshrl.u32 %v10857, 7
      %v10859 = vsub.s32 %v10856, %v10858
      %v10860 = vrot.slane %v10099, %v10859
      %v10861 = vcombine.low %v10107, %v10115
      %v10862 = vcombine.low %v10114, %v10116
      %v10864 = vunpack.c.l.s4 1983009808
      %v10865 = vunpack.c.0.s8 %v10864
      %v10866 = vlaneseq
      %v10867 = vshrl.u32 %v10866, 7
      %v10868 = vsub.s32 %v10865, %v10867
      %v10869 = vrot.slane %v10861, %v10868
      %v10871 = vunpack.c.l.s4 1983009808
      %v10872 = vunpack.c.0.s8 %v10871
      %v10873 = vlaneseq
      %v10874 = vshrl.u32 %v10873, 7
      %v10875 = vsub.s32 %v10872, %v10874
      %v10876 = vrot.slane %v10862, %v10875
      %v10877 = vcombine.low %v10869, %v10876
      %v10878 = vcombine.low %v10124, %v10132
      %v10879 = vcombine.low %v10131, %v10133
      %v10881 = vunpack.c.l.s4 1983009808
      %v10882 = vunpack.c.0.s8 %v10881
      %v10883 = vlaneseq
      %v10884 = vshrl.u32 %v10883, 7
      %v10885 = vsub.s32 %v10882, %v10884
      %v10886 = vrot.slane %v10878, %v10885
      %v10888 = vunpack.c.l.s4 1983009808
      %v10889 = vunpack.c.0.s8 %v10888
      %v10890 = vlaneseq
      %v10891 = vshrl.u32 %v10890, 7
      %v10892 = vsub.s32 %v10889, %v10891
      %v10893 = vrot.slane %v10879, %v10892
      %v10894 = vcombine.low %v10886, %v10893
      %v10896 = vunpack.c.l.s4 1983009808
      %v10897 = vunpack.c.0.s8 %v10896
      %v10898 = vlaneseq
      %v10899 = vshrl.u32 %v10898, 7
      %v10900 = vsub.s32 %v10897, %v10899
      %v10901 = vrot.slane %v10141, %v10900
      %v10902 = vcombine.low %v10149, %v10148
      %v10903 = vcombine.low %v10150, %v10158
      %v10905 = vunpack.c.l.s4 1983009808
      %v10906 = vunpack.c.0.s8 %v10905
      %v10907 = vlaneseq
      %v10908 = vshrl.u32 %v10907, 7
      %v10909 = vsub.s32 %v10906, %v10908
      %v10910 = vrot.slane %v10902, %v10909
      %v10912 = vunpack.c.l.s4 1983009808
      %v10913 = vunpack.c.0.s8 %v10912
      %v10914 = vlaneseq
      %v10915 = vshrl.u32 %v10914, 7
      %v10916 = vsub.s32 %v10913, %v10915
      %v10917 = vrot.slane %v10903, %v10916
      %v10918 = vcombine.low %v10910, %v10917
      %v10919 = vcombine.low %v10166, %v10165
      %v10920 = vcombine.low %v10167, %v10175
      %v10922 = vunpack.c.l.s4 1983009808
      %v10923 = vunpack.c.0.s8 %v10922
      %v10924 = vlaneseq
      %v10925 = vshrl.u32 %v10924, 7
      %v10926 = vsub.s32 %v10923, %v10925
      %v10927 = vrot.slane %v10919, %v10926
      %v10929 = vunpack.c.l.s4 1983009808
      %v10930 = vunpack.c.0.s8 %v10929
      %v10931 = vlaneseq
      %v10932 = vshrl.u32 %v10931, 7
      %v10933 = vsub.s32 %v10930, %v10932
      %v10934 = vrot.slane %v10920, %v10933
      %v10935 = vcombine.low %v10927, %v10934
      %v10937 = vunpack.c.l.s4 1983009808
      %v10938 = vunpack.c.0.s8 %v10937
      %v10939 = vlaneseq
      %v10940 = vshrl.u32 %v10939, 7
      %v10941 = vsub.s32 %v10938, %v10940
      %v10942 = vrot.slane %v10183, %v10941
      %v10943 = vcombine.low %v10182, %v10184
      %v10944 = vcombine.low %v10192, %v10200
      %v10946 = vunpack.c.l.s4 1983009808
      %v10947 = vunpack.c.0.s8 %v10946
      %v10948 = vlaneseq
      %v10949 = vshrl.u32 %v10948, 7
      %v10950 = vsub.s32 %v10947, %v10949
      %v10951 = vrot.slane %v10943, %v10950
      %v10953 = vunpack.c.l.s4 1983009808
      %v10954 = vunpack.c.0.s8 %v10953
      %v10955 = vlaneseq
      %v10956 = vshrl.u32 %v10955, 7
      %v10957 = vsub.s32 %v10954, %v10956
      %v10958 = vrot.slane %v10944, %v10957
      %v10959 = vcombine.low %v10951, %v10958
      %v10960 = vcombine.low %v10199, %v10201
      %v10961 = vcombine.low %v10209, %v10217
      %v10963 = vunpack.c.l.s4 1983009808
      %v10964 = vunpack.c.0.s8 %v10963
      %v10965 = vlaneseq
      %v10966 = vshrl.u32 %v10965, 7
      %v10967 = vsub.s32 %v10964, %v10966
      %v10968 = vrot.slane %v10960, %v10967
      %v10970 = vunpack.c.l.s4 1983009808
      %v10971 = vunpack.c.0.s8 %v10970
      %v10972 = vlaneseq
      %v10973 = vshrl.u32 %v10972, 7
      %v10974 = vsub.s32 %v10971, %v10973
      %v10975 = vrot.slane %v10961, %v10974
      %v10976 = vcombine.low %v10968, %v10975
      %v10978 = vunpack.c.l.s4 1983009808
      %v10979 = vunpack.c.0.s8 %v10978
      %v10980 = vlaneseq
      %v10981 = vshrl.u32 %v10980, 7
      %v10982 = vsub.s32 %v10979, %v10981
      %v10983 = vrot.slane %v10216, %v10982
      %v10984 = vcombine.low %v10218, %v10226
      %v10985 = vcombine.low %v10234, %v10233
      %v10987 = vunpack.c.l.s4 1983009808
      %v10988 = vunpack.c.0.s8 %v10987
      %v10989 = vlaneseq
      %v10990 = vshrl.u32 %v10989, 7
      %v10991 = vsub.s32 %v10988, %v10990
      %v10992 = vrot.slane %v10984, %v10991
      %v10994 = vunpack.c.l.s4 1983009808
      %v10995 = vunpack.c.0.s8 %v10994
      %v10996 = vlaneseq
      %v10997 = vshrl.u32 %v10996, 7
      %v10998 = vsub.s32 %v10995, %v10997
      %v10999 = vrot.slane %v10985, %v10998
      %v11000 = vcombine.low %v10992, %v10999
      %v11001 = vcombine.low %v10235, %v10243
      %v11002 = vcombine.low %v10251, %v10250
      %v11004 = vunpack.c.l.s4 1983009808
      %v11005 = vunpack.c.0.s8 %v11004
      %v11006 = vlaneseq
      %v11007 = vshrl.u32 %v11006, 7
      %v11008 = vsub.s32 %v11005, %v11007
      %v11009 = vrot.slane %v11001, %v11008
      %v11011 = vunpack.c.l.s4 1983009808
      %v11012 = vunpack.c.0.s8 %v11011
      %v11013 = vlaneseq
      %v11014 = vshrl.u32 %v11013, 7
      %v11015 = vsub.s32 %v11012, %v11014
      %v11016 = vrot.slane %v11002, %v11015
      %v11017 = vcombine.low %v11009, %v11016
      %v11019 = vunpack.c.l.s4 1983009808
      %v11020 = vunpack.c.0.s8 %v11019
      %v11021 = vlaneseq
      %v11022 = vshrl.u32 %v11021, 7
      %v11023 = vsub.s32 %v11020, %v11022
      %v11024 = vrot.slane %v10252, %v11023
      %v11025 = vcombine.low %v10260, %v10268
      %v11026 = vcombine.low %v10267, %v10269
      %v11028 = vunpack.c.l.s4 1983009808
      %v11029 = vunpack.c.0.s8 %v11028
      %v11030 = vlaneseq
      %v11031 = vshrl.u32 %v11030, 7
      %v11032 = vsub.s32 %v11029, %v11031
      %v11033 = vrot.slane %v11025, %v11032
      %v11035 = vunpack.c.l.s4 1983009808
      %v11036 = vunpack.c.0.s8 %v11035
      %v11037 = vlaneseq
      %v11038 = vshrl.u32 %v11037, 7
      %v11039 = vsub.s32 %v11036, %v11038
      %v11040 = vrot.slane %v11026, %v11039
      %v11041 = vcombine.low %v11033, %v11040
      %v11042 = vcombine.low %v10277, %v10285
      %v11043 = vcombine.low %v10284, %v10286
      %v11045 = vunpack.c.l.s4 1983009808
      %v11046 = vunpack.c.0.s8 %v11045
      %v11047 = vlaneseq
      %v11048 = vshrl.u32 %v11047, 7
      %v11049 = vsub.s32 %v11046, %v11048
      %v11050 = vrot.slane %v11042, %v11049
      %v11052 = vunpack.c.l.s4 1983009808
      %v11053 = vunpack.c.0.s8 %v11052
      %v11054 = vlaneseq
      %v11055 = vshrl.u32 %v11054, 7
      %v11056 = vsub.s32 %v11053, %v11055
      %v11057 = vrot.slane %v11043, %v11056
      %v11058 = vcombine.low %v11050, %v11057
      %v11060 = vunpack.c.l.s4 1983009808
      %v11061 = vunpack.c.0.s8 %v11060
      %v11062 = vlaneseq
      %v11063 = vshrl.u32 %v11062, 7
      %v11064 = vsub.s32 %v11061, %v11063
      %v11065 = vrot.slane %v10294, %v11064
      %v11066 = vcombine.low %v10302, %v10301
      %v11067 = vcombine.low %v10303, %v10311
      %v11069 = vunpack.c.l.s4 1983009808
      %v11070 = vunpack.c.0.s8 %v11069
      %v11071 = vlaneseq
      %v11072 = vshrl.u32 %v11071, 7
      %v11073 = vsub.s32 %v11070, %v11072
      %v11074 = vrot.slane %v11066, %v11073
      %v11076 = vunpack.c.l.s4 1983009808
      %v11077 = vunpack.c.0.s8 %v11076
      %v11078 = vlaneseq
      %v11079 = vshrl.u32 %v11078, 7
      %v11080 = vsub.s32 %v11077, %v11079
      %v11081 = vrot.slane %v11067, %v11080
      %v11082 = vcombine.low %v11074, %v11081
      %v11083 = vcombine.low %v10319, %v10318
      %v11084 = vcombine.low %v10320, %v10328
      %v11086 = vunpack.c.l.s4 1983009808
      %v11087 = vunpack.c.0.s8 %v11086
      %v11088 = vlaneseq
      %v11089 = vshrl.u32 %v11088, 7
      %v11090 = vsub.s32 %v11087, %v11089
      %v11091 = vrot.slane %v11083, %v11090
      %v11093 = vunpack.c.l.s4 1983009808
      %v11094 = vunpack.c.0.s8 %v11093
      %v11095 = vlaneseq
      %v11096 = vshrl.u32 %v11095, 7
      %v11097 = vsub.s32 %v11094, %v11096
      %v11098 = vrot.slane %v11084, %v11097
      %v11099 = vcombine.low %v11091, %v11098
      %v11101 = vunpack.c.l.s4 1983009808
      %v11102 = vunpack.c.0.s8 %v11101
      %v11103 = vlaneseq
      %v11104 = vshrl.u32 %v11103, 7
      %v11105 = vsub.s32 %v11102, %v11104
      %v11106 = vrot.slane %v10336, %v11105
      %v11107 = vcombine.low %v10335, %v10337
      %v11108 = vcombine.low %v10345, %v10353
      %v11110 = vunpack.c.l.s4 1983009808
      %v11111 = vunpack.c.0.s8 %v11110
      %v11112 = vlaneseq
      %v11113 = vshrl.u32 %v11112, 7
      %v11114 = vsub.s32 %v11111, %v11113
      %v11115 = vrot.slane %v11107, %v11114
      %v11117 = vunpack.c.l.s4 1983009808
      %v11118 = vunpack.c.0.s8 %v11117
      %v11119 = vlaneseq
      %v11120 = vshrl.u32 %v11119, 7
      %v11121 = vsub.s32 %v11118, %v11120
      %v11122 = vrot.slane %v11108, %v11121
      %v11123 = vcombine.low %v11115, %v11122
      %v11124 = vcombine.low %v10352, %v10354
      %v11125 = vcombine.low %v10362, %v10370
      %v11127 = vunpack.c.l.s4 1983009808
      %v11128 = vunpack.c.0.s8 %v11127
      %v11129 = vlaneseq
      %v11130 = vshrl.u32 %v11129, 7
      %v11131 = vsub.s32 %v11128, %v11130
      %v11132 = vrot.slane %v11124, %v11131
      %v11134 = vunpack.c.l.s4 1983009808
      %v11135 = vunpack.c.0.s8 %v11134
      %v11136 = vlaneseq
      %v11137 = vshrl.u32 %v11136, 7
      %v11138 = vsub.s32 %v11135, %v11137
      %v11139 = vrot.slane %v11125, %v11138
      %v11140 = vcombine.low %v11132, %v11139
      %v11142 = vunpack.c.l.s4 1983009808
      %v11143 = vunpack.c.0.s8 %v11142
      %v11144 = vlaneseq
      %v11145 = vshrl.u32 %v11144, 7
      %v11146 = vsub.s32 %v11143, %v11145
      %v11147 = vrot.slane %v10369, %v11146
      %v11148 = vcombine.low %v10371, %v10379
      %v11149 = vcombine.low %v10387, %v10386
      %v11151 = vunpack.c.l.s4 1983009808
      %v11152 = vunpack.c.0.s8 %v11151
      %v11153 = vlaneseq
      %v11154 = vshrl.u32 %v11153, 7
      %v11155 = vsub.s32 %v11152, %v11154
      %v11156 = vrot.slane %v11148, %v11155
      %v11158 = vunpack.c.l.s4 1983009808
      %v11159 = vunpack.c.0.s8 %v11158
      %v11160 = vlaneseq
      %v11161 = vshrl.u32 %v11160, 7
      %v11162 = vsub.s32 %v11159, %v11161
      %v11163 = vrot.slane %v11149, %v11162
      %v11164 = vcombine.low %v11156, %v11163
      %v11165 = vcombine.low %v10388, %v10396
      %v11166 = vcombine.low %v10404, %v10403
      %v11168 = vunpack.c.l.s4 1983009808
      %v11169 = vunpack.c.0.s8 %v11168
      %v11170 = vlaneseq
      %v11171 = vshrl.u32 %v11170, 7
      %v11172 = vsub.s32 %v11169, %v11171
      %v11173 = vrot.slane %v11165, %v11172
      %v11175 = vunpack.c.l.s4 1983009808
      %v11176 = vunpack.c.0.s8 %v11175
      %v11177 = vlaneseq
      %v11178 = vshrl.u32 %v11177, 7
      %v11179 = vsub.s32 %v11176, %v11178
      %v11180 = vrot.slane %v11166, %v11179
      %v11181 = vcombine.low %v11173, %v11180
      %v11183 = vunpack.c.l.s4 1983009808
      %v11184 = vunpack.c.0.s8 %v11183
      %v11185 = vlaneseq
      %v11186 = vshrl.u32 %v11185, 7
      %v11187 = vsub.s32 %v11184, %v11186
      %v11188 = vrot.slane %v10405, %v11187
      %v11189 = vcombine.low %v10413, %v10421
      %v11190 = vcombine.low %v10420, %v10422
      %v11192 = vunpack.c.l.s4 1983009808
      %v11193 = vunpack.c.0.s8 %v11192
      %v11194 = vlaneseq
      %v11195 = vshrl.u32 %v11194, 7
      %v11196 = vsub.s32 %v11193, %v11195
      %v11197 = vrot.slane %v11189, %v11196
      %v11199 = vunpack.c.l.s4 1983009808
      %v11200 = vunpack.c.0.s8 %v11199
      %v11201 = vlaneseq
      %v11202 = vshrl.u32 %v11201, 7
      %v11203 = vsub.s32 %v11200, %v11202
      %v11204 = vrot.slane %v11190, %v11203
      %v11205 = vcombine.low %v11197, %v11204
      %v11206 = vcombine.low %v10430, %v10438
      %v11207 = vcombine.low %v10437, %v10439
      %v11209 = vunpack.c.l.s4 1983009808
      %v11210 = vunpack.c.0.s8 %v11209
      %v11211 = vlaneseq
      %v11212 = vshrl.u32 %v11211, 7
      %v11213 = vsub.s32 %v11210, %v11212
      %v11214 = vrot.slane %v11206, %v11213
      %v11216 = vunpack.c.l.s4 1983009808
      %v11217 = vunpack.c.0.s8 %v11216
      %v11218 = vlaneseq
      %v11219 = vshrl.u32 %v11218, 7
      %v11220 = vsub.s32 %v11217, %v11219
      %v11221 = vrot.slane %v11207, %v11220
      %v11222 = vcombine.low %v11214, %v11221
      %v11224 = vunpack.c.l.s4 1983009808
      %v11225 = vunpack.c.0.s8 %v11224
      %v11226 = vlaneseq
      %v11227 = vshrl.u32 %v11226, 7
      %v11228 = vsub.s32 %v11225, %v11227
      %v11229 = vrot.slane %v10447, %v11228
      %v11230 = vcombine.low %v10455, %v10454
      %v11231 = vcombine.low %v10456, %v10464
      %v11233 = vunpack.c.l.s4 1983009808
      %v11234 = vunpack.c.0.s8 %v11233
      %v11235 = vlaneseq
      %v11236 = vshrl.u32 %v11235, 7
      %v11237 = vsub.s32 %v11234, %v11236
      %v11238 = vrot.slane %v11230, %v11237
      %v11240 = vunpack.c.l.s4 1983009808
      %v11241 = vunpack.c.0.s8 %v11240
      %v11242 = vlaneseq
      %v11243 = vshrl.u32 %v11242, 7
      %v11244 = vsub.s32 %v11241, %v11243
      %v11245 = vrot.slane %v11231, %v11244
      %v11246 = vcombine.low %v11238, %v11245
      %v11247 = vcombine.low %v10472, %v10471
      %v11248 = vcombine.low %v10473, %v10480
      %v11250 = vunpack.c.l.s4 1983009808
      %v11251 = vunpack.c.0.s8 %v11250
      %v11252 = vlaneseq
      %v11253 = vshrl.u32 %v11252, 7
      %v11254 = vsub.s32 %v11251, %v11253
      %v11255 = vrot.slane %v11247, %v11254
      %v11257 = vunpack.c.l.s4 1983009808
      %v11258 = vunpack.c.0.s8 %v11257
      %v11259 = vlaneseq
      %v11260 = vshrl.u32 %v11259, 7
      %v11261 = vsub.s32 %v11258, %v11260
      %v11262 = vrot.slane %v11248, %v11261
      %v11263 = vcombine.low %v11255, %v11262
      %v11265 = vunpack.c.l.s4 1983009808
      %v11266 = vunpack.c.0.s8 %v11265
      %v11267 = vlaneseq
      %v11268 = vshrl.u32 %v11267, 7
      %v11269 = vsub.s32 %v11266, %v11268
      %v11270 = vrot.slane %v10481, %v11269
      %v11325 = vsel %vm10524, %v10549, 0.0
      %v11326 = vsel %vm10525, %v10566, 0.0
      %v11327 = vsel %vm10526, %v10573, 0.0
      %v11328 = vsel %vm10527, %v10590, 0.0
      %v11329 = vsel %vm10528, %v10607, 0.0
      %v11330 = vsel %vm10529, %v10614, 0.0
      %v11331 = vsel %vm10527, %v10631, 0.0
      %v11332 = vsel %vm10528, %v10648, 0.0
      %v11333 = vsel %vm10529, %v10655, 0.0
      %v11334 = vsel %vm10527, %v10672, 0.0
      %v11335 = vsel %vm10528, %v10689, 0.0
      %v11336 = vsel %vm10529, %v10696, 0.0
      %v11337 = vsel %vm10527, %v10713, 0.0
      %v11338 = vsel %vm10528, %v10730, 0.0
      %v11339 = vsel %vm10529, %v10737, 0.0
      %v11340 = vsel %vm10527, %v10754, 0.0
      %v11341 = vsel %vm10528, %v10771, 0.0
      %v11342 = vsel %vm10529, %v10778, 0.0
      %v11343 = vsel %vm10527, %v10795, 0.0
      %v11344 = vsel %vm10528, %v10812, 0.0
      %v11345 = vsel %vm10529, %v10819, 0.0
      %v11346 = vsel %vm10527, %v10836, 0.0
      %v11347 = vsel %vm10528, %v10853, 0.0
      %v11348 = vsel %vm10529, %v10860, 0.0
      %v11349 = vsel %vm10527, %v10877, 0.0
      %v11350 = vsel %vm10528, %v10894, 0.0
      %v11351 = vsel %vm10529, %v10901, 0.0
      %v11352 = vsel %vm10527, %v10918, 0.0
      %v11353 = vsel %vm10528, %v10935, 0.0
      %v11354 = vsel %vm10529, %v10942, 0.0
      %v11355 = vsel %vm10527, %v10959, 0.0
      %v11356 = vsel %vm10528, %v10976, 0.0
      %v11357 = vsel %vm10529, %v10983, 0.0
      %v11358 = vsel %vm10527, %v11000, 0.0
      %v11359 = vsel %vm10528, %v11017, 0.0
      %v11360 = vsel %vm10529, %v11024, 0.0
      %v11361 = vsel %vm10527, %v11041, 0.0
      %v11362 = vsel %vm10528, %v11058, 0.0
      %v11363 = vsel %vm10529, %v11065, 0.0
      %v11364 = vsel %vm10527, %v11082, 0.0
      %v11365 = vsel %vm10528, %v11099, 0.0
      %v11366 = vsel %vm10529, %v11106, 0.0
      %v11367 = vsel %vm10527, %v11123, 0.0
      %v11368 = vsel %vm10528, %v11140, 0.0
      %v11369 = vsel %vm10529, %v11147, 0.0
      %v11370 = vsel %vm10527, %v11164, 0.0
      %v11371 = vsel %vm10528, %v11181, 0.0
      %v11372 = vsel %vm10529, %v11188, 0.0
      %v11373 = vsel %vm10527, %v11205, 0.0
      %v11374 = vsel %vm10528, %v11222, 0.0
      %v11375 = vsel %vm10529, %v11229, 0.0
      %v11376 = vsel %vm10530, %v11246, 0.0
      %v11377 = vsel %vm10531, %v11263, 0.0
      %v11378 = vsel %vm10532, %v11270, 0.0
      %v11379 = vpack.c.bf16 %v11326, %v11325
      %v11380 = vpack.c.bf16 %v11327, %v11327
      %v11381 = vpack.c.bf16 %v11329, %v11328
      %v11382 = vpack.c.bf16 %v11330, %v11330
      %v11383 = vpack.c.bf16 %v11332, %v11331
      %v11384 = vpack.c.bf16 %v11333, %v11333
      %v11385 = vpack.c.bf16 %v11335, %v11334
      %v11386 = vpack.c.bf16 %v11336, %v11336
      %v11387 = vpack.c.bf16 %v11338, %v11337
      %v11388 = vpack.c.bf16 %v11339, %v11339
      %v11389 = vpack.c.bf16 %v11341, %v11340
      %v11390 = vpack.c.bf16 %v11342, %v11342
      %v11391 = vpack.c.bf16 %v11344, %v11343
      %v11392 = vpack.c.bf16 %v11345, %v11345
      %v11393 = vpack.c.bf16 %v11347, %v11346
      %v11394 = vpack.c.bf16 %v11348, %v11348
      %v11395 = vpack.c.bf16 %v11350, %v11349
      %v11396 = vpack.c.bf16 %v11351, %v11351
      %v11397 = vpack.c.bf16 %v11353, %v11352
      %v11398 = vpack.c.bf16 %v11354, %v11354
      %v11399 = vpack.c.bf16 %v11356, %v11355
      %v11400 = vpack.c.bf16 %v11357, %v11357
      %v11401 = vpack.c.bf16 %v11359, %v11358
      %v11402 = vpack.c.bf16 %v11360, %v11360
      %v11403 = vpack.c.bf16 %v11362, %v11361
      %v11404 = vpack.c.bf16 %v11363, %v11363
      %v11405 = vpack.c.bf16 %v11365, %v11364
      %v11406 = vpack.c.bf16 %v11366, %v11366
      %v11407 = vpack.c.bf16 %v11368, %v11367
      %v11408 = vpack.c.bf16 %v11369, %v11369
      %v11409 = vpack.c.bf16 %v11371, %v11370
      %v11410 = vpack.c.bf16 %v11372, %v11372
      %v11411 = vpack.c.bf16 %v11374, %v11373
      %v11412 = vpack.c.bf16 %v11375, %v11375
      %v11413 = vpack.c.bf16 %v11377, %v11376
      %v11414 = vpack.c.bf16 %v11378, %v11378
      %v11415 = vld [vmem:[%s3] sm:$0xf]
      %v11416 = vld [vmem:[%s3 + $0x4] sm:$0xf]
      %v11417 = vld [vmem:[%s3 + $0x8] sm:$0xf]
      %v11418 = vld [vmem:[%s3 + $0xc] sm:$0xf]
      %v11419 = vld [vmem:[%s3 + $0x10] sm:$0xf]
      %v11420 = vld [vmem:[%s3 + $0x14] sm:$0xf]
      %v11421 = vld [vmem:[%s3 + $0x18] sm:$0xf]
      %v11422 = vld [vmem:[%s3 + $0x1c] sm:$0xf]
      %v11423 = vld [vmem:[%s3 + $0x20] sm:$0xf]
      %v11424 = vld [vmem:[%s3 + $0x24] sm:$0xf]
      %v11425 = vld [vmem:[%s3 + $0x28] sm:$0xf]
      %v11426 = vld [vmem:[%s3 + $0x2c] sm:$0xf]
      %v11427 = vld [vmem:[%s3 + $0x30] sm:$0xf]
      %v11428 = vld [vmem:[%s3 + $0x34] sm:$0xf]
      %v11429 = vld [vmem:[%s3 + $0x38] sm:$0xf]
      %v11430 = vld [vmem:[%s3 + $0x3c] sm:$0xf]
      %v11431 = vld [vmem:[%s3 + $0x40] sm:$0xf]
      %v11432 = vld [vmem:[%s3 + $0x44] sm:$0xf]
      %v11433 = vld [vmem:[%s3 + $0x48] sm:$0xf]
      %v11434 = vld [vmem:[%s3 + $0x4c] sm:$0xf]
      %v11435 = vld [vmem:[%s3 + $0x50] sm:$0xf]
      %v11436 = vld [vmem:[%s3 + $0x54] sm:$0xf]
      %v11437 = vld [vmem:[%s3 + $0x58] sm:$0xf]
      %v11438 = vld [vmem:[%s3 + $0x5c] sm:$0xf]
      %v11439 = vld [vmem:[%s3 + $0x60] sm:$0xf]
      %v11440 = vld [vmem:[%s3 + $0x64] sm:$0xf]
      %v11441 = vld [vmem:[%s3 + $0x68] sm:$0xf]
      %v11442 = vld [vmem:[%s3 + $0x6c] sm:$0xf]
      %v11443 = vld [vmem:[%s3 + $0x70] sm:$0xf]
      %v11444 = vld [vmem:[%s3 + $0x74] sm:$0xf]
      %v11445 = vld [vmem:[%s3 + $0x78] sm:$0xf]
      %v11446 = vld [vmem:[%s3 + $0x7c] sm:$0xf]
      %v11447 = vld [vmem:[%s3 + $0x80] sm:$0xf]
      %v11448 = vld [vmem:[%s3 + $0x84] sm:$0xf]
      %v11449 = vld [vmem:[%s3 + $0x88] sm:$0xf]
      %v11450 = vld [vmem:[%s3 + $0x8c] sm:$0xf]
      %v11451 = vld [vmem:[%s3 + $0x90] sm:$0xf]
      %v11452 = vld [vmem:[%s3 + $0x94] sm:$0xf]
      %v11453 = vld [vmem:[%s3 + $0x98] sm:$0xf]
      %v11454 = vld [vmem:[%s3 + $0x9c] sm:$0xf]
      %v11455 = vld [vmem:[%s3 + $0xa0] sm:$0xf]
      %v11456 = vld [vmem:[%s3 + $0xa4] sm:$0xf]
      %v11457 = vld [vmem:[%s3 + $0xa8] sm:$0xf]
      %v11458 = vld [vmem:[%s3 + $0xac] sm:$0xf]
      %v11459 = vld [vmem:[%s3 + $0xb0] sm:$0xf]
      %v11460 = vld [vmem:[%s3 + $0xb4] sm:$0xf]
      %v11461 = vld [vmem:[%s3 + $0xb8] sm:$0xf]
      %v11462 = vld [vmem:[%s3 + $0xbc] sm:$0xf]
      %vm11463 = vsmask.f32 7424
      %v11465 = vshrl.u32 %v11379, 16
      %v11467 = vshll.u32 %v11379, 16
      %v11469 = vrot.slane %v11467, 1
      %v11470 = vor.u32 %v11465, %v11469
      %v11472 = vshll.u32 %v11380, 16
      %v11474 = vrot.slane %v11472, 1
      %v11475 = vsel %vm11463, %v11470, %v11474
      %v11477 = vshrl.u32 %v11381, 16
      %v11479 = vshll.u32 %v11381, 16
      %v11481 = vrot.slane %v11479, 1
      %v11482 = vor.u32 %v11477, %v11481
      %v11484 = vshll.u32 %v11382, 16
      %v11486 = vrot.slane %v11484, 1
      %v11487 = vsel %vm11463, %v11482, %v11486
      %v11489 = vshrl.u32 %v11383, 16
      %v11491 = vshll.u32 %v11383, 16
      %v11493 = vrot.slane %v11491, 1
      %v11494 = vor.u32 %v11489, %v11493
      %v11496 = vshll.u32 %v11384, 16
      %v11498 = vrot.slane %v11496, 1
      %v11499 = vsel %vm11463, %v11494, %v11498
      %v11501 = vshrl.u32 %v11385, 16
      %v11503 = vshll.u32 %v11385, 16
      %v11505 = vrot.slane %v11503, 1
      %v11506 = vor.u32 %v11501, %v11505
      %v11508 = vshll.u32 %v11386, 16
      %v11510 = vrot.slane %v11508, 1
      %v11511 = vsel %vm11463, %v11506, %v11510
      %v11513 = vshrl.u32 %v11387, 16
      %v11515 = vshll.u32 %v11387, 16
      %v11517 = vrot.slane %v11515, 1
      %v11518 = vor.u32 %v11513, %v11517
      %v11520 = vshll.u32 %v11388, 16
      %v11522 = vrot.slane %v11520, 1
      %v11523 = vsel %vm11463, %v11518, %v11522
      %v11525 = vshrl.u32 %v11389, 16
      %v11527 = vshll.u32 %v11389, 16
      %v11529 = vrot.slane %v11527, 1
      %v11530 = vor.u32 %v11525, %v11529
      %v11532 = vshll.u32 %v11390, 16
      %v11534 = vrot.slane %v11532, 1
      %v11535 = vsel %vm11463, %v11530, %v11534
      %v11537 = vshrl.u32 %v11391, 16
      %v11539 = vshll.u32 %v11391, 16
      %v11541 = vrot.slane %v11539, 1
      %v11542 = vor.u32 %v11537, %v11541
      %v11544 = vshll.u32 %v11392, 16
      %v11546 = vrot.slane %v11544, 1
      %v11547 = vsel %vm11463, %v11542, %v11546
      %v11549 = vshrl.u32 %v11393, 16
      %v11551 = vshll.u32 %v11393, 16
      %v11553 = vrot.slane %v11551, 1
      %v11554 = vor.u32 %v11549, %v11553
      %v11556 = vshll.u32 %v11394, 16
      %v11558 = vrot.slane %v11556, 1
      %v11559 = vsel %vm11463, %v11554, %v11558
      %v11561 = vshrl.u32 %v11395, 16
      %v11563 = vshll.u32 %v11395, 16
      %v11565 = vrot.slane %v11563, 1
      %v11566 = vor.u32 %v11561, %v11565
      %v11568 = vshll.u32 %v11396, 16
      %v11570 = vrot.slane %v11568, 1
      %v11571 = vsel %vm11463, %v11566, %v11570
      %v11573 = vshrl.u32 %v11397, 16
      %v11575 = vshll.u32 %v11397, 16
      %v11577 = vrot.slane %v11575, 1
      %v11578 = vor.u32 %v11573, %v11577
      %v11580 = vshll.u32 %v11398, 16
      %v11582 = vrot.slane %v11580, 1
      %v11583 = vsel %vm11463, %v11578, %v11582
      %v11585 = vshrl.u32 %v11399, 16
      %v11587 = vshll.u32 %v11399, 16
      %v11589 = vrot.slane %v11587, 1
      %v11590 = vor.u32 %v11585, %v11589
      %v11592 = vshll.u32 %v11400, 16
      %v11594 = vrot.slane %v11592, 1
      %v11595 = vsel %vm11463, %v11590, %v11594
      %v11597 = vshrl.u32 %v11401, 16
      %v11599 = vshll.u32 %v11401, 16
      %v11601 = vrot.slane %v11599, 1
      %v11602 = vor.u32 %v11597, %v11601
      %v11604 = vshll.u32 %v11402, 16
      %v11606 = vrot.slane %v11604, 1
      %v11607 = vsel %vm11463, %v11602, %v11606
      %v11609 = vshrl.u32 %v11403, 16
      %v11611 = vshll.u32 %v11403, 16
      %v11613 = vrot.slane %v11611, 1
      %v11614 = vor.u32 %v11609, %v11613
      %v11616 = vshll.u32 %v11404, 16
      %v11618 = vrot.slane %v11616, 1
      %v11619 = vsel %vm11463, %v11614, %v11618
      %v11621 = vshrl.u32 %v11405, 16
      %v11623 = vshll.u32 %v11405, 16
      %v11625 = vrot.slane %v11623, 1
      %v11626 = vor.u32 %v11621, %v11625
      %v11628 = vshll.u32 %v11406, 16
      %v11630 = vrot.slane %v11628, 1
      %v11631 = vsel %vm11463, %v11626, %v11630
      %v11633 = vshrl.u32 %v11407, 16
      %v11635 = vshll.u32 %v11407, 16
      %v11637 = vrot.slane %v11635, 1
      %v11638 = vor.u32 %v11633, %v11637
      %v11640 = vshll.u32 %v11408, 16
      %v11642 = vrot.slane %v11640, 1
      %v11643 = vsel %vm11463, %v11638, %v11642
      %v11645 = vshrl.u32 %v11409, 16
      %v11647 = vshll.u32 %v11409, 16
      %v11649 = vrot.slane %v11647, 1
      %v11650 = vor.u32 %v11645, %v11649
      %v11652 = vshll.u32 %v11410, 16
      %v11654 = vrot.slane %v11652, 1
      %v11655 = vsel %vm11463, %v11650, %v11654
      %v11657 = vshrl.u32 %v11411, 16
      %v11659 = vshll.u32 %v11411, 16
      %v11661 = vrot.slane %v11659, 1
      %v11662 = vor.u32 %v11657, %v11661
      %v11664 = vshll.u32 %v11412, 16
      %v11666 = vrot.slane %v11664, 1
      %v11667 = vsel %vm11463, %v11662, %v11666
      %v11669 = vshrl.u32 %v11413, 16
      %v11671 = vshll.u32 %v11413, 16
      %v11673 = vrot.slane %v11671, 1
      %v11674 = vor.u32 %v11669, %v11673
      %v11676 = vshll.u32 %v11414, 16
      %v11678 = vrot.slane %v11676, 1
      %v11679 = vsel %vm11463, %v11674, %v11678
      %s11698 = scalar_lea.vmem %s3, 192
      %v11699 = vld [vmem:[%s11698] sm:$0xf]
      %v11700 = vld [vmem:[%s11698 + $0x4] sm:$0xf]
      %v11701 = vld [vmem:[%s11698 + $0x8] sm:$0xf]
      %v11702 = vld [vmem:[%s11698 + $0xc] sm:$0xf]
      %v11703 = vld [vmem:[%s11698 + $0x10] sm:$0xf]
      %v11704 = vld [vmem:[%s11698 + $0x14] sm:$0xf]
      %v11705 = vld [vmem:[%s11698 + $0x18] sm:$0xf]
      %v11706 = vld [vmem:[%s11698 + $0x1c] sm:$0xf]
      %v11707 = vld [vmem:[%s11698 + $0x20] sm:$0xf]
      %v11708 = vld [vmem:[%s11698 + $0x24] sm:$0xf]
      %v11709 = vld [vmem:[%s11698 + $0x28] sm:$0xf]
      %v11710 = vld [vmem:[%s11698 + $0x2c] sm:$0xf]
      %v11711 = vld [vmem:[%s11698 + $0x30] sm:$0xf]
      %v11712 = vld [vmem:[%s11698 + $0x34] sm:$0xf]
      %v11713 = vld [vmem:[%s11698 + $0x38] sm:$0xf]
      %v11714 = vld [vmem:[%s11698 + $0x3c] sm:$0xf]
      %v11715 = vld [vmem:[%s11698 + $0x40] sm:$0xf]
      %v11716 = vld [vmem:[%s11698 + $0x44] sm:$0xf]
      %v11717 = vld [vmem:[%s11698 + $0x48] sm:$0xf]
      %v11718 = vld [vmem:[%s11698 + $0x4c] sm:$0xf]
      %v11719 = vld [vmem:[%s11698 + $0x50] sm:$0xf]
      %v11720 = vld [vmem:[%s11698 + $0x54] sm:$0xf]
      %v11721 = vld [vmem:[%s11698 + $0x58] sm:$0xf]
      %v11722 = vld [vmem:[%s11698 + $0x5c] sm:$0xf]
      %v11723 = vld [vmem:[%s11698 + $0x60] sm:$0xf]
      %v11724 = vld [vmem:[%s11698 + $0x64] sm:$0xf]
      %v11725 = vld [vmem:[%s11698 + $0x68] sm:$0xf]
      %v11726 = vld [vmem:[%s11698 + $0x6c] sm:$0xf]
      %v11727 = vld [vmem:[%s11698 + $0x70] sm:$0xf]
      %v11728 = vld [vmem:[%s11698 + $0x74] sm:$0xf]
      %v11729 = vld [vmem:[%s11698 + $0x78] sm:$0xf]
      %v11730 = vld [vmem:[%s11698 + $0x7c] sm:$0xf]
      %v11731 = vld [vmem:[%s11698 + $0x80] sm:$0xf]
      %v11732 = vld [vmem:[%s11698 + $0x84] sm:$0xf]
      %v11733 = vld [vmem:[%s11698 + $0x88] sm:$0xf]
      %v11734 = vld [vmem:[%s11698 + $0x8c] sm:$0xf]
      %v11735 = vld [vmem:[%s11698 + $0x90] sm:$0xf]
      %v11736 = vld [vmem:[%s11698 + $0x94] sm:$0xf]
      %v11737 = vld [vmem:[%s11698 + $0x98] sm:$0xf]
      %v11738 = vld [vmem:[%s11698 + $0x9c] sm:$0xf]
      %v11739 = vld [vmem:[%s11698 + $0xa0] sm:$0xf]
      %v11740 = vld [vmem:[%s11698 + $0xa4] sm:$0xf]
      %v11741 = vld [vmem:[%s11698 + $0xa8] sm:$0xf]
      %v11742 = vld [vmem:[%s11698 + $0xac] sm:$0xf]
      %v11743 = vld [vmem:[%s11698 + $0xb0] sm:$0xf]
      %v11744 = vld [vmem:[%s11698 + $0xb4] sm:$0xf]
      %v11745 = vld [vmem:[%s11698 + $0xb8] sm:$0xf]
      %v11746 = vld [vmem:[%s11698 + $0xbc] sm:$0xf]
      %v11795 = vunpack.c.l.b16 %v11699
      %v11796 = vunpack.c.l.b16 %v11700
      %v11797 = vunpack.c.l.b16 %v11701
      %v11798 = vunpack.c.l.b16 %v11702
      %v11799 = vunpack.c.l.b16 %v11703
      %v11800 = vunpack.c.l.b16 %v11704
      %v11801 = vunpack.c.l.b16 %v11705
      %v11802 = vunpack.c.l.b16 %v11706
      %v11803 = vunpack.c.l.b16 %v11707
      %v11804 = vunpack.c.l.b16 %v11708
      %v11805 = vunpack.c.l.b16 %v11709
      %v11806 = vunpack.c.l.b16 %v11710
      %v11807 = vunpack.c.l.b16 %v11711
      %v11808 = vunpack.c.l.b16 %v11712
      %v11809 = vunpack.c.l.b16 %v11713
      %v11810 = vunpack.c.l.b16 %v11714
      %v11811 = vunpack.c.l.b16 %v11715
      %v11812 = vunpack.c.l.b16 %v11716
      %v11813 = vunpack.c.l.b16 %v11717
      %v11814 = vunpack.c.l.b16 %v11718
      %v11815 = vunpack.c.l.b16 %v11719
      %v11816 = vunpack.c.l.b16 %v11720
      %v11817 = vunpack.c.l.b16 %v11721
      %v11818 = vunpack.c.l.b16 %v11722
      %v11819 = vunpack.c.l.b16 %v11723
      %v11820 = vunpack.c.l.b16 %v11724
      %v11821 = vunpack.c.l.b16 %v11725
      %v11822 = vunpack.c.l.b16 %v11726
      %v11823 = vunpack.c.l.b16 %v11727
      %v11824 = vunpack.c.l.b16 %v11728
      %v11825 = vunpack.c.l.b16 %v11729
      %v11826 = vunpack.c.l.b16 %v11730
      %v11827 = vunpack.c.l.b16 %v11731
      %v11828 = vunpack.c.l.b16 %v11732
      %v11829 = vunpack.c.l.b16 %v11733
      %v11830 = vunpack.c.l.b16 %v11734
      %v11831 = vunpack.c.l.b16 %v11735
      %v11832 = vunpack.c.l.b16 %v11736
      %v11833 = vunpack.c.l.b16 %v11737
      %v11834 = vunpack.c.l.b16 %v11738
      %v11835 = vunpack.c.l.b16 %v11739
      %v11836 = vunpack.c.l.b16 %v11740
      %v11837 = vunpack.c.l.b16 %v11741
      %v11838 = vunpack.c.l.b16 %v11742
      %v11839 = vunpack.c.l.b16 %v11743
      %v11840 = vunpack.c.l.b16 %v11744
      %v11841 = vunpack.c.l.b16 %v11745
      %v11842 = vunpack.c.l.b16 %v11746
      %v11843 = vpack.c.b16 %v11796, %v11795
      %v11844 = vpack.c.b16 %v11798, %v11797
      %v11845 = vpack.c.b16 %v11800, %v11799
      %v11846 = vpack.c.b16 %v11802, %v11801
      %v11847 = vpack.c.b16 %v11804, %v11803
      %v11848 = vpack.c.b16 %v11806, %v11805
      %v11849 = vpack.c.b16 %v11808, %v11807
      %v11850 = vpack.c.b16 %v11810, %v11809
      %v11851 = vpack.c.b16 %v11812, %v11811
      %v11852 = vpack.c.b16 %v11814, %v11813
      %v11853 = vpack.c.b16 %v11816, %v11815
      %v11854 = vpack.c.b16 %v11818, %v11817
      %v11855 = vpack.c.b16 %v11820, %v11819
      %v11856 = vpack.c.b16 %v11822, %v11821
      %v11857 = vpack.c.b16 %v11824, %v11823
      %v11858 = vpack.c.b16 %v11826, %v11825
      %v11859 = vpack.c.b16 %v11828, %v11827
      %v11860 = vpack.c.b16 %v11830, %v11829
      %v11861 = vpack.c.b16 %v11832, %v11831
      %v11862 = vpack.c.b16 %v11834, %v11833
      %v11863 = vpack.c.b16 %v11836, %v11835
      %v11864 = vpack.c.b16 %v11838, %v11837
      %v11865 = vpack.c.b16 %v11840, %v11839
      %v11866 = vpack.c.b16 %v11842, %v11841
      %11891 = vmatprep.subr.bf16.mxu0 0
      %11892 = vmatpush1.bf16.msra.mxu0 %v11843
      %11893 = vmatprep.subr.bf16.mxu0 0
      %11894 = vmatpush1.bf16.msra.mxu0 %v11844
      %11895 = vmatprep.subr.bf16.mxu0 0
      %11896 = vmatpush1.bf16.msra.mxu0 %v11845
      %11897 = vmatprep.subr.bf16.mxu0 0
      %11898 = vmatpush1.bf16.msra.mxu0 %v11846
      %11899 = vmatprep.subr.bf16.mxu0 0
      %11900 = vmatpush1.bf16.msra.mxu0 %v11847
      %11901 = vmatprep.subr.bf16.mxu0 0
      %11902 = vmatpush1.bf16.msra.mxu0 %v11848
      %11903 = vmatprep.subr.bf16.mxu0 0
      %11904 = vmatpush1.bf16.msra.mxu0 %v11849
      %11905 = vmatprep.subr.bf16.mxu0 0
      %11906 = vmatpush1.bf16.msra.mxu0 %v11850
      %11907 = vmatprep.subr.bf16.mxu0 0
      %11908 = vmatpush1.bf16.msra.mxu0 %v11851
      %11909 = vmatprep.subr.bf16.mxu0 0
      %11910 = vmatpush1.bf16.msra.mxu0 %v11852
      %11911 = vmatprep.subr.bf16.mxu0 0
      %11912 = vmatpush1.bf16.msra.mxu0 %v11853
      %11913 = vmatprep.subr.bf16.mxu0 0
      %11914 = vmatpush1.bf16.msra.mxu0 %v11854
      %11915 = vmatprep.subr.bf16.mxu0 0
      %11916 = vmatpush1.bf16.msra.mxu0 %v11855
      %11917 = vmatprep.subr.bf16.mxu0 0
      %11918 = vmatpush1.bf16.msra.mxu0 %v11856
      %11919 = vmatprep.subr.bf16.mxu0 0
      %11920 = vmatpush1.bf16.msra.mxu0 %v11857
      %11921 = vmatprep.subr.bf16.mxu0 0
      %11922 = vmatpush1.bf16.msra.mxu0 %v11858
      %11923 = vmatprep.mubr.bf16.mxu0 %v11487
      %11924 = vmatmul.mubr.bf16.gmra.mrb[0].mxu0 %v11475
      %v11925 = vpop.f32.mrb[0].mxu0
      %v11926 = vadd.f32 0.0, %v11925
      %v11927 = vpop.f32.mrb[0].mxu0
      %v11928 = vpop.f32.mrb[0].mxu0
      %v11929 = vadd.f32 0.0, %v11928
      %v11930 = vpop.f32.mrb[0].mxu0
      %11931 = vmatprep.mubr.bf16.mxu0 %v11499
      %11932 = vmatmul.mubr.bf16.gmra.mrb[0].mxu0 %v11487
      %v11933 = vpop.f32.mrb[0].mxu0
      %v11934 = vadd.f32 0.0, %v11933
      %v11935 = vpop.f32.mrb[0].mxu0
      %v11936 = vpop.f32.mrb[0].mxu0
      %v11937 = vadd.f32 0.0, %v11936
      %v11938 = vpop.f32.mrb[0].mxu0
      %11939 = vmatprep.mubr.bf16.mxu0 %v11511
      %11940 = vmatmul.mubr.bf16.gmra.mrb[0].mxu0 %v11499
      %v11941 = vpop.f32.mrb[0].mxu0
      %v11942 = vadd.f32 0.0, %v11941
      %v11943 = vpop.f32.mrb[0].mxu0
      %v11944 = vpop.f32.mrb[0].mxu0
      %v11945 = vadd.f32 0.0, %v11944
      %v11946 = vpop.f32.mrb[0].mxu0
      %11947 = vmatprep.mubr.bf16.mxu0 %v11523
      %11948 = vmatmul.mubr.bf16.gmra.mrb[0].mxu0 %v11511
      %v11949 = vpop.f32.mrb[0].mxu0
      %v11950 = vadd.f32 0.0, %v11949
      %v11951 = vpop.f32.mrb[0].mxu0
      %v11952 = vpop.f32.mrb[0].mxu0
      %v11953 = vadd.f32 0.0, %v11952
      %v11954 = vpop.f32.mrb[0].mxu0
      %11955 = vmatprep.mubr.bf16.mxu0 %v11535
      %11956 = vmatmul.mubr.bf16.gmra.mrb[0].mxu0 %v11523
      %v11957 = vpop.f32.mrb[0].mxu0
      %v11958 = vadd.f32 0.0, %v11957
      %v11959 = vpop.f32.mrb[0].mxu0
      %v11960 = vpop.f32.mrb[0].mxu0
      %v11961 = vadd.f32 0.0, %v11960
      %v11962 = vpop.f32.mrb[0].mxu0
      %11963 = vmatprep.mubr.bf16.mxu0 %v11547
      %11964 = vmatmul.mubr.bf16.gmra.mrb[0].mxu0 %v11535
      %v11965 = vpop.f32.mrb[0].mxu0
      %v11966 = vadd.f32 0.0, %v11965
      %v11967 = vpop.f32.mrb[0].mxu0
      %v11968 = vpop.f32.mrb[0].mxu0
      %v11969 = vadd.f32 0.0, %v11968
      %v11970 = vpop.f32.mrb[0].mxu0
      %11971 = vmatprep.mubr.bf16.mxu0 %v11559
      %11972 = vmatmul.mubr.bf16.gmra.mrb[0].mxu0 %v11547
      %v11973 = vpop.f32.mrb[0].mxu0
      %v11974 = vadd.f32 0.0, %v11973
      %v11975 = vpop.f32.mrb[0].mxu0
      %v11976 = vpop.f32.mrb[0].mxu0
      %v11977 = vadd.f32 0.0, %v11976
      %v11978 = vpop.f32.mrb[0].mxu0
      %11979 = vmatprep.mubr.bf16.mxu0 %v11571
      %11980 = vmatmul.mubr.bf16.gmra.mrb[0].mxu0 %v11559
      %v11981 = vpop.f32.mrb[0].mxu0
      %v11982 = vadd.f32 0.0, %v11981
      %v11983 = vpop.f32.mrb[0].mxu0
      %v11984 = vpop.f32.mrb[0].mxu0
      %v11985 = vadd.f32 0.0, %v11984
      %v11986 = vpop.f32.mrb[0].mxu0
      %11987 = vmatprep.mubr.bf16.mxu0 %v11583
      %11988 = vmatmul.mubr.bf16.gmra.mrb[0].mxu0 %v11571
      %v11989 = vpop.f32.mrb[0].mxu0
      %v11990 = vadd.f32 0.0, %v11989
      %v11991 = vpop.f32.mrb[0].mxu0
      %v11992 = vpop.f32.mrb[0].mxu0
      %v11993 = vadd.f32 0.0, %v11992
      %v11994 = vpop.f32.mrb[0].mxu0
      %11995 = vmatprep.mubr.bf16.mxu0 %v11595
      %11996 = vmatmul.mubr.bf16.gmra.mrb[0].mxu0 %v11583
      %v11997 = vpop.f32.mrb[0].mxu0
      %v11998 = vadd.f32 0.0, %v11997
      %v11999 = vpop.f32.mrb[0].mxu0
      %v12000 = vpop.f32.mrb[0].mxu0
      %v12001 = vadd.f32 0.0, %v12000
      %v12002 = vpop.f32.mrb[0].mxu0
      %12003 = vmatprep.mubr.bf16.mxu0 %v11607
      %12004 = vmatmul.mubr.bf16.gmra.mrb[0].mxu0 %v11595
      %v12005 = vpop.f32.mrb[0].mxu0
      %v12006 = vadd.f32 0.0, %v12005
      %v12007 = vpop.f32.mrb[0].mxu0
      %v12008 = vpop.f32.mrb[0].mxu0
      %v12009 = vadd.f32 0.0, %v12008
      %v12010 = vpop.f32.mrb[0].mxu0
      %12011 = vmatprep.mubr.bf16.mxu0 %v11619
      %12012 = vmatmul.mubr.bf16.gmra.mrb[0].mxu0 %v11607
      %v12013 = vpop.f32.mrb[0].mxu0
      %v12014 = vadd.f32 0.0, %v12013
      %v12015 = vpop.f32.mrb[0].mxu0
      %v12016 = vpop.f32.mrb[0].mxu0
      %v12017 = vadd.f32 0.0, %v12016
      %v12018 = vpop.f32.mrb[0].mxu0
      %12019 = vmatprep.mubr.bf16.mxu0 %v11631
      %12020 = vmatmul.mubr.bf16.gmra.mrb[0].mxu0 %v11619
      %v12021 = vpop.f32.mrb[0].mxu0
      %v12022 = vadd.f32 0.0, %v12021
      %v12023 = vpop.f32.mrb[0].mxu0
      %v12024 = vpop.f32.mrb[0].mxu0
      %v12025 = vadd.f32 0.0, %v12024
      %v12026 = vpop.f32.mrb[0].mxu0
      %12027 = vmatprep.mubr.bf16.mxu0 %v11643
      %12028 = vmatmul.mubr.bf16.gmra.mrb[0].mxu0 %v11631
      %v12029 = vpop.f32.mrb[0].mxu0
      %v12030 = vadd.f32 0.0, %v12029
      %v12031 = vpop.f32.mrb[0].mxu0
      %v12032 = vpop.f32.mrb[0].mxu0
      %v12033 = vadd.f32 0.0, %v12032
      %v12034 = vpop.f32.mrb[0].mxu0
      %12035 = vmatprep.mubr.bf16.mxu0 %v11655
      %12036 = vmatmul.mubr.bf16.gmra.mrb[0].mxu0 %v11643
      %v12037 = vpop.f32.mrb[0].mxu0
      %v12038 = vadd.f32 0.0, %v12037
      %v12039 = vpop.f32.mrb[0].mxu0
      %v12040 = vpop.f32.mrb[0].mxu0
      %v12041 = vadd.f32 0.0, %v12040
      %v12042 = vpop.f32.mrb[0].mxu0
      %12043 = vmatprep.mubr.bf16.mxu0 %v11667
      %12044 = vmatmul.mubr.bf16.gmra.mrb[0].mxu0 %v11655
      %v12045 = vpop.f32.mrb[0].mxu0
      %v12046 = vadd.f32 0.0, %v12045
      %v12047 = vpop.f32.mrb[0].mxu0
      %v12048 = vpop.f32.mrb[0].mxu0
      %v12049 = vadd.f32 0.0, %v12048
      %v12050 = vpop.f32.mrb[0].mxu0
      %12051 = vdwg.mxu0
      %12052 = vmatprep.subr.bf16.mxu0 0
      %12053 = vmatpush1.bf16.msra.mxu0 %v11859
      %12054 = vmatprep.subr.bf16.mxu0 0
      %12055 = vmatpush1.bf16.msra.mxu0 %v11860
      %12056 = vmatprep.subr.bf16.mxu0 0
      %12057 = vmatpush1.bf16.msra.mxu0 %v11861
      %12058 = vmatprep.subr.bf16.mxu0 0
      %12059 = vmatpush1.bf16.msra.mxu0 %v11862
      %12060 = vmatprep.subr.bf16.mxu0 0
      %12061 = vmatpush1.bf16.msra.mxu0 %v11863
      %12062 = vmatprep.subr.bf16.mxu0 0
      %12063 = vmatpush1.bf16.msra.mxu0 %v11864
      %12064 = vmatprep.subr.bf16.mxu0 0
      %12065 = vmatpush1.bf16.msra.mxu0 %v11865
      %12066 = vmatprep.subr.bf16.mxu0 0
      %12067 = vmatpush1.bf16.msra.mxu0 %v11866
      %12068 = vmatprep.subr.bf16.mxu0 0
      %12069 = vmatpush1.bf16.msra.mxu0 0
      %12070 = vmatprep.subr.bf16.mxu0 0
      %12071 = vmatpush1.bf16.msra.mxu0 0
      %12072 = vmatprep.subr.bf16.mxu0 0
      %12073 = vmatpush1.bf16.msra.mxu0 0
      %12074 = vmatprep.subr.bf16.mxu0 0
      %12075 = vmatpush1.bf16.msra.mxu0 0
      %12076 = vmatprep.subr.bf16.mxu0 0
      %12077 = vmatpush1.bf16.msra.mxu0 0
      %12078 = vmatprep.subr.bf16.mxu0 0
      %12079 = vmatpush1.bf16.msra.mxu0 0
      %12080 = vmatprep.subr.bf16.mxu0 0
      %12081 = vmatpush1.bf16.msra.mxu0 0
      %12082 = vmatprep.subr.bf16.mxu0 0
      %12083 = vmatpush1.bf16.msra.mxu0 0
      %12084 = vmatprep.mubr.bf16.mxu0 0
      %12085 = vmatmul.mubr.bf16.gmra.mrb[0].mxu0 %v11499
      %v12086 = vpop.f32.mrb[0].mxu0
      %v12087 = vadd.f32 %v11926, %v12086
      %v12088 = vpop.f32.mrb[0].mxu0
      %v12089 = vpop.f32.mrb[0].mxu0
      %v12090 = vadd.f32 %v11929, %v12089
      %v12091 = vpop.f32.mrb[0].mxu0
      %12092 = vmatprep.mubr.bf16.mxu0 0
      %12093 = vmatmul.mubr.bf16.gmra.mrb[0].mxu0 %v11511
      %v12094 = vpop.f32.mrb[0].mxu0
      %v12095 = vadd.f32 %v11934, %v12094
      %v12096 = vpop.f32.mrb[0].mxu0
      %v12097 = vpop.f32.mrb[0].mxu0
      %v12098 = vadd.f32 %v11937, %v12097
      %v12099 = vpop.f32.mrb[0].mxu0
      %12100 = vmatprep.mubr.bf16.mxu0 0
      %12101 = vmatmul.mubr.bf16.gmra.mrb[0].mxu0 %v11523
      %v12102 = vpop.f32.mrb[0].mxu0
      %v12103 = vadd.f32 %v11942, %v12102
      %v12104 = vpop.f32.mrb[0].mxu0
      %v12105 = vpop.f32.mrb[0].mxu0
      %v12106 = vadd.f32 %v11945, %v12105
      %v12107 = vpop.f32.mrb[0].mxu0
      %12108 = vmatprep.mubr.bf16.mxu0 0
      %12109 = vmatmul.mubr.bf16.gmra.mrb[0].mxu0 %v11535
      %v12110 = vpop.f32.mrb[0].mxu0
      %v12111 = vadd.f32 %v11950, %v12110
      %v12112 = vpop.f32.mrb[0].mxu0
      %v12113 = vpop.f32.mrb[0].mxu0
      %v12114 = vadd.f32 %v11953, %v12113
      %v12115 = vpop.f32.mrb[0].mxu0
      %12116 = vmatprep.mubr.bf16.mxu0 0
      %12117 = vmatmul.mubr.bf16.gmra.mrb[0].mxu0 %v11547
      %v12118 = vpop.f32.mrb[0].mxu0
      %v12119 = vadd.f32 %v11958, %v12118
      %v12120 = vpop.f32.mrb[0].mxu0
      %v12121 = vpop.f32.mrb[0].mxu0
      %v12122 = vadd.f32 %v11961, %v12121
      %v12123 = vpop.f32.mrb[0].mxu0
      %12124 = vmatprep.mubr.bf16.mxu0 0
      %12125 = vmatmul.mubr.bf16.gmra.mrb[0].mxu0 %v11559
      %v12126 = vpop.f32.mrb[0].mxu0
      %v12127 = vadd.f32 %v11966, %v12126
      %v12128 = vpop.f32.mrb[0].mxu0
      %v12129 = vpop.f32.mrb[0].mxu0
      %v12130 = vadd.f32 %v11969, %v12129
      %v12131 = vpop.f32.mrb[0].mxu0
      %12132 = vmatprep.mubr.bf16.mxu0 0
      %12133 = vmatmul.mubr.bf16.gmra.mrb[0].mxu0 %v11571
      %v12134 = vpop.f32.mrb[0].mxu0
      %v12135 = vadd.f32 %v11974, %v12134
      %v12136 = vpop.f32.mrb[0].mxu0
      %v12137 = vpop.f32.mrb[0].mxu0
      %v12138 = vadd.f32 %v11977, %v12137
      %v12139 = vpop.f32.mrb[0].mxu0
      %12140 = vmatprep.mubr.bf16.mxu0 0
      %12141 = vmatmul.mubr.bf16.gmra.mrb[0].mxu0 %v11583
      %v12142 = vpop.f32.mrb[0].mxu0
      %v12143 = vadd.f32 %v11982, %v12142
      %v12144 = vpop.f32.mrb[0].mxu0
      %v12145 = vpop.f32.mrb[0].mxu0
      %v12146 = vadd.f32 %v11985, %v12145
      %v12147 = vpop.f32.mrb[0].mxu0
      %12148 = vmatprep.mubr.bf16.mxu0 0
      %12149 = vmatmul.mubr.bf16.gmra.mrb[0].mxu0 %v11595
      %v12150 = vpop.f32.mrb[0].mxu0
      %v12151 = vadd.f32 %v11990, %v12150
      %v12152 = vpop.f32.mrb[0].mxu0
      %v12153 = vpop.f32.mrb[0].mxu0
      %v12154 = vadd.f32 %v11993, %v12153
      %v12155 = vpop.f32.mrb[0].mxu0
      %12156 = vmatprep.mubr.bf16.mxu0 0
      %12157 = vmatmul.mubr.bf16.gmra.mrb[0].mxu0 %v11607
      %v12158 = vpop.f32.mrb[0].mxu0
      %v12159 = vadd.f32 %v11998, %v12158
      %v12160 = vpop.f32.mrb[0].mxu0
      %v12161 = vpop.f32.mrb[0].mxu0
      %v12162 = vadd.f32 %v12001, %v12161
      %v12163 = vpop.f32.mrb[0].mxu0
      %12164 = vmatprep.mubr.bf16.mxu0 0
      %12165 = vmatmul.mubr.bf16.gmra.mrb[0].mxu0 %v11619
      %v12166 = vpop.f32.mrb[0].mxu0
      %v12167 = vadd.f32 %v12006, %v12166
      %v12168 = vpop.f32.mrb[0].mxu0
      %v12169 = vpop.f32.mrb[0].mxu0
      %v12170 = vadd.f32 %v12009, %v12169
      %v12171 = vpop.f32.mrb[0].mxu0
      %12172 = vmatprep.mubr.bf16.mxu0 0
      %12173 = vmatmul.mubr.bf16.gmra.mrb[0].mxu0 %v11631
      %v12174 = vpop.f32.mrb[0].mxu0
      %v12175 = vadd.f32 %v12014, %v12174
      %v12176 = vpop.f32.mrb[0].mxu0
      %v12177 = vpop.f32.mrb[0].mxu0
      %v12178 = vadd.f32 %v12017, %v12177
      %v12179 = vpop.f32.mrb[0].mxu0
      %12180 = vmatprep.mubr.bf16.mxu0 0
      %12181 = vmatmul.mubr.bf16.gmra.mrb[0].mxu0 %v11643
      %v12182 = vpop.f32.mrb[0].mxu0
      %v12183 = vadd.f32 %v12022, %v12182
      %v12184 = vpop.f32.mrb[0].mxu0
      %v12185 = vpop.f32.mrb[0].mxu0
      %v12186 = vadd.f32 %v12025, %v12185
      %v12187 = vpop.f32.mrb[0].mxu0
      %12188 = vmatprep.mubr.bf16.mxu0 0
      %12189 = vmatmul.mubr.bf16.gmra.mrb[0].mxu0 %v11655
      %v12190 = vpop.f32.mrb[0].mxu0
      %v12191 = vadd.f32 %v12030, %v12190
      %v12192 = vpop.f32.mrb[0].mxu0
      %v12193 = vpop.f32.mrb[0].mxu0
      %v12194 = vadd.f32 %v12033, %v12193
      %v12195 = vpop.f32.mrb[0].mxu0
      %12196 = vmatprep.mubr.bf16.mxu0 0
      %12197 = vmatmul.mubr.bf16.gmra.mrb[0].mxu0 %v11667
      %v12198 = vpop.f32.mrb[0].mxu0
      %v12199 = vadd.f32 %v12038, %v12198
      %v12200 = vpop.f32.mrb[0].mxu0
      %v12201 = vpop.f32.mrb[0].mxu0
      %v12202 = vadd.f32 %v12041, %v12201
      %v12203 = vpop.f32.mrb[0].mxu0
      %12204 = vmatprep.mubr.bf16.mxu0 0
      %12205 = vmatmul.mubr.bf16.gmra.mrb[0].mxu0 %v11679
      %v12206 = vpop.f32.mrb[0].mxu0
      %v12207 = vadd.f32 %v12046, %v12206
      %v12208 = vpop.f32.mrb[0].mxu0
      %v12209 = vpop.f32.mrb[0].mxu0
      %v12210 = vadd.f32 %v12049, %v12209
      %v12211 = vpop.f32.mrb[0].mxu0
      %12212 = vdwg.mxu0
      %v12261 = vunpack.c.l.b16 %v11415
      %v12262 = vunpack.c.l.b16 %v11416
      %v12263 = vunpack.c.l.b16 %v11417
      %v12264 = vunpack.c.l.b16 %v11418
      %v12265 = vunpack.c.l.b16 %v11419
      %v12266 = vunpack.c.l.b16 %v11420
      %v12267 = vunpack.c.l.b16 %v11421
      %v12268 = vunpack.c.l.b16 %v11422
      %v12269 = vunpack.c.l.b16 %v11423
      %v12270 = vunpack.c.l.b16 %v11424
      %v12271 = vunpack.c.l.b16 %v11425
      %v12272 = vunpack.c.l.b16 %v11426
      %v12273 = vunpack.c.l.b16 %v11427
      %v12274 = vunpack.c.l.b16 %v11428
      %v12275 = vunpack.c.l.b16 %v11429
      %v12276 = vunpack.c.l.b16 %v11430
      %v12277 = vunpack.c.l.b16 %v11431
      %v12278 = vunpack.c.l.b16 %v11432
      %v12279 = vunpack.c.l.b16 %v11433
      %v12280 = vunpack.c.l.b16 %v11434
      %v12281 = vunpack.c.l.b16 %v11435
      %v12282 = vunpack.c.l.b16 %v11436
      %v12283 = vunpack.c.l.b16 %v11437
      %v12284 = vunpack.c.l.b16 %v11438
      %v12285 = vunpack.c.l.b16 %v11439
      %v12286 = vunpack.c.l.b16 %v11440
      %v12287 = vunpack.c.l.b16 %v11441
      %v12288 = vunpack.c.l.b16 %v11442
      %v12289 = vunpack.c.l.b16 %v11443
      %v12290 = vunpack.c.l.b16 %v11444
      %v12291 = vunpack.c.l.b16 %v11445
      %v12292 = vunpack.c.l.b16 %v11446
      %v12293 = vunpack.c.l.b16 %v11447
      %v12294 = vunpack.c.l.b16 %v11448
      %v12295 = vunpack.c.l.b16 %v11449
      %v12296 = vunpack.c.l.b16 %v11450
      %v12297 = vunpack.c.l.b16 %v11451
      %v12298 = vunpack.c.l.b16 %v11452
      %v12299 = vunpack.c.l.b16 %v11453
      %v12300 = vunpack.c.l.b16 %v11454
      %v12301 = vunpack.c.l.b16 %v11455
      %v12302 = vunpack.c.l.b16 %v11456
      %v12303 = vunpack.c.l.b16 %v11457
      %v12304 = vunpack.c.l.b16 %v11458
      %v12305 = vunpack.c.l.b16 %v11459
      %v12306 = vunpack.c.l.b16 %v11460
      %v12307 = vunpack.c.l.b16 %v11461
      %v12308 = vunpack.c.l.b16 %v11462
      %v12309 = vpack.c.b16 %v12262, %v12261
      %v12310 = vpack.c.b16 %v12264, %v12263
      %v12311 = vpack.c.b16 %v12266, %v12265
      %v12312 = vpack.c.b16 %v12268, %v12267
      %v12313 = vpack.c.b16 %v12270, %v12269
      %v12314 = vpack.c.b16 %v12272, %v12271
      %v12315 = vpack.c.b16 %v12274, %v12273
      %v12316 = vpack.c.b16 %v12276, %v12275
      %v12317 = vpack.c.b16 %v12278, %v12277
      %v12318 = vpack.c.b16 %v12280, %v12279
      %v12319 = vpack.c.b16 %v12282, %v12281
      %v12320 = vpack.c.b16 %v12284, %v12283
      %v12321 = vpack.c.b16 %v12286, %v12285
      %v12322 = vpack.c.b16 %v12288, %v12287
      %v12323 = vpack.c.b16 %v12290, %v12289
      %v12324 = vpack.c.b16 %v12292, %v12291
      %v12325 = vpack.c.b16 %v12294, %v12293
      %v12326 = vpack.c.b16 %v12296, %v12295
      %v12327 = vpack.c.b16 %v12298, %v12297
      %v12328 = vpack.c.b16 %v12300, %v12299
      %v12329 = vpack.c.b16 %v12302, %v12301
      %v12330 = vpack.c.b16 %v12304, %v12303
      %v12331 = vpack.c.b16 %v12306, %v12305
      %v12332 = vpack.c.b16 %v12308, %v12307
      %12357 = vmatprep.subr.bf16.mxu0 0
      %12358 = vmatpush1.bf16.msra.mxu0 %v12309
      %12359 = vmatprep.subr.bf16.mxu0 0
      %12360 = vmatpush1.bf16.msra.mxu0 %v12310
      %12361 = vmatprep.subr.bf16.mxu0 0
      %12362 = vmatpush1.bf16.msra.mxu0 %v12311
      %12363 = vmatprep.subr.bf16.mxu0 0
      %12364 = vmatpush1.bf16.msra.mxu0 %v12312
      %12365 = vmatprep.subr.bf16.mxu0 0
      %12366 = vmatpush1.bf16.msra.mxu0 %v12313
      %12367 = vmatprep.subr.bf16.mxu0 0
      %12368 = vmatpush1.bf16.msra.mxu0 %v12314
      %12369 = vmatprep.subr.bf16.mxu0 0
      %12370 = vmatpush1.bf16.msra.mxu0 %v12315
      %12371 = vmatprep.subr.bf16.mxu0 0
      %12372 = vmatpush1.bf16.msra.mxu0 %v12316
      %12373 = vmatprep.subr.bf16.mxu0 0
      %12374 = vmatpush1.bf16.msra.mxu0 %v12317
      %12375 = vmatprep.subr.bf16.mxu0 0
      %12376 = vmatpush1.bf16.msra.mxu0 %v12318
      %12377 = vmatprep.subr.bf16.mxu0 0
      %12378 = vmatpush1.bf16.msra.mxu0 %v12319
      %12379 = vmatprep.subr.bf16.mxu0 0
      %12380 = vmatpush1.bf16.msra.mxu0 %v12320
      %12381 = vmatprep.subr.bf16.mxu0 0
      %12382 = vmatpush1.bf16.msra.mxu0 %v12321
      %12383 = vmatprep.subr.bf16.mxu0 0
      %12384 = vmatpush1.bf16.msra.mxu0 %v12322
      %12385 = vmatprep.subr.bf16.mxu0 0
      %12386 = vmatpush1.bf16.msra.mxu0 %v12323
      %12387 = vmatprep.subr.bf16.mxu0 0
      %12388 = vmatpush1.bf16.msra.mxu0 %v12324
      %12389 = vmatprep.mubr.bf16.mxu0 %v11381
      %12390 = vmatmul.mubr.bf16.gmra.mrb[0].mxu0 %v11379
      %v12391 = vpop.f32.mrb[0].mxu0
      %v12392 = vadd.f32 %v12087, %v12391
      %v12393 = vpop.f32.mrb[0].mxu0
      %v12394 = vpop.f32.mrb[0].mxu0
      %v12395 = vadd.f32 %v12090, %v12394
      %v12396 = vpop.f32.mrb[0].mxu0
      %12397 = vmatprep.mubr.bf16.mxu0 %v11383
      %12398 = vmatmul.mubr.bf16.gmra.mrb[0].mxu0 %v11381
      %v12399 = vpop.f32.mrb[0].mxu0
      %v12400 = vadd.f32 %v12095, %v12399
      %v12401 = vpop.f32.mrb[0].mxu0
      %v12402 = vpop.f32.mrb[0].mxu0
      %v12403 = vadd.f32 %v12098, %v12402
      %v12404 = vpop.f32.mrb[0].mxu0
      %12405 = vmatprep.mubr.bf16.mxu0 %v11385
      %12406 = vmatmul.mubr.bf16.gmra.mrb[0].mxu0 %v11383
      %v12407 = vpop.f32.mrb[0].mxu0
      %v12408 = vadd.f32 %v12103, %v12407
      %v12409 = vpop.f32.mrb[0].mxu0
      %v12410 = vpop.f32.mrb[0].mxu0
      %v12411 = vadd.f32 %v12106, %v12410
      %v12412 = vpop.f32.mrb[0].mxu0
      %12413 = vmatprep.mubr.bf16.mxu0 %v11387
      %12414 = vmatmul.mubr.bf16.gmra.mrb[0].mxu0 %v11385
      %v12415 = vpop.f32.mrb[0].mxu0
      %v12416 = vadd.f32 %v12111, %v12415
      %v12417 = vpop.f32.mrb[0].mxu0
      %v12418 = vpop.f32.mrb[0].mxu0
      %v12419 = vadd.f32 %v12114, %v12418
      %v12420 = vpop.f32.mrb[0].mxu0
      %12421 = vmatprep.mubr.bf16.mxu0 %v11389
      %12422 = vmatmul.mubr.bf16.gmra.mrb[0].mxu0 %v11387
      %v12423 = vpop.f32.mrb[0].mxu0
      %v12424 = vadd.f32 %v12119, %v12423
      %v12425 = vpop.f32.mrb[0].mxu0
      %v12426 = vpop.f32.mrb[0].mxu0
      %v12427 = vadd.f32 %v12122, %v12426
      %v12428 = vpop.f32.mrb[0].mxu0
      %12429 = vmatprep.mubr.bf16.mxu0 %v11391
      %12430 = vmatmul.mubr.bf16.gmra.mrb[0].mxu0 %v11389
      %v12431 = vpop.f32.mrb[0].mxu0
      %v12432 = vadd.f32 %v12127, %v12431
      %v12433 = vpop.f32.mrb[0].mxu0
      %v12434 = vpop.f32.mrb[0].mxu0
      %v12435 = vadd.f32 %v12130, %v12434
      %v12436 = vpop.f32.mrb[0].mxu0
      %12437 = vmatprep.mubr.bf16.mxu0 %v11393
      %12438 = vmatmul.mubr.bf16.gmra.mrb[0].mxu0 %v11391
      %v12439 = vpop.f32.mrb[0].mxu0
      %v12440 = vadd.f32 %v12135, %v12439
      %v12441 = vpop.f32.mrb[0].mxu0
      %v12442 = vpop.f32.mrb[0].mxu0
      %v12443 = vadd.f32 %v12138, %v12442
      %v12444 = vpop.f32.mrb[0].mxu0
      %12445 = vmatprep.mubr.bf16.mxu0 %v11395
      %12446 = vmatmul.mubr.bf16.gmra.mrb[0].mxu0 %v11393
      %v12447 = vpop.f32.mrb[0].mxu0
      %v12448 = vadd.f32 %v12143, %v12447
      %v12449 = vpop.f32.mrb[0].mxu0
      %v12450 = vpop.f32.mrb[0].mxu0
      %v12451 = vadd.f32 %v12146, %v12450
      %v12452 = vpop.f32.mrb[0].mxu0
      %12453 = vmatprep.mubr.bf16.mxu0 %v11397
      %12454 = vmatmul.mubr.bf16.gmra.mrb[0].mxu0 %v11395
      %v12455 = vpop.f32.mrb[0].mxu0
      %v12456 = vadd.f32 %v12151, %v12455
      %v12457 = vpop.f32.mrb[0].mxu0
      %v12458 = vpop.f32.mrb[0].mxu0
      %v12459 = vadd.f32 %v12154, %v12458
      %v12460 = vpop.f32.mrb[0].mxu0
      %12461 = vmatprep.mubr.bf16.mxu0 %v11399
      %12462 = vmatmul.mubr.bf16.gmra.mrb[0].mxu0 %v11397
      %v12463 = vpop.f32.mrb[0].mxu0
      %v12464 = vadd.f32 %v12159, %v12463
      %v12465 = vpop.f32.mrb[0].mxu0
      %v12466 = vpop.f32.mrb[0].mxu0
      %v12467 = vadd.f32 %v12162, %v12466
      %v12468 = vpop.f32.mrb[0].mxu0
      %12469 = vmatprep.mubr.bf16.mxu0 %v11401
      %12470 = vmatmul.mubr.bf16.gmra.mrb[0].mxu0 %v11399
      %v12471 = vpop.f32.mrb[0].mxu0
      %v12472 = vadd.f32 %v12167, %v12471
      %v12473 = vpop.f32.mrb[0].mxu0
      %v12474 = vpop.f32.mrb[0].mxu0
      %v12475 = vadd.f32 %v12170, %v12474
      %v12476 = vpop.f32.mrb[0].mxu0
      %12477 = vmatprep.mubr.bf16.mxu0 %v11403
      %12478 = vmatmul.mubr.bf16.gmra.mrb[0].mxu0 %v11401
      %v12479 = vpop.f32.mrb[0].mxu0
      %v12480 = vadd.f32 %v12175, %v12479
      %v12481 = vpop.f32.mrb[0].mxu0
      %v12482 = vpop.f32.mrb[0].mxu0
      %v12483 = vadd.f32 %v12178, %v12482
      %v12484 = vpop.f32.mrb[0].mxu0
      %12485 = vmatprep.mubr.bf16.mxu0 %v11405
      %12486 = vmatmul.mubr.bf16.gmra.mrb[0].mxu0 %v11403
      %v12487 = vpop.f32.mrb[0].mxu0
      %v12488 = vadd.f32 %v12183, %v12487
      %v12489 = vpop.f32.mrb[0].mxu0
      %v12490 = vpop.f32.mrb[0].mxu0
      %v12491 = vadd.f32 %v12186, %v12490
      %v12492 = vpop.f32.mrb[0].mxu0
      %12493 = vmatprep.mubr.bf16.mxu0 %v11407
      %12494 = vmatmul.mubr.bf16.gmra.mrb[0].mxu0 %v11405
      %v12495 = vpop.f32.mrb[0].mxu0
      %v12496 = vadd.f32 %v12191, %v12495
      %v12497 = vpop.f32.mrb[0].mxu0
      %v12498 = vpop.f32.mrb[0].mxu0
      %v12499 = vadd.f32 %v12194, %v12498
      %v12500 = vpop.f32.mrb[0].mxu0
      %12501 = vmatprep.mubr.bf16.mxu0 %v11409
      %12502 = vmatmul.mubr.bf16.gmra.mrb[0].mxu0 %v11407
      %v12503 = vpop.f32.mrb[0].mxu0
      %v12504 = vadd.f32 %v12199, %v12503
      %v12505 = vpop.f32.mrb[0].mxu0
      %v12506 = vpop.f32.mrb[0].mxu0
      %v12507 = vadd.f32 %v12202, %v12506
      %v12508 = vpop.f32.mrb[0].mxu0
      %12509 = vmatprep.mubr.bf16.mxu0 %v11411
      %12510 = vmatmul.mubr.bf16.gmra.mrb[0].mxu0 %v11409
      %v12511 = vpop.f32.mrb[0].mxu0
      %v12512 = vadd.f32 %v12207, %v12511
      %v12513 = vpop.f32.mrb[0].mxu0
      %v12514 = vpop.f32.mrb[0].mxu0
      %v12515 = vadd.f32 %v12210, %v12514
      %v12516 = vpop.f32.mrb[0].mxu0
      %12517 = vdwg.mxu0
      %12518 = vmatprep.subr.bf16.mxu0 0
      %12519 = vmatpush1.bf16.msra.mxu0 %v12325
      %12520 = vmatprep.subr.bf16.mxu0 0
      %12521 = vmatpush1.bf16.msra.mxu0 %v12326
      %12522 = vmatprep.subr.bf16.mxu0 0
      %12523 = vmatpush1.bf16.msra.mxu0 %v12327
      %12524 = vmatprep.subr.bf16.mxu0 0
      %12525 = vmatpush1.bf16.msra.mxu0 %v12328
      %12526 = vmatprep.subr.bf16.mxu0 0
      %12527 = vmatpush1.bf16.msra.mxu0 %v12329
      %12528 = vmatprep.subr.bf16.mxu0 0
      %12529 = vmatpush1.bf16.msra.mxu0 %v12330
      %12530 = vmatprep.subr.bf16.mxu0 0
      %12531 = vmatpush1.bf16.msra.mxu0 %v12331
      %12532 = vmatprep.subr.bf16.mxu0 0
      %12533 = vmatpush1.bf16.msra.mxu0 %v12332
      %12534 = vmatprep.subr.bf16.mxu0 0
      %12535 = vmatpush1.bf16.msra.mxu0 0
      %12536 = vmatprep.subr.bf16.mxu0 0
      %12537 = vmatpush1.bf16.msra.mxu0 0
      %12538 = vmatprep.subr.bf16.mxu0 0
      %12539 = vmatpush1.bf16.msra.mxu0 0
      %12540 = vmatprep.subr.bf16.mxu0 0
      %12541 = vmatpush1.bf16.msra.mxu0 0
      %12542 = vmatprep.subr.bf16.mxu0 0
      %12543 = vmatpush1.bf16.msra.mxu0 0
      %12544 = vmatprep.subr.bf16.mxu0 0
      %12545 = vmatpush1.bf16.msra.mxu0 0
      %12546 = vmatprep.subr.bf16.mxu0 0
      %12547 = vmatpush1.bf16.msra.mxu0 0
      %12548 = vmatprep.subr.bf16.mxu0 0
      %12549 = vmatpush1.bf16.msra.mxu0 0
      %12550 = vmatprep.mubr.bf16.mxu0 0
      %12551 = vmatmul.mubr.bf16.gmra.mrb[0].mxu0 %v11383
      %v12552 = vpop.f32.mrb[0].mxu0
      %v12553 = vadd.f32 %v12392, %v12552
      %v12554 = vpop.f32.mrb[0].mxu0
      %v12555 = vpop.f32.mrb[0].mxu0
      %v12556 = vadd.f32 %v12395, %v12555
      %v12557 = vpop.f32.mrb[0].mxu0
      %12558 = vmatprep.mubr.bf16.mxu0 0
      %12559 = vmatmul.mubr.bf16.gmra.mrb[0].mxu0 %v11385
      %v12560 = vpop.f32.mrb[0].mxu0
      %v12561 = vadd.f32 %v12400, %v12560
      %v12562 = vpop.f32.mrb[0].mxu0
      %v12563 = vpop.f32.mrb[0].mxu0
      %v12564 = vadd.f32 %v12403, %v12563
      %v12565 = vpop.f32.mrb[0].mxu0
      %12566 = vmatprep.mubr.bf16.mxu0 0
      %12567 = vmatmul.mubr.bf16.gmra.mrb[0].mxu0 %v11387
      %v12568 = vpop.f32.mrb[0].mxu0
      %v12569 = vadd.f32 %v12408, %v12568
      %v12570 = vpop.f32.mrb[0].mxu0
      %v12571 = vpop.f32.mrb[0].mxu0
      %v12572 = vadd.f32 %v12411, %v12571
      %v12573 = vpop.f32.mrb[0].mxu0
      %12574 = vmatprep.mubr.bf16.mxu0 0
      %12575 = vmatmul.mubr.bf16.gmra.mrb[0].mxu0 %v11389
      %v12576 = vpop.f32.mrb[0].mxu0
      %v12577 = vadd.f32 %v12416, %v12576
      %v12578 = vpop.f32.mrb[0].mxu0
      %v12579 = vpop.f32.mrb[0].mxu0
      %v12580 = vadd.f32 %v12419, %v12579
      %v12581 = vpop.f32.mrb[0].mxu0
      %12582 = vmatprep.mubr.bf16.mxu0 0
      %12583 = vmatmul.mubr.bf16.gmra.mrb[0].mxu0 %v11391
      %v12584 = vpop.f32.mrb[0].mxu0
      %v12585 = vadd.f32 %v12424, %v12584
      %v12586 = vpop.f32.mrb[0].mxu0
      %v12587 = vpop.f32.mrb[0].mxu0
      %v12588 = vadd.f32 %v12427, %v12587
      %v12589 = vpop.f32.mrb[0].mxu0
      %12590 = vmatprep.mubr.bf16.mxu0 0
      %12591 = vmatmul.mubr.bf16.gmra.mrb[0].mxu0 %v11393
      %v12592 = vpop.f32.mrb[0].mxu0
      %v12593 = vadd.f32 %v12432, %v12592
      %v12594 = vpop.f32.mrb[0].mxu0
      %v12595 = vpop.f32.mrb[0].mxu0
      %v12596 = vadd.f32 %v12435, %v12595
      %v12597 = vpop.f32.mrb[0].mxu0
      %12598 = vmatprep.mubr.bf16.mxu0 0
      %12599 = vmatmul.mubr.bf16.gmra.mrb[0].mxu0 %v11395
      %v12600 = vpop.f32.mrb[0].mxu0
      %v12601 = vadd.f32 %v12440, %v12600
      %v12602 = vpop.f32.mrb[0].mxu0
      %v12603 = vpop.f32.mrb[0].mxu0
      %v12604 = vadd.f32 %v12443, %v12603
      %v12605 = vpop.f32.mrb[0].mxu0
      %12606 = vmatprep.mubr.bf16.mxu0 0
      %12607 = vmatmul.mubr.bf16.gmra.mrb[0].mxu0 %v11397
      %v12608 = vpop.f32.mrb[0].mxu0
      %v12609 = vadd.f32 %v12448, %v12608
      %v12610 = vpop.f32.mrb[0].mxu0
      %v12611 = vpop.f32.mrb[0].mxu0
      %v12612 = vadd.f32 %v12451, %v12611
      %v12613 = vpop.f32.mrb[0].mxu0
      %12614 = vmatprep.mubr.bf16.mxu0 0
      %12615 = vmatmul.mubr.bf16.gmra.mrb[0].mxu0 %v11399
      %v12616 = vpop.f32.mrb[0].mxu0
      %v12617 = vadd.f32 %v12456, %v12616
      %v12618 = vpop.f32.mrb[0].mxu0
      %v12619 = vpop.f32.mrb[0].mxu0
      %v12620 = vadd.f32 %v12459, %v12619
      %v12621 = vpop.f32.mrb[0].mxu0
      %12622 = vmatprep.mubr.bf16.mxu0 0
      %12623 = vmatmul.mubr.bf16.gmra.mrb[0].mxu0 %v11401
      %v12624 = vpop.f32.mrb[0].mxu0
      %v12625 = vadd.f32 %v12464, %v12624
      %v12626 = vpop.f32.mrb[0].mxu0
      %v12627 = vpop.f32.mrb[0].mxu0
      %v12628 = vadd.f32 %v12467, %v12627
      %v12629 = vpop.f32.mrb[0].mxu0
      %12630 = vmatprep.mubr.bf16.mxu0 0
      %12631 = vmatmul.mubr.bf16.gmra.mrb[0].mxu0 %v11403
      %v12632 = vpop.f32.mrb[0].mxu0
      %v12633 = vadd.f32 %v12472, %v12632
      %v12634 = vpop.f32.mrb[0].mxu0
      %v12635 = vpop.f32.mrb[0].mxu0
      %v12636 = vadd.f32 %v12475, %v12635
      %v12637 = vpop.f32.mrb[0].mxu0
      %12638 = vmatprep.mubr.bf16.mxu0 0
      %12639 = vmatmul.mubr.bf16.gmra.mrb[0].mxu0 %v11405
      %v12640 = vpop.f32.mrb[0].mxu0
      %v12641 = vadd.f32 %v12480, %v12640
      %v12642 = vpop.f32.mrb[0].mxu0
      %v12643 = vpop.f32.mrb[0].mxu0
      %v12644 = vadd.f32 %v12483, %v12643
      %v12645 = vpop.f32.mrb[0].mxu0
      %12646 = vmatprep.mubr.bf16.mxu0 0
      %12647 = vmatmul.mubr.bf16.gmra.mrb[0].mxu0 %v11407
      %v12648 = vpop.f32.mrb[0].mxu0
      %v12649 = vadd.f32 %v12488, %v12648
      %v12650 = vpop.f32.mrb[0].mxu0
      %v12651 = vpop.f32.mrb[0].mxu0
      %v12652 = vadd.f32 %v12491, %v12651
      %v12653 = vpop.f32.mrb[0].mxu0
      %12654 = vmatprep.mubr.bf16.mxu0 0
      %12655 = vmatmul.mubr.bf16.gmra.mrb[0].mxu0 %v11409
      %v12656 = vpop.f32.mrb[0].mxu0
      %v12657 = vadd.f32 %v12496, %v12656
      %v12658 = vpop.f32.mrb[0].mxu0
      %v12659 = vpop.f32.mrb[0].mxu0
      %v12660 = vadd.f32 %v12499, %v12659
      %v12661 = vpop.f32.mrb[0].mxu0
      %12662 = vmatprep.mubr.bf16.mxu0 0
      %12663 = vmatmul.mubr.bf16.gmra.mrb[0].mxu0 %v11411
      %v12664 = vpop.f32.mrb[0].mxu0
      %v12665 = vadd.f32 %v12504, %v12664
      %v12666 = vpop.f32.mrb[0].mxu0
      %v12667 = vpop.f32.mrb[0].mxu0
      %v12668 = vadd.f32 %v12507, %v12667
      %v12669 = vpop.f32.mrb[0].mxu0
      %12670 = vmatprep.mubr.bf16.mxu0 0
      %12671 = vmatmul.mubr.bf16.gmra.mrb[0].mxu0 %v11413
      %v12672 = vpop.f32.mrb[0].mxu0
      %v12673 = vadd.f32 %v12512, %v12672
      %v12674 = vpop.f32.mrb[0].mxu0
      %v12675 = vpop.f32.mrb[0].mxu0
      %v12676 = vadd.f32 %v12515, %v12675
      %v12677 = vpop.f32.mrb[0].mxu0
      %12678 = vdwg.mxu0
      %vm12715 = vcmask 1046528
      %v12716 = vrot.slane %v11379, 1
      %v12717 = vrot.slane %v11380, 1
      %v12718 = vsel %vm12715, %v12716, %v12717
      %v12719 = vrot.slane %v11381, 1
      %v12720 = vrot.slane %v11382, 1
      %v12721 = vsel %vm12715, %v12719, %v12720
      %v12722 = vrot.slane %v11383, 1
      %v12723 = vrot.slane %v11384, 1
      %v12724 = vsel %vm12715, %v12722, %v12723
      %v12725 = vrot.slane %v11385, 1
      %v12726 = vrot.slane %v11386, 1
      %v12727 = vsel %vm12715, %v12725, %v12726
      %v12728 = vrot.slane %v11387, 1
      %v12729 = vrot.slane %v11388, 1
      %v12730 = vsel %vm12715, %v12728, %v12729
      %v12731 = vrot.slane %v11389, 1
      %v12732 = vrot.slane %v11390, 1
      %v12733 = vsel %vm12715, %v12731, %v12732
      %v12734 = vrot.slane %v11391, 1
      %v12735 = vrot.slane %v11392, 1
      %v12736 = vsel %vm12715, %v12734, %v12735
      %v12737 = vrot.slane %v11393, 1
      %v12738 = vrot.slane %v11394, 1
      %v12739 = vsel %vm12715, %v12737, %v12738
      %v12740 = vrot.slane %v11395, 1
      %v12741 = vrot.slane %v11396, 1
      %v12742 = vsel %vm12715, %v12740, %v12741
      %v12743 = vrot.slane %v11397, 1
      %v12744 = vrot.slane %v11398, 1
      %v12745 = vsel %vm12715, %v12743, %v12744
      %v12746 = vrot.slane %v11399, 1
      %v12747 = vrot.slane %v11400, 1
      %v12748 = vsel %vm12715, %v12746, %v12747
      %v12749 = vrot.slane %v11401, 1
      %v12750 = vrot.slane %v11402, 1
      %v12751 = vsel %vm12715, %v12749, %v12750
      %v12752 = vrot.slane %v11403, 1
      %v12753 = vrot.slane %v11404, 1
      %v12754 = vsel %vm12715, %v12752, %v12753
      %v12755 = vrot.slane %v11405, 1
      %v12756 = vrot.slane %v11406, 1
      %v12757 = vsel %vm12715, %v12755, %v12756
      %v12758 = vrot.slane %v11407, 1
      %v12759 = vrot.slane %v11408, 1
      %v12760 = vsel %vm12715, %v12758, %v12759
      %v12761 = vrot.slane %v11409, 1
      %v12762 = vrot.slane %v11410, 1
      %v12763 = vsel %vm12715, %v12761, %v12762
      %v12764 = vrot.slane %v11411, 1
      %v12765 = vrot.slane %v11412, 1
      %v12766 = vsel %vm12715, %v12764, %v12765
      %v12767 = vrot.slane %v11413, 1
      %v12768 = vrot.slane %v11414, 1
      %v12769 = vsel %vm12715, %v12767, %v12768
      %s12788 = scalar_lea.vmem %s3, 384
      %v12789 = vld [vmem:[%s12788] sm:$0xf]
      %v12790 = vld [vmem:[%s12788 + $0x4] sm:$0xf]
      %v12791 = vld [vmem:[%s12788 + $0x8] sm:$0xf]
      %v12792 = vld [vmem:[%s12788 + $0xc] sm:$0xf]
      %v12793 = vld [vmem:[%s12788 + $0x10] sm:$0xf]
      %v12794 = vld [vmem:[%s12788 + $0x14] sm:$0xf]
      %v12795 = vld [vmem:[%s12788 + $0x18] sm:$0xf]
      %v12796 = vld [vmem:[%s12788 + $0x1c] sm:$0xf]
      %v12797 = vld [vmem:[%s12788 + $0x20] sm:$0xf]
      %v12798 = vld [vmem:[%s12788 + $0x24] sm:$0xf]
      %v12799 = vld [vmem:[%s12788 + $0x28] sm:$0xf]
      %v12800 = vld [vmem:[%s12788 + $0x2c] sm:$0xf]
      %v12801 = vld [vmem:[%s12788 + $0x30] sm:$0xf]
      %v12802 = vld [vmem:[%s12788 + $0x34] sm:$0xf]
      %v12803 = vld [vmem:[%s12788 + $0x38] sm:$0xf]
      %v12804 = vld [vmem:[%s12788 + $0x3c] sm:$0xf]
      %v12805 = vld [vmem:[%s12788 + $0x40] sm:$0xf]
      %v12806 = vld [vmem:[%s12788 + $0x44] sm:$0xf]
      %v12807 = vld [vmem:[%s12788 + $0x48] sm:$0xf]
      %v12808 = vld [vmem:[%s12788 + $0x4c] sm:$0xf]
      %v12809 = vld [vmem:[%s12788 + $0x50] sm:$0xf]
      %v12810 = vld [vmem:[%s12788 + $0x54] sm:$0xf]
      %v12811 = vld [vmem:[%s12788 + $0x58] sm:$0xf]
      %v12812 = vld [vmem:[%s12788 + $0x5c] sm:$0xf]
      %v12813 = vld [vmem:[%s12788 + $0x60] sm:$0xf]
      %v12814 = vld [vmem:[%s12788 + $0x64] sm:$0xf]
      %v12815 = vld [vmem:[%s12788 + $0x68] sm:$0xf]
      %v12816 = vld [vmem:[%s12788 + $0x6c] sm:$0xf]
      %v12817 = vld [vmem:[%s12788 + $0x70] sm:$0xf]
      %v12818 = vld [vmem:[%s12788 + $0x74] sm:$0xf]
      %v12819 = vld [vmem:[%s12788 + $0x78] sm:$0xf]
      %v12820 = vld [vmem:[%s12788 + $0x7c] sm:$0xf]
      %v12821 = vld [vmem:[%s12788 + $0x80] sm:$0xf]
      %v12822 = vld [vmem:[%s12788 + $0x84] sm:$0xf]
      %v12823 = vld [vmem:[%s12788 + $0x88] sm:$0xf]
      %v12824 = vld [vmem:[%s12788 + $0x8c] sm:$0xf]
      %v12825 = vld [vmem:[%s12788 + $0x90] sm:$0xf]
      %v12826 = vld [vmem:[%s12788 + $0x94] sm:$0xf]
      %v12827 = vld [vmem:[%s12788 + $0x98] sm:$0xf]
      %v12828 = vld [vmem:[%s12788 + $0x9c] sm:$0xf]
      %v12829 = vld [vmem:[%s12788 + $0xa0] sm:$0xf]
      %v12830 = vld [vmem:[%s12788 + $0xa4] sm:$0xf]
      %v12831 = vld [vmem:[%s12788 + $0xa8] sm:$0xf]
      %v12832 = vld [vmem:[%s12788 + $0xac] sm:$0xf]
      %v12833 = vld [vmem:[%s12788 + $0xb0] sm:$0xf]
      %v12834 = vld [vmem:[%s12788 + $0xb4] sm:$0xf]
      %v12835 = vld [vmem:[%s12788 + $0xb8] sm:$0xf]
      %v12836 = vld [vmem:[%s12788 + $0xbc] sm:$0xf]
      %v12885 = vunpack.c.l.b16 %v12789
      %v12886 = vunpack.c.l.b16 %v12790
      %v12887 = vunpack.c.l.b16 %v12791
      %v12888 = vunpack.c.l.b16 %v12792
      %v12889 = vunpack.c.l.b16 %v12793
      %v12890 = vunpack.c.l.b16 %v12794
      %v12891 = vunpack.c.l.b16 %v12795
      %v12892 = vunpack.c.l.b16 %v12796
      %v12893 = vunpack.c.l.b16 %v12797
      %v12894 = vunpack.c.l.b16 %v12798
      %v12895 = vunpack.c.l.b16 %v12799
      %v12896 = vunpack.c.l.b16 %v12800
      %v12897 = vunpack.c.l.b16 %v12801
      %v12898 = vunpack.c.l.b16 %v12802
      %v12899 = vunpack.c.l.b16 %v12803
      %v12900 = vunpack.c.l.b16 %v12804
      %v12901 = vunpack.c.l.b16 %v12805
      %v12902 = vunpack.c.l.b16 %v12806
      %v12903 = vunpack.c.l.b16 %v12807
      %v12904 = vunpack.c.l.b16 %v12808
      %v12905 = vunpack.c.l.b16 %v12809
      %v12906 = vunpack.c.l.b16 %v12810
      %v12907 = vunpack.c.l.b16 %v12811
      %v12908 = vunpack.c.l.b16 %v12812
      %v12909 = vunpack.c.l.b16 %v12813
      %v12910 = vunpack.c.l.b16 %v12814
      %v12911 = vunpack.c.l.b16 %v12815
      %v12912 = vunpack.c.l.b16 %v12816
      %v12913 = vunpack.c.l.b16 %v12817
      %v12914 = vunpack.c.l.b16 %v12818
      %v12915 = vunpack.c.l.b16 %v12819
      %v12916 = vunpack.c.l.b16 %v12820
      %v12917 = vunpack.c.l.b16 %v12821
      %v12918 = vunpack.c.l.b16 %v12822
      %v12919 = vunpack.c.l.b16 %v12823
      %v12920 = vunpack.c.l.b16 %v12824
      %v12921 = vunpack.c.l.b16 %v12825
      %v12922 = vunpack.c.l.b16 %v12826
      %v12923 = vunpack.c.l.b16 %v12827
      %v12924 = vunpack.c.l.b16 %v12828
      %v12925 = vunpack.c.l.b16 %v12829
      %v12926 = vunpack.c.l.b16 %v12830
      %v12927 = vunpack.c.l.b16 %v12831
      %v12928 = vunpack.c.l.b16 %v12832
      %v12929 = vunpack.c.l.b16 %v12833
      %v12930 = vunpack.c.l.b16 %v12834
      %v12931 = vunpack.c.l.b16 %v12835
      %v12932 = vunpack.c.l.b16 %v12836
      %v12933 = vpack.c.b16 %v12886, %v12885
      %v12934 = vpack.c.b16 %v12888, %v12887
      %v12935 = vpack.c.b16 %v12890, %v12889
      %v12936 = vpack.c.b16 %v12892, %v12891
      %v12937 = vpack.c.b16 %v12894, %v12893
      %v12938 = vpack.c.b16 %v12896, %v12895
      %v12939 = vpack.c.b16 %v12898, %v12897
      %v12940 = vpack.c.b16 %v12900, %v12899
      %v12941 = vpack.c.b16 %v12902, %v12901
      %v12942 = vpack.c.b16 %v12904, %v12903
      %v12943 = vpack.c.b16 %v12906, %v12905
      %v12944 = vpack.c.b16 %v12908, %v12907
      %v12945 = vpack.c.b16 %v12910, %v12909
      %v12946 = vpack.c.b16 %v12912, %v12911
      %v12947 = vpack.c.b16 %v12914, %v12913
      %v12948 = vpack.c.b16 %v12916, %v12915
      %v12949 = vpack.c.b16 %v12918, %v12917
      %v12950 = vpack.c.b16 %v12920, %v12919
      %v12951 = vpack.c.b16 %v12922, %v12921
      %v12952 = vpack.c.b16 %v12924, %v12923
      %v12953 = vpack.c.b16 %v12926, %v12925
      %v12954 = vpack.c.b16 %v12928, %v12927
      %v12955 = vpack.c.b16 %v12930, %v12929
      %v12956 = vpack.c.b16 %v12932, %v12931
      %12981 = vmatprep.subr.bf16.mxu0 0
      %12982 = vmatpush1.bf16.msra.mxu0 %v12933
      %12983 = vmatprep.subr.bf16.mxu0 0
      %12984 = vmatpush1.bf16.msra.mxu0 %v12934
      %12985 = vmatprep.subr.bf16.mxu0 0
      %12986 = vmatpush1.bf16.msra.mxu0 %v12935
      %12987 = vmatprep.subr.bf16.mxu0 0
      %12988 = vmatpush1.bf16.msra.mxu0 %v12936
      %12989 = vmatprep.subr.bf16.mxu0 0
      %12990 = vmatpush1.bf16.msra.mxu0 %v12937
      %12991 = vmatprep.subr.bf16.mxu0 0
      %12992 = vmatpush1.bf16.msra.mxu0 %v12938
      %12993 = vmatprep.subr.bf16.mxu0 0
      %12994 = vmatpush1.bf16.msra.mxu0 %v12939
      %12995 = vmatprep.subr.bf16.mxu0 0
      %12996 = vmatpush1.bf16.msra.mxu0 %v12940
      %12997 = vmatprep.subr.bf16.mxu0 0
      %12998 = vmatpush1.bf16.msra.mxu0 %v12941
      %12999 = vmatprep.subr.bf16.mxu0 0
      %13000 = vmatpush1.bf16.msra.mxu0 %v12942
      %13001 = vmatprep.subr.bf16.mxu0 0
      %13002 = vmatpush1.bf16.msra.mxu0 %v12943
      %13003 = vmatprep.subr.bf16.mxu0 0
      %13004 = vmatpush1.bf16.msra.mxu0 %v12944
      %13005 = vmatprep.subr.bf16.mxu0 0
      %13006 = vmatpush1.bf16.msra.mxu0 %v12945
      %13007 = vmatprep.subr.bf16.mxu0 0
      %13008 = vmatpush1.bf16.msra.mxu0 %v12946
      %13009 = vmatprep.subr.bf16.mxu0 0
      %13010 = vmatpush1.bf16.msra.mxu0 %v12947
      %13011 = vmatprep.subr.bf16.mxu0 0
      %13012 = vmatpush1.bf16.msra.mxu0 %v12948
      %13013 = vmatprep.mubr.bf16.mxu0 %v12721
      %13014 = vmatmul.mubr.bf16.gmra.mrb[0].mxu0 %v12718
      %v13015 = vpop.f32.mrb[0].mxu0
      %v13016 = vadd.f32 0.0, %v13015
      %v13017 = vpop.f32.mrb[0].mxu0
      %v13018 = vpop.f32.mrb[0].mxu0
      %v13019 = vadd.f32 0.0, %v13018
      %v13020 = vpop.f32.mrb[0].mxu0
      %13021 = vmatprep.mubr.bf16.mxu0 %v12724
      %13022 = vmatmul.mubr.bf16.gmra.mrb[0].mxu0 %v12721
      %v13023 = vpop.f32.mrb[0].mxu0
      %v13024 = vadd.f32 0.0, %v13023
      %v13025 = vpop.f32.mrb[0].mxu0
      %v13026 = vpop.f32.mrb[0].mxu0
      %v13027 = vadd.f32 0.0, %v13026
      %v13028 = vpop.f32.mrb[0].mxu0
      %13029 = vmatprep.mubr.bf16.mxu0 %v12727
      %13030 = vmatmul.mubr.bf16.gmra.mrb[0].mxu0 %v12724
      %v13031 = vpop.f32.mrb[0].mxu0
      %v13032 = vadd.f32 0.0, %v13031
      %v13033 = vpop.f32.mrb[0].mxu0
      %v13034 = vpop.f32.mrb[0].mxu0
      %v13035 = vadd.f32 0.0, %v13034
      %v13036 = vpop.f32.mrb[0].mxu0
      %13037 = vmatprep.mubr.bf16.mxu0 %v12730
      %13038 = vmatmul.mubr.bf16.gmra.mrb[0].mxu0 %v12727
      %v13039 = vpop.f32.mrb[0].mxu0
      %v13040 = vadd.f32 0.0, %v13039
      %v13041 = vpop.f32.mrb[0].mxu0
      %v13042 = vpop.f32.mrb[0].mxu0
      %v13043 = vadd.f32 0.0, %v13042
      %v13044 = vpop.f32.mrb[0].mxu0
      %13045 = vmatprep.mubr.bf16.mxu0 %v12733
      %13046 = vmatmul.mubr.bf16.gmra.mrb[0].mxu0 %v12730
      %v13047 = vpop.f32.mrb[0].mxu0
      %v13048 = vadd.f32 0.0, %v13047
      %v13049 = vpop.f32.mrb[0].mxu0
      %v13050 = vpop.f32.mrb[0].mxu0
      %v13051 = vadd.f32 0.0, %v13050
      %v13052 = vpop.f32.mrb[0].mxu0
      %13053 = vmatprep.mubr.bf16.mxu0 %v12736
      %13054 = vmatmul.mubr.bf16.gmra.mrb[0].mxu0 %v12733
      %v13055 = vpop.f32.mrb[0].mxu0
      %v13056 = vadd.f32 0.0, %v13055
      %v13057 = vpop.f32.mrb[0].mxu0
      %v13058 = vpop.f32.mrb[0].mxu0
      %v13059 = vadd.f32 0.0, %v13058
      %v13060 = vpop.f32.mrb[0].mxu0
      %13061 = vmatprep.mubr.bf16.mxu0 %v12739
      %13062 = vmatmul.mubr.bf16.gmra.mrb[0].mxu0 %v12736
      %v13063 = vpop.f32.mrb[0].mxu0
      %v13064 = vadd.f32 0.0, %v13063
      %v13065 = vpop.f32.mrb[0].mxu0
      %v13066 = vpop.f32.mrb[0].mxu0
      %v13067 = vadd.f32 0.0, %v13066
      %v13068 = vpop.f32.mrb[0].mxu0
      %13069 = vmatprep.mubr.bf16.mxu0 %v12742
      %13070 = vmatmul.mubr.bf16.gmra.mrb[0].mxu0 %v12739
      %v13071 = vpop.f32.mrb[0].mxu0
      %v13072 = vadd.f32 0.0, %v13071
      %v13073 = vpop.f32.mrb[0].mxu0
      %v13074 = vpop.f32.mrb[0].mxu0
      %v13075 = vadd.f32 0.0, %v13074
      %v13076 = vpop.f32.mrb[0].mxu0
      %13077 = vmatprep.mubr.bf16.mxu0 %v12745
      %13078 = vmatmul.mubr.bf16.gmra.mrb[0].mxu0 %v12742
      %v13079 = vpop.f32.mrb[0].mxu0
      %v13080 = vadd.f32 0.0, %v13079
      %v13081 = vpop.f32.mrb[0].mxu0
      %v13082 = vpop.f32.mrb[0].mxu0
      %v13083 = vadd.f32 0.0, %v13082
      %v13084 = vpop.f32.mrb[0].mxu0
      %13085 = vmatprep.mubr.bf16.mxu0 %v12748
      %13086 = vmatmul.mubr.bf16.gmra.mrb[0].mxu0 %v12745
      %v13087 = vpop.f32.mrb[0].mxu0
      %v13088 = vadd.f32 0.0, %v13087
      %v13089 = vpop.f32.mrb[0].mxu0
      %v13090 = vpop.f32.mrb[0].mxu0
      %v13091 = vadd.f32 0.0, %v13090
      %v13092 = vpop.f32.mrb[0].mxu0
      %13093 = vmatprep.mubr.bf16.mxu0 %v12751
      %13094 = vmatmul.mubr.bf16.gmra.mrb[0].mxu0 %v12748
      %v13095 = vpop.f32.mrb[0].mxu0
      %v13096 = vadd.f32 0.0, %v13095
      %v13097 = vpop.f32.mrb[0].mxu0
      %v13098 = vpop.f32.mrb[0].mxu0
      %v13099 = vadd.f32 0.0, %v13098
      %v13100 = vpop.f32.mrb[0].mxu0
      %13101 = vmatprep.mubr.bf16.mxu0 %v12754
      %13102 = vmatmul.mubr.bf16.gmra.mrb[0].mxu0 %v12751
      %v13103 = vpop.f32.mrb[0].mxu0
      %v13104 = vadd.f32 0.0, %v13103
      %v13105 = vpop.f32.mrb[0].mxu0
      %v13106 = vpop.f32.mrb[0].mxu0
      %v13107 = vadd.f32 0.0, %v13106
      %v13108 = vpop.f32.mrb[0].mxu0
      %13109 = vmatprep.mubr.bf16.mxu0 %v12757
      %13110 = vmatmul.mubr.bf16.gmra.mrb[0].mxu0 %v12754
      %v13111 = vpop.f32.mrb[0].mxu0
      %v13112 = vadd.f32 0.0, %v13111
      %v13113 = vpop.f32.mrb[0].mxu0
      %v13114 = vpop.f32.mrb[0].mxu0
      %v13115 = vadd.f32 0.0, %v13114
      %v13116 = vpop.f32.mrb[0].mxu0
      %13117 = vmatprep.mubr.bf16.mxu0 %v12760
      %13118 = vmatmul.mubr.bf16.gmra.mrb[0].mxu0 %v12757
      %v13119 = vpop.f32.mrb[0].mxu0
      %v13120 = vadd.f32 0.0, %v13119
      %v13121 = vpop.f32.mrb[0].mxu0
      %v13122 = vpop.f32.mrb[0].mxu0
      %v13123 = vadd.f32 0.0, %v13122
      %v13124 = vpop.f32.mrb[0].mxu0
      %13125 = vmatprep.mubr.bf16.mxu0 %v12763
      %13126 = vmatmul.mubr.bf16.gmra.mrb[0].mxu0 %v12760
      %v13127 = vpop.f32.mrb[0].mxu0
      %v13128 = vadd.f32 0.0, %v13127
      %v13129 = vpop.f32.mrb[0].mxu0
      %v13130 = vpop.f32.mrb[0].mxu0
      %v13131 = vadd.f32 0.0, %v13130
      %v13132 = vpop.f32.mrb[0].mxu0
      %13133 = vmatprep.mubr.bf16.mxu0 %v12766
      %13134 = vmatmul.mubr.bf16.gmra.mrb[0].mxu0 %v12763
      %v13135 = vpop.f32.mrb[0].mxu0
      %v13136 = vadd.f32 0.0, %v13135
      %v13137 = vpop.f32.mrb[0].mxu0
      %v13138 = vpop.f32.mrb[0].mxu0
      %v13139 = vadd.f32 0.0, %v13138
      %v13140 = vpop.f32.mrb[0].mxu0
      %13141 = vdwg.mxu0
      %13142 = vmatprep.subr.bf16.mxu0 0
      %13143 = vmatpush1.bf16.msra.mxu0 %v12949
      %13144 = vmatprep.subr.bf16.mxu0 0
      %13145 = vmatpush1.bf16.msra.mxu0 %v12950
      %13146 = vmatprep.subr.bf16.mxu0 0
      %13147 = vmatpush1.bf16.msra.mxu0 %v12951
      %13148 = vmatprep.subr.bf16.mxu0 0
      %13149 = vmatpush1.bf16.msra.mxu0 %v12952
      %13150 = vmatprep.subr.bf16.mxu0 0
      %13151 = vmatpush1.bf16.msra.mxu0 %v12953
      %13152 = vmatprep.subr.bf16.mxu0 0
      %13153 = vmatpush1.bf16.msra.mxu0 %v12954
      %13154 = vmatprep.subr.bf16.mxu0 0
      %13155 = vmatpush1.bf16.msra.mxu0 %v12955
      %13156 = vmatprep.subr.bf16.mxu0 0
      %13157 = vmatpush1.bf16.msra.mxu0 %v12956
      %13158 = vmatprep.subr.bf16.mxu0 0
      %13159 = vmatpush1.bf16.msra.mxu0 0
      %13160 = vmatprep.subr.bf16.mxu0 0
      %13161 = vmatpush1.bf16.msra.mxu0 0
      %13162 = vmatprep.subr.bf16.mxu0 0
      %13163 = vmatpush1.bf16.msra.mxu0 0
      %13164 = vmatprep.subr.bf16.mxu0 0
      %13165 = vmatpush1.bf16.msra.mxu0 0
      %13166 = vmatprep.subr.bf16.mxu0 0
      %13167 = vmatpush1.bf16.msra.mxu0 0
      %13168 = vmatprep.subr.bf16.mxu0 0
      %13169 = vmatpush1.bf16.msra.mxu0 0
      %13170 = vmatprep.subr.bf16.mxu0 0
      %13171 = vmatpush1.bf16.msra.mxu0 0
      %13172 = vmatprep.subr.bf16.mxu0 0
      %13173 = vmatpush1.bf16.msra.mxu0 0
      %13174 = vmatprep.mubr.bf16.mxu0 0
      %13175 = vmatmul.mubr.bf16.gmra.mrb[0].mxu0 %v12724
      %v13176 = vpop.f32.mrb[0].mxu0
      %v13177 = vadd.f32 %v13016, %v13176
      %v13178 = vpop.f32.mrb[0].mxu0
      %v13179 = vpop.f32.mrb[0].mxu0
      %v13180 = vadd.f32 %v13019, %v13179
      %v13181 = vpop.f32.mrb[0].mxu0
      %13182 = vmatprep.mubr.bf16.mxu0 0
      %13183 = vmatmul.mubr.bf16.gmra.mrb[0].mxu0 %v12727
      %v13184 = vpop.f32.mrb[0].mxu0
      %v13185 = vadd.f32 %v13024, %v13184
      %v13186 = vpop.f32.mrb[0].mxu0
      %v13187 = vpop.f32.mrb[0].mxu0
      %v13188 = vadd.f32 %v13027, %v13187
      %v13189 = vpop.f32.mrb[0].mxu0
      %13190 = vmatprep.mubr.bf16.mxu0 0
      %13191 = vmatmul.mubr.bf16.gmra.mrb[0].mxu0 %v12730
      %v13192 = vpop.f32.mrb[0].mxu0
      %v13193 = vadd.f32 %v13032, %v13192
      %v13194 = vpop.f32.mrb[0].mxu0
      %v13195 = vpop.f32.mrb[0].mxu0
      %v13196 = vadd.f32 %v13035, %v13195
      %v13197 = vpop.f32.mrb[0].mxu0
      %13198 = vmatprep.mubr.bf16.mxu0 0
      %13199 = vmatmul.mubr.bf16.gmra.mrb[0].mxu0 %v12733
      %v13200 = vpop.f32.mrb[0].mxu0
      %v13201 = vadd.f32 %v13040, %v13200
      %v13202 = vpop.f32.mrb[0].mxu0
      %v13203 = vpop.f32.mrb[0].mxu0
      %v13204 = vadd.f32 %v13043, %v13203
      %v13205 = vpop.f32.mrb[0].mxu0
      %13206 = vmatprep.mubr.bf16.mxu0 0
      %13207 = vmatmul.mubr.bf16.gmra.mrb[0].mxu0 %v12736
      %v13208 = vpop.f32.mrb[0].mxu0
      %v13209 = vadd.f32 %v13048, %v13208
      %v13210 = vpop.f32.mrb[0].mxu0
      %v13211 = vpop.f32.mrb[0].mxu0
      %v13212 = vadd.f32 %v13051, %v13211
      %v13213 = vpop.f32.mrb[0].mxu0
      %13214 = vmatprep.mubr.bf16.mxu0 0
      %13215 = vmatmul.mubr.bf16.gmra.mrb[0].mxu0 %v12739
      %v13216 = vpop.f32.mrb[0].mxu0
      %v13217 = vadd.f32 %v13056, %v13216
      %v13218 = vpop.f32.mrb[0].mxu0
      %v13219 = vpop.f32.mrb[0].mxu0
      %v13220 = vadd.f32 %v13059, %v13219
      %v13221 = vpop.f32.mrb[0].mxu0
      %13222 = vmatprep.mubr.bf16.mxu0 0
      %13223 = vmatmul.mubr.bf16.gmra.mrb[0].mxu0 %v12742
      %v13224 = vpop.f32.mrb[0].mxu0
      %v13225 = vadd.f32 %v13064, %v13224
      %v13226 = vpop.f32.mrb[0].mxu0
      %v13227 = vpop.f32.mrb[0].mxu0
      %v13228 = vadd.f32 %v13067, %v13227
      %v13229 = vpop.f32.mrb[0].mxu0
      %13230 = vmatprep.mubr.bf16.mxu0 0
      %13231 = vmatmul.mubr.bf16.gmra.mrb[0].mxu0 %v12745
      %v13232 = vpop.f32.mrb[0].mxu0
      %v13233 = vadd.f32 %v13072, %v13232
      %v13234 = vpop.f32.mrb[0].mxu0
      %v13235 = vpop.f32.mrb[0].mxu0
      %v13236 = vadd.f32 %v13075, %v13235
      %v13237 = vpop.f32.mrb[0].mxu0
      %13238 = vmatprep.mubr.bf16.mxu0 0
      %13239 = vmatmul.mubr.bf16.gmra.mrb[0].mxu0 %v12748
      %v13240 = vpop.f32.mrb[0].mxu0
      %v13241 = vadd.f32 %v13080, %v13240
      %v13242 = vpop.f32.mrb[0].mxu0
      %v13243 = vpop.f32.mrb[0].mxu0
      %v13244 = vadd.f32 %v13083, %v13243
      %v13245 = vpop.f32.mrb[0].mxu0
      %13246 = vmatprep.mubr.bf16.mxu0 0
      %13247 = vmatmul.mubr.bf16.gmra.mrb[0].mxu0 %v12751
      %v13248 = vpop.f32.mrb[0].mxu0
      %v13249 = vadd.f32 %v13088, %v13248
      %v13250 = vpop.f32.mrb[0].mxu0
      %v13251 = vpop.f32.mrb[0].mxu0
      %v13252 = vadd.f32 %v13091, %v13251
      %v13253 = vpop.f32.mrb[0].mxu0
      %13254 = vmatprep.mubr.bf16.mxu0 0
      %13255 = vmatmul.mubr.bf16.gmra.mrb[0].mxu0 %v12754
      %v13256 = vpop.f32.mrb[0].mxu0
      %v13257 = vadd.f32 %v13096, %v13256
      %v13258 = vpop.f32.mrb[0].mxu0
      %v13259 = vpop.f32.mrb[0].mxu0
      %v13260 = vadd.f32 %v13099, %v13259
      %v13261 = vpop.f32.mrb[0].mxu0
      %13262 = vmatprep.mubr.bf16.mxu0 0
      %13263 = vmatmul.mubr.bf16.gmra.mrb[0].mxu0 %v12757
      %v13264 = vpop.f32.mrb[0].mxu0
      %v13265 = vadd.f32 %v13104, %v13264
      %v13266 = vpop.f32.mrb[0].mxu0
      %v13267 = vpop.f32.mrb[0].mxu0
      %v13268 = vadd.f32 %v13107, %v13267
      %v13269 = vpop.f32.mrb[0].mxu0
      %13270 = vmatprep.mubr.bf16.mxu0 0
      %13271 = vmatmul.mubr.bf16.gmra.mrb[0].mxu0 %v12760
      %v13272 = vpop.f32.mrb[0].mxu0
      %v13273 = vadd.f32 %v13112, %v13272
      %v13274 = vpop.f32.mrb[0].mxu0
      %v13275 = vpop.f32.mrb[0].mxu0
      %v13276 = vadd.f32 %v13115, %v13275
      %v13277 = vpop.f32.mrb[0].mxu0
      %13278 = vmatprep.mubr.bf16.mxu0 0
      %13279 = vmatmul.mubr.bf16.gmra.mrb[0].mxu0 %v12763
      %v13280 = vpop.f32.mrb[0].mxu0
      %v13281 = vadd.f32 %v13120, %v13280
      %v13282 = vpop.f32.mrb[0].mxu0
      %v13283 = vpop.f32.mrb[0].mxu0
      %v13284 = vadd.f32 %v13123, %v13283
      %v13285 = vpop.f32.mrb[0].mxu0
      %13286 = vmatprep.mubr.bf16.mxu0 0
      %13287 = vmatmul.mubr.bf16.gmra.mrb[0].mxu0 %v12766
      %v13288 = vpop.f32.mrb[0].mxu0
      %v13289 = vadd.f32 %v13128, %v13288
      %v13290 = vpop.f32.mrb[0].mxu0
      %v13291 = vpop.f32.mrb[0].mxu0
      %v13292 = vadd.f32 %v13131, %v13291
      %v13293 = vpop.f32.mrb[0].mxu0
      %13294 = vmatprep.mubr.bf16.mxu0 0
      %13295 = vmatmul.mubr.bf16.gmra.mrb[0].mxu0 %v12769
      %v13296 = vpop.f32.mrb[0].mxu0
      %v13297 = vadd.f32 %v13136, %v13296
      %v13298 = vpop.f32.mrb[0].mxu0
      %v13299 = vpop.f32.mrb[0].mxu0
      %v13300 = vadd.f32 %v13139, %v13299
      %v13301 = vpop.f32.mrb[0].mxu0
      %13302 = vdwg.mxu0
      %v13303 = vadd.f32 %v12553, %v13177
      %v13304 = vadd.f32 %v12556, %v13180
      %v13305 = vadd.f32 %v12561, %v13185
      %v13306 = vadd.f32 %v12564, %v13188
      %v13307 = vadd.f32 %v12569, %v13193
      %v13308 = vadd.f32 %v12572, %v13196
      %v13309 = vadd.f32 %v12577, %v13201
      %v13310 = vadd.f32 %v12580, %v13204
      %v13311 = vadd.f32 %v12585, %v13209
      %v13312 = vadd.f32 %v12588, %v13212
      %v13313 = vadd.f32 %v12593, %v13217
      %v13314 = vadd.f32 %v12596, %v13220
      %v13315 = vadd.f32 %v12601, %v13225
      %v13316 = vadd.f32 %v12604, %v13228
      %v13317 = vadd.f32 %v12609, %v13233
      %v13318 = vadd.f32 %v12612, %v13236
      %v13319 = vadd.f32 %v12617, %v13241
      %v13320 = vadd.f32 %v12620, %v13244
      %v13321 = vadd.f32 %v12625, %v13249
      %v13322 = vadd.f32 %v12628, %v13252
      %v13323 = vadd.f32 %v12633, %v13257
      %v13324 = vadd.f32 %v12636, %v13260
      %v13325 = vadd.f32 %v12641, %v13265
      %v13326 = vadd.f32 %v12644, %v13268
      %v13327 = vadd.f32 %v12649, %v13273
      %v13328 = vadd.f32 %v12652, %v13276
      %v13329 = vadd.f32 %v12657, %v13281
      %v13330 = vadd.f32 %v12660, %v13284
      %v13331 = vadd.f32 %v12665, %v13289
      %v13332 = vadd.f32 %v12668, %v13292
      %v13333 = vadd.f32 %v12673, %v13297
      %v13334 = vadd.f32 %v12676, %v13300
      %v13335 = vld [vmem:[%s4] sm:$0x1]
      %v13337 = vlaneseq
      %v13338 = vshrl.u32 %v13337, 7
      %v13339 = vsub.s32 0, %v13338
      %v13340 = vrot.slane %v13335, %v13339
      %v13342 = vadd.f32 %v13303, %v13340
      %v13343 = vadd.f32 %v13304, %v13340
      %v13344 = vadd.f32 %v13305, %v13340
      %v13345 = vadd.f32 %v13306, %v13340
      %v13346 = vadd.f32 %v13307, %v13340
      %v13347 = vadd.f32 %v13308, %v13340
      %v13348 = vadd.f32 %v13309, %v13340
      %v13349 = vadd.f32 %v13310, %v13340
      %v13350 = vadd.f32 %v13311, %v13340
      %v13351 = vadd.f32 %v13312, %v13340
      %v13352 = vadd.f32 %v13313, %v13340
      %v13353 = vadd.f32 %v13314, %v13340
      %v13354 = vadd.f32 %v13315, %v13340
      %v13355 = vadd.f32 %v13316, %v13340
      %v13356 = vadd.f32 %v13317, %v13340
      %v13357 = vadd.f32 %v13318, %v13340
      %v13358 = vadd.f32 %v13319, %v13340
      %v13359 = vadd.f32 %v13320, %v13340
      %v13360 = vadd.f32 %v13321, %v13340
      %v13361 = vadd.f32 %v13322, %v13340
      %v13362 = vadd.f32 %v13323, %v13340
      %v13363 = vadd.f32 %v13324, %v13340
      %v13364 = vadd.f32 %v13325, %v13340
      %v13365 = vadd.f32 %v13326, %v13340
      %v13366 = vadd.f32 %v13327, %v13340
      %v13367 = vadd.f32 %v13328, %v13340
      %v13368 = vadd.f32 %v13329, %v13340
      %v13369 = vadd.f32 %v13330, %v13340
      %v13370 = vadd.f32 %v13331, %v13340
      %v13371 = vadd.f32 %v13332, %v13340
      %v13372 = vadd.f32 %v13333, %v13340
      %v13373 = vadd.f32 %v13334, %v13340
      %v13374 = vmax.f32 %v13342, 0.0
      %v13375 = vmax.f32 %v13343, 0.0
      %v13376 = vmax.f32 %v13344, 0.0
      %v13377 = vmax.f32 %v13345, 0.0
      %v13378 = vmax.f32 %v13346, 0.0
      %v13379 = vmax.f32 %v13347, 0.0
      %v13380 = vmax.f32 %v13348, 0.0
      %v13381 = vmax.f32 %v13349, 0.0
      %v13382 = vmax.f32 %v13350, 0.0
      %v13383 = vmax.f32 %v13351, 0.0
      %v13384 = vmax.f32 %v13352, 0.0
      %v13385 = vmax.f32 %v13353, 0.0
      %v13386 = vmax.f32 %v13354, 0.0
      %v13387 = vmax.f32 %v13355, 0.0
      %v13388 = vmax.f32 %v13356, 0.0
      %v13389 = vmax.f32 %v13357, 0.0
      %v13390 = vmax.f32 %v13358, 0.0
      %v13391 = vmax.f32 %v13359, 0.0
      %v13392 = vmax.f32 %v13360, 0.0
      %v13393 = vmax.f32 %v13361, 0.0
      %v13394 = vmax.f32 %v13362, 0.0
      %v13395 = vmax.f32 %v13363, 0.0
      %v13396 = vmax.f32 %v13364, 0.0
      %v13397 = vmax.f32 %v13365, 0.0
      %v13398 = vmax.f32 %v13366, 0.0
      %v13399 = vmax.f32 %v13367, 0.0
      %v13400 = vmax.f32 %v13368, 0.0
      %v13401 = vmax.f32 %v13369, 0.0
      %v13402 = vmax.f32 %v13370, 0.0
      %v13403 = vmax.f32 %v13371, 0.0
      %v13404 = vmax.f32 %v13372, 0.0
      %v13405 = vmax.f32 %v13373, 0.0
      %v13406 = vpack.c.bf16 %v13375, %v13374
      %v13407 = vpack.c.bf16 %v13377, %v13376
      %v13408 = vpack.c.bf16 %v13379, %v13378
      %v13409 = vpack.c.bf16 %v13381, %v13380
      %v13410 = vpack.c.bf16 %v13383, %v13382
      %v13411 = vpack.c.bf16 %v13385, %v13384
      %v13412 = vpack.c.bf16 %v13387, %v13386
      %v13413 = vpack.c.bf16 %v13389, %v13388
      %v13414 = vpack.c.bf16 %v13391, %v13390
      %v13415 = vpack.c.bf16 %v13393, %v13392
      %v13416 = vpack.c.bf16 %v13395, %v13394
      %v13417 = vpack.c.bf16 %v13397, %v13396
      %v13418 = vpack.c.bf16 %v13399, %v13398
      %v13419 = vpack.c.bf16 %v13401, %v13400
      %v13420 = vpack.c.bf16 %v13403, %v13402
      %v13421 = vpack.c.bf16 %v13405, %v13404
      %v13438 = vunpack.c.l.b16 %v13406
      %v13439 = vunpack.c.h.b16 %v13406
      %v13440 = vunpack.c.l.b16 %v13407
      %v13441 = vunpack.c.h.b16 %v13407
      %v13442 = vunpack.c.l.b16 %v13408
      %v13443 = vunpack.c.h.b16 %v13408
      %v13444 = vunpack.c.l.b16 %v13409
      %v13445 = vunpack.c.h.b16 %v13409
      %v13446 = vunpack.c.l.b16 %v13410
      %v13447 = vunpack.c.h.b16 %v13410
      %v13448 = vunpack.c.l.b16 %v13411
      %v13449 = vunpack.c.h.b16 %v13411
      %v13450 = vunpack.c.l.b16 %v13412
      %v13451 = vunpack.c.h.b16 %v13412
      %v13452 = vunpack.c.l.b16 %v13413
      %v13453 = vunpack.c.h.b16 %v13413
      %v13454 = vunpack.c.l.b16 %v13414
      %v13455 = vunpack.c.h.b16 %v13414
      %v13456 = vunpack.c.l.b16 %v13415
      %v13457 = vunpack.c.h.b16 %v13415
      %v13458 = vunpack.c.l.b16 %v13416
      %v13459 = vunpack.c.h.b16 %v13416
      %v13460 = vunpack.c.l.b16 %v13417
      %v13461 = vunpack.c.h.b16 %v13417
      %v13462 = vunpack.c.l.b16 %v13418
      %v13463 = vunpack.c.h.b16 %v13418
      %v13464 = vunpack.c.l.b16 %v13419
      %v13465 = vunpack.c.h.b16 %v13419
      %v13466 = vunpack.c.l.b16 %v13420
      %v13467 = vunpack.c.h.b16 %v13420
      %v13468 = vunpack.c.l.b16 %v13421
      %v13469 = vunpack.c.h.b16 %v13421
      %v13470 = vpack.c.b16 %v13438, %v13438
      %v13471 = vpack.c.b16 %v13439, %v13439
      %v13472 = vpack.c.b16 %v13440, %v13440
      %v13473 = vpack.c.b16 %v13441, %v13441
      %v13474 = vpack.c.b16 %v13442, %v13442
      %v13475 = vpack.c.b16 %v13443, %v13443
      %v13476 = vpack.c.b16 %v13444, %v13444
      %v13477 = vpack.c.b16 %v13445, %v13445
      %v13478 = vpack.c.b16 %v13446, %v13446
      %v13479 = vpack.c.b16 %v13447, %v13447
      %v13480 = vpack.c.b16 %v13448, %v13448
      %v13481 = vpack.c.b16 %v13449, %v13449
      %v13482 = vpack.c.b16 %v13450, %v13450
      %v13483 = vpack.c.b16 %v13451, %v13451
      %v13484 = vpack.c.b16 %v13452, %v13452
      %v13485 = vpack.c.b16 %v13453, %v13453
      %v13486 = vpack.c.b16 %v13454, %v13454
      %v13487 = vpack.c.b16 %v13455, %v13455
      %v13488 = vpack.c.b16 %v13456, %v13456
      %v13489 = vpack.c.b16 %v13457, %v13457
      %v13490 = vpack.c.b16 %v13458, %v13458
      %v13491 = vpack.c.b16 %v13459, %v13459
      %v13492 = vpack.c.b16 %v13460, %v13460
      %v13493 = vpack.c.b16 %v13461, %v13461
      %v13494 = vpack.c.b16 %v13462, %v13462
      %v13495 = vpack.c.b16 %v13463, %v13463
      %v13496 = vpack.c.b16 %v13464, %v13464
      %v13497 = vpack.c.b16 %v13465, %v13465
      %v13498 = vpack.c.b16 %v13466, %v13466
      %v13499 = vpack.c.b16 %v13467, %v13467
      %v13500 = vpack.c.b16 %v13468, %v13468
      %v13501 = vpack.c.b16 %v13469, %v13469
      %13534 = vst [vmem:[%s248] sm:$0xf] %v13470
      %13535 = vst [vmem:[%s248 + $0x4] sm:$0xf] %v13471
      %13536 = vst [vmem:[%s248 + $0x8] sm:$0xf] %v13472
      %13537 = vst [vmem:[%s248 + $0xc] sm:$0xf] %v13473
      %13538 = vst [vmem:[%s248 + $0x10] sm:$0xf] %v13474
      %13539 = vst [vmem:[%s248 + $0x14] sm:$0xf] %v13475
      %13540 = vst [vmem:[%s248 + $0x18] sm:$0xf] %v13476
      %13541 = vst [vmem:[%s248 + $0x1c] sm:$0xf] %v13477
      %13542 = vst [vmem:[%s248 + $0x20] sm:$0xf] %v13478
      %13543 = vst [vmem:[%s248 + $0x24] sm:$0xf] %v13479
      %13544 = vst [vmem:[%s248 + $0x28] sm:$0xf] %v13480
      %13545 = vst [vmem:[%s248 + $0x2c] sm:$0xf] %v13481
      %13546 = vst [vmem:[%s248 + $0x30] sm:$0xf] %v13482
      %13547 = vst [vmem:[%s248 + $0x34] sm:$0xf] %v13483
      %13548 = vst [vmem:[%s248 + $0x38] sm:$0xf] %v13484
      %13549 = vst [vmem:[%s248 + $0x3c] sm:$0xf] %v13485
      %13550 = vst [vmem:[%s248 + $0x40] sm:$0xf] %v13486
      %13551 = vst [vmem:[%s248 + $0x44] sm:$0xf] %v13487
      %13552 = vst [vmem:[%s248 + $0x48] sm:$0xf] %v13488
      %13553 = vst [vmem:[%s248 + $0x4c] sm:$0xf] %v13489
      %13554 = vst [vmem:[%s248 + $0x50] sm:$0xf] %v13490
      %13555 = vst [vmem:[%s248 + $0x54] sm:$0xf] %v13491
      %13556 = vst [vmem:[%s248 + $0x58] sm:$0xf] %v13492
      %13557 = vst [vmem:[%s248 + $0x5c] sm:$0xf] %v13493
      %13558 = vst [vmem:[%s248 + $0x60] sm:$0xf] %v13494
      %13559 = vst [vmem:[%s248 + $0x64] sm:$0xf] %v13495
      %13560 = vst [vmem:[%s248 + $0x68] sm:$0xf] %v13496
      %13561 = vst [vmem:[%s248 + $0x6c] sm:$0xf] %v13497
      %13562 = vst [vmem:[%s248 + $0x70] sm:$0xf] %v13498
      %13563 = vst [vmem:[%s248 + $0x74] sm:$0xf] %v13499
      %13564 = vst [vmem:[%s248 + $0x78] sm:$0xf] %v13500
      %13565 = vst [vmem:[%s248 + $0x7c] sm:$0xf] %v13501
      %s13566 = smul.u32 16, %s21
      %p13567 = scmp.lt.s32.totalorder %s20, 1
      %s13568 = scalar_select %p13567, %s20, 1
      %p13569 = scmp.lt.s32.totalorder %s13566, 15
      %s13570 = scalar_select %p13569, %s13566, 15
      %s13571 = smul.addr %s13570, 2
      %s13572 = smul.addr %s13568, 32
      %s13573 = sadd.s32 %s13571, %s13572
      %s13574 = smul.addr %s13573, 4
      %s13575 = scalar_lea.vmem %s5, %s13574
      // Predicated region
      $region41: #{bridge_forward.1} parent=39 // pred_check
        %p13576 = pneg %p158
      $region42: #{bridge_forward.1} parent=39 // pred_check_branch
        %13578 = sbr.rel (%p13576) target = $region44
      $region43: #{bridge_forward.1} parent=39 // pred_region
        %s13579 = smul.u32 16, %s21
      $region44: #{bridge_forward.1} parent=39 // pred_fallthru
        _
    $region40: #{bridge_forward.1} parent=5 // pred_fallthru
      _
    %p13580 = scmp.le.s32.totalorder 2, %s11
    // Predicated region
    $region45: #{bridge_forward.1} parent=5 // pred_check
      %p13581 = pneg %p13580
    $region46: #{bridge_forward.1} parent=5 // pred_check_branch
      %13583 = sbr.rel (%p13581) target = $region48
    $region47: #{bridge_forward.1} parent=5 // pred_region
      %s13584 = ssub.s32 %s11, 2
      // Predicated region
      $region49: #{bridge_forward.1} parent=47 // pred_check
        %p13585 = pneg %p164
      $region50: #{bridge_forward.1} parent=47 // pred_check_branch
        %13587 = sbr.rel (%p13585) target = $region52
      $region51: #{bridge_forward.1} parent=47 // pred_region
        %s13588 = smul.u32 16, %s23
        %p13589 = scmp.lt.s32.totalorder %s22, 1
        %s13590 = scalar_select %p13589, %s22, 1
        %p13591 = scmp.lt.s32.totalorder %s13588, 15
        %s13592 = scalar_select %p13591, %s13588, 15
        %s13593 = smul.addr %s13592, 2
        %s13594 = smul.addr %s13590, 32
        %s13595 = sadd.s32 %s13593, %s13594
        %s13596 = smul.addr %s13595, 4
        %s13597 = scalar_lea.vmem %s5, %s13596
      $region52: #{bridge_forward.1} parent=47 // pred_fallthru
        _
    $region48: #{bridge_forward.1} parent=5 // pred_fallthru
      _
  $region6: #{bridge_forward.1} parent=0 // loop_footer
    %s15 = sadd.s32 1, %s11
  $region7: #{bridge_forward.1} parent=0 // loop_footer_branch
    %10 = sbr.rel target = $region3
  $region8: #{bridge_forward.1} parent=0 // loop_exit
    _

</llo_original>
